<compile_context>
chip_gen: v7x
topology: tpu7x:2x2x1
jax: 0.10.0
libtpu: 0.0.40
codegen_flags: <defaults>
</compile_context>

<pallas_src>
import functools

import jax
import jax.numpy as jnp
from jax.experimental import pallas as pl
from jax.experimental.pallas import tpu as pltpu


def attend_kernel(a_ref, b_ref, w1_ref, b1_ref, w2_ref, b2_ref,
                  beta_ref, alpha_ref, *, lane_dense_out, approx_recip=False):
    """One grid step processes a block of Bblk batch elements (f32 math throughout)."""
    Bblk, Ta, H = a_ref.shape
    _,    Tb, _ = b_ref.shape
    Hh = w1_ref.shape[1]

    W1 = w1_ref[...]                     # [H,  Hh]
    b1 = b1_ref[...]                     # [1,  Hh]
    W2 = w2_ref[...]                     # [Hh, Hh]  (module requires num_inputs == num_hiddens)
    b2 = b2_ref[...]                     # [1,  Hh]

    A3 = a_ref[...]                      # [Bblk, Ta, H]
    B3 = b_ref[...]                      # [Bblk, Tb, H]

    # ---- shared MLP f(.): Dropout(identity) -> Linear -> ReLU -> Dropout -> Linear -> ReLU
    # (Bblk, T, H) -> (Bblk*T, H) is a pure major-dim merge (minor dims untouched), so it is
    # a free view as long as T % 8 == 0 (Ta=8, Tb=16 here).  The two applications reuse the
    # resident W1/W2; no concatenate/slice round trip.
    def f(x2d):
        h1 = jnp.maximum(jnp.dot(x2d, W1, preferred_element_type=jnp.float32) + b1, 0.0)
        return jnp.maximum(jnp.dot(h1, W2, preferred_element_type=jnp.float32) + b2, 0.0)

    f_A = f(A3.reshape(Bblk * Ta, H)).reshape(Bblk, Ta, Hh)
    f_B = f(B3.reshape(Bblk * Tb, H)).reshape(Bblk, Tb, Hh)

    # ---- attention scores + softmax over j (last axis); f32 on every generation ---------
    e = jnp.einsum("bih,bjh->bij", f_A, f_B,
                   preferred_element_type=jnp.float32)            # [Bblk, Ta, Tb]
    e_max = jnp.max(e, axis=-1, keepdims=True)
    p = jnp.exp(e - e_max)
    denom = jnp.sum(p, axis=-1, keepdims=True)
    if approx_recip:
        p = p * pl.reciprocal(denom, approx=True)                 # EUP slot (optional)
    else:
        p = p / denom                                             # exact path (default)

    # ---- beta = softmax(e, -1) @ B ; store it before touching alpha (vreg pressure) -----
    beta = jnp.einsum("bij,bjh->bih", p, B3,
                      preferred_element_type=jnp.float32)         # [Bblk, Ta, H]
    if lane_dense_out:
        beta_ref[...] = beta.astype(beta_ref.dtype).reshape(Bblk, Ta * H)
    else:
        beta_ref[...] = beta.astype(beta_ref.dtype)

    # ---- alpha = bmm(softmax(e.permute(0,2,1), dim=1), A) == p^T @ A ---------------------
    # Explicit minor-dims transpose keeps the matmul in the canonical lowering form.
    p_t = jnp.swapaxes(p, 1, 2)                                   # [Bblk, Tb, Ta]
    alpha = jnp.einsum("bji,bih->bjh", p_t, A3,
                       preferred_element_type=jnp.float32)        # [Bblk, Tb, H]
    if lane_dense_out:
        alpha_ref[...] = alpha.astype(alpha_ref.dtype).reshape(Bblk, Tb * H)
    else:
        alpha_ref[...] = alpha.astype(alpha_ref.dtype)


def _choose_block_b(Bsz, Ta, Tb, H, Hh, itemsize, budget_bytes, min_grid):
    """Largest batch block that (a) keeps lane-dense 2-D output blocks tile-aligned
    (block_b % 8 == 0, or the whole batch), (b) fits the per-step VMEM budget, and
    (c) leaves at least `min_grid` grid steps for pipelining / v7x megacore."""
    cands = [d for d in range(1, Bsz + 1)
             if Bsz % d == 0 and (d % 8 == 0 or d == Bsz)]

    def per_step_bytes(bb):
        io = 2 * 2 * bb * (Ta + Tb) * H * itemsize            # A,B in + beta,alpha out, double-buffered
        wts = 2 * (H * Hh + Hh * Hh + 2 * Hh) * 4             # weights (double-buffered, tiny)
        live = bb * (Ta * Tb + 2 * (Ta + Tb) * Hh + (Ta + Tb) * H) * 4   # e/p, h1/h2, beta/alpha (f32)
        return io + wts + live

    fits = [d for d in cands if per_step_bytes(d) <= budget_bytes] or [min(cands)]
    pref = [d for d in fits if Bsz // d >= min_grid]
    return max(pref) if pref else max(fits)


def attend(A, B, W1, b1, W2, b2, *, block_b=None, lane_dense_out=True,
           approx_recip=False, vmem_limit_bytes=48 * 1024 * 1024,
           block_vmem_budget=24 * 1024 * 1024, min_grid=2):
    Bsz, Ta, H = A.shape
    _,   Tb, _ = B.shape
    Hh = W1.shape[1]          # module wiring requires num_hiddens == num_inputs

    out_dtype = A.dtype
    if block_b is None:
        block_b = _choose_block_b(Bsz, Ta, Tb, H, Hh, jnp.dtype(A.dtype).itemsize,
                                  block_vmem_budget, min_grid)
    assert Bsz % block_b == 0, "batch size must be divisible by block_b"
    if lane_dense_out:
        assert block_b % 8 == 0 or block_b == Bsz, \
            "lane-dense 2-D output blocks need block_b % 8 == 0 or block_b == Bsz"
    grid = (Bsz // block_b,)

    kernel = functools.partial(attend_kernel, lane_dense_out=lane_dense_out,
                               approx_recip=approx_recip)

    in_specs = [
        pl.BlockSpec((block_b, Ta, H), lambda i: (i, 0, 0)),   # A
        pl.BlockSpec((block_b, Tb, H), lambda i: (i, 0, 0)),   # B
        # Constant-index weights: Pallas skips re-DMA across steps (tiny at H=Hh=32).
        pl.BlockSpec((H, Hh),  lambda i: (0, 0)),              # W1
        pl.BlockSpec((1, Hh),  lambda i: (0, 0)),              # b1
        pl.BlockSpec((Hh, Hh), lambda i: (0, 0)),              # W2
        pl.BlockSpec((1, Hh),  lambda i: (0, 0)),              # b2
    ]

    if lane_dense_out:
        # Lane-dense output slabs: unmasked stores + dense writeback DMA.
        out_shape = (jax.ShapeDtypeStruct((Bsz, Ta * H), out_dtype),   # beta (flattened)
                     jax.ShapeDtypeStruct((Bsz, Tb * H), out_dtype))   # alpha (flattened)
        out_specs = [pl.BlockSpec((block_b, Ta * H), lambda i: (i, 0)),
                     pl.BlockSpec((block_b, Tb * H), lambda i: (i, 0))]
    else:
        out_shape = (jax.ShapeDtypeStruct((Bsz, Ta, H), out_dtype),    # beta
                     jax.ShapeDtypeStruct((Bsz, Tb, H), out_dtype))    # alpha
        out_specs = [pl.BlockSpec((block_b, Ta, H), lambda i: (i, 0, 0)),
                     pl.BlockSpec((block_b, Tb, H), lambda i: (i, 0, 0))]

    beta, alpha = pl.pallas_call(
        kernel,
        out_shape=out_shape,
        grid_spec=pltpu.PrefetchScalarGridSpec(
            num_scalar_prefetch=0,
            grid=grid,
            in_specs=in_specs,
            out_specs=out_specs),
        compiler_params=pltpu.CompilerParams(
            dimension_semantics=("parallel",),      # batch axis -> megacore on v7x
            vmem_limit_bytes=vmem_limit_bytes),
    )(A, B, W1, b1, W2, b2)

    if lane_dense_out:
        beta = beta.reshape(Bsz, Ta, H)
        alpha = alpha.reshape(Bsz, Tb, H)
    return beta, alpha


def attend_reference(A, B, W1, b1, W2, b2):
    """Literal JAX translation of the PyTorch module (eval-mode dropout)."""
    def f(x):
        h1 = jnp.maximum(jnp.einsum("bth,ho->bto", x, W1) + b1, 0.0)
        return jnp.maximum(jnp.einsum("bth,ho->bto", h1, W2) + b2, 0.0)
    fA, fB = f(A), f(B)
    e = jnp.einsum("bih,bjh->bij", fA, fB)                        # bmm(f_A, f_B^T)
    beta = jnp.einsum("bij,bjh->bih", jax.nn.softmax(e, axis=-1), B)
    e_p = jnp.transpose(e, (0, 2, 1))                             # e.permute(0,2,1)
    alpha = jnp.einsum("bji,bih->bjh", jax.nn.softmax(e_p, axis=1), A)  # dim=1 softmax
    return beta, alpha


if __name__ == "__main__":
    key = jax.random.PRNGKey(0)
    Bsz, Ta, Tb = 16, 8, 16            # Bsz=16 -> block_b=8, grid=(2,) (>=2 steps for v7x)
    num_inputs = num_hiddens = 32      # module requires num_inputs == num_hiddens

    kA, kB, kw1, kb1, kw2, kb2 = jax.random.split(key, 6)
    A  = jax.random.normal(kA, (Bsz, Ta, num_inputs), dtype=jnp.float32)
    B  = jax.random.normal(kB, (Bsz, Tb, num_inputs), dtype=jnp.float32)
    # Linear weights stored pre-transposed as [in, out].
    W1 = 0.1 * jax.random.normal(kw1, (num_inputs,  num_hiddens), dtype=jnp.float32)
    b1 = 0.1 * jax.random.normal(kb1, (1,           num_hiddens), dtype=jnp.float32)
    W2 = 0.1 * jax.random.normal(kw2, (num_hiddens, num_hiddens), dtype=jnp.float32)
    b2 = 0.1 * jax.random.normal(kb2, (1,           num_hiddens), dtype=jnp.float32)

    beta_ref_v, alpha_ref_v = attend_reference(A, B, W1, b1, W2, b2)

    # Prefer the lane-dense-output layout; if this Mosaic build cannot lower the
    # in-register flatten (relayout), fall back to the known-good 3-D output layout.
    try:
        beta, alpha = attend(A, B, W1, b1, W2, b2, lane_dense_out=True)
        jax.block_until_ready((beta, alpha))
    except Exception:
        beta, alpha = attend(A, B, W1, b1, W2, b2, lane_dense_out=False)
        jax.block_until_ready((beta, alpha))

    # Tolerances allow for MXU multi-pass f32 rounding differences vs. the XLA reference.
    assert jnp.allclose(beta,  beta_ref_v,  atol=1e-4, rtol=1e-4)
    assert jnp.allclose(alpha, alpha_ref_v, atol=1e-4, rtol=1e-4)

    print("KERNEL_OK")
</pallas_src>

<mosaic_0001>
module attributes {stable_mosaic.version = 11 : i64} {
  func.func @attend_kernel(%arg0: i32, %arg1: memref<8x8x32xf32, #tpu.memory_space<vmem>>, %arg2: memref<8x16x32xf32, #tpu.memory_space<vmem>>, %arg3: memref<32x32xf32, #tpu.memory_space<vmem>>, %arg4: memref<1x32xf32, #tpu.memory_space<vmem>>, %arg5: memref<32x32xf32, #tpu.memory_space<vmem>>, %arg6: memref<1x32xf32, #tpu.memory_space<vmem>>, %arg7: memref<8x256xf32, #tpu.memory_space<vmem>>, %arg8: memref<8x512xf32, #tpu.memory_space<vmem>>) attributes {dimension_semantics = [#tpu.dimension_semantics<parallel>], iteration_bounds = array<i64: 2>, scalar_prefetch = 0 : i64, scratch_operands = 0 : i64, tpu.core_type = #tpu.core_type<tc>, window_params = [{transform_indices = @transform_0, window_bounds = array<i64: 8, 8, 32>}, {transform_indices = @transform_1, window_bounds = array<i64: 8, 16, 32>}, {pipeline_mode = #tpu.pipeline_mode<synchronous>, transform_indices = @transform_2, window_bounds = array<i64: 32, 32>}, {pipeline_mode = #tpu.pipeline_mode<synchronous>, transform_indices = @transform_3, window_bounds = array<i64: 1, 32>}, {pipeline_mode = #tpu.pipeline_mode<synchronous>, transform_indices = @transform_4, window_bounds = array<i64: 32, 32>}, {pipeline_mode = #tpu.pipeline_mode<synchronous>, transform_indices = @transform_5, window_bounds = array<i64: 1, 32>}, {transform_indices = @transform_6, window_bounds = array<i64: 8, 256>}, {transform_indices = @transform_7, window_bounds = array<i64: 8, 512>}]} {
    %c0 = arith.constant 0 : index
    %c0_0 = arith.constant 0 : index
    %0 = vector.load %arg3[%c0, %c0_0] : memref<32x32xf32, #tpu.memory_space<vmem>>, vector<32x32xf32>
    %c0_1 = arith.constant 0 : index
    %c0_2 = arith.constant 0 : index
    %1 = vector.load %arg4[%c0_1, %c0_2] : memref<1x32xf32, #tpu.memory_space<vmem>>, vector<1x32xf32>
    %c0_3 = arith.constant 0 : index
    %c0_4 = arith.constant 0 : index
    %2 = vector.load %arg5[%c0_3, %c0_4] : memref<32x32xf32, #tpu.memory_space<vmem>>, vector<32x32xf32>
    %c0_5 = arith.constant 0 : index
    %c0_6 = arith.constant 0 : index
    %3 = vector.load %arg6[%c0_5, %c0_6] : memref<1x32xf32, #tpu.memory_space<vmem>>, vector<1x32xf32>
    %c0_7 = arith.constant 0 : index
    %c0_8 = arith.constant 0 : index
    %c0_9 = arith.constant 0 : index
    %4 = vector.load %arg1[%c0_7, %c0_8, %c0_9] : memref<8x8x32xf32, #tpu.memory_space<vmem>>, vector<8x8x32xf32>
    %c0_10 = arith.constant 0 : index
    %c0_11 = arith.constant 0 : index
    %c0_12 = arith.constant 0 : index
    %5 = vector.load %arg2[%c0_10, %c0_11, %c0_12] : memref<8x16x32xf32, #tpu.memory_space<vmem>>, vector<8x16x32xf32>
    %6 = vector.shape_cast %4 : vector<8x8x32xf32> to vector<64x32xf32>
    %cst = arith.constant dense<0.000000e+00> : vector<64x32xf32>
    %7 = tpu.matmul %6, %0, %cst {dimension_numbers = #tpu.dot_dimension_numbers<[1], [0], [0], [1], [0, 0, 1, 1], [], []>} : vector<64x32xf32>, vector<32x32xf32>, vector<64x32xf32> -> vector<64x32xf32>
    %8 = vector.broadcast %1 : vector<1x32xf32> to vector<64x32xf32>
    %9 = arith.addf %7, %8 : vector<64x32xf32>
    %cst_13 = arith.constant 0.000000e+00 : f32
    %10 = vector.broadcast %cst_13 : f32 to vector<64x32xf32>
    %11 = arith.maximumf %9, %10 : vector<64x32xf32>
    %cst_14 = arith.constant dense<0.000000e+00> : vector<64x32xf32>
    %12 = tpu.matmul %11, %2, %cst_14 {dimension_numbers = #tpu.dot_dimension_numbers<[1], [0], [0], [1], [0, 0, 1, 1], [], []>} : vector<64x32xf32>, vector<32x32xf32>, vector<64x32xf32> -> vector<64x32xf32>
    %13 = vector.broadcast %3 : vector<1x32xf32> to vector<64x32xf32>
    %14 = arith.addf %12, %13 : vector<64x32xf32>
    %cst_15 = arith.constant 0.000000e+00 : f32
    %15 = vector.broadcast %cst_15 : f32 to vector<64x32xf32>
    %16 = arith.maximumf %14, %15 : vector<64x32xf32>
    %17 = vector.shape_cast %16 : vector<64x32xf32> to vector<8x8x32xf32>
    %18 = vector.shape_cast %5 : vector<8x16x32xf32> to vector<128x32xf32>
    %cst_16 = arith.constant dense<0.000000e+00> : vector<128x32xf32>
    %19 = tpu.matmul %18, %0, %cst_16 {dimension_numbers = #tpu.dot_dimension_numbers<[1], [0], [0], [1], [0, 0, 1, 1], [], []>} : vector<128x32xf32>, vector<32x32xf32>, vector<128x32xf32> -> vector<128x32xf32>
    %20 = vector.broadcast %1 : vector<1x32xf32> to vector<128x32xf32>
    %21 = arith.addf %19, %20 : vector<128x32xf32>
    %cst_17 = arith.constant 0.000000e+00 : f32
    %22 = vector.broadcast %cst_17 : f32 to vector<128x32xf32>
    %23 = arith.maximumf %21, %22 : vector<128x32xf32>
    %cst_18 = arith.constant dense<0.000000e+00> : vector<128x32xf32>
    %24 = tpu.matmul %23, %2, %cst_18 {dimension_numbers = #tpu.dot_dimension_numbers<[1], [0], [0], [1], [0, 0, 1, 1], [], []>} : vector<128x32xf32>, vector<32x32xf32>, vector<128x32xf32> -> vector<128x32xf32>
    %25 = vector.broadcast %3 : vector<1x32xf32> to vector<128x32xf32>
    %26 = arith.addf %24, %25 : vector<128x32xf32>
    %cst_19 = arith.constant 0.000000e+00 : f32
    %27 = vector.broadcast %cst_19 : f32 to vector<128x32xf32>
    %28 = arith.maximumf %26, %27 : vector<128x32xf32>
    %29 = vector.shape_cast %28 : vector<128x32xf32> to vector<8x16x32xf32>
    "tpu.trace_start"() <{level = 10 : i32, message = "bih,bjh->bij"}> : () -> ()
    %cst_20 = arith.constant dense<0.000000e+00> : vector<8x8x16xf32>
    %30 = tpu.matmul %17, %29, %cst_20 {dimension_numbers = #tpu.dot_dimension_numbers<[2], [2], [1], [1], [0, 0, 0, 1, 1, 1], [0], [0]>} : vector<8x8x32xf32>, vector<8x16x32xf32>, vector<8x8x16xf32> -> vector<8x8x16xf32>
    "tpu.trace_stop"() : () -> ()
    %cst_21 = arith.constant dense<0xFF800000> : vector<8x8xf32>
    %31 = vector.multi_reduction <maximumf>, %30, %cst_21 [2] : vector<8x8x16xf32> to vector<8x8xf32>
    %32 = vector.shape_cast %31 : vector<8x8xf32> to vector<8x8x1xf32>
    %33 = vector.broadcast %32 : vector<8x8x1xf32> to vector<8x8x16xf32>
    %34 = arith.subf %30, %33 : vector<8x8x16xf32>
    %35 = math.exp %34 : vector<8x8x16xf32>
    %cst_22 = arith.constant dense<0.000000e+00> : vector<8x8xf32>
    %36 = vector.multi_reduction <add>, %35, %cst_22 [2] : vector<8x8x16xf32> to vector<8x8xf32>
    %37 = vector.shape_cast %36 : vector<8x8xf32> to vector<8x8x1xf32>
    %38 = vector.broadcast %37 : vector<8x8x1xf32> to vector<8x8x16xf32>
    %39 = arith.divf %35, %38 : vector<8x8x16xf32>
    "tpu.trace_start"() <{level = 10 : i32, message = "bij,bjh->bih"}> : () -> ()
    %cst_23 = arith.constant dense<0.000000e+00> : vector<8x8x32xf32>
    %40 = tpu.matmul %39, %5, %cst_23 {dimension_numbers = #tpu.dot_dimension_numbers<[2], [1], [1], [2], [0, 0, 0, 1, 1, 2], [0], [0]>} : vector<8x8x16xf32>, vector<8x16x32xf32>, vector<8x8x32xf32> -> vector<8x8x32xf32>
    "tpu.trace_stop"() : () -> ()
    %41 = vector.shape_cast %40 : vector<8x8x32xf32> to vector<8x256xf32>
    %c0_24 = arith.constant 0 : index
    %c0_25 = arith.constant 0 : index
    %42 = vector.load %arg7[%c0_24, %c0_25] : memref<8x256xf32, #tpu.memory_space<vmem>>, vector<8x256xf32>
    tpu.vector_store %arg7[%c0_24, %c0_25], %41 {strides = array<i32>} : memref<8x256xf32, #tpu.memory_space<vmem>>, vector<8x256xf32>,
    %43 = tpu.transpose %39, [0, 2, 1] : vector<8x8x16xf32> -> vector<8x16x8xf32>
    "tpu.trace_start"() <{level = 10 : i32, message = "bji,bih->bjh"}> : () -> ()
    %cst_26 = arith.constant dense<0.000000e+00> : vector<8x16x32xf32>
    %44 = tpu.matmul %43, %4, %cst_26 {dimension_numbers = #tpu.dot_dimension_numbers<[2], [1], [1], [2], [0, 0, 0, 1, 1, 2], [0], [0]>} : vector<8x16x8xf32>, vector<8x8x32xf32>, vector<8x16x32xf32> -> vector<8x16x32xf32>
    "tpu.trace_stop"() : () -> ()
    %45 = vector.shape_cast %44 : vector<8x16x32xf32> to vector<8x512xf32>
    %c0_27 = arith.constant 0 : index
    %c0_28 = arith.constant 0 : index
    %46 = vector.load %arg8[%c0_27, %c0_28] : memref<8x512xf32, #tpu.memory_space<vmem>>, vector<8x512xf32>
    tpu.vector_store %arg8[%c0_27, %c0_28], %45 {strides = array<i32>} : memref<8x512xf32, #tpu.memory_space<vmem>>, vector<8x512xf32>,
    return
  }
  func.func @transform_0(%arg0: i32) -> (i32, i32, i32) {
    %c0_i32 = arith.constant 0 : i32
    %c0_i32_0 = arith.constant 0 : i32
    %c0_i32_1 = arith.constant 0 : i32
    return %arg0, %c0_i32, %c0_i32_0 : i32, i32, i32
  }
  func.func @transform_1(%arg0: i32) -> (i32, i32, i32) {
    %c0_i32 = arith.constant 0 : i32
    %c0_i32_0 = arith.constant 0 : i32
    %c0_i32_1 = arith.constant 0 : i32
    return %arg0, %c0_i32, %c0_i32_0 : i32, i32, i32
  }
  func.func @transform_2(%arg0: i32) -> (i32, i32) {
    %c0_i32 = arith.constant 0 : i32
    %c0_i32_0 = arith.constant 0 : i32
    %c0_i32_1 = arith.constant 0 : i32
    return %c0_i32, %c0_i32_0 : i32, i32
  }
  func.func @transform_3(%arg0: i32) -> (i32, i32) {
    %c0_i32 = arith.constant 0 : i32
    %c0_i32_0 = arith.constant 0 : i32
    %c0_i32_1 = arith.constant 0 : i32
    return %c0_i32, %c0_i32_0 : i32, i32
  }
  func.func @transform_4(%arg0: i32) -> (i32, i32) {
    %c0_i32 = arith.constant 0 : i32
    %c0_i32_0 = arith.constant 0 : i32
    %c0_i32_1 = arith.constant 0 : i32
    return %c0_i32, %c0_i32_0 : i32, i32
  }
  func.func @transform_5(%arg0: i32) -> (i32, i32) {
    %c0_i32 = arith.constant 0 : i32
    %c0_i32_0 = arith.constant 0 : i32
    %c0_i32_1 = arith.constant 0 : i32
    return %c0_i32, %c0_i32_0 : i32, i32
  }
  func.func @transform_6(%arg0: i32) -> (i32, i32) {
    %c0_i32 = arith.constant 0 : i32
    %c0_i32_0 = arith.constant 0 : i32
    return %arg0, %c0_i32 : i32, i32
  }
  func.func @transform_7(%arg0: i32) -> (i32, i32) {
    %c0_i32 = arith.constant 0 : i32
    %c0_i32_0 = arith.constant 0 : i32
    return %arg0, %c0_i32 : i32, i32
  }
}

module attributes {stable_mosaic.version = 11 : i64} {
  func.func @attend_kernel(%arg0: i32, %arg1: memref<8x8x32xf32, #tpu.memory_space<vmem>>, %arg2: memref<8x16x32xf32, #tpu.memory_space<vmem>>, %arg3: memref<32x32xf32, #tpu.memory_space<vmem>>, %arg4: memref<1x32xf32, #tpu.memory_space<vmem>>, %arg5: memref<32x32xf32, #tpu.memory_space<vmem>>, %arg6: memref<1x32xf32, #tpu.memory_space<vmem>>, %arg7: memref<8x8x32xf32, #tpu.memory_space<vmem>>, %arg8: memref<8x16x32xf32, #tpu.memory_space<vmem>>) attributes {dimension_semantics = [#tpu.dimension_semantics<parallel>], iteration_bounds = array<i64: 2>, scalar_prefetch = 0 : i64, scratch_operands = 0 : i64, tpu.core_type = #tpu.core_type<tc>, window_params = [{transform_indices = @transform_0, window_bounds = array<i64: 8, 8, 32>}, {transform_indices = @transform_1, window_bounds = array<i64: 8, 16, 32>}, {pipeline_mode = #tpu.pipeline_mode<synchronous>, transform_indices = @transform_2, window_bounds = array<i64: 32, 32>}, {pipeline_mode = #tpu.pipeline_mode<synchronous>, transform_indices = @transform_3, window_bounds = array<i64: 1, 32>}, {pipeline_mode = #tpu.pipeline_mode<synchronous>, transform_indices = @transform_4, window_bounds = array<i64: 32, 32>}, {pipeline_mode = #tpu.pipeline_mode<synchronous>, transform_indices = @transform_5, window_bounds = array<i64: 1, 32>}, {transform_indices = @transform_6, window_bounds = array<i64: 8, 8, 32>}, {transform_indices = @transform_7, window_bounds = array<i64: 8, 16, 32>}]} {
    %c0 = arith.constant 0 : index
    %c0_0 = arith.constant 0 : index
    %0 = vector.load %arg3[%c0, %c0_0] : memref<32x32xf32, #tpu.memory_space<vmem>>, vector<32x32xf32>
    %c0_1 = arith.constant 0 : index
    %c0_2 = arith.constant 0 : index
    %1 = vector.load %arg4[%c0_1, %c0_2] : memref<1x32xf32, #tpu.memory_space<vmem>>, vector<1x32xf32>
    %c0_3 = arith.constant 0 : index
    %c0_4 = arith.constant 0 : index
    %2 = vector.load %arg5[%c0_3, %c0_4] : memref<32x32xf32, #tpu.memory_space<vmem>>, vector<32x32xf32>
    %c0_5 = arith.constant 0 : index
    %c0_6 = arith.constant 0 : index
    %3 = vector.load %arg6[%c0_5, %c0_6] : memref<1x32xf32, #tpu.memory_space<vmem>>, vector<1x32xf32>
    %c0_7 = arith.constant 0 : index
    %c0_8 = arith.constant 0 : index
    %c0_9 = arith.constant 0 : index
    %4 = vector.load %arg1[%c0_7, %c0_8, %c0_9] : memref<8x8x32xf32, #tpu.memory_space<vmem>>, vector<8x8x32xf32>
    %c0_10 = arith.constant 0 : index
    %c0_11 = arith.constant 0 : index
    %c0_12 = arith.constant 0 : index
    %5 = vector.load %arg2[%c0_10, %c0_11, %c0_12] : memref<8x16x32xf32, #tpu.memory_space<vmem>>, vector<8x16x32xf32>
    %6 = vector.shape_cast %4 : vector<8x8x32xf32> to vector<64x32xf32>
    %cst = arith.constant dense<0.000000e+00> : vector<64x32xf32>
    %7 = tpu.matmul %6, %0, %cst {dimension_numbers = #tpu.dot_dimension_numbers<[1], [0], [0], [1], [0, 0, 1, 1], [], []>} : vector<64x32xf32>, vector<32x32xf32>, vector<64x32xf32> -> vector<64x32xf32>
    %8 = vector.broadcast %1 : vector<1x32xf32> to vector<64x32xf32>
    %9 = arith.addf %7, %8 : vector<64x32xf32>
    %cst_13 = arith.constant 0.000000e+00 : f32
    %10 = vector.broadcast %cst_13 : f32 to vector<64x32xf32>
    %11 = arith.maximumf %9, %10 : vector<64x32xf32>
    %cst_14 = arith.constant dense<0.000000e+00> : vector<64x32xf32>
    %12 = tpu.matmul %11, %2, %cst_14 {dimension_numbers = #tpu.dot_dimension_numbers<[1], [0], [0], [1], [0, 0, 1, 1], [], []>} : vector<64x32xf32>, vector<32x32xf32>, vector<64x32xf32> -> vector<64x32xf32>
    %13 = vector.broadcast %3 : vector<1x32xf32> to vector<64x32xf32>
    %14 = arith.addf %12, %13 : vector<64x32xf32>
    %cst_15 = arith.constant 0.000000e+00 : f32
    %15 = vector.broadcast %cst_15 : f32 to vector<64x32xf32>
    %16 = arith.maximumf %14, %15 : vector<64x32xf32>
    %17 = vector.shape_cast %16 : vector<64x32xf32> to vector<8x8x32xf32>
    %18 = vector.shape_cast %5 : vector<8x16x32xf32> to vector<128x32xf32>
    %cst_16 = arith.constant dense<0.000000e+00> : vector<128x32xf32>
    %19 = tpu.matmul %18, %0, %cst_16 {dimension_numbers = #tpu.dot_dimension_numbers<[1], [0], [0], [1], [0, 0, 1, 1], [], []>} : vector<128x32xf32>, vector<32x32xf32>, vector<128x32xf32> -> vector<128x32xf32>
    %20 = vector.broadcast %1 : vector<1x32xf32> to vector<128x32xf32>
    %21 = arith.addf %19, %20 : vector<128x32xf32>
    %cst_17 = arith.constant 0.000000e+00 : f32
    %22 = vector.broadcast %cst_17 : f32 to vector<128x32xf32>
    %23 = arith.maximumf %21, %22 : vector<128x32xf32>
    %cst_18 = arith.constant dense<0.000000e+00> : vector<128x32xf32>
    %24 = tpu.matmul %23, %2, %cst_18 {dimension_numbers = #tpu.dot_dimension_numbers<[1], [0], [0], [1], [0, 0, 1, 1], [], []>} : vector<128x32xf32>, vector<32x32xf32>, vector<128x32xf32> -> vector<128x32xf32>
    %25 = vector.broadcast %3 : vector<1x32xf32> to vector<128x32xf32>
    %26 = arith.addf %24, %25 : vector<128x32xf32>
    %cst_19 = arith.constant 0.000000e+00 : f32
    %27 = vector.broadcast %cst_19 : f32 to vector<128x32xf32>
    %28 = arith.maximumf %26, %27 : vector<128x32xf32>
    %29 = vector.shape_cast %28 : vector<128x32xf32> to vector<8x16x32xf32>
    "tpu.trace_start"() <{level = 10 : i32, message = "bih,bjh->bij"}> : () -> ()
    %cst_20 = arith.constant dense<0.000000e+00> : vector<8x8x16xf32>
    %30 = tpu.matmul %17, %29, %cst_20 {dimension_numbers = #tpu.dot_dimension_numbers<[2], [2], [1], [1], [0, 0, 0, 1, 1, 1], [0], [0]>} : vector<8x8x32xf32>, vector<8x16x32xf32>, vector<8x8x16xf32> -> vector<8x8x16xf32>
    "tpu.trace_stop"() : () -> ()
    %cst_21 = arith.constant dense<0xFF800000> : vector<8x8xf32>
    %31 = vector.multi_reduction <maximumf>, %30, %cst_21 [2] : vector<8x8x16xf32> to vector<8x8xf32>
    %32 = vector.shape_cast %31 : vector<8x8xf32> to vector<8x8x1xf32>
    %33 = vector.broadcast %32 : vector<8x8x1xf32> to vector<8x8x16xf32>
    %34 = arith.subf %30, %33 : vector<8x8x16xf32>
    %35 = math.exp %34 : vector<8x8x16xf32>
    %cst_22 = arith.constant dense<0.000000e+00> : vector<8x8xf32>
    %36 = vector.multi_reduction <add>, %35, %cst_22 [2] : vector<8x8x16xf32> to vector<8x8xf32>
    %37 = vector.shape_cast %36 : vector<8x8xf32> to vector<8x8x1xf32>
    %38 = vector.broadcast %37 : vector<8x8x1xf32> to vector<8x8x16xf32>
    %39 = arith.divf %35, %38 : vector<8x8x16xf32>
    "tpu.trace_start"() <{level = 10 : i32, message = "bij,bjh->bih"}> : () -> ()
    %cst_23 = arith.constant dense<0.000000e+00> : vector<8x8x32xf32>
    %40 = tpu.matmul %39, %5, %cst_23 {dimension_numbers = #tpu.dot_dimension_numbers<[2], [1], [1], [2], [0, 0, 0, 1, 1, 2], [0], [0]>} : vector<8x8x16xf32>, vector<8x16x32xf32>, vector<8x8x32xf32> -> vector<8x8x32xf32>
    "tpu.trace_stop"() : () -> ()
    %c0_24 = arith.constant 0 : index
    %c0_25 = arith.constant 0 : index
    %c0_26 = arith.constant 0 : index
    %41 = vector.load %arg7[%c0_24, %c0_25, %c0_26] : memref<8x8x32xf32, #tpu.memory_space<vmem>>, vector<8x8x32xf32>
    tpu.vector_store %arg7[%c0_24, %c0_25, %c0_26], %40 {strides = array<i32>} : memref<8x8x32xf32, #tpu.memory_space<vmem>>, vector<8x8x32xf32>,
    %42 = tpu.transpose %39, [0, 2, 1] : vector<8x8x16xf32> -> vector<8x16x8xf32>
    "tpu.trace_start"() <{level = 10 : i32, message = "bji,bih->bjh"}> : () -> ()
    %cst_27 = arith.constant dense<0.000000e+00> : vector<8x16x32xf32>
    %43 = tpu.matmul %42, %4, %cst_27 {dimension_numbers = #tpu.dot_dimension_numbers<[2], [1], [1], [2], [0, 0, 0, 1, 1, 2], [0], [0]>} : vector<8x16x8xf32>, vector<8x8x32xf32>, vector<8x16x32xf32> -> vector<8x16x32xf32>
    "tpu.trace_stop"() : () -> ()
    %c0_28 = arith.constant 0 : index
    %c0_29 = arith.constant 0 : index
    %c0_30 = arith.constant 0 : index
    %44 = vector.load %arg8[%c0_28, %c0_29, %c0_30] : memref<8x16x32xf32, #tpu.memory_space<vmem>>, vector<8x16x32xf32>
    tpu.vector_store %arg8[%c0_28, %c0_29, %c0_30], %43 {strides = array<i32>} : memref<8x16x32xf32, #tpu.memory_space<vmem>>, vector<8x16x32xf32>,
    return
  }
  func.func @transform_0(%arg0: i32) -> (i32, i32, i32) {
    %c0_i32 = arith.constant 0 : i32
    %c0_i32_0 = arith.constant 0 : i32
    %c0_i32_1 = arith.constant 0 : i32
    return %arg0, %c0_i32, %c0_i32_0 : i32, i32, i32
  }
  func.func @transform_1(%arg0: i32) -> (i32, i32, i32) {
    %c0_i32 = arith.constant 0 : i32
    %c0_i32_0 = arith.constant 0 : i32
    %c0_i32_1 = arith.constant 0 : i32
    return %arg0, %c0_i32, %c0_i32_0 : i32, i32, i32
  }
  func.func @transform_2(%arg0: i32) -> (i32, i32) {
    %c0_i32 = arith.constant 0 : i32
    %c0_i32_0 = arith.constant 0 : i32
    %c0_i32_1 = arith.constant 0 : i32
    return %c0_i32, %c0_i32_0 : i32, i32
  }
  func.func @transform_3(%arg0: i32) -> (i32, i32) {
    %c0_i32 = arith.constant 0 : i32
    %c0_i32_0 = arith.constant 0 : i32
    %c0_i32_1 = arith.constant 0 : i32
    return %c0_i32, %c0_i32_0 : i32, i32
  }
  func.func @transform_4(%arg0: i32) -> (i32, i32) {
    %c0_i32 = arith.constant 0 : i32
    %c0_i32_0 = arith.constant 0 : i32
    %c0_i32_1 = arith.constant 0 : i32
    return %c0_i32, %c0_i32_0 : i32, i32
  }
  func.func @transform_5(%arg0: i32) -> (i32, i32) {
    %c0_i32 = arith.constant 0 : i32
    %c0_i32_0 = arith.constant 0 : i32
    %c0_i32_1 = arith.constant 0 : i32
    return %c0_i32, %c0_i32_0 : i32, i32
  }
  func.func @transform_6(%arg0: i32) -> (i32, i32, i32) {
    %c0_i32 = arith.constant 0 : i32
    %c0_i32_0 = arith.constant 0 : i32
    %c0_i32_1 = arith.constant 0 : i32
    return %arg0, %c0_i32, %c0_i32_0 : i32, i32, i32
  }
  func.func @transform_7(%arg0: i32) -> (i32, i32, i32) {
    %c0_i32 = arith.constant 0 : i32
    %c0_i32_0 = arith.constant 0 : i32
    %c0_i32_1 = arith.constant 0 : i32
    return %arg0, %c0_i32, %c0_i32_0 : i32, i32, i32
  }
}

</mosaic_0001>

<llo_original>
// kernel: tpu_custom_call.1
$region0: #{tpu_custom_call.1}
  #allocation0 [shape = 'u32[]', space=smem, size = 0x4, offset = 0x4, fixed_abs, tag = 'smem constant byte address 0x4 - core index']
  #allocation1 [shape = 'u32[144,128]{1,0:T(1,128)}', space=vmem, size = 0x12000, scoped, tag = 'internal scratch']
  %s0 = inlined_call_operand.hbm [shape: f32[16,8,32], index: 0, kind: input, shape index: {}]
  %s1 = inlined_call_operand.hbm [shape: f32[16,16,32], index: 1, kind: input, shape index: {}]
  %s2 = inlined_call_operand.hbm [shape: f32[32,32], index: 2, kind: input, shape index: {}]
  %s3 = inlined_call_operand.vmem [shape: f32[1,32], index: 3, kind: input, shape index: {}]
  %s4 = inlined_call_operand.hbm [shape: f32[32,32], index: 4, kind: input, shape index: {}]
  %s5 = inlined_call_operand.vmem [shape: f32[1,32], index: 5, kind: input, shape index: {}]
  %s6 = inlined_call_operand.hbm [shape: f32[16,256], index: 6, kind: output, shape index: {0}]
  %s7 = inlined_call_operand.hbm [shape: f32[16,512], index: 7, kind: output, shape index: {1}]
  %8 = xla_tuple %s6, %s7
  %s9 = sld [smem:[#allocation0]]
  $region81: #{tpu_custom_call.1} parent=0
    _
  %s11 = ssub.s32 1, %s9
  %s12 = scalar_select 0, %s11, %s9
  $region1: #{tpu_custom_call.1} parent=0
    #allocation2 [shape = 'u8[65536]{0}', space=vmem, size = 0x10000, scoped, tag = 'input window, operand 0']
    #allocation3 [shape = 's32[2]{0}', space=sflag, size = 0x8, scoped, tag = 'scoped memory for tpu_custom_call.1']
    #allocation4 [shape = 's32[2]{0}', space=sflag, size = 0x8, scoped, tag = 'scoped memory for tpu_custom_call.1']
    #allocation5 [shape = 'u8[131072]{0}', space=vmem, size = 0x20000, scoped, tag = 'input window, operand 1']
    #allocation6 [shape = 's32[2]{0}', space=sflag, size = 0x8, scoped, tag = 'scoped memory for tpu_custom_call.1']
    #allocation7 [shape = 'u8[16384]{0}', space=vmem, size = 0x4000, scoped, tag = 'input window, operand 2, single buffered']
    #allocation8 [shape = 'u8[16384]{0}', space=vmem, size = 0x4000, scoped, tag = 'input window, operand 4, single buffered']
    #allocation9 [shape = 's32[1]{0}', space=sflag, size = 0x4, scoped, tag = 'scoped memory for tpu_custom_call.1']
    #allocation10 [shape = 'u8[16384]{0}', space=vmem, size = 0x4000, scoped, tag = 'output window, operand 0']
    #allocation11 [shape = 'u8[32768]{0}', space=vmem, size = 0x8000, scoped, tag = 'output window, operand 1']
    #allocation12 [shape = 's32[2]{0}', space=sflag, size = 0x8, scoped, tag = 'scoped memory for tpu_custom_call.1']
    %13 = vsyncpa [#allocation3], 0
    %s14 = scalar_lea.sflag [#allocation3], 1
    %15 = vsyncpa %s14, 0
    %16 = vsyncpa [#allocation6], 0
    %s17 = scalar_lea.sflag [#allocation6], 1
    %18 = vsyncpa %s17, 0
    %19 = vsyncpa [#allocation9], 0
    %20 = vsyncpa [#allocation4], 0
    %s21 = scalar_lea.sflag [#allocation4], 1
    %22 = vsyncpa %s21, 0
    %23 = vsyncpa [#allocation12], 0
    %s24 = scalar_lea.sflag [#allocation12], 1
    %25 = vsyncpa %s24, 0
    loop: start=0, step=1, limit=4
    $region2: #{tpu_custom_call.1} parent=1 // loop_pre_header
      _
    $region3: #{tpu_custom_call.1} parent=1 // loop_header
      %s27 = sphi 0, %s31
      %p28 = scmp.ge.s32.totalorder %s27, 4
      %s37 = sphi 0, %s39
      %s40 = sphi 0, %s37
      %s41 = sphi 0, %s40
      %s57 = sphi 0, %s41
      %s63 = sphi 0, %s65
      %s66 = sphi 0, %s63
      %s67 = sphi 0, %s66
      %s83 = sphi 0, %s67
      %s87 = sphi 0, %s87
      %s89 = sphi 0, %s87
      %s90 = sphi 0, %s89
      %s104 = sphi 0, %s90
      %s108 = sphi 0, %s108
      %s110 = sphi 0, %s108
      %s111 = sphi 0, %s110
      %s125 = sphi 0, %s111
      %s129 = sphi 0, %s129
      %s131 = sphi 0, %s129
      %s132 = sphi 0, %s131
      %s146 = sphi 0, %s132
      %s150 = sphi 0, %s150
      %s152 = sphi 0, %s150
      %s153 = sphi 0, %s152
      %s167 = sphi 0, %s153
      %s173 = sphi 0, %s175
      %s176 = sphi 0, %s173
      %s177 = sphi 0, %s176
      %s193 = sphi 0, %s177
      %s199 = sphi 0, %s201
      %s202 = sphi 0, %s199
      %s203 = sphi 0, %s202
      %s219 = sphi 0, %s203
    $region4: #{tpu_custom_call.1} parent=1 // loop_header_branch
      %30 = sbr.rel (%p28) target = $region8
    $region5: #{tpu_custom_call.1} parent=1 // loop_body
      %s32 = ssub.s32 %s27, 1
      %s33 = ssub.s32 %s27, 2
      %s34 = sadd.s32 %s27, 1
      %s35 = ssub.s32 %s27, %s34
      %p36 = scmp.eq.s32.totalorder %s35, 0
      %s38 = sadd.s32 %s37, 1
      %s39 = scalar_select %p36, %s37, %s38
      %p42 = pneg %p36
      %p43 = scmp.eq.s32.totalorder %s27, 1
      %p44 = por %p42, %p43
      %p45 = scmp.ne.s32.totalorder %s37, %s40
      %p46 = scmp.eq.s32.totalorder %s27, 0
      %p47 = por %p45, %p46
      %p48 = scmp.ne.s32.totalorder %s37, %s40
      %p49 = scmp.eq.s32.totalorder %s32, 1
      %p50 = por %p48, %p49
      %p51 = scmp.ne.s32.totalorder %s40, %s41
      %p52 = scmp.eq.s32.totalorder %s32, 0
      %p53 = por %p51, %p52
      %p54 = scmp.ne.s32.totalorder %s40, %s41
      %p55 = scmp.eq.s32.totalorder %s33, 1
      %p56 = por %p54, %p55
      %p58 = scmp.ne.s32.totalorder %s41, %s57
      %p59 = scmp.eq.s32.totalorder %s33, 0
      %p60 = por %p58, %p59
      %s61 = ssub.s32 %s27, %s34
      %p62 = scmp.eq.s32.totalorder %s61, 0
      %s64 = sadd.s32 %s63, 1
      %s65 = scalar_select %p62, %s63, %s64
      %p68 = pneg %p62
      %p69 = scmp.eq.s32.totalorder %s27, 1
      %p70 = por %p68, %p69
      %p71 = scmp.ne.s32.totalorder %s63, %s66
      %p72 = scmp.eq.s32.totalorder %s27, 0
      %p73 = por %p71, %p72
      %p74 = scmp.ne.s32.totalorder %s63, %s66
      %p75 = scmp.eq.s32.totalorder %s32, 1
      %p76 = por %p74, %p75
      %p77 = scmp.ne.s32.totalorder %s66, %s67
      %p78 = scmp.eq.s32.totalorder %s32, 0
      %p79 = por %p77, %p78
      %p80 = scmp.ne.s32.totalorder %s66, %s67
      %p81 = scmp.eq.s32.totalorder %s33, 1
      %p82 = por %p80, %p81
      %p84 = scmp.ne.s32.totalorder %s67, %s83
      %p85 = scmp.eq.s32.totalorder %s33, 0
      %p86 = por %p84, %p85
      %s88 = sadd.s32 %s87, 1
      %p91 = scmp.eq.s32.totalorder %s27, 1
      %p92 = scmp.ne.s32.totalorder %s87, %s89
      %p93 = scmp.eq.s32.totalorder %s27, 0
      %p94 = por %p92, %p93
      %p95 = scmp.ne.s32.totalorder %s87, %s89
      %p96 = scmp.eq.s32.totalorder %s32, 1
      %p97 = por %p95, %p96
      %p98 = scmp.ne.s32.totalorder %s89, %s90
      %p99 = scmp.eq.s32.totalorder %s32, 0
      %p100 = por %p98, %p99
      %p101 = scmp.ne.s32.totalorder %s89, %s90
      %p102 = scmp.eq.s32.totalorder %s33, 1
      %p103 = por %p101, %p102
      %p105 = scmp.ne.s32.totalorder %s90, %s104
      %p106 = scmp.eq.s32.totalorder %s33, 0
      %p107 = por %p105, %p106
      %s109 = sadd.s32 %s108, 1
      %p112 = scmp.eq.s32.totalorder %s27, 1
      %p113 = scmp.ne.s32.totalorder %s108, %s110
      %p114 = scmp.eq.s32.totalorder %s27, 0
      %p115 = por %p113, %p114
      %p116 = scmp.ne.s32.totalorder %s108, %s110
      %p117 = scmp.eq.s32.totalorder %s32, 1
      %p118 = por %p116, %p117
      %p119 = scmp.ne.s32.totalorder %s110, %s111
      %p120 = scmp.eq.s32.totalorder %s32, 0
      %p121 = por %p119, %p120
      %p122 = scmp.ne.s32.totalorder %s110, %s111
      %p123 = scmp.eq.s32.totalorder %s33, 1
      %p124 = por %p122, %p123
      %p126 = scmp.ne.s32.totalorder %s111, %s125
      %p127 = scmp.eq.s32.totalorder %s33, 0
      %p128 = por %p126, %p127
      %s130 = sadd.s32 %s129, 1
      %p133 = scmp.eq.s32.totalorder %s27, 1
      %p134 = scmp.ne.s32.totalorder %s129, %s131
      %p135 = scmp.eq.s32.totalorder %s27, 0
      %p136 = por %p134, %p135
      %p137 = scmp.ne.s32.totalorder %s129, %s131
      %p138 = scmp.eq.s32.totalorder %s32, 1
      %p139 = por %p137, %p138
      %p140 = scmp.ne.s32.totalorder %s131, %s132
      %p141 = scmp.eq.s32.totalorder %s32, 0
      %p142 = por %p140, %p141
      %p143 = scmp.ne.s32.totalorder %s131, %s132
      %p144 = scmp.eq.s32.totalorder %s33, 1
      %p145 = por %p143, %p144
      %p147 = scmp.ne.s32.totalorder %s132, %s146
      %p148 = scmp.eq.s32.totalorder %s33, 0
      %p149 = por %p147, %p148
      %s151 = sadd.s32 %s150, 1
      %p154 = scmp.eq.s32.totalorder %s27, 1
      %p155 = scmp.ne.s32.totalorder %s150, %s152
      %p156 = scmp.eq.s32.totalorder %s27, 0
      %p157 = por %p155, %p156
      %p158 = scmp.ne.s32.totalorder %s150, %s152
      %p159 = scmp.eq.s32.totalorder %s32, 1
      %p160 = por %p158, %p159
      %p161 = scmp.ne.s32.totalorder %s152, %s153
      %p162 = scmp.eq.s32.totalorder %s32, 0
      %p163 = por %p161, %p162
      %p164 = scmp.ne.s32.totalorder %s152, %s153
      %p165 = scmp.eq.s32.totalorder %s33, 1
      %p166 = por %p164, %p165
      %p168 = scmp.ne.s32.totalorder %s153, %s167
      %p169 = scmp.eq.s32.totalorder %s33, 0
      %p170 = por %p168, %p169
      %s171 = ssub.s32 %s27, %s34
      %p172 = scmp.eq.s32.totalorder %s171, 0
      %s174 = sadd.s32 %s173, 1
      %s175 = scalar_select %p172, %s173, %s174
      %p178 = pneg %p172
      %p179 = scmp.eq.s32.totalorder %s27, 1
      %p180 = por %p178, %p179
      %p181 = scmp.ne.s32.totalorder %s173, %s176
      %p182 = scmp.eq.s32.totalorder %s27, 0
      %p183 = por %p181, %p182
      %p184 = scmp.ne.s32.totalorder %s173, %s176
      %p185 = scmp.eq.s32.totalorder %s32, 1
      %p186 = por %p184, %p185
      %p187 = scmp.ne.s32.totalorder %s176, %s177
      %p188 = scmp.eq.s32.totalorder %s32, 0
      %p189 = por %p187, %p188
      %p190 = scmp.ne.s32.totalorder %s176, %s177
      %p191 = scmp.eq.s32.totalorder %s33, 1
      %p192 = por %p190, %p191
      %p194 = scmp.ne.s32.totalorder %s177, %s193
      %p195 = scmp.eq.s32.totalorder %s33, 0
      %p196 = por %p194, %p195
      %s197 = ssub.s32 %s27, %s34
      %p198 = scmp.eq.s32.totalorder %s197, 0
      %s200 = sadd.s32 %s199, 1
      %s201 = scalar_select %p198, %s199, %s200
      %p204 = pneg %p198
      %p205 = scmp.eq.s32.totalorder %s27, 1
      %p206 = por %p204, %p205
      %p207 = scmp.ne.s32.totalorder %s199, %s202
      %p208 = scmp.eq.s32.totalorder %s27, 0
      %p209 = por %p207, %p208
      %p210 = scmp.ne.s32.totalorder %s199, %s202
      %p211 = scmp.eq.s32.totalorder %s32, 1
      %p212 = por %p210, %p211
      %p213 = scmp.ne.s32.totalorder %s202, %s203
      %p214 = scmp.eq.s32.totalorder %s32, 0
      %p215 = por %p213, %p214
      %p216 = scmp.ne.s32.totalorder %s202, %s203
      %p217 = scmp.eq.s32.totalorder %s33, 1
      %p218 = por %p216, %p217
      %p220 = scmp.ne.s32.totalorder %s203, %s219
      %p221 = scmp.eq.s32.totalorder %s33, 0
      %p222 = por %p220, %p221
      %p223 = scmp.le.s32.totalorder 1, %s27
      %p224 = scmp.lt.s32.totalorder %s27, 3
      %p225 = pnand %p223, %p224
      %p226 = pneg %p225
      // Predicated region
      $region9: #{tpu_custom_call.1} parent=5 // pred_check
        _
      $region10: #{tpu_custom_call.1} parent=5 // pred_check_branch
        %228 = sbr.rel (%p225) target = $region12
      $region11: #{tpu_custom_call.1} parent=5 // pred_region
        %s229 = ssub.s32 %s27, 1
        // Predicated region
        $region13: #{tpu_custom_call.1} parent=11 // pred_check
          %p230 = pneg %p100
        $region14: #{tpu_custom_call.1} parent=11 // pred_check_branch
          %232 = sbr.rel (%p230) target = $region16
        $region15: #{tpu_custom_call.1} parent=11 // pred_region
          %s234 = ssub.s32 512, 512
          %235 = vsyncadd [#allocation6], %s234
          %s236 = sshll.u32 [#allocation7], 4
          %s237 = int_to_ptr.vmem [resolvable:$true] %s236
          %242 = dma.hbm_to_vmem [thread:$0]  %s2, 512, %s237, [#allocation6], 128, 128, 8
        $region16: #{tpu_custom_call.1} parent=11 // pred_fallthru
          _
        // Predicated region
        $region17: #{tpu_custom_call.1} parent=11 // pred_check
          %p243 = pneg %p121
        $region18: #{tpu_custom_call.1} parent=11 // pred_check_branch
          %245 = sbr.rel (%p243) target = $region20
        $region19: #{tpu_custom_call.1} parent=11 // pred_region
          _
        $region20: #{tpu_custom_call.1} parent=11 // pred_fallthru
          _
        // Predicated region
        $region21: #{tpu_custom_call.1} parent=11 // pred_check
          %p246 = pneg %p142
        $region22: #{tpu_custom_call.1} parent=11 // pred_check_branch
          %248 = sbr.rel (%p246) target = $region24
        $region23: #{tpu_custom_call.1} parent=11 // pred_region
          %s250 = ssub.s32 512, 512
          %251 = vsyncadd [#allocation9], %s250
          %s252 = sshll.u32 [#allocation8], 4
          %s253 = int_to_ptr.vmem [resolvable:$true] %s252
          %258 = dma.hbm_to_vmem [thread:$0]  %s4, 512, %s253, [#allocation9], 128, 128, 8
        $region24: #{tpu_custom_call.1} parent=11 // pred_fallthru
          _
        // Predicated region
        $region25: #{tpu_custom_call.1} parent=11 // pred_check
          %p259 = pneg %p163
        $region26: #{tpu_custom_call.1} parent=11 // pred_check_branch
          %261 = sbr.rel (%p259) target = $region28
        $region27: #{tpu_custom_call.1} parent=11 // pred_region
          _
        $region28: #{tpu_custom_call.1} parent=11 // pred_fallthru
          _
      $region12: #{tpu_custom_call.1} parent=5 // pred_fallthru
        _
      %p262 = scmp.lt.s32.totalorder %s27, 2
      // Predicated region
      $region29: #{tpu_custom_call.1} parent=5 // pred_check
        %p263 = pneg %p262
      $region30: #{tpu_custom_call.1} parent=5 // pred_check_branch
        %265 = sbr.rel (%p263) target = $region32
      $region31: #{tpu_custom_call.1} parent=5 // pred_region
        // Predicated region
        $region33: #{tpu_custom_call.1} parent=31 // pred_check
          %p266 = pneg %p47
        $region34: #{tpu_custom_call.1} parent=31 // pred_check_branch
          %268 = sbr.rel (%p266) target = $region36
        $region35: #{tpu_custom_call.1} parent=31 // pred_region
          %s269 = sand.u32 %s37, 1
          %s270 = scalar_lea.sflag [#allocation3], %s269
          %s271 = sand.u32 %s37, 1
          %s272 = smul.addr %s271, 64
          %s273 = scalar_lea.vmem [#allocation2], %s272
          %s274 = smul.u32 8, %s27
          %s276 = ssub.s32 1024, 1024
          %277 = vsyncadd %s270, %s276
          %s278 = smul.addr %s274, 128
          %s279 = scalar_lea.hbm %s0, %s278
          %s280 = sshll.u32 %s273, 4
          %s281 = int_to_ptr.vmem [resolvable:$true] %s280
          %286 = dma.hbm_to_vmem [thread:$0]  %s279, 1024, %s281, %s270, 128, 128, 8
        $region36: #{tpu_custom_call.1} parent=31 // pred_fallthru
          _
        // Predicated region
        $region37: #{tpu_custom_call.1} parent=31 // pred_check
          %p287 = pneg %p73
        $region38: #{tpu_custom_call.1} parent=31 // pred_check_branch
          %289 = sbr.rel (%p287) target = $region40
        $region39: #{tpu_custom_call.1} parent=31 // pred_region
          %s290 = sand.u32 %s27, 1
          %s291 = scalar_lea.sflag [#allocation6], %s290
          %s292 = sand.u32 %s63, 1
          %s293 = smul.addr %s292, 128
          %s294 = scalar_lea.vmem [#allocation5], %s293
          %s295 = smul.u32 8, %s27
          %s297 = ssub.s32 2048, 2048
          %298 = vsyncadd %s291, %s297
          %s299 = smul.addr %s295, 2
          %s300 = smul.addr %s299, 128
          %s301 = scalar_lea.hbm %s1, %s300
          %s302 = sshll.u32 %s294, 4
          %s303 = int_to_ptr.vmem [resolvable:$true] %s302
          %308 = dma.hbm_to_vmem [thread:$0]  %s301, 2048, %s303, %s291, 128, 128, 8
        $region40: #{tpu_custom_call.1} parent=31 // pred_fallthru
          _
      $region32: #{tpu_custom_call.1} parent=5 // pred_fallthru
        _
      %p309 = scmp.le.s32.totalorder 1, %s27
      %p310 = scmp.lt.s32.totalorder %s27, 3
      %p311 = pnand %p309, %p310
      %p312 = pneg %p311
      // Predicated region
      $region41: #{tpu_custom_call.1} parent=5 // pred_check
        _
      $region42: #{tpu_custom_call.1} parent=5 // pred_check_branch
        %314 = sbr.rel (%p311) target = $region44
      $region43: #{tpu_custom_call.1} parent=5 // pred_region
        %s315 = ssub.s32 %s27, 1
        %s316 = sand.u32 %s40, 1
        %s317 = scalar_lea.sflag [#allocation3], %s316
        %s318 = sand.u32 %s40, 1
        %s319 = smul.addr %s318, 64
        %s320 = scalar_lea.vmem [#allocation2], %s319
        // Predicated region
        $region45: #{tpu_custom_call.1} parent=43 // pred_check
          %p321 = pneg %p53
        $region46: #{tpu_custom_call.1} parent=43 // pred_check_branch
          %323 = sbr.rel (%p321) target = $region48
        $region47: #{tpu_custom_call.1} parent=43 // pred_region
          %324 = dma.done %s317, 1024
        $region48: #{tpu_custom_call.1} parent=43 // pred_fallthru
          _
        %s325 = sand.u32 %s32, 1
        %s326 = scalar_lea.sflag [#allocation6], %s325
        %s327 = sand.u32 %s66, 1
        %s328 = smul.addr %s327, 128
        %s329 = scalar_lea.vmem [#allocation5], %s328
        // Predicated region
        $region49: #{tpu_custom_call.1} parent=43 // pred_check
          %p330 = pneg %p79
        $region50: #{tpu_custom_call.1} parent=43 // pred_check_branch
          %332 = sbr.rel (%p330) target = $region52
        $region51: #{tpu_custom_call.1} parent=43 // pred_region
          %333 = dma.done %s326, 2048
        $region52: #{tpu_custom_call.1} parent=43 // pred_fallthru
          _
        // Predicated region
        $region53: #{tpu_custom_call.1} parent=43 // pred_check
          %p334 = pneg %p100
        $region54: #{tpu_custom_call.1} parent=43 // pred_check_branch
          %336 = sbr.rel (%p334) target = $region56
        $region55: #{tpu_custom_call.1} parent=43 // pred_region
          %337 = dma.done [#allocation6], 512
        $region56: #{tpu_custom_call.1} parent=43 // pred_fallthru
          _
        // Predicated region
        $region57: #{tpu_custom_call.1} parent=43 // pred_check
          %p338 = pneg %p142
        $region58: #{tpu_custom_call.1} parent=43 // pred_check_branch
          %340 = sbr.rel (%p338) target = $region60
        $region59: #{tpu_custom_call.1} parent=43 // pred_region
          %341 = dma.done [#allocation9], 512
        $region60: #{tpu_custom_call.1} parent=43 // pred_fallthru
          _
        %s342 = sand.u32 %s40, 1
        %s343 = scalar_lea.sflag [#allocation3], %s342
        %s344 = sand.u32 %s40, 1
        %s345 = smul.addr %s344, 64
        %s346 = scalar_lea.vmem [#allocation2], %s345
        %p347 = pneg %p53
        %p348 = pneg %p50
        %s349 = sand.u32 %s32, 1
        %s350 = scalar_lea.sflag [#allocation6], %s349
        %s351 = sand.u32 %s66, 1
        %s352 = smul.addr %s351, 128
        %s353 = scalar_lea.vmem [#allocation5], %s352
        %p354 = pneg %p79
        %p355 = pneg %p76
        %p356 = pneg %p100
        %p357 = pneg %p97
        %p358 = pneg %p121
        %p359 = pneg %p118
        %p360 = pneg %p142
        %p361 = pneg %p139
        %p362 = pneg %p163
        %p363 = pneg %p160
        %p364 = pneg %p189
        %p365 = pneg %p186
        %s366 = sand.u32 %s176, 1
        %s367 = scalar_lea.sflag [#allocation4], %s366
        %s368 = sand.u32 %s176, 1
        %s369 = smul.addr %s368, 16
        %s370 = scalar_lea.vmem [#allocation10], %s369
        %p371 = pneg %p215
        %p372 = pneg %p212
        %s373 = sand.u32 %s202, 1
        %s374 = scalar_lea.sflag [#allocation12], %s373
        %s375 = sand.u32 %s202, 1
        %s376 = smul.addr %s375, 32
        %s377 = scalar_lea.vmem [#allocation11], %s376
        %s378 = smul.u32 8, %s32
        %s379 = smul.u32 8, %s32
        %v380 = vld [vmem:[#allocation7] sm:$0xff]
        %v381 = vld [vmem:[#allocation7 + $0x8] sm:$0xff]
        %v382 = vld [vmem:[#allocation7 + $0x10] sm:$0xff]
        %v383 = vld [vmem:[#allocation7 + $0x18] sm:$0xff]
        %v384 = vld [vmem:[%s3] sm:$0x1]
        %v385 = vld [vmem:[#allocation8] sm:$0xff]
        %v386 = vld [vmem:[#allocation8 + $0x8] sm:$0xff]
        %v387 = vld [vmem:[#allocation8 + $0x10] sm:$0xff]
        %v388 = vld [vmem:[#allocation8 + $0x18] sm:$0xff]
        %v389 = vld [vmem:[%s5] sm:$0x1]
        %v390 = vld [vmem:[%s320] sm:$0xff]
        %v391 = vld [vmem:[%s320 + $0x8] sm:$0xff]
        %v392 = vld [vmem:[%s320 + $0x10] sm:$0xff]
        %v393 = vld [vmem:[%s320 + $0x18] sm:$0xff]
        %v394 = vld [vmem:[%s320 + $0x20] sm:$0xff]
        %v395 = vld [vmem:[%s320 + $0x28] sm:$0xff]
        %v396 = vld [vmem:[%s320 + $0x30] sm:$0xff]
        %v397 = vld [vmem:[%s320 + $0x38] sm:$0xff]
        %v398 = vld [vmem:[%s329] sm:$0xff]
        %v399 = vld [vmem:[%s329 + $0x8] sm:$0xff]
        %v400 = vld [vmem:[%s329 + $0x10] sm:$0xff]
        %v401 = vld [vmem:[%s329 + $0x18] sm:$0xff]
        %v402 = vld [vmem:[%s329 + $0x20] sm:$0xff]
        %v403 = vld [vmem:[%s329 + $0x28] sm:$0xff]
        %v404 = vld [vmem:[%s329 + $0x30] sm:$0xff]
        %v405 = vld [vmem:[%s329 + $0x38] sm:$0xff]
        %v406 = vld [vmem:[%s329 + $0x40] sm:$0xff]
        %v407 = vld [vmem:[%s329 + $0x48] sm:$0xff]
        %v408 = vld [vmem:[%s329 + $0x50] sm:$0xff]
        %v409 = vld [vmem:[%s329 + $0x58] sm:$0xff]
        %v410 = vld [vmem:[%s329 + $0x60] sm:$0xff]
        %v411 = vld [vmem:[%s329 + $0x68] sm:$0xff]
        %v412 = vld [vmem:[%s329 + $0x70] sm:$0xff]
        %v413 = vld [vmem:[%s329 + $0x78] sm:$0xff]
        %v415 = vlaneseq
        %v416 = vshrl.u32 %v415, 7
        %v417 = vsub.s32 0, %v416
        %v418 = vrot.slane %v384, %v417
        %vm420 = vcmask 261120
        %v422 = vsel %vm420, %v390, 0
        %v425 = vsel %vm420, %v391, 0
        %v428 = vsel %vm420, %v392, 0
        %v431 = vsel %vm420, %v393, 0
        %v434 = vsel %vm420, %v394, 0
        %v437 = vsel %vm420, %v395, 0
        %v440 = vsel %vm420, %v396, 0
        %v443 = vsel %vm420, %v397, 0
        %445 = vmatprep.subr.mxu0 0.0
        %446 = vmatpush1.msra.mxu0 %v380
        %447 = vmatprep.subr.mxu0 0.0
        %448 = vmatpush1.msra.mxu0 %v381
        %449 = vmatprep.subr.mxu0 0.0
        %450 = vmatpush1.msra.mxu0 %v382
        %451 = vmatprep.subr.mxu0 0.0
        %452 = vmatpush1.msra.mxu0 %v383
        %453 = vmatprep.subr.mxu0 0.0
        %454 = vmatpush1.msra.mxu0 0.0
        %455 = vmatprep.subr.mxu0 0.0
        %456 = vmatpush1.msra.mxu0 0.0
        %457 = vmatprep.subr.mxu0 0.0
        %458 = vmatpush1.msra.mxu0 0.0
        %459 = vmatprep.subr.mxu0 0.0
        %460 = vmatpush1.msra.mxu0 0.0
        %461 = vmatprep.subr.mxu0 0.0
        %462 = vmatpush1.msra.mxu0 0.0
        %463 = vmatprep.subr.mxu0 0.0
        %464 = vmatpush1.msra.mxu0 0.0
        %465 = vmatprep.subr.mxu0 0.0
        %466 = vmatpush1.msra.mxu0 0.0
        %467 = vmatprep.subr.mxu0 0.0
        %468 = vmatpush1.msra.mxu0 0.0
        %469 = vmatprep.subr.mxu0 0.0
        %470 = vmatpush1.msra.mxu0 0.0
        %471 = vmatprep.subr.mxu0 0.0
        %472 = vmatpush1.msra.mxu0 0.0
        %473 = vmatprep.subr.mxu0 0.0
        %474 = vmatpush1.msra.mxu0 0.0
        %475 = vmatprep.subr.mxu0 0.0
        %476 = vmatpush1.msra.mxu0 0.0
        %477 = vmatprep.subr.mxu0 0.0
        %478 = vmatpush1.msra.mxu0 0.0
        %479 = vmatprep.subr.mxu0 0.0
        %480 = vmatpush1.msra.mxu0 0.0
        %481 = vmatprep.subr.mxu0 0.0
        %482 = vmatpush1.msra.mxu0 0.0
        %483 = vmatprep.subr.mxu0 0.0
        %484 = vmatpush1.msra.mxu0 0.0
        %485 = vmatprep.subr.mxu0 0.0
        %486 = vmatpush1.msra.mxu0 0.0
        %487 = vmatprep.subr.mxu0 0.0
        %488 = vmatpush1.msra.mxu0 0.0
        %489 = vmatprep.subr.mxu0 0.0
        %490 = vmatpush1.msra.mxu0 0.0
        %491 = vmatprep.subr.mxu0 0.0
        %492 = vmatpush1.msra.mxu0 0.0
        %493 = vmatprep.subr.mxu0 0.0
        %494 = vmatpush1.msra.mxu0 0.0
        %495 = vmatprep.subr.mxu0 0.0
        %496 = vmatpush1.msra.mxu0 0.0
        %497 = vmatprep.subr.mxu0 0.0
        %498 = vmatpush1.msra.mxu0 0.0
        %499 = vmatprep.subr.mxu0 0.0
        %500 = vmatpush1.msra.mxu0 0.0
        %501 = vmatprep.subr.mxu0 0.0
        %502 = vmatpush1.msra.mxu0 0.0
        %503 = vmatprep.subr.mxu0 0.0
        %504 = vmatpush1.msra.mxu0 0.0
        %505 = vmatprep.subr.mxu0 0.0
        %506 = vmatpush1.msra.mxu0 0.0
        %507 = vmatprep.subr.mxu0 0.0
        %508 = vmatpush1.msra.mxu0 0.0
        %509 = vmatprep.mubr.f32.mxu0 0.0
        %510 = vmatmul.mubr.f32.gmra.mrb[0].mxu0 %v422
        %v511 = vpop.f32.mrb[0].mxu0
        %v512 = vadd.f32 %v418, %v511
        %v513 = vpop.f32.mrb[0].mxu0
        %514 = vmatprep.mubr.f32.mxu0 0.0
        %515 = vmatmul.mubr.f32.gmra.mrb[0].mxu0 %v425
        %v516 = vpop.f32.mrb[0].mxu0
        %v517 = vadd.f32 %v418, %v516
        %v518 = vpop.f32.mrb[0].mxu0
        %519 = vmatprep.mubr.f32.mxu0 0.0
        %520 = vmatmul.mubr.f32.gmra.mrb[0].mxu0 %v428
        %v521 = vpop.f32.mrb[0].mxu0
        %v522 = vadd.f32 %v418, %v521
        %v523 = vpop.f32.mrb[0].mxu0
        %524 = vmatprep.mubr.f32.mxu0 0.0
        %525 = vmatmul.mubr.f32.gmra.mrb[0].mxu0 %v431
        %v526 = vpop.f32.mrb[0].mxu0
        %v527 = vadd.f32 %v418, %v526
        %v528 = vpop.f32.mrb[0].mxu0
        %529 = vmatprep.mubr.f32.mxu0 0.0
        %530 = vmatmul.mubr.f32.gmra.mrb[0].mxu0 %v434
        %v531 = vpop.f32.mrb[0].mxu0
        %v532 = vadd.f32 %v418, %v531
        %v533 = vpop.f32.mrb[0].mxu0
        %534 = vmatprep.mubr.f32.mxu0 0.0
        %535 = vmatmul.mubr.f32.gmra.mrb[0].mxu0 %v437
        %v536 = vpop.f32.mrb[0].mxu0
        %v537 = vadd.f32 %v418, %v536
        %v538 = vpop.f32.mrb[0].mxu0
        %539 = vmatprep.mubr.f32.mxu0 0.0
        %540 = vmatmul.mubr.f32.gmra.mrb[0].mxu0 %v440
        %v541 = vpop.f32.mrb[0].mxu0
        %v542 = vadd.f32 %v418, %v541
        %v543 = vpop.f32.mrb[0].mxu0
        %544 = vmatprep.mubr.f32.mxu0 0.0
        %545 = vmatmul.mubr.f32.gmra.mrb[0].mxu0 %v443
        %v546 = vpop.f32.mrb[0].mxu0
        %v547 = vadd.f32 %v418, %v546
        %v548 = vpop.f32.mrb[0].mxu0
        %549 = vdwg.mxu0
        %v550 = vmax.f32 %v512, 0.0
        %v551 = vmax.f32 %v517, 0.0
        %v552 = vmax.f32 %v522, 0.0
        %v553 = vmax.f32 %v527, 0.0
        %v554 = vmax.f32 %v532, 0.0
        %v555 = vmax.f32 %v537, 0.0
        %v556 = vmax.f32 %v542, 0.0
        %v557 = vmax.f32 %v547, 0.0
        %v559 = vlaneseq
        %v560 = vshrl.u32 %v559, 7
        %v561 = vsub.s32 0, %v560
        %v562 = vrot.slane %v389, %v561
        %v565 = vsel %vm420, %v550, 0
        %v568 = vsel %vm420, %v551, 0
        %v571 = vsel %vm420, %v552, 0
        %v574 = vsel %vm420, %v553, 0
        %v577 = vsel %vm420, %v554, 0
        %v580 = vsel %vm420, %v555, 0
        %v583 = vsel %vm420, %v556, 0
        %v586 = vsel %vm420, %v557, 0
        %588 = vmatprep.subr.mxu0 0.0
        %589 = vmatpush1.msra.mxu0 %v385
        %590 = vmatprep.subr.mxu0 0.0
        %591 = vmatpush1.msra.mxu0 %v386
        %592 = vmatprep.subr.mxu0 0.0
        %593 = vmatpush1.msra.mxu0 %v387
        %594 = vmatprep.subr.mxu0 0.0
        %595 = vmatpush1.msra.mxu0 %v388
        %596 = vmatprep.subr.mxu0 0.0
        %597 = vmatpush1.msra.mxu0 0.0
        %598 = vmatprep.subr.mxu0 0.0
        %599 = vmatpush1.msra.mxu0 0.0
        %600 = vmatprep.subr.mxu0 0.0
        %601 = vmatpush1.msra.mxu0 0.0
        %602 = vmatprep.subr.mxu0 0.0
        %603 = vmatpush1.msra.mxu0 0.0
        %604 = vmatprep.subr.mxu0 0.0
        %605 = vmatpush1.msra.mxu0 0.0
        %606 = vmatprep.subr.mxu0 0.0
        %607 = vmatpush1.msra.mxu0 0.0
        %608 = vmatprep.subr.mxu0 0.0
        %609 = vmatpush1.msra.mxu0 0.0
        %610 = vmatprep.subr.mxu0 0.0
        %611 = vmatpush1.msra.mxu0 0.0
        %612 = vmatprep.subr.mxu0 0.0
        %613 = vmatpush1.msra.mxu0 0.0
        %614 = vmatprep.subr.mxu0 0.0
        %615 = vmatpush1.msra.mxu0 0.0
        %616 = vmatprep.subr.mxu0 0.0
        %617 = vmatpush1.msra.mxu0 0.0
        %618 = vmatprep.subr.mxu0 0.0
        %619 = vmatpush1.msra.mxu0 0.0
        %620 = vmatprep.subr.mxu0 0.0
        %621 = vmatpush1.msra.mxu0 0.0
        %622 = vmatprep.subr.mxu0 0.0
        %623 = vmatpush1.msra.mxu0 0.0
        %624 = vmatprep.subr.mxu0 0.0
        %625 = vmatpush1.msra.mxu0 0.0
        %626 = vmatprep.subr.mxu0 0.0
        %627 = vmatpush1.msra.mxu0 0.0
        %628 = vmatprep.subr.mxu0 0.0
        %629 = vmatpush1.msra.mxu0 0.0
        %630 = vmatprep.subr.mxu0 0.0
        %631 = vmatpush1.msra.mxu0 0.0
        %632 = vmatprep.subr.mxu0 0.0
        %633 = vmatpush1.msra.mxu0 0.0
        %634 = vmatprep.subr.mxu0 0.0
        %635 = vmatpush1.msra.mxu0 0.0
        %636 = vmatprep.subr.mxu0 0.0
        %637 = vmatpush1.msra.mxu0 0.0
        %638 = vmatprep.subr.mxu0 0.0
        %639 = vmatpush1.msra.mxu0 0.0
        %640 = vmatprep.subr.mxu0 0.0
        %641 = vmatpush1.msra.mxu0 0.0
        %642 = vmatprep.subr.mxu0 0.0
        %643 = vmatpush1.msra.mxu0 0.0
        %644 = vmatprep.subr.mxu0 0.0
        %645 = vmatpush1.msra.mxu0 0.0
        %646 = vmatprep.subr.mxu0 0.0
        %647 = vmatpush1.msra.mxu0 0.0
        %648 = vmatprep.subr.mxu0 0.0
        %649 = vmatpush1.msra.mxu0 0.0
        %650 = vmatprep.subr.mxu0 0.0
        %651 = vmatpush1.msra.mxu0 0.0
        %652 = vmatprep.mubr.f32.mxu0 0.0
        %653 = vmatmul.mubr.f32.gmra.mrb[0].mxu0 %v565
        %v654 = vpop.f32.mrb[0].mxu0
        %v655 = vadd.f32 %v562, %v654
        %v656 = vpop.f32.mrb[0].mxu0
        %657 = vmatprep.mubr.f32.mxu0 0.0
        %658 = vmatmul.mubr.f32.gmra.mrb[0].mxu0 %v568
        %v659 = vpop.f32.mrb[0].mxu0
        %v660 = vadd.f32 %v562, %v659
        %v661 = vpop.f32.mrb[0].mxu0
        %662 = vmatprep.mubr.f32.mxu0 0.0
        %663 = vmatmul.mubr.f32.gmra.mrb[0].mxu0 %v571
        %v664 = vpop.f32.mrb[0].mxu0
        %v665 = vadd.f32 %v562, %v664
        %v666 = vpop.f32.mrb[0].mxu0
        %667 = vmatprep.mubr.f32.mxu0 0.0
        %668 = vmatmul.mubr.f32.gmra.mrb[0].mxu0 %v574
        %v669 = vpop.f32.mrb[0].mxu0
        %v670 = vadd.f32 %v562, %v669
        %v671 = vpop.f32.mrb[0].mxu0
        %672 = vmatprep.mubr.f32.mxu0 0.0
        %673 = vmatmul.mubr.f32.gmra.mrb[0].mxu0 %v577
        %v674 = vpop.f32.mrb[0].mxu0
        %v675 = vadd.f32 %v562, %v674
        %v676 = vpop.f32.mrb[0].mxu0
        %677 = vmatprep.mubr.f32.mxu0 0.0
        %678 = vmatmul.mubr.f32.gmra.mrb[0].mxu0 %v580
        %v679 = vpop.f32.mrb[0].mxu0
        %v680 = vadd.f32 %v562, %v679
        %v681 = vpop.f32.mrb[0].mxu0
        %682 = vmatprep.mubr.f32.mxu0 0.0
        %683 = vmatmul.mubr.f32.gmra.mrb[0].mxu0 %v583
        %v684 = vpop.f32.mrb[0].mxu0
        %v685 = vadd.f32 %v562, %v684
        %v686 = vpop.f32.mrb[0].mxu0
        %687 = vmatprep.mubr.f32.mxu0 0.0
        %688 = vmatmul.mubr.f32.gmra.mrb[0].mxu0 %v586
        %v689 = vpop.f32.mrb[0].mxu0
        %v690 = vadd.f32 %v562, %v689
        %v691 = vpop.f32.mrb[0].mxu0
        %692 = vdwg.mxu0
        %v693 = vmax.f32 %v655, 0.0
        %v694 = vmax.f32 %v660, 0.0
        %v695 = vmax.f32 %v665, 0.0
        %v696 = vmax.f32 %v670, 0.0
        %v697 = vmax.f32 %v675, 0.0
        %v698 = vmax.f32 %v680, 0.0
        %v699 = vmax.f32 %v685, 0.0
        %v700 = vmax.f32 %v690, 0.0
        %v702 = vsel %vm420, %v398, 0
        %v705 = vsel %vm420, %v399, 0
        %v708 = vsel %vm420, %v400, 0
        %v711 = vsel %vm420, %v401, 0
        %v714 = vsel %vm420, %v402, 0
        %v717 = vsel %vm420, %v403, 0
        %v720 = vsel %vm420, %v404, 0
        %v723 = vsel %vm420, %v405, 0
        %v726 = vsel %vm420, %v406, 0
        %v729 = vsel %vm420, %v407, 0
        %v732 = vsel %vm420, %v408, 0
        %v735 = vsel %vm420, %v409, 0
        %v738 = vsel %vm420, %v410, 0
        %v741 = vsel %vm420, %v411, 0
        %v744 = vsel %vm420, %v412, 0
        %v747 = vsel %vm420, %v413, 0
        %749 = vmatprep.subr.mxu0 0.0
        %750 = vmatpush1.msra.mxu0 %v380
        %751 = vmatprep.subr.mxu0 0.0
        %752 = vmatpush1.msra.mxu0 %v381
        %753 = vmatprep.subr.mxu0 0.0
        %754 = vmatpush1.msra.mxu0 %v382
        %755 = vmatprep.subr.mxu0 0.0
        %756 = vmatpush1.msra.mxu0 %v383
        %757 = vmatprep.subr.mxu0 0.0
        %758 = vmatpush1.msra.mxu0 0.0
        %759 = vmatprep.subr.mxu0 0.0
        %760 = vmatpush1.msra.mxu0 0.0
        %761 = vmatprep.subr.mxu0 0.0
        %762 = vmatpush1.msra.mxu0 0.0
        %763 = vmatprep.subr.mxu0 0.0
        %764 = vmatpush1.msra.mxu0 0.0
        %765 = vmatprep.subr.mxu0 0.0
        %766 = vmatpush1.msra.mxu0 0.0
        %767 = vmatprep.subr.mxu0 0.0
        %768 = vmatpush1.msra.mxu0 0.0
        %769 = vmatprep.subr.mxu0 0.0
        %770 = vmatpush1.msra.mxu0 0.0
        %771 = vmatprep.subr.mxu0 0.0
        %772 = vmatpush1.msra.mxu0 0.0
        %773 = vmatprep.subr.mxu0 0.0
        %774 = vmatpush1.msra.mxu0 0.0
        %775 = vmatprep.subr.mxu0 0.0
        %776 = vmatpush1.msra.mxu0 0.0
        %777 = vmatprep.subr.mxu0 0.0
        %778 = vmatpush1.msra.mxu0 0.0
        %779 = vmatprep.subr.mxu0 0.0
        %780 = vmatpush1.msra.mxu0 0.0
        %781 = vmatprep.subr.mxu0 0.0
        %782 = vmatpush1.msra.mxu0 0.0
        %783 = vmatprep.subr.mxu0 0.0
        %784 = vmatpush1.msra.mxu0 0.0
        %785 = vmatprep.subr.mxu0 0.0
        %786 = vmatpush1.msra.mxu0 0.0
        %787 = vmatprep.subr.mxu0 0.0
        %788 = vmatpush1.msra.mxu0 0.0
        %789 = vmatprep.subr.mxu0 0.0
        %790 = vmatpush1.msra.mxu0 0.0
        %791 = vmatprep.subr.mxu0 0.0
        %792 = vmatpush1.msra.mxu0 0.0
        %793 = vmatprep.subr.mxu0 0.0
        %794 = vmatpush1.msra.mxu0 0.0
        %795 = vmatprep.subr.mxu0 0.0
        %796 = vmatpush1.msra.mxu0 0.0
        %797 = vmatprep.subr.mxu0 0.0
        %798 = vmatpush1.msra.mxu0 0.0
        %799 = vmatprep.subr.mxu0 0.0
        %800 = vmatpush1.msra.mxu0 0.0
        %801 = vmatprep.subr.mxu0 0.0
        %802 = vmatpush1.msra.mxu0 0.0
        %803 = vmatprep.subr.mxu0 0.0
        %804 = vmatpush1.msra.mxu0 0.0
        %805 = vmatprep.subr.mxu0 0.0
        %806 = vmatpush1.msra.mxu0 0.0
        %807 = vmatprep.subr.mxu0 0.0
        %808 = vmatpush1.msra.mxu0 0.0
        %809 = vmatprep.subr.mxu0 0.0
        %810 = vmatpush1.msra.mxu0 0.0
        %811 = vmatprep.subr.mxu0 0.0
        %812 = vmatpush1.msra.mxu0 0.0
        %813 = vmatprep.mubr.f32.mxu0 0.0
        %814 = vmatmul.mubr.f32.gmra.mrb[0].mxu0 %v702
        %v815 = vpop.f32.mrb[0].mxu0
        %v816 = vadd.f32 %v418, %v815
        %v817 = vpop.f32.mrb[0].mxu0
        %818 = vmatprep.mubr.f32.mxu0 0.0
        %819 = vmatmul.mubr.f32.gmra.mrb[0].mxu0 %v705
        %v820 = vpop.f32.mrb[0].mxu0
        %v821 = vadd.f32 %v418, %v820
        %v822 = vpop.f32.mrb[0].mxu0
        %823 = vmatprep.mubr.f32.mxu0 0.0
        %824 = vmatmul.mubr.f32.gmra.mrb[0].mxu0 %v708
        %v825 = vpop.f32.mrb[0].mxu0
        %v826 = vadd.f32 %v418, %v825
        %v827 = vpop.f32.mrb[0].mxu0
        %828 = vmatprep.mubr.f32.mxu0 0.0
        %829 = vmatmul.mubr.f32.gmra.mrb[0].mxu0 %v711
        %v830 = vpop.f32.mrb[0].mxu0
        %v831 = vadd.f32 %v418, %v830
        %v832 = vpop.f32.mrb[0].mxu0
        %833 = vmatprep.mubr.f32.mxu0 0.0
        %834 = vmatmul.mubr.f32.gmra.mrb[0].mxu0 %v714
        %v835 = vpop.f32.mrb[0].mxu0
        %v836 = vadd.f32 %v418, %v835
        %v837 = vpop.f32.mrb[0].mxu0
        %838 = vmatprep.mubr.f32.mxu0 0.0
        %839 = vmatmul.mubr.f32.gmra.mrb[0].mxu0 %v717
        %v840 = vpop.f32.mrb[0].mxu0
        %v841 = vadd.f32 %v418, %v840
        %v842 = vpop.f32.mrb[0].mxu0
        %843 = vmatprep.mubr.f32.mxu0 0.0
        %844 = vmatmul.mubr.f32.gmra.mrb[0].mxu0 %v720
        %v845 = vpop.f32.mrb[0].mxu0
        %v846 = vadd.f32 %v418, %v845
        %v847 = vpop.f32.mrb[0].mxu0
        %848 = vmatprep.mubr.f32.mxu0 0.0
        %849 = vmatmul.mubr.f32.gmra.mrb[0].mxu0 %v723
        %v850 = vpop.f32.mrb[0].mxu0
        %v851 = vadd.f32 %v418, %v850
        %v852 = vpop.f32.mrb[0].mxu0
        %853 = vmatprep.mubr.f32.mxu0 0.0
        %854 = vmatmul.mubr.f32.gmra.mrb[0].mxu0 %v726
        %v855 = vpop.f32.mrb[0].mxu0
        %v856 = vadd.f32 %v418, %v855
        %v857 = vpop.f32.mrb[0].mxu0
        %858 = vmatprep.mubr.f32.mxu0 0.0
        %859 = vmatmul.mubr.f32.gmra.mrb[0].mxu0 %v729
        %v860 = vpop.f32.mrb[0].mxu0
        %v861 = vadd.f32 %v418, %v860
        %v862 = vpop.f32.mrb[0].mxu0
        %863 = vmatprep.mubr.f32.mxu0 0.0
        %864 = vmatmul.mubr.f32.gmra.mrb[0].mxu0 %v732
        %v865 = vpop.f32.mrb[0].mxu0
        %v866 = vadd.f32 %v418, %v865
        %v867 = vpop.f32.mrb[0].mxu0
        %868 = vmatprep.mubr.f32.mxu0 0.0
        %869 = vmatmul.mubr.f32.gmra.mrb[0].mxu0 %v735
        %v870 = vpop.f32.mrb[0].mxu0
        %v871 = vadd.f32 %v418, %v870
        %v872 = vpop.f32.mrb[0].mxu0
        %873 = vmatprep.mubr.f32.mxu0 0.0
        %874 = vmatmul.mubr.f32.gmra.mrb[0].mxu0 %v738
        %v875 = vpop.f32.mrb[0].mxu0
        %v876 = vadd.f32 %v418, %v875
        %v877 = vpop.f32.mrb[0].mxu0
        %878 = vmatprep.mubr.f32.mxu0 0.0
        %879 = vmatmul.mubr.f32.gmra.mrb[0].mxu0 %v741
        %v880 = vpop.f32.mrb[0].mxu0
        %v881 = vadd.f32 %v418, %v880
        %v882 = vpop.f32.mrb[0].mxu0
        %883 = vmatprep.mubr.f32.mxu0 0.0
        %884 = vmatmul.mubr.f32.gmra.mrb[0].mxu0 %v744
        %v885 = vpop.f32.mrb[0].mxu0
        %v886 = vadd.f32 %v418, %v885
        %v887 = vpop.f32.mrb[0].mxu0
        %888 = vmatprep.mubr.f32.mxu0 0.0
        %889 = vmatmul.mubr.f32.gmra.mrb[0].mxu0 %v747
        %v890 = vpop.f32.mrb[0].mxu0
        %v891 = vadd.f32 %v418, %v890
        %v892 = vpop.f32.mrb[0].mxu0
        %893 = vdwg.mxu0
        %v894 = vmax.f32 %v816, 0.0
        %v895 = vmax.f32 %v821, 0.0
        %v896 = vmax.f32 %v826, 0.0
        %v897 = vmax.f32 %v831, 0.0
        %v898 = vmax.f32 %v836, 0.0
        %v899 = vmax.f32 %v841, 0.0
        %v900 = vmax.f32 %v846, 0.0
        %v901 = vmax.f32 %v851, 0.0
        %v902 = vmax.f32 %v856, 0.0
        %v903 = vmax.f32 %v861, 0.0
        %v904 = vmax.f32 %v866, 0.0
        %v905 = vmax.f32 %v871, 0.0
        %v906 = vmax.f32 %v876, 0.0
        %v907 = vmax.f32 %v881, 0.0
        %v908 = vmax.f32 %v886, 0.0
        %v909 = vmax.f32 %v891, 0.0
        %v911 = vsel %vm420, %v894, 0
        %v914 = vsel %vm420, %v895, 0
        %v917 = vsel %vm420, %v896, 0
        %v920 = vsel %vm420, %v897, 0
        %v923 = vsel %vm420, %v898, 0
        %v926 = vsel %vm420, %v899, 0
        %v929 = vsel %vm420, %v900, 0
        %v932 = vsel %vm420, %v901, 0
        %v935 = vsel %vm420, %v902, 0
        %v938 = vsel %vm420, %v903, 0
        %v941 = vsel %vm420, %v904, 0
        %v944 = vsel %vm420, %v905, 0
        %v947 = vsel %vm420, %v906, 0
        %v950 = vsel %vm420, %v907, 0
        %v953 = vsel %vm420, %v908, 0
        %v956 = vsel %vm420, %v909, 0
        %958 = vmatprep.subr.mxu0 0.0
        %959 = vmatpush1.msra.mxu0 %v385
        %960 = vmatprep.subr.mxu0 0.0
        %961 = vmatpush1.msra.mxu0 %v386
        %962 = vmatprep.subr.mxu0 0.0
        %963 = vmatpush1.msra.mxu0 %v387
        %964 = vmatprep.subr.mxu0 0.0
        %965 = vmatpush1.msra.mxu0 %v388
        %966 = vmatprep.subr.mxu0 0.0
        %967 = vmatpush1.msra.mxu0 0.0
        %968 = vmatprep.subr.mxu0 0.0
        %969 = vmatpush1.msra.mxu0 0.0
        %970 = vmatprep.subr.mxu0 0.0
        %971 = vmatpush1.msra.mxu0 0.0
        %972 = vmatprep.subr.mxu0 0.0
        %973 = vmatpush1.msra.mxu0 0.0
        %974 = vmatprep.subr.mxu0 0.0
        %975 = vmatpush1.msra.mxu0 0.0
        %976 = vmatprep.subr.mxu0 0.0
        %977 = vmatpush1.msra.mxu0 0.0
        %978 = vmatprep.subr.mxu0 0.0
        %979 = vmatpush1.msra.mxu0 0.0
        %980 = vmatprep.subr.mxu0 0.0
        %981 = vmatpush1.msra.mxu0 0.0
        %982 = vmatprep.subr.mxu0 0.0
        %983 = vmatpush1.msra.mxu0 0.0
        %984 = vmatprep.subr.mxu0 0.0
        %985 = vmatpush1.msra.mxu0 0.0
        %986 = vmatprep.subr.mxu0 0.0
        %987 = vmatpush1.msra.mxu0 0.0
        %988 = vmatprep.subr.mxu0 0.0
        %989 = vmatpush1.msra.mxu0 0.0
        %990 = vmatprep.subr.mxu0 0.0
        %991 = vmatpush1.msra.mxu0 0.0
        %992 = vmatprep.subr.mxu0 0.0
        %993 = vmatpush1.msra.mxu0 0.0
        %994 = vmatprep.subr.mxu0 0.0
        %995 = vmatpush1.msra.mxu0 0.0
        %996 = vmatprep.subr.mxu0 0.0
        %997 = vmatpush1.msra.mxu0 0.0
        %998 = vmatprep.subr.mxu0 0.0
        %999 = vmatpush1.msra.mxu0 0.0
        %1000 = vmatprep.subr.mxu0 0.0
        %1001 = vmatpush1.msra.mxu0 0.0
        %1002 = vmatprep.subr.mxu0 0.0
        %1003 = vmatpush1.msra.mxu0 0.0
        %1004 = vmatprep.subr.mxu0 0.0
        %1005 = vmatpush1.msra.mxu0 0.0
        %1006 = vmatprep.subr.mxu0 0.0
        %1007 = vmatpush1.msra.mxu0 0.0
        %1008 = vmatprep.subr.mxu0 0.0
        %1009 = vmatpush1.msra.mxu0 0.0
        %1010 = vmatprep.subr.mxu0 0.0
        %1011 = vmatpush1.msra.mxu0 0.0
        %1012 = vmatprep.subr.mxu0 0.0
        %1013 = vmatpush1.msra.mxu0 0.0
        %1014 = vmatprep.subr.mxu0 0.0
        %1015 = vmatpush1.msra.mxu0 0.0
        %1016 = vmatprep.subr.mxu0 0.0
        %1017 = vmatpush1.msra.mxu0 0.0
        %1018 = vmatprep.subr.mxu0 0.0
        %1019 = vmatpush1.msra.mxu0 0.0
        %1020 = vmatprep.subr.mxu0 0.0
        %1021 = vmatpush1.msra.mxu0 0.0
        %1022 = vmatprep.mubr.f32.mxu0 0.0
        %1023 = vmatmul.mubr.f32.gmra.mrb[0].mxu0 %v911
        %v1024 = vpop.f32.mrb[0].mxu0
        %v1025 = vadd.f32 %v562, %v1024
        %v1026 = vpop.f32.mrb[0].mxu0
        %1027 = vmatprep.mubr.f32.mxu0 0.0
        %1028 = vmatmul.mubr.f32.gmra.mrb[0].mxu0 %v914
        %v1029 = vpop.f32.mrb[0].mxu0
        %v1030 = vadd.f32 %v562, %v1029
        %v1031 = vpop.f32.mrb[0].mxu0
        %1032 = vmatprep.mubr.f32.mxu0 0.0
        %1033 = vmatmul.mubr.f32.gmra.mrb[0].mxu0 %v917
        %v1034 = vpop.f32.mrb[0].mxu0
        %v1035 = vadd.f32 %v562, %v1034
        %v1036 = vpop.f32.mrb[0].mxu0
        %1037 = vmatprep.mubr.f32.mxu0 0.0
        %1038 = vmatmul.mubr.f32.gmra.mrb[0].mxu0 %v920
        %v1039 = vpop.f32.mrb[0].mxu0
        %v1040 = vadd.f32 %v562, %v1039
        %v1041 = vpop.f32.mrb[0].mxu0
        %1042 = vmatprep.mubr.f32.mxu0 0.0
        %1043 = vmatmul.mubr.f32.gmra.mrb[0].mxu0 %v923
        %v1044 = vpop.f32.mrb[0].mxu0
        %v1045 = vadd.f32 %v562, %v1044
        %v1046 = vpop.f32.mrb[0].mxu0
        %1047 = vmatprep.mubr.f32.mxu0 0.0
        %1048 = vmatmul.mubr.f32.gmra.mrb[0].mxu0 %v926
        %v1049 = vpop.f32.mrb[0].mxu0
        %v1050 = vadd.f32 %v562, %v1049
        %v1051 = vpop.f32.mrb[0].mxu0
        %1052 = vmatprep.mubr.f32.mxu0 0.0
        %1053 = vmatmul.mubr.f32.gmra.mrb[0].mxu0 %v929
        %v1054 = vpop.f32.mrb[0].mxu0
        %v1055 = vadd.f32 %v562, %v1054
        %v1056 = vpop.f32.mrb[0].mxu0
        %1057 = vmatprep.mubr.f32.mxu0 0.0
        %1058 = vmatmul.mubr.f32.gmra.mrb[0].mxu0 %v932
        %v1059 = vpop.f32.mrb[0].mxu0
        %v1060 = vadd.f32 %v562, %v1059
        %v1061 = vpop.f32.mrb[0].mxu0
        %1062 = vmatprep.mubr.f32.mxu0 0.0
        %1063 = vmatmul.mubr.f32.gmra.mrb[0].mxu0 %v935
        %v1064 = vpop.f32.mrb[0].mxu0
        %v1065 = vadd.f32 %v562, %v1064
        %v1066 = vpop.f32.mrb[0].mxu0
        %1067 = vmatprep.mubr.f32.mxu0 0.0
        %1068 = vmatmul.mubr.f32.gmra.mrb[0].mxu0 %v938
        %v1069 = vpop.f32.mrb[0].mxu0
        %v1070 = vadd.f32 %v562, %v1069
        %v1071 = vpop.f32.mrb[0].mxu0
        %1072 = vmatprep.mubr.f32.mxu0 0.0
        %1073 = vmatmul.mubr.f32.gmra.mrb[0].mxu0 %v941
        %v1074 = vpop.f32.mrb[0].mxu0
        %v1075 = vadd.f32 %v562, %v1074
        %v1076 = vpop.f32.mrb[0].mxu0
        %1077 = vmatprep.mubr.f32.mxu0 0.0
        %1078 = vmatmul.mubr.f32.gmra.mrb[0].mxu0 %v944
        %v1079 = vpop.f32.mrb[0].mxu0
        %v1080 = vadd.f32 %v562, %v1079
        %v1081 = vpop.f32.mrb[0].mxu0
        %1082 = vmatprep.mubr.f32.mxu0 0.0
        %1083 = vmatmul.mubr.f32.gmra.mrb[0].mxu0 %v947
        %v1084 = vpop.f32.mrb[0].mxu0
        %v1085 = vadd.f32 %v562, %v1084
        %v1086 = vpop.f32.mrb[0].mxu0
        %1087 = vmatprep.mubr.f32.mxu0 0.0
        %1088 = vmatmul.mubr.f32.gmra.mrb[0].mxu0 %v950
        %v1089 = vpop.f32.mrb[0].mxu0
        %v1090 = vadd.f32 %v562, %v1089
        %v1091 = vpop.f32.mrb[0].mxu0
        %1092 = vmatprep.mubr.f32.mxu0 0.0
        %1093 = vmatmul.mubr.f32.gmra.mrb[0].mxu0 %v953
        %v1094 = vpop.f32.mrb[0].mxu0
        %v1095 = vadd.f32 %v562, %v1094
        %v1096 = vpop.f32.mrb[0].mxu0
        %1097 = vmatprep.mubr.f32.mxu0 0.0
        %1098 = vmatmul.mubr.f32.gmra.mrb[0].mxu0 %v956
        %v1099 = vpop.f32.mrb[0].mxu0
        %v1100 = vadd.f32 %v562, %v1099
        %v1101 = vpop.f32.mrb[0].mxu0
        %1102 = vdwg.mxu0
        %v1103 = vmax.f32 %v1025, 0.0
        %v1104 = vmax.f32 %v1030, 0.0
        %v1105 = vmax.f32 %v1035, 0.0
        %v1106 = vmax.f32 %v1040, 0.0
        %v1107 = vmax.f32 %v1045, 0.0
        %v1108 = vmax.f32 %v1050, 0.0
        %v1109 = vmax.f32 %v1055, 0.0
        %v1110 = vmax.f32 %v1060, 0.0
        %v1111 = vmax.f32 %v1065, 0.0
        %v1112 = vmax.f32 %v1070, 0.0
        %v1113 = vmax.f32 %v1075, 0.0
        %v1114 = vmax.f32 %v1080, 0.0
        %v1115 = vmax.f32 %v1085, 0.0
        %v1116 = vmax.f32 %v1090, 0.0
        %v1117 = vmax.f32 %v1095, 0.0
        %v1118 = vmax.f32 %v1100, 0.0
        %v1120 = vsel %vm420, %v693, 0
        %v1123 = vsel %vm420, %v1103, 0
        %v1126 = vsel %vm420, %v1104, 0
        %1128 = vmatprep.subr.mxu0 0.0
        %1129 = vmatpush1.xpose.msra.mxu0 %v1123
        %1130 = vmatprep.subr.mxu0 0.0
        %1131 = vmatpush1.xpose.msra.mxu0 %v1126
        %1132 = vmatprep.subr.mxu0 0.0
        %1133 = vmatpush1.xpose.msra.mxu0 0.0
        %1134 = vmatprep.subr.mxu0 0.0
        %1135 = vmatpush1.xpose.msra.mxu0 0.0
        %1136 = vmatprep.subr.mxu0 0.0
        %1137 = vmatpush1.xpose.msra.mxu0 0.0
        %1138 = vmatprep.subr.mxu0 0.0
        %1139 = vmatpush1.xpose.msra.mxu0 0.0
        %1140 = vmatprep.subr.mxu0 0.0
        %1141 = vmatpush1.xpose.msra.mxu0 0.0
        %1142 = vmatprep.subr.mxu0 0.0
        %1143 = vmatpush1.xpose.msra.mxu0 0.0
        %1144 = vmatprep.subr.mxu0 0.0
        %1145 = vmatpush1.xpose.msra.mxu0 0.0
        %1146 = vmatprep.subr.mxu0 0.0
        %1147 = vmatpush1.xpose.msra.mxu0 0.0
        %1148 = vmatprep.subr.mxu0 0.0
        %1149 = vmatpush1.xpose.msra.mxu0 0.0
        %1150 = vmatprep.subr.mxu0 0.0
        %1151 = vmatpush1.xpose.msra.mxu0 0.0
        %1152 = vmatprep.subr.mxu0 0.0
        %1153 = vmatpush1.xpose.msra.mxu0 0.0
        %1154 = vmatprep.subr.mxu0 0.0
        %1155 = vmatpush1.xpose.msra.mxu0 0.0
        %1156 = vmatprep.subr.mxu0 0.0
        %1157 = vmatpush1.xpose.msra.mxu0 0.0
        %1158 = vmatprep.subr.mxu0 0.0
        %1159 = vmatpush1.xpose.msra.mxu0 0.0
        %1160 = vmatprep.subr.mxu0 0.0
        %1161 = vmatpush1.xpose.msra.mxu0 0.0
        %1162 = vmatprep.subr.mxu0 0.0
        %1163 = vmatpush1.xpose.msra.mxu0 0.0
        %1164 = vmatprep.subr.mxu0 0.0
        %1165 = vmatpush1.xpose.msra.mxu0 0.0
        %1166 = vmatprep.subr.mxu0 0.0
        %1167 = vmatpush1.xpose.msra.mxu0 0.0
        %1168 = vmatprep.subr.mxu0 0.0
        %1169 = vmatpush1.xpose.msra.mxu0 0.0
        %1170 = vmatprep.subr.mxu0 0.0
        %1171 = vmatpush1.xpose.msra.mxu0 0.0
        %1172 = vmatprep.subr.mxu0 0.0
        %1173 = vmatpush1.xpose.msra.mxu0 0.0
        %1174 = vmatprep.subr.mxu0 0.0
        %1175 = vmatpush1.xpose.msra.mxu0 0.0
        %1176 = vmatprep.subr.mxu0 0.0
        %1177 = vmatpush1.xpose.msra.mxu0 0.0
        %1178 = vmatprep.subr.mxu0 0.0
        %1179 = vmatpush1.xpose.msra.mxu0 0.0
        %1180 = vmatprep.subr.mxu0 0.0
        %1181 = vmatpush1.xpose.msra.mxu0 0.0
        %1182 = vmatprep.subr.mxu0 0.0
        %1183 = vmatpush1.xpose.msra.mxu0 0.0
        %1184 = vmatprep.subr.mxu0 0.0
        %1185 = vmatpush1.xpose.msra.mxu0 0.0
        %1186 = vmatprep.subr.mxu0 0.0
        %1187 = vmatpush1.xpose.msra.mxu0 0.0
        %1188 = vmatprep.subr.mxu0 0.0
        %1189 = vmatpush1.xpose.msra.mxu0 0.0
        %1190 = vmatprep.subr.mxu0 0.0
        %1191 = vmatpush1.xpose.msra.mxu0 0.0
        %1192 = vmatprep.mubr.f32.mxu0 0.0
        %1193 = vmatmul.mubr.f32.gmra.mrb[0].mxu0 %v1120
        %v1194 = vpop.f32.mrb[0].mxu0
        %v1195 = vadd.f32 0.0, %v1194
        %v1196 = vpop.f32.mrb[0].mxu0
        %1197 = vdwg.mxu0
        %v1199 = vsel %vm420, %v694, 0
        %v1202 = vsel %vm420, %v1105, 0
        %v1205 = vsel %vm420, %v1106, 0
        %1207 = vmatprep.subr.mxu0 0.0
        %1208 = vmatpush1.xpose.msra.mxu0 %v1202
        %1209 = vmatprep.subr.mxu0 0.0
        %1210 = vmatpush1.xpose.msra.mxu0 %v1205
        %1211 = vmatprep.subr.mxu0 0.0
        %1212 = vmatpush1.xpose.msra.mxu0 0.0
        %1213 = vmatprep.subr.mxu0 0.0
        %1214 = vmatpush1.xpose.msra.mxu0 0.0
        %1215 = vmatprep.subr.mxu0 0.0
        %1216 = vmatpush1.xpose.msra.mxu0 0.0
        %1217 = vmatprep.subr.mxu0 0.0
        %1218 = vmatpush1.xpose.msra.mxu0 0.0
        %1219 = vmatprep.subr.mxu0 0.0
        %1220 = vmatpush1.xpose.msra.mxu0 0.0
        %1221 = vmatprep.subr.mxu0 0.0
        %1222 = vmatpush1.xpose.msra.mxu0 0.0
        %1223 = vmatprep.subr.mxu0 0.0
        %1224 = vmatpush1.xpose.msra.mxu0 0.0
        %1225 = vmatprep.subr.mxu0 0.0
        %1226 = vmatpush1.xpose.msra.mxu0 0.0
        %1227 = vmatprep.subr.mxu0 0.0
        %1228 = vmatpush1.xpose.msra.mxu0 0.0
        %1229 = vmatprep.subr.mxu0 0.0
        %1230 = vmatpush1.xpose.msra.mxu0 0.0
        %1231 = vmatprep.subr.mxu0 0.0
        %1232 = vmatpush1.xpose.msra.mxu0 0.0
        %1233 = vmatprep.subr.mxu0 0.0
        %1234 = vmatpush1.xpose.msra.mxu0 0.0
        %1235 = vmatprep.subr.mxu0 0.0
        %1236 = vmatpush1.xpose.msra.mxu0 0.0
        %1237 = vmatprep.subr.mxu0 0.0
        %1238 = vmatpush1.xpose.msra.mxu0 0.0
        %1239 = vmatprep.subr.mxu0 0.0
        %1240 = vmatpush1.xpose.msra.mxu0 0.0
        %1241 = vmatprep.subr.mxu0 0.0
        %1242 = vmatpush1.xpose.msra.mxu0 0.0
        %1243 = vmatprep.subr.mxu0 0.0
        %1244 = vmatpush1.xpose.msra.mxu0 0.0
        %1245 = vmatprep.subr.mxu0 0.0
        %1246 = vmatpush1.xpose.msra.mxu0 0.0
        %1247 = vmatprep.subr.mxu0 0.0
        %1248 = vmatpush1.xpose.msra.mxu0 0.0
        %1249 = vmatprep.subr.mxu0 0.0
        %1250 = vmatpush1.xpose.msra.mxu0 0.0
        %1251 = vmatprep.subr.mxu0 0.0
        %1252 = vmatpush1.xpose.msra.mxu0 0.0
        %1253 = vmatprep.subr.mxu0 0.0
        %1254 = vmatpush1.xpose.msra.mxu0 0.0
        %1255 = vmatprep.subr.mxu0 0.0
        %1256 = vmatpush1.xpose.msra.mxu0 0.0
        %1257 = vmatprep.subr.mxu0 0.0
        %1258 = vmatpush1.xpose.msra.mxu0 0.0
        %1259 = vmatprep.subr.mxu0 0.0
        %1260 = vmatpush1.xpose.msra.mxu0 0.0
        %1261 = vmatprep.subr.mxu0 0.0
        %1262 = vmatpush1.xpose.msra.mxu0 0.0
        %1263 = vmatprep.subr.mxu0 0.0
        %1264 = vmatpush1.xpose.msra.mxu0 0.0
        %1265 = vmatprep.subr.mxu0 0.0
        %1266 = vmatpush1.xpose.msra.mxu0 0.0
        %1267 = vmatprep.subr.mxu0 0.0
        %1268 = vmatpush1.xpose.msra.mxu0 0.0
        %1269 = vmatprep.subr.mxu0 0.0
        %1270 = vmatpush1.xpose.msra.mxu0 0.0
        %1271 = vmatprep.mubr.f32.mxu0 0.0
        %1272 = vmatmul.mubr.f32.gmra.mrb[0].mxu0 %v1199
        %v1273 = vpop.f32.mrb[0].mxu0
        %v1274 = vadd.f32 0.0, %v1273
        %v1275 = vpop.f32.mrb[0].mxu0
        %1276 = vdwg.mxu0
        %v1278 = vsel %vm420, %v695, 0
        %v1281 = vsel %vm420, %v1107, 0
        %v1284 = vsel %vm420, %v1108, 0
        %1286 = vmatprep.subr.mxu0 0.0
        %1287 = vmatpush1.xpose.msra.mxu0 %v1281
        %1288 = vmatprep.subr.mxu0 0.0
        %1289 = vmatpush1.xpose.msra.mxu0 %v1284
        %1290 = vmatprep.subr.mxu0 0.0
        %1291 = vmatpush1.xpose.msra.mxu0 0.0
        %1292 = vmatprep.subr.mxu0 0.0
        %1293 = vmatpush1.xpose.msra.mxu0 0.0
        %1294 = vmatprep.subr.mxu0 0.0
        %1295 = vmatpush1.xpose.msra.mxu0 0.0
        %1296 = vmatprep.subr.mxu0 0.0
        %1297 = vmatpush1.xpose.msra.mxu0 0.0
        %1298 = vmatprep.subr.mxu0 0.0
        %1299 = vmatpush1.xpose.msra.mxu0 0.0
        %1300 = vmatprep.subr.mxu0 0.0
        %1301 = vmatpush1.xpose.msra.mxu0 0.0
        %1302 = vmatprep.subr.mxu0 0.0
        %1303 = vmatpush1.xpose.msra.mxu0 0.0
        %1304 = vmatprep.subr.mxu0 0.0
        %1305 = vmatpush1.xpose.msra.mxu0 0.0
        %1306 = vmatprep.subr.mxu0 0.0
        %1307 = vmatpush1.xpose.msra.mxu0 0.0
        %1308 = vmatprep.subr.mxu0 0.0
        %1309 = vmatpush1.xpose.msra.mxu0 0.0
        %1310 = vmatprep.subr.mxu0 0.0
        %1311 = vmatpush1.xpose.msra.mxu0 0.0
        %1312 = vmatprep.subr.mxu0 0.0
        %1313 = vmatpush1.xpose.msra.mxu0 0.0
        %1314 = vmatprep.subr.mxu0 0.0
        %1315 = vmatpush1.xpose.msra.mxu0 0.0
        %1316 = vmatprep.subr.mxu0 0.0
        %1317 = vmatpush1.xpose.msra.mxu0 0.0
        %1318 = vmatprep.subr.mxu0 0.0
        %1319 = vmatpush1.xpose.msra.mxu0 0.0
        %1320 = vmatprep.subr.mxu0 0.0
        %1321 = vmatpush1.xpose.msra.mxu0 0.0
        %1322 = vmatprep.subr.mxu0 0.0
        %1323 = vmatpush1.xpose.msra.mxu0 0.0
        %1324 = vmatprep.subr.mxu0 0.0
        %1325 = vmatpush1.xpose.msra.mxu0 0.0
        %1326 = vmatprep.subr.mxu0 0.0
        %1327 = vmatpush1.xpose.msra.mxu0 0.0
        %1328 = vmatprep.subr.mxu0 0.0
        %1329 = vmatpush1.xpose.msra.mxu0 0.0
        %1330 = vmatprep.subr.mxu0 0.0
        %1331 = vmatpush1.xpose.msra.mxu0 0.0
        %1332 = vmatprep.subr.mxu0 0.0
        %1333 = vmatpush1.xpose.msra.mxu0 0.0
        %1334 = vmatprep.subr.mxu0 0.0
        %1335 = vmatpush1.xpose.msra.mxu0 0.0
        %1336 = vmatprep.subr.mxu0 0.0
        %1337 = vmatpush1.xpose.msra.mxu0 0.0
        %1338 = vmatprep.subr.mxu0 0.0
        %1339 = vmatpush1.xpose.msra.mxu0 0.0
        %1340 = vmatprep.subr.mxu0 0.0
        %1341 = vmatpush1.xpose.msra.mxu0 0.0
        %1342 = vmatprep.subr.mxu0 0.0
        %1343 = vmatpush1.xpose.msra.mxu0 0.0
        %1344 = vmatprep.subr.mxu0 0.0
        %1345 = vmatpush1.xpose.msra.mxu0 0.0
        %1346 = vmatprep.subr.mxu0 0.0
        %1347 = vmatpush1.xpose.msra.mxu0 0.0
        %1348 = vmatprep.subr.mxu0 0.0
        %1349 = vmatpush1.xpose.msra.mxu0 0.0
        %1350 = vmatprep.mubr.f32.mxu0 0.0
        %1351 = vmatmul.mubr.f32.gmra.mrb[0].mxu0 %v1278
        %v1352 = vpop.f32.mrb[0].mxu0
        %v1353 = vadd.f32 0.0, %v1352
        %v1354 = vpop.f32.mrb[0].mxu0
        %1355 = vdwg.mxu0
        %v1357 = vsel %vm420, %v696, 0
        %v1360 = vsel %vm420, %v1109, 0
        %v1363 = vsel %vm420, %v1110, 0
        %1365 = vmatprep.subr.mxu0 0.0
        %1366 = vmatpush1.xpose.msra.mxu0 %v1360
        %1367 = vmatprep.subr.mxu0 0.0
        %1368 = vmatpush1.xpose.msra.mxu0 %v1363
        %1369 = vmatprep.subr.mxu0 0.0
        %1370 = vmatpush1.xpose.msra.mxu0 0.0
        %1371 = vmatprep.subr.mxu0 0.0
        %1372 = vmatpush1.xpose.msra.mxu0 0.0
        %1373 = vmatprep.subr.mxu0 0.0
        %1374 = vmatpush1.xpose.msra.mxu0 0.0
        %1375 = vmatprep.subr.mxu0 0.0
        %1376 = vmatpush1.xpose.msra.mxu0 0.0
        %1377 = vmatprep.subr.mxu0 0.0
        %1378 = vmatpush1.xpose.msra.mxu0 0.0
        %1379 = vmatprep.subr.mxu0 0.0
        %1380 = vmatpush1.xpose.msra.mxu0 0.0
        %1381 = vmatprep.subr.mxu0 0.0
        %1382 = vmatpush1.xpose.msra.mxu0 0.0
        %1383 = vmatprep.subr.mxu0 0.0
        %1384 = vmatpush1.xpose.msra.mxu0 0.0
        %1385 = vmatprep.subr.mxu0 0.0
        %1386 = vmatpush1.xpose.msra.mxu0 0.0
        %1387 = vmatprep.subr.mxu0 0.0
        %1388 = vmatpush1.xpose.msra.mxu0 0.0
        %1389 = vmatprep.subr.mxu0 0.0
        %1390 = vmatpush1.xpose.msra.mxu0 0.0
        %1391 = vmatprep.subr.mxu0 0.0
        %1392 = vmatpush1.xpose.msra.mxu0 0.0
        %1393 = vmatprep.subr.mxu0 0.0
        %1394 = vmatpush1.xpose.msra.mxu0 0.0
        %1395 = vmatprep.subr.mxu0 0.0
        %1396 = vmatpush1.xpose.msra.mxu0 0.0
        %1397 = vmatprep.subr.mxu0 0.0
        %1398 = vmatpush1.xpose.msra.mxu0 0.0
        %1399 = vmatprep.subr.mxu0 0.0
        %1400 = vmatpush1.xpose.msra.mxu0 0.0
        %1401 = vmatprep.subr.mxu0 0.0
        %1402 = vmatpush1.xpose.msra.mxu0 0.0
        %1403 = vmatprep.subr.mxu0 0.0
        %1404 = vmatpush1.xpose.msra.mxu0 0.0
        %1405 = vmatprep.subr.mxu0 0.0
        %1406 = vmatpush1.xpose.msra.mxu0 0.0
        %1407 = vmatprep.subr.mxu0 0.0
        %1408 = vmatpush1.xpose.msra.mxu0 0.0
        %1409 = vmatprep.subr.mxu0 0.0
        %1410 = vmatpush1.xpose.msra.mxu0 0.0
        %1411 = vmatprep.subr.mxu0 0.0
        %1412 = vmatpush1.xpose.msra.mxu0 0.0
        %1413 = vmatprep.subr.mxu0 0.0
        %1414 = vmatpush1.xpose.msra.mxu0 0.0
        %1415 = vmatprep.subr.mxu0 0.0
        %1416 = vmatpush1.xpose.msra.mxu0 0.0
        %1417 = vmatprep.subr.mxu0 0.0
        %1418 = vmatpush1.xpose.msra.mxu0 0.0
        %1419 = vmatprep.subr.mxu0 0.0
        %1420 = vmatpush1.xpose.msra.mxu0 0.0
        %1421 = vmatprep.subr.mxu0 0.0
        %1422 = vmatpush1.xpose.msra.mxu0 0.0
        %1423 = vmatprep.subr.mxu0 0.0
        %1424 = vmatpush1.xpose.msra.mxu0 0.0
        %1425 = vmatprep.subr.mxu0 0.0
        %1426 = vmatpush1.xpose.msra.mxu0 0.0
        %1427 = vmatprep.subr.mxu0 0.0
        %1428 = vmatpush1.xpose.msra.mxu0 0.0
        %1429 = vmatprep.mubr.f32.mxu0 0.0
        %1430 = vmatmul.mubr.f32.gmra.mrb[0].mxu0 %v1357
        %v1431 = vpop.f32.mrb[0].mxu0
        %v1432 = vadd.f32 0.0, %v1431
        %v1433 = vpop.f32.mrb[0].mxu0
        %1434 = vdwg.mxu0
        %v1436 = vsel %vm420, %v697, 0
        %v1439 = vsel %vm420, %v1111, 0
        %v1442 = vsel %vm420, %v1112, 0
        %1444 = vmatprep.subr.mxu0 0.0
        %1445 = vmatpush1.xpose.msra.mxu0 %v1439
        %1446 = vmatprep.subr.mxu0 0.0
        %1447 = vmatpush1.xpose.msra.mxu0 %v1442
        %1448 = vmatprep.subr.mxu0 0.0
        %1449 = vmatpush1.xpose.msra.mxu0 0.0
        %1450 = vmatprep.subr.mxu0 0.0
        %1451 = vmatpush1.xpose.msra.mxu0 0.0
        %1452 = vmatprep.subr.mxu0 0.0
        %1453 = vmatpush1.xpose.msra.mxu0 0.0
        %1454 = vmatprep.subr.mxu0 0.0
        %1455 = vmatpush1.xpose.msra.mxu0 0.0
        %1456 = vmatprep.subr.mxu0 0.0
        %1457 = vmatpush1.xpose.msra.mxu0 0.0
        %1458 = vmatprep.subr.mxu0 0.0
        %1459 = vmatpush1.xpose.msra.mxu0 0.0
        %1460 = vmatprep.subr.mxu0 0.0
        %1461 = vmatpush1.xpose.msra.mxu0 0.0
        %1462 = vmatprep.subr.mxu0 0.0
        %1463 = vmatpush1.xpose.msra.mxu0 0.0
        %1464 = vmatprep.subr.mxu0 0.0
        %1465 = vmatpush1.xpose.msra.mxu0 0.0
        %1466 = vmatprep.subr.mxu0 0.0
        %1467 = vmatpush1.xpose.msra.mxu0 0.0
        %1468 = vmatprep.subr.mxu0 0.0
        %1469 = vmatpush1.xpose.msra.mxu0 0.0
        %1470 = vmatprep.subr.mxu0 0.0
        %1471 = vmatpush1.xpose.msra.mxu0 0.0
        %1472 = vmatprep.subr.mxu0 0.0
        %1473 = vmatpush1.xpose.msra.mxu0 0.0
        %1474 = vmatprep.subr.mxu0 0.0
        %1475 = vmatpush1.xpose.msra.mxu0 0.0
        %1476 = vmatprep.subr.mxu0 0.0
        %1477 = vmatpush1.xpose.msra.mxu0 0.0
        %1478 = vmatprep.subr.mxu0 0.0
        %1479 = vmatpush1.xpose.msra.mxu0 0.0
        %1480 = vmatprep.subr.mxu0 0.0
        %1481 = vmatpush1.xpose.msra.mxu0 0.0
        %1482 = vmatprep.subr.mxu0 0.0
        %1483 = vmatpush1.xpose.msra.mxu0 0.0
        %1484 = vmatprep.subr.mxu0 0.0
        %1485 = vmatpush1.xpose.msra.mxu0 0.0
        %1486 = vmatprep.subr.mxu0 0.0
        %1487 = vmatpush1.xpose.msra.mxu0 0.0
        %1488 = vmatprep.subr.mxu0 0.0
        %1489 = vmatpush1.xpose.msra.mxu0 0.0
        %1490 = vmatprep.subr.mxu0 0.0
        %1491 = vmatpush1.xpose.msra.mxu0 0.0
        %1492 = vmatprep.subr.mxu0 0.0
        %1493 = vmatpush1.xpose.msra.mxu0 0.0
        %1494 = vmatprep.subr.mxu0 0.0
        %1495 = vmatpush1.xpose.msra.mxu0 0.0
        %1496 = vmatprep.subr.mxu0 0.0
        %1497 = vmatpush1.xpose.msra.mxu0 0.0
        %1498 = vmatprep.subr.mxu0 0.0
        %1499 = vmatpush1.xpose.msra.mxu0 0.0
        %1500 = vmatprep.subr.mxu0 0.0
        %1501 = vmatpush1.xpose.msra.mxu0 0.0
        %1502 = vmatprep.subr.mxu0 0.0
        %1503 = vmatpush1.xpose.msra.mxu0 0.0
        %1504 = vmatprep.subr.mxu0 0.0
        %1505 = vmatpush1.xpose.msra.mxu0 0.0
        %1506 = vmatprep.subr.mxu0 0.0
        %1507 = vmatpush1.xpose.msra.mxu0 0.0
        %1508 = vmatprep.mubr.f32.mxu0 0.0
        %1509 = vmatmul.mubr.f32.gmra.mrb[0].mxu0 %v1436
        %v1510 = vpop.f32.mrb[0].mxu0
        %v1511 = vadd.f32 0.0, %v1510
        %v1512 = vpop.f32.mrb[0].mxu0
        %1513 = vdwg.mxu0
        %v1515 = vsel %vm420, %v698, 0
        %v1518 = vsel %vm420, %v1113, 0
        %v1521 = vsel %vm420, %v1114, 0
        %1523 = vmatprep.subr.mxu0 0.0
        %1524 = vmatpush1.xpose.msra.mxu0 %v1518
        %1525 = vmatprep.subr.mxu0 0.0
        %1526 = vmatpush1.xpose.msra.mxu0 %v1521
        %1527 = vmatprep.subr.mxu0 0.0
        %1528 = vmatpush1.xpose.msra.mxu0 0.0
        %1529 = vmatprep.subr.mxu0 0.0
        %1530 = vmatpush1.xpose.msra.mxu0 0.0
        %1531 = vmatprep.subr.mxu0 0.0
        %1532 = vmatpush1.xpose.msra.mxu0 0.0
        %1533 = vmatprep.subr.mxu0 0.0
        %1534 = vmatpush1.xpose.msra.mxu0 0.0
        %1535 = vmatprep.subr.mxu0 0.0
        %1536 = vmatpush1.xpose.msra.mxu0 0.0
        %1537 = vmatprep.subr.mxu0 0.0
        %1538 = vmatpush1.xpose.msra.mxu0 0.0
        %1539 = vmatprep.subr.mxu0 0.0
        %1540 = vmatpush1.xpose.msra.mxu0 0.0
        %1541 = vmatprep.subr.mxu0 0.0
        %1542 = vmatpush1.xpose.msra.mxu0 0.0
        %1543 = vmatprep.subr.mxu0 0.0
        %1544 = vmatpush1.xpose.msra.mxu0 0.0
        %1545 = vmatprep.subr.mxu0 0.0
        %1546 = vmatpush1.xpose.msra.mxu0 0.0
        %1547 = vmatprep.subr.mxu0 0.0
        %1548 = vmatpush1.xpose.msra.mxu0 0.0
        %1549 = vmatprep.subr.mxu0 0.0
        %1550 = vmatpush1.xpose.msra.mxu0 0.0
        %1551 = vmatprep.subr.mxu0 0.0
        %1552 = vmatpush1.xpose.msra.mxu0 0.0
        %1553 = vmatprep.subr.mxu0 0.0
        %1554 = vmatpush1.xpose.msra.mxu0 0.0
        %1555 = vmatprep.subr.mxu0 0.0
        %1556 = vmatpush1.xpose.msra.mxu0 0.0
        %1557 = vmatprep.subr.mxu0 0.0
        %1558 = vmatpush1.xpose.msra.mxu0 0.0
        %1559 = vmatprep.subr.mxu0 0.0
        %1560 = vmatpush1.xpose.msra.mxu0 0.0
        %1561 = vmatprep.subr.mxu0 0.0
        %1562 = vmatpush1.xpose.msra.mxu0 0.0
        %1563 = vmatprep.subr.mxu0 0.0
        %1564 = vmatpush1.xpose.msra.mxu0 0.0
        %1565 = vmatprep.subr.mxu0 0.0
        %1566 = vmatpush1.xpose.msra.mxu0 0.0
        %1567 = vmatprep.subr.mxu0 0.0
        %1568 = vmatpush1.xpose.msra.mxu0 0.0
        %1569 = vmatprep.subr.mxu0 0.0
        %1570 = vmatpush1.xpose.msra.mxu0 0.0
        %1571 = vmatprep.subr.mxu0 0.0
        %1572 = vmatpush1.xpose.msra.mxu0 0.0
        %1573 = vmatprep.subr.mxu0 0.0
        %1574 = vmatpush1.xpose.msra.mxu0 0.0
        %1575 = vmatprep.subr.mxu0 0.0
        %1576 = vmatpush1.xpose.msra.mxu0 0.0
        %1577 = vmatprep.subr.mxu0 0.0
        %1578 = vmatpush1.xpose.msra.mxu0 0.0
        %1579 = vmatprep.subr.mxu0 0.0
        %1580 = vmatpush1.xpose.msra.mxu0 0.0
        %1581 = vmatprep.subr.mxu0 0.0
        %1582 = vmatpush1.xpose.msra.mxu0 0.0
        %1583 = vmatprep.subr.mxu0 0.0
        %1584 = vmatpush1.xpose.msra.mxu0 0.0
        %1585 = vmatprep.subr.mxu0 0.0
        %1586 = vmatpush1.xpose.msra.mxu0 0.0
        %1587 = vmatprep.mubr.f32.mxu0 0.0
        %1588 = vmatmul.mubr.f32.gmra.mrb[0].mxu0 %v1515
        %v1589 = vpop.f32.mrb[0].mxu0
        %v1590 = vadd.f32 0.0, %v1589
        %v1591 = vpop.f32.mrb[0].mxu0
        %1592 = vdwg.mxu0
        %v1594 = vsel %vm420, %v699, 0
        %v1597 = vsel %vm420, %v1115, 0
        %v1600 = vsel %vm420, %v1116, 0
        %1602 = vmatprep.subr.mxu0 0.0
        %1603 = vmatpush1.xpose.msra.mxu0 %v1597
        %1604 = vmatprep.subr.mxu0 0.0
        %1605 = vmatpush1.xpose.msra.mxu0 %v1600
        %1606 = vmatprep.subr.mxu0 0.0
        %1607 = vmatpush1.xpose.msra.mxu0 0.0
        %1608 = vmatprep.subr.mxu0 0.0
        %1609 = vmatpush1.xpose.msra.mxu0 0.0
        %1610 = vmatprep.subr.mxu0 0.0
        %1611 = vmatpush1.xpose.msra.mxu0 0.0
        %1612 = vmatprep.subr.mxu0 0.0
        %1613 = vmatpush1.xpose.msra.mxu0 0.0
        %1614 = vmatprep.subr.mxu0 0.0
        %1615 = vmatpush1.xpose.msra.mxu0 0.0
        %1616 = vmatprep.subr.mxu0 0.0
        %1617 = vmatpush1.xpose.msra.mxu0 0.0
        %1618 = vmatprep.subr.mxu0 0.0
        %1619 = vmatpush1.xpose.msra.mxu0 0.0
        %1620 = vmatprep.subr.mxu0 0.0
        %1621 = vmatpush1.xpose.msra.mxu0 0.0
        %1622 = vmatprep.subr.mxu0 0.0
        %1623 = vmatpush1.xpose.msra.mxu0 0.0
        %1624 = vmatprep.subr.mxu0 0.0
        %1625 = vmatpush1.xpose.msra.mxu0 0.0
        %1626 = vmatprep.subr.mxu0 0.0
        %1627 = vmatpush1.xpose.msra.mxu0 0.0
        %1628 = vmatprep.subr.mxu0 0.0
        %1629 = vmatpush1.xpose.msra.mxu0 0.0
        %1630 = vmatprep.subr.mxu0 0.0
        %1631 = vmatpush1.xpose.msra.mxu0 0.0
        %1632 = vmatprep.subr.mxu0 0.0
        %1633 = vmatpush1.xpose.msra.mxu0 0.0
        %1634 = vmatprep.subr.mxu0 0.0
        %1635 = vmatpush1.xpose.msra.mxu0 0.0
        %1636 = vmatprep.subr.mxu0 0.0
        %1637 = vmatpush1.xpose.msra.mxu0 0.0
        %1638 = vmatprep.subr.mxu0 0.0
        %1639 = vmatpush1.xpose.msra.mxu0 0.0
        %1640 = vmatprep.subr.mxu0 0.0
        %1641 = vmatpush1.xpose.msra.mxu0 0.0
        %1642 = vmatprep.subr.mxu0 0.0
        %1643 = vmatpush1.xpose.msra.mxu0 0.0
        %1644 = vmatprep.subr.mxu0 0.0
        %1645 = vmatpush1.xpose.msra.mxu0 0.0
        %1646 = vmatprep.subr.mxu0 0.0
        %1647 = vmatpush1.xpose.msra.mxu0 0.0
        %1648 = vmatprep.subr.mxu0 0.0
        %1649 = vmatpush1.xpose.msra.mxu0 0.0
        %1650 = vmatprep.subr.mxu0 0.0
        %1651 = vmatpush1.xpose.msra.mxu0 0.0
        %1652 = vmatprep.subr.mxu0 0.0
        %1653 = vmatpush1.xpose.msra.mxu0 0.0
        %1654 = vmatprep.subr.mxu0 0.0
        %1655 = vmatpush1.xpose.msra.mxu0 0.0
        %1656 = vmatprep.subr.mxu0 0.0
        %1657 = vmatpush1.xpose.msra.mxu0 0.0
        %1658 = vmatprep.subr.mxu0 0.0
        %1659 = vmatpush1.xpose.msra.mxu0 0.0
        %1660 = vmatprep.subr.mxu0 0.0
        %1661 = vmatpush1.xpose.msra.mxu0 0.0
        %1662 = vmatprep.subr.mxu0 0.0
        %1663 = vmatpush1.xpose.msra.mxu0 0.0
        %1664 = vmatprep.subr.mxu0 0.0
        %1665 = vmatpush1.xpose.msra.mxu0 0.0
        %1666 = vmatprep.mubr.f32.mxu0 0.0
        %1667 = vmatmul.mubr.f32.gmra.mrb[0].mxu0 %v1594
        %v1668 = vpop.f32.mrb[0].mxu0
        %v1669 = vadd.f32 0.0, %v1668
        %v1670 = vpop.f32.mrb[0].mxu0
        %1671 = vdwg.mxu0
        %v1673 = vsel %vm420, %v700, 0
        %v1676 = vsel %vm420, %v1117, 0
        %v1679 = vsel %vm420, %v1118, 0
        %1681 = vmatprep.subr.mxu0 0.0
        %1682 = vmatpush1.xpose.msra.mxu0 %v1676
        %1683 = vmatprep.subr.mxu0 0.0
        %1684 = vmatpush1.xpose.msra.mxu0 %v1679
        %1685 = vmatprep.subr.mxu0 0.0
        %1686 = vmatpush1.xpose.msra.mxu0 0.0
        %1687 = vmatprep.subr.mxu0 0.0
        %1688 = vmatpush1.xpose.msra.mxu0 0.0
        %1689 = vmatprep.subr.mxu0 0.0
        %1690 = vmatpush1.xpose.msra.mxu0 0.0
        %1691 = vmatprep.subr.mxu0 0.0
        %1692 = vmatpush1.xpose.msra.mxu0 0.0
        %1693 = vmatprep.subr.mxu0 0.0
        %1694 = vmatpush1.xpose.msra.mxu0 0.0
        %1695 = vmatprep.subr.mxu0 0.0
        %1696 = vmatpush1.xpose.msra.mxu0 0.0
        %1697 = vmatprep.subr.mxu0 0.0
        %1698 = vmatpush1.xpose.msra.mxu0 0.0
        %1699 = vmatprep.subr.mxu0 0.0
        %1700 = vmatpush1.xpose.msra.mxu0 0.0
        %1701 = vmatprep.subr.mxu0 0.0
        %1702 = vmatpush1.xpose.msra.mxu0 0.0
        %1703 = vmatprep.subr.mxu0 0.0
        %1704 = vmatpush1.xpose.msra.mxu0 0.0
        %1705 = vmatprep.subr.mxu0 0.0
        %1706 = vmatpush1.xpose.msra.mxu0 0.0
        %1707 = vmatprep.subr.mxu0 0.0
        %1708 = vmatpush1.xpose.msra.mxu0 0.0
        %1709 = vmatprep.subr.mxu0 0.0
        %1710 = vmatpush1.xpose.msra.mxu0 0.0
        %1711 = vmatprep.subr.mxu0 0.0
        %1712 = vmatpush1.xpose.msra.mxu0 0.0
        %1713 = vmatprep.subr.mxu0 0.0
        %1714 = vmatpush1.xpose.msra.mxu0 0.0
        %1715 = vmatprep.subr.mxu0 0.0
        %1716 = vmatpush1.xpose.msra.mxu0 0.0
        %1717 = vmatprep.subr.mxu0 0.0
        %1718 = vmatpush1.xpose.msra.mxu0 0.0
        %1719 = vmatprep.subr.mxu0 0.0
        %1720 = vmatpush1.xpose.msra.mxu0 0.0
        %1721 = vmatprep.subr.mxu0 0.0
        %1722 = vmatpush1.xpose.msra.mxu0 0.0
        %1723 = vmatprep.subr.mxu0 0.0
        %1724 = vmatpush1.xpose.msra.mxu0 0.0
        %1725 = vmatprep.subr.mxu0 0.0
        %1726 = vmatpush1.xpose.msra.mxu0 0.0
        %1727 = vmatprep.subr.mxu0 0.0
        %1728 = vmatpush1.xpose.msra.mxu0 0.0
        %1729 = vmatprep.subr.mxu0 0.0
        %1730 = vmatpush1.xpose.msra.mxu0 0.0
        %1731 = vmatprep.subr.mxu0 0.0
        %1732 = vmatpush1.xpose.msra.mxu0 0.0
        %1733 = vmatprep.subr.mxu0 0.0
        %1734 = vmatpush1.xpose.msra.mxu0 0.0
        %1735 = vmatprep.subr.mxu0 0.0
        %1736 = vmatpush1.xpose.msra.mxu0 0.0
        %1737 = vmatprep.subr.mxu0 0.0
        %1738 = vmatpush1.xpose.msra.mxu0 0.0
        %1739 = vmatprep.subr.mxu0 0.0
        %1740 = vmatpush1.xpose.msra.mxu0 0.0
        %1741 = vmatprep.subr.mxu0 0.0
        %1742 = vmatpush1.xpose.msra.mxu0 0.0
        %1743 = vmatprep.subr.mxu0 0.0
        %1744 = vmatpush1.xpose.msra.mxu0 0.0
        %1745 = vmatprep.mubr.f32.mxu0 0.0
        %1746 = vmatmul.mubr.f32.gmra.mrb[0].mxu0 %v1673
        %v1747 = vpop.f32.mrb[0].mxu0
        %v1748 = vadd.f32 0.0, %v1747
        %v1749 = vpop.f32.mrb[0].mxu0
        %1750 = vdwg.mxu0
        %vm1751 = vcmask 130048
        %v1752 = vsel %vm1751, %v1195, -inf
        %1753 = vmax.xlane.f32.xlu0 %v1752
        %v1754 = vpop.xlane.xlu0 %1753
        %v1755 = vsel %vm1751, %v1274, -inf
        %1756 = vmax.xlane.f32.xlu0 %v1755
        %v1757 = vpop.xlane.xlu0 %1756
        %v1758 = vsel %vm1751, %v1353, -inf
        %1759 = vmax.xlane.f32.xlu0 %v1758
        %v1760 = vpop.xlane.xlu0 %1759
        %v1761 = vsel %vm1751, %v1432, -inf
        %1762 = vmax.xlane.f32.xlu0 %v1761
        %v1763 = vpop.xlane.xlu0 %1762
        %v1764 = vsel %vm1751, %v1511, -inf
        %1765 = vmax.xlane.f32.xlu0 %v1764
        %v1766 = vpop.xlane.xlu0 %1765
        %v1767 = vsel %vm1751, %v1590, -inf
        %1768 = vmax.xlane.f32.xlu0 %v1767
        %v1769 = vpop.xlane.xlu0 %1768
        %v1770 = vsel %vm1751, %v1669, -inf
        %1771 = vmax.xlane.f32.xlu0 %v1770
        %v1772 = vpop.xlane.xlu0 %1771
        %v1773 = vsel %vm1751, %v1748, -inf
        %1774 = vmax.xlane.f32.xlu0 %v1773
        %v1775 = vpop.xlane.xlu0 %1774
        %v1776 = vsub.f32 %v1195, %v1754
        %v1777 = vsub.f32 %v1274, %v1757
        %v1778 = vsub.f32 %v1353, %v1760
        %v1779 = vsub.f32 %v1432, %v1763
        %v1780 = vsub.f32 %v1511, %v1766
        %v1781 = vsub.f32 %v1590, %v1769
        %v1782 = vsub.f32 %v1669, %v1772
        %v1783 = vsub.f32 %v1748, %v1775
        %v1784 = vmul.f32 %v1776, 1.442695
        %v1785 = vpow.pop %v1784
        %v1786 = vmul.f32 %v1777, 1.442695
        %v1787 = vpow.pop %v1786
        %v1788 = vmul.f32 %v1778, 1.442695
        %v1789 = vpow.pop %v1788
        %v1790 = vmul.f32 %v1779, 1.442695
        %v1791 = vpow.pop %v1790
        %v1792 = vmul.f32 %v1780, 1.442695
        %v1793 = vpow.pop %v1792
        %v1794 = vmul.f32 %v1781, 1.442695
        %v1795 = vpow.pop %v1794
        %v1796 = vmul.f32 %v1782, 1.442695
        %v1797 = vpow.pop %v1796
        %v1798 = vmul.f32 %v1783, 1.442695
        %v1799 = vpow.pop %v1798
        %v1800 = vsel %vm1751, %v1785, 0.0
        %1801 = vadd.xlane.f32.xlu0 %v1800
        %v1802 = vpop.xlane.xlu0 %1801
        %v1803 = vsel %vm1751, %v1787, 0.0
        %1804 = vadd.xlane.f32.xlu0 %v1803
        %v1805 = vpop.xlane.xlu0 %1804
        %v1806 = vsel %vm1751, %v1789, 0.0
        %1807 = vadd.xlane.f32.xlu0 %v1806
        %v1808 = vpop.xlane.xlu0 %1807
        %v1809 = vsel %vm1751, %v1791, 0.0
        %1810 = vadd.xlane.f32.xlu0 %v1809
        %v1811 = vpop.xlane.xlu0 %1810
        %v1812 = vsel %vm1751, %v1793, 0.0
        %1813 = vadd.xlane.f32.xlu0 %v1812
        %v1814 = vpop.xlane.xlu0 %1813
        %v1815 = vsel %vm1751, %v1795, 0.0
        %1816 = vadd.xlane.f32.xlu0 %v1815
        %v1817 = vpop.xlane.xlu0 %1816
        %v1818 = vsel %vm1751, %v1797, 0.0
        %1819 = vadd.xlane.f32.xlu0 %v1818
        %v1820 = vpop.xlane.xlu0 %1819
        %v1821 = vsel %vm1751, %v1799, 0.0
        %1822 = vadd.xlane.f32.xlu0 %v1821
        %v1823 = vpop.xlane.xlu0 %1822
        %v1824 = vrcp.pop %v1802
        %v1825 = vmul.f32 %v1785, %v1824
        %v1826 = vrcp.pop %v1805
        %v1827 = vmul.f32 %v1787, %v1826
        %v1828 = vrcp.pop %v1808
        %v1829 = vmul.f32 %v1789, %v1828
        %v1830 = vrcp.pop %v1811
        %v1831 = vmul.f32 %v1791, %v1830
        %v1832 = vrcp.pop %v1814
        %v1833 = vmul.f32 %v1793, %v1832
        %v1834 = vrcp.pop %v1817
        %v1835 = vmul.f32 %v1795, %v1834
        %v1836 = vrcp.pop %v1820
        %v1837 = vmul.f32 %v1797, %v1836
        %v1838 = vrcp.pop %v1823
        %v1839 = vmul.f32 %v1799, %v1838
        %v1841 = vsel %vm1751, %v1825, 0
        %1843 = vmatprep.subr.mxu0 0.0
        %1844 = vmatpush1.msra.mxu0 %v398
        %1845 = vmatprep.subr.mxu0 0.0
        %1846 = vmatpush1.msra.mxu0 %v399
        %1847 = vmatprep.subr.mxu0 0.0
        %1848 = vmatpush1.msra.mxu0 0.0
        %1849 = vmatprep.subr.mxu0 0.0
        %1850 = vmatpush1.msra.mxu0 0.0
        %1851 = vmatprep.subr.mxu0 0.0
        %1852 = vmatpush1.msra.mxu0 0.0
        %1853 = vmatprep.subr.mxu0 0.0
        %1854 = vmatpush1.msra.mxu0 0.0
        %1855 = vmatprep.subr.mxu0 0.0
        %1856 = vmatpush1.msra.mxu0 0.0
        %1857 = vmatprep.subr.mxu0 0.0
        %1858 = vmatpush1.msra.mxu0 0.0
        %1859 = vmatprep.subr.mxu0 0.0
        %1860 = vmatpush1.msra.mxu0 0.0
        %1861 = vmatprep.subr.mxu0 0.0
        %1862 = vmatpush1.msra.mxu0 0.0
        %1863 = vmatprep.subr.mxu0 0.0
        %1864 = vmatpush1.msra.mxu0 0.0
        %1865 = vmatprep.subr.mxu0 0.0
        %1866 = vmatpush1.msra.mxu0 0.0
        %1867 = vmatprep.subr.mxu0 0.0
        %1868 = vmatpush1.msra.mxu0 0.0
        %1869 = vmatprep.subr.mxu0 0.0
        %1870 = vmatpush1.msra.mxu0 0.0
        %1871 = vmatprep.subr.mxu0 0.0
        %1872 = vmatpush1.msra.mxu0 0.0
        %1873 = vmatprep.subr.mxu0 0.0
        %1874 = vmatpush1.msra.mxu0 0.0
        %1875 = vmatprep.subr.mxu0 0.0
        %1876 = vmatpush1.msra.mxu0 0.0
        %1877 = vmatprep.subr.mxu0 0.0
        %1878 = vmatpush1.msra.mxu0 0.0
        %1879 = vmatprep.subr.mxu0 0.0
        %1880 = vmatpush1.msra.mxu0 0.0
        %1881 = vmatprep.subr.mxu0 0.0
        %1882 = vmatpush1.msra.mxu0 0.0
        %1883 = vmatprep.subr.mxu0 0.0
        %1884 = vmatpush1.msra.mxu0 0.0
        %1885 = vmatprep.subr.mxu0 0.0
        %1886 = vmatpush1.msra.mxu0 0.0
        %1887 = vmatprep.subr.mxu0 0.0
        %1888 = vmatpush1.msra.mxu0 0.0
        %1889 = vmatprep.subr.mxu0 0.0
        %1890 = vmatpush1.msra.mxu0 0.0
        %1891 = vmatprep.subr.mxu0 0.0
        %1892 = vmatpush1.msra.mxu0 0.0
        %1893 = vmatprep.subr.mxu0 0.0
        %1894 = vmatpush1.msra.mxu0 0.0
        %1895 = vmatprep.subr.mxu0 0.0
        %1896 = vmatpush1.msra.mxu0 0.0
        %1897 = vmatprep.subr.mxu0 0.0
        %1898 = vmatpush1.msra.mxu0 0.0
        %1899 = vmatprep.subr.mxu0 0.0
        %1900 = vmatpush1.msra.mxu0 0.0
        %1901 = vmatprep.subr.mxu0 0.0
        %1902 = vmatpush1.msra.mxu0 0.0
        %1903 = vmatprep.subr.mxu0 0.0
        %1904 = vmatpush1.msra.mxu0 0.0
        %1905 = vmatprep.subr.mxu0 0.0
        %1906 = vmatpush1.msra.mxu0 0.0
        %1907 = vmatprep.mubr.f32.mxu0 0.0
        %1908 = vmatmul.mubr.f32.gmra.mrb[0].mxu0 %v1841
        %v1909 = vpop.f32.mrb[0].mxu0
        %v1910 = vadd.f32 0.0, %v1909
        %v1911 = vpop.f32.mrb[0].mxu0
        %1912 = vdwg.mxu0
        %v1914 = vsel %vm1751, %v1827, 0
        %1916 = vmatprep.subr.mxu0 0.0
        %1917 = vmatpush1.msra.mxu0 %v400
        %1918 = vmatprep.subr.mxu0 0.0
        %1919 = vmatpush1.msra.mxu0 %v401
        %1920 = vmatprep.subr.mxu0 0.0
        %1921 = vmatpush1.msra.mxu0 0.0
        %1922 = vmatprep.subr.mxu0 0.0
        %1923 = vmatpush1.msra.mxu0 0.0
        %1924 = vmatprep.subr.mxu0 0.0
        %1925 = vmatpush1.msra.mxu0 0.0
        %1926 = vmatprep.subr.mxu0 0.0
        %1927 = vmatpush1.msra.mxu0 0.0
        %1928 = vmatprep.subr.mxu0 0.0
        %1929 = vmatpush1.msra.mxu0 0.0
        %1930 = vmatprep.subr.mxu0 0.0
        %1931 = vmatpush1.msra.mxu0 0.0
        %1932 = vmatprep.subr.mxu0 0.0
        %1933 = vmatpush1.msra.mxu0 0.0
        %1934 = vmatprep.subr.mxu0 0.0
        %1935 = vmatpush1.msra.mxu0 0.0
        %1936 = vmatprep.subr.mxu0 0.0
        %1937 = vmatpush1.msra.mxu0 0.0
        %1938 = vmatprep.subr.mxu0 0.0
        %1939 = vmatpush1.msra.mxu0 0.0
        %1940 = vmatprep.subr.mxu0 0.0
        %1941 = vmatpush1.msra.mxu0 0.0
        %1942 = vmatprep.subr.mxu0 0.0
        %1943 = vmatpush1.msra.mxu0 0.0
        %1944 = vmatprep.subr.mxu0 0.0
        %1945 = vmatpush1.msra.mxu0 0.0
        %1946 = vmatprep.subr.mxu0 0.0
        %1947 = vmatpush1.msra.mxu0 0.0
        %1948 = vmatprep.subr.mxu0 0.0
        %1949 = vmatpush1.msra.mxu0 0.0
        %1950 = vmatprep.subr.mxu0 0.0
        %1951 = vmatpush1.msra.mxu0 0.0
        %1952 = vmatprep.subr.mxu0 0.0
        %1953 = vmatpush1.msra.mxu0 0.0
        %1954 = vmatprep.subr.mxu0 0.0
        %1955 = vmatpush1.msra.mxu0 0.0
        %1956 = vmatprep.subr.mxu0 0.0
        %1957 = vmatpush1.msra.mxu0 0.0
        %1958 = vmatprep.subr.mxu0 0.0
        %1959 = vmatpush1.msra.mxu0 0.0
        %1960 = vmatprep.subr.mxu0 0.0
        %1961 = vmatpush1.msra.mxu0 0.0
        %1962 = vmatprep.subr.mxu0 0.0
        %1963 = vmatpush1.msra.mxu0 0.0
        %1964 = vmatprep.subr.mxu0 0.0
        %1965 = vmatpush1.msra.mxu0 0.0
        %1966 = vmatprep.subr.mxu0 0.0
        %1967 = vmatpush1.msra.mxu0 0.0
        %1968 = vmatprep.subr.mxu0 0.0
        %1969 = vmatpush1.msra.mxu0 0.0
        %1970 = vmatprep.subr.mxu0 0.0
        %1971 = vmatpush1.msra.mxu0 0.0
        %1972 = vmatprep.subr.mxu0 0.0
        %1973 = vmatpush1.msra.mxu0 0.0
        %1974 = vmatprep.subr.mxu0 0.0
        %1975 = vmatpush1.msra.mxu0 0.0
        %1976 = vmatprep.subr.mxu0 0.0
        %1977 = vmatpush1.msra.mxu0 0.0
        %1978 = vmatprep.subr.mxu0 0.0
        %1979 = vmatpush1.msra.mxu0 0.0
        %1980 = vmatprep.mubr.f32.mxu0 0.0
        %1981 = vmatmul.mubr.f32.gmra.mrb[0].mxu0 %v1914
        %v1982 = vpop.f32.mrb[0].mxu0
        %v1983 = vadd.f32 0.0, %v1982
        %v1984 = vpop.f32.mrb[0].mxu0
        %1985 = vdwg.mxu0
        %v1987 = vsel %vm1751, %v1829, 0
        %1989 = vmatprep.subr.mxu0 0.0
        %1990 = vmatpush1.msra.mxu0 %v402
        %1991 = vmatprep.subr.mxu0 0.0
        %1992 = vmatpush1.msra.mxu0 %v403
        %1993 = vmatprep.subr.mxu0 0.0
        %1994 = vmatpush1.msra.mxu0 0.0
        %1995 = vmatprep.subr.mxu0 0.0
        %1996 = vmatpush1.msra.mxu0 0.0
        %1997 = vmatprep.subr.mxu0 0.0
        %1998 = vmatpush1.msra.mxu0 0.0
        %1999 = vmatprep.subr.mxu0 0.0
        %2000 = vmatpush1.msra.mxu0 0.0
        %2001 = vmatprep.subr.mxu0 0.0
        %2002 = vmatpush1.msra.mxu0 0.0
        %2003 = vmatprep.subr.mxu0 0.0
        %2004 = vmatpush1.msra.mxu0 0.0
        %2005 = vmatprep.subr.mxu0 0.0
        %2006 = vmatpush1.msra.mxu0 0.0
        %2007 = vmatprep.subr.mxu0 0.0
        %2008 = vmatpush1.msra.mxu0 0.0
        %2009 = vmatprep.subr.mxu0 0.0
        %2010 = vmatpush1.msra.mxu0 0.0
        %2011 = vmatprep.subr.mxu0 0.0
        %2012 = vmatpush1.msra.mxu0 0.0
        %2013 = vmatprep.subr.mxu0 0.0
        %2014 = vmatpush1.msra.mxu0 0.0
        %2015 = vmatprep.subr.mxu0 0.0
        %2016 = vmatpush1.msra.mxu0 0.0
        %2017 = vmatprep.subr.mxu0 0.0
        %2018 = vmatpush1.msra.mxu0 0.0
        %2019 = vmatprep.subr.mxu0 0.0
        %2020 = vmatpush1.msra.mxu0 0.0
        %2021 = vmatprep.subr.mxu0 0.0
        %2022 = vmatpush1.msra.mxu0 0.0
        %2023 = vmatprep.subr.mxu0 0.0
        %2024 = vmatpush1.msra.mxu0 0.0
        %2025 = vmatprep.subr.mxu0 0.0
        %2026 = vmatpush1.msra.mxu0 0.0
        %2027 = vmatprep.subr.mxu0 0.0
        %2028 = vmatpush1.msra.mxu0 0.0
        %2029 = vmatprep.subr.mxu0 0.0
        %2030 = vmatpush1.msra.mxu0 0.0
        %2031 = vmatprep.subr.mxu0 0.0
        %2032 = vmatpush1.msra.mxu0 0.0
        %2033 = vmatprep.subr.mxu0 0.0
        %2034 = vmatpush1.msra.mxu0 0.0
        %2035 = vmatprep.subr.mxu0 0.0
        %2036 = vmatpush1.msra.mxu0 0.0
        %2037 = vmatprep.subr.mxu0 0.0
        %2038 = vmatpush1.msra.mxu0 0.0
        %2039 = vmatprep.subr.mxu0 0.0
        %2040 = vmatpush1.msra.mxu0 0.0
        %2041 = vmatprep.subr.mxu0 0.0
        %2042 = vmatpush1.msra.mxu0 0.0
        %2043 = vmatprep.subr.mxu0 0.0
        %2044 = vmatpush1.msra.mxu0 0.0
        %2045 = vmatprep.subr.mxu0 0.0
        %2046 = vmatpush1.msra.mxu0 0.0
        %2047 = vmatprep.subr.mxu0 0.0
        %2048 = vmatpush1.msra.mxu0 0.0
        %2049 = vmatprep.subr.mxu0 0.0
        %2050 = vmatpush1.msra.mxu0 0.0
        %2051 = vmatprep.subr.mxu0 0.0
        %2052 = vmatpush1.msra.mxu0 0.0
        %2053 = vmatprep.mubr.f32.mxu0 0.0
        %2054 = vmatmul.mubr.f32.gmra.mrb[0].mxu0 %v1987
        %v2055 = vpop.f32.mrb[0].mxu0
        %v2056 = vadd.f32 0.0, %v2055
        %v2057 = vpop.f32.mrb[0].mxu0
        %2058 = vdwg.mxu0
        %v2060 = vsel %vm1751, %v1831, 0
        %2062 = vmatprep.subr.mxu0 0.0
        %2063 = vmatpush1.msra.mxu0 %v404
        %2064 = vmatprep.subr.mxu0 0.0
        %2065 = vmatpush1.msra.mxu0 %v405
        %2066 = vmatprep.subr.mxu0 0.0
        %2067 = vmatpush1.msra.mxu0 0.0
        %2068 = vmatprep.subr.mxu0 0.0
        %2069 = vmatpush1.msra.mxu0 0.0
        %2070 = vmatprep.subr.mxu0 0.0
        %2071 = vmatpush1.msra.mxu0 0.0
        %2072 = vmatprep.subr.mxu0 0.0
        %2073 = vmatpush1.msra.mxu0 0.0
        %2074 = vmatprep.subr.mxu0 0.0
        %2075 = vmatpush1.msra.mxu0 0.0
        %2076 = vmatprep.subr.mxu0 0.0
        %2077 = vmatpush1.msra.mxu0 0.0
        %2078 = vmatprep.subr.mxu0 0.0
        %2079 = vmatpush1.msra.mxu0 0.0
        %2080 = vmatprep.subr.mxu0 0.0
        %2081 = vmatpush1.msra.mxu0 0.0
        %2082 = vmatprep.subr.mxu0 0.0
        %2083 = vmatpush1.msra.mxu0 0.0
        %2084 = vmatprep.subr.mxu0 0.0
        %2085 = vmatpush1.msra.mxu0 0.0
        %2086 = vmatprep.subr.mxu0 0.0
        %2087 = vmatpush1.msra.mxu0 0.0
        %2088 = vmatprep.subr.mxu0 0.0
        %2089 = vmatpush1.msra.mxu0 0.0
        %2090 = vmatprep.subr.mxu0 0.0
        %2091 = vmatpush1.msra.mxu0 0.0
        %2092 = vmatprep.subr.mxu0 0.0
        %2093 = vmatpush1.msra.mxu0 0.0
        %2094 = vmatprep.subr.mxu0 0.0
        %2095 = vmatpush1.msra.mxu0 0.0
        %2096 = vmatprep.subr.mxu0 0.0
        %2097 = vmatpush1.msra.mxu0 0.0
        %2098 = vmatprep.subr.mxu0 0.0
        %2099 = vmatpush1.msra.mxu0 0.0
        %2100 = vmatprep.subr.mxu0 0.0
        %2101 = vmatpush1.msra.mxu0 0.0
        %2102 = vmatprep.subr.mxu0 0.0
        %2103 = vmatpush1.msra.mxu0 0.0
        %2104 = vmatprep.subr.mxu0 0.0
        %2105 = vmatpush1.msra.mxu0 0.0
        %2106 = vmatprep.subr.mxu0 0.0
        %2107 = vmatpush1.msra.mxu0 0.0
        %2108 = vmatprep.subr.mxu0 0.0
        %2109 = vmatpush1.msra.mxu0 0.0
        %2110 = vmatprep.subr.mxu0 0.0
        %2111 = vmatpush1.msra.mxu0 0.0
        %2112 = vmatprep.subr.mxu0 0.0
        %2113 = vmatpush1.msra.mxu0 0.0
        %2114 = vmatprep.subr.mxu0 0.0
        %2115 = vmatpush1.msra.mxu0 0.0
        %2116 = vmatprep.subr.mxu0 0.0
        %2117 = vmatpush1.msra.mxu0 0.0
        %2118 = vmatprep.subr.mxu0 0.0
        %2119 = vmatpush1.msra.mxu0 0.0
        %2120 = vmatprep.subr.mxu0 0.0
        %2121 = vmatpush1.msra.mxu0 0.0
        %2122 = vmatprep.subr.mxu0 0.0
        %2123 = vmatpush1.msra.mxu0 0.0
        %2124 = vmatprep.subr.mxu0 0.0
        %2125 = vmatpush1.msra.mxu0 0.0
        %2126 = vmatprep.mubr.f32.mxu0 0.0
        %2127 = vmatmul.mubr.f32.gmra.mrb[0].mxu0 %v2060
        %v2128 = vpop.f32.mrb[0].mxu0
        %v2129 = vadd.f32 0.0, %v2128
        %v2130 = vpop.f32.mrb[0].mxu0
        %2131 = vdwg.mxu0
        %v2133 = vsel %vm1751, %v1833, 0
        %2135 = vmatprep.subr.mxu0 0.0
        %2136 = vmatpush1.msra.mxu0 %v406
        %2137 = vmatprep.subr.mxu0 0.0
        %2138 = vmatpush1.msra.mxu0 %v407
        %2139 = vmatprep.subr.mxu0 0.0
        %2140 = vmatpush1.msra.mxu0 0.0
        %2141 = vmatprep.subr.mxu0 0.0
        %2142 = vmatpush1.msra.mxu0 0.0
        %2143 = vmatprep.subr.mxu0 0.0
        %2144 = vmatpush1.msra.mxu0 0.0
        %2145 = vmatprep.subr.mxu0 0.0
        %2146 = vmatpush1.msra.mxu0 0.0
        %2147 = vmatprep.subr.mxu0 0.0
        %2148 = vmatpush1.msra.mxu0 0.0
        %2149 = vmatprep.subr.mxu0 0.0
        %2150 = vmatpush1.msra.mxu0 0.0
        %2151 = vmatprep.subr.mxu0 0.0
        %2152 = vmatpush1.msra.mxu0 0.0
        %2153 = vmatprep.subr.mxu0 0.0
        %2154 = vmatpush1.msra.mxu0 0.0
        %2155 = vmatprep.subr.mxu0 0.0
        %2156 = vmatpush1.msra.mxu0 0.0
        %2157 = vmatprep.subr.mxu0 0.0
        %2158 = vmatpush1.msra.mxu0 0.0
        %2159 = vmatprep.subr.mxu0 0.0
        %2160 = vmatpush1.msra.mxu0 0.0
        %2161 = vmatprep.subr.mxu0 0.0
        %2162 = vmatpush1.msra.mxu0 0.0
        %2163 = vmatprep.subr.mxu0 0.0
        %2164 = vmatpush1.msra.mxu0 0.0
        %2165 = vmatprep.subr.mxu0 0.0
        %2166 = vmatpush1.msra.mxu0 0.0
        %2167 = vmatprep.subr.mxu0 0.0
        %2168 = vmatpush1.msra.mxu0 0.0
        %2169 = vmatprep.subr.mxu0 0.0
        %2170 = vmatpush1.msra.mxu0 0.0
        %2171 = vmatprep.subr.mxu0 0.0
        %2172 = vmatpush1.msra.mxu0 0.0
        %2173 = vmatprep.subr.mxu0 0.0
        %2174 = vmatpush1.msra.mxu0 0.0
        %2175 = vmatprep.subr.mxu0 0.0
        %2176 = vmatpush1.msra.mxu0 0.0
        %2177 = vmatprep.subr.mxu0 0.0
        %2178 = vmatpush1.msra.mxu0 0.0
        %2179 = vmatprep.subr.mxu0 0.0
        %2180 = vmatpush1.msra.mxu0 0.0
        %2181 = vmatprep.subr.mxu0 0.0
        %2182 = vmatpush1.msra.mxu0 0.0
        %2183 = vmatprep.subr.mxu0 0.0
        %2184 = vmatpush1.msra.mxu0 0.0
        %2185 = vmatprep.subr.mxu0 0.0
        %2186 = vmatpush1.msra.mxu0 0.0
        %2187 = vmatprep.subr.mxu0 0.0
        %2188 = vmatpush1.msra.mxu0 0.0
        %2189 = vmatprep.subr.mxu0 0.0
        %2190 = vmatpush1.msra.mxu0 0.0
        %2191 = vmatprep.subr.mxu0 0.0
        %2192 = vmatpush1.msra.mxu0 0.0
        %2193 = vmatprep.subr.mxu0 0.0
        %2194 = vmatpush1.msra.mxu0 0.0
        %2195 = vmatprep.subr.mxu0 0.0
        %2196 = vmatpush1.msra.mxu0 0.0
        %2197 = vmatprep.subr.mxu0 0.0
        %2198 = vmatpush1.msra.mxu0 0.0
        %2199 = vmatprep.mubr.f32.mxu0 0.0
        %2200 = vmatmul.mubr.f32.gmra.mrb[0].mxu0 %v2133
        %v2201 = vpop.f32.mrb[0].mxu0
        %v2202 = vadd.f32 0.0, %v2201
        %v2203 = vpop.f32.mrb[0].mxu0
        %2204 = vdwg.mxu0
        %v2206 = vsel %vm1751, %v1835, 0
        %2208 = vmatprep.subr.mxu0 0.0
        %2209 = vmatpush1.msra.mxu0 %v408
        %2210 = vmatprep.subr.mxu0 0.0
        %2211 = vmatpush1.msra.mxu0 %v409
        %2212 = vmatprep.subr.mxu0 0.0
        %2213 = vmatpush1.msra.mxu0 0.0
        %2214 = vmatprep.subr.mxu0 0.0
        %2215 = vmatpush1.msra.mxu0 0.0
        %2216 = vmatprep.subr.mxu0 0.0
        %2217 = vmatpush1.msra.mxu0 0.0
        %2218 = vmatprep.subr.mxu0 0.0
        %2219 = vmatpush1.msra.mxu0 0.0
        %2220 = vmatprep.subr.mxu0 0.0
        %2221 = vmatpush1.msra.mxu0 0.0
        %2222 = vmatprep.subr.mxu0 0.0
        %2223 = vmatpush1.msra.mxu0 0.0
        %2224 = vmatprep.subr.mxu0 0.0
        %2225 = vmatpush1.msra.mxu0 0.0
        %2226 = vmatprep.subr.mxu0 0.0
        %2227 = vmatpush1.msra.mxu0 0.0
        %2228 = vmatprep.subr.mxu0 0.0
        %2229 = vmatpush1.msra.mxu0 0.0
        %2230 = vmatprep.subr.mxu0 0.0
        %2231 = vmatpush1.msra.mxu0 0.0
        %2232 = vmatprep.subr.mxu0 0.0
        %2233 = vmatpush1.msra.mxu0 0.0
        %2234 = vmatprep.subr.mxu0 0.0
        %2235 = vmatpush1.msra.mxu0 0.0
        %2236 = vmatprep.subr.mxu0 0.0
        %2237 = vmatpush1.msra.mxu0 0.0
        %2238 = vmatprep.subr.mxu0 0.0
        %2239 = vmatpush1.msra.mxu0 0.0
        %2240 = vmatprep.subr.mxu0 0.0
        %2241 = vmatpush1.msra.mxu0 0.0
        %2242 = vmatprep.subr.mxu0 0.0
        %2243 = vmatpush1.msra.mxu0 0.0
        %2244 = vmatprep.subr.mxu0 0.0
        %2245 = vmatpush1.msra.mxu0 0.0
        %2246 = vmatprep.subr.mxu0 0.0
        %2247 = vmatpush1.msra.mxu0 0.0
        %2248 = vmatprep.subr.mxu0 0.0
        %2249 = vmatpush1.msra.mxu0 0.0
        %2250 = vmatprep.subr.mxu0 0.0
        %2251 = vmatpush1.msra.mxu0 0.0
        %2252 = vmatprep.subr.mxu0 0.0
        %2253 = vmatpush1.msra.mxu0 0.0
        %2254 = vmatprep.subr.mxu0 0.0
        %2255 = vmatpush1.msra.mxu0 0.0
        %2256 = vmatprep.subr.mxu0 0.0
        %2257 = vmatpush1.msra.mxu0 0.0
        %2258 = vmatprep.subr.mxu0 0.0
        %2259 = vmatpush1.msra.mxu0 0.0
        %2260 = vmatprep.subr.mxu0 0.0
        %2261 = vmatpush1.msra.mxu0 0.0
        %2262 = vmatprep.subr.mxu0 0.0
        %2263 = vmatpush1.msra.mxu0 0.0
        %2264 = vmatprep.subr.mxu0 0.0
        %2265 = vmatpush1.msra.mxu0 0.0
        %2266 = vmatprep.subr.mxu0 0.0
        %2267 = vmatpush1.msra.mxu0 0.0
        %2268 = vmatprep.subr.mxu0 0.0
        %2269 = vmatpush1.msra.mxu0 0.0
        %2270 = vmatprep.subr.mxu0 0.0
        %2271 = vmatpush1.msra.mxu0 0.0
        %2272 = vmatprep.mubr.f32.mxu0 0.0
        %2273 = vmatmul.mubr.f32.gmra.mrb[0].mxu0 %v2206
        %v2274 = vpop.f32.mrb[0].mxu0
        %v2275 = vadd.f32 0.0, %v2274
        %v2276 = vpop.f32.mrb[0].mxu0
        %2277 = vdwg.mxu0
        %v2279 = vsel %vm1751, %v1837, 0
        %2281 = vmatprep.subr.mxu0 0.0
        %2282 = vmatpush1.msra.mxu0 %v410
        %2283 = vmatprep.subr.mxu0 0.0
        %2284 = vmatpush1.msra.mxu0 %v411
        %2285 = vmatprep.subr.mxu0 0.0
        %2286 = vmatpush1.msra.mxu0 0.0
        %2287 = vmatprep.subr.mxu0 0.0
        %2288 = vmatpush1.msra.mxu0 0.0
        %2289 = vmatprep.subr.mxu0 0.0
        %2290 = vmatpush1.msra.mxu0 0.0
        %2291 = vmatprep.subr.mxu0 0.0
        %2292 = vmatpush1.msra.mxu0 0.0
        %2293 = vmatprep.subr.mxu0 0.0
        %2294 = vmatpush1.msra.mxu0 0.0
        %2295 = vmatprep.subr.mxu0 0.0
        %2296 = vmatpush1.msra.mxu0 0.0
        %2297 = vmatprep.subr.mxu0 0.0
        %2298 = vmatpush1.msra.mxu0 0.0
        %2299 = vmatprep.subr.mxu0 0.0
        %2300 = vmatpush1.msra.mxu0 0.0
        %2301 = vmatprep.subr.mxu0 0.0
        %2302 = vmatpush1.msra.mxu0 0.0
        %2303 = vmatprep.subr.mxu0 0.0
        %2304 = vmatpush1.msra.mxu0 0.0
        %2305 = vmatprep.subr.mxu0 0.0
        %2306 = vmatpush1.msra.mxu0 0.0
        %2307 = vmatprep.subr.mxu0 0.0
        %2308 = vmatpush1.msra.mxu0 0.0
        %2309 = vmatprep.subr.mxu0 0.0
        %2310 = vmatpush1.msra.mxu0 0.0
        %2311 = vmatprep.subr.mxu0 0.0
        %2312 = vmatpush1.msra.mxu0 0.0
        %2313 = vmatprep.subr.mxu0 0.0
        %2314 = vmatpush1.msra.mxu0 0.0
        %2315 = vmatprep.subr.mxu0 0.0
        %2316 = vmatpush1.msra.mxu0 0.0
        %2317 = vmatprep.subr.mxu0 0.0
        %2318 = vmatpush1.msra.mxu0 0.0
        %2319 = vmatprep.subr.mxu0 0.0
        %2320 = vmatpush1.msra.mxu0 0.0
        %2321 = vmatprep.subr.mxu0 0.0
        %2322 = vmatpush1.msra.mxu0 0.0
        %2323 = vmatprep.subr.mxu0 0.0
        %2324 = vmatpush1.msra.mxu0 0.0
        %2325 = vmatprep.subr.mxu0 0.0
        %2326 = vmatpush1.msra.mxu0 0.0
        %2327 = vmatprep.subr.mxu0 0.0
        %2328 = vmatpush1.msra.mxu0 0.0
        %2329 = vmatprep.subr.mxu0 0.0
        %2330 = vmatpush1.msra.mxu0 0.0
        %2331 = vmatprep.subr.mxu0 0.0
        %2332 = vmatpush1.msra.mxu0 0.0
        %2333 = vmatprep.subr.mxu0 0.0
        %2334 = vmatpush1.msra.mxu0 0.0
        %2335 = vmatprep.subr.mxu0 0.0
        %2336 = vmatpush1.msra.mxu0 0.0
        %2337 = vmatprep.subr.mxu0 0.0
        %2338 = vmatpush1.msra.mxu0 0.0
        %2339 = vmatprep.subr.mxu0 0.0
        %2340 = vmatpush1.msra.mxu0 0.0
        %2341 = vmatprep.subr.mxu0 0.0
        %2342 = vmatpush1.msra.mxu0 0.0
        %2343 = vmatprep.subr.mxu0 0.0
        %2344 = vmatpush1.msra.mxu0 0.0
        %2345 = vmatprep.mubr.f32.mxu0 0.0
        %2346 = vmatmul.mubr.f32.gmra.mrb[0].mxu0 %v2279
        %v2347 = vpop.f32.mrb[0].mxu0
        %v2348 = vadd.f32 0.0, %v2347
        %v2349 = vpop.f32.mrb[0].mxu0
        %2350 = vdwg.mxu0
        %v2352 = vsel %vm1751, %v1839, 0
        %2354 = vmatprep.subr.mxu0 0.0
        %2355 = vmatpush1.msra.mxu0 %v412
        %2356 = vmatprep.subr.mxu0 0.0
        %2357 = vmatpush1.msra.mxu0 %v413
        %2358 = vmatprep.subr.mxu0 0.0
        %2359 = vmatpush1.msra.mxu0 0.0
        %2360 = vmatprep.subr.mxu0 0.0
        %2361 = vmatpush1.msra.mxu0 0.0
        %2362 = vmatprep.subr.mxu0 0.0
        %2363 = vmatpush1.msra.mxu0 0.0
        %2364 = vmatprep.subr.mxu0 0.0
        %2365 = vmatpush1.msra.mxu0 0.0
        %2366 = vmatprep.subr.mxu0 0.0
        %2367 = vmatpush1.msra.mxu0 0.0
        %2368 = vmatprep.subr.mxu0 0.0
        %2369 = vmatpush1.msra.mxu0 0.0
        %2370 = vmatprep.subr.mxu0 0.0
        %2371 = vmatpush1.msra.mxu0 0.0
        %2372 = vmatprep.subr.mxu0 0.0
        %2373 = vmatpush1.msra.mxu0 0.0
        %2374 = vmatprep.subr.mxu0 0.0
        %2375 = vmatpush1.msra.mxu0 0.0
        %2376 = vmatprep.subr.mxu0 0.0
        %2377 = vmatpush1.msra.mxu0 0.0
        %2378 = vmatprep.subr.mxu0 0.0
        %2379 = vmatpush1.msra.mxu0 0.0
        %2380 = vmatprep.subr.mxu0 0.0
        %2381 = vmatpush1.msra.mxu0 0.0
        %2382 = vmatprep.subr.mxu0 0.0
        %2383 = vmatpush1.msra.mxu0 0.0
        %2384 = vmatprep.subr.mxu0 0.0
        %2385 = vmatpush1.msra.mxu0 0.0
        %2386 = vmatprep.subr.mxu0 0.0
        %2387 = vmatpush1.msra.mxu0 0.0
        %2388 = vmatprep.subr.mxu0 0.0
        %2389 = vmatpush1.msra.mxu0 0.0
        %2390 = vmatprep.subr.mxu0 0.0
        %2391 = vmatpush1.msra.mxu0 0.0
        %2392 = vmatprep.subr.mxu0 0.0
        %2393 = vmatpush1.msra.mxu0 0.0
        %2394 = vmatprep.subr.mxu0 0.0
        %2395 = vmatpush1.msra.mxu0 0.0
        %2396 = vmatprep.subr.mxu0 0.0
        %2397 = vmatpush1.msra.mxu0 0.0
        %2398 = vmatprep.subr.mxu0 0.0
        %2399 = vmatpush1.msra.mxu0 0.0
        %2400 = vmatprep.subr.mxu0 0.0
        %2401 = vmatpush1.msra.mxu0 0.0
        %2402 = vmatprep.subr.mxu0 0.0
        %2403 = vmatpush1.msra.mxu0 0.0
        %2404 = vmatprep.subr.mxu0 0.0
        %2405 = vmatpush1.msra.mxu0 0.0
        %2406 = vmatprep.subr.mxu0 0.0
        %2407 = vmatpush1.msra.mxu0 0.0
        %2408 = vmatprep.subr.mxu0 0.0
        %2409 = vmatpush1.msra.mxu0 0.0
        %2410 = vmatprep.subr.mxu0 0.0
        %2411 = vmatpush1.msra.mxu0 0.0
        %2412 = vmatprep.subr.mxu0 0.0
        %2413 = vmatpush1.msra.mxu0 0.0
        %2414 = vmatprep.subr.mxu0 0.0
        %2415 = vmatpush1.msra.mxu0 0.0
        %2416 = vmatprep.subr.mxu0 0.0
        %2417 = vmatpush1.msra.mxu0 0.0
        %2418 = vmatprep.mubr.f32.mxu0 0.0
        %2419 = vmatmul.mubr.f32.gmra.mrb[0].mxu0 %v2352
        %v2420 = vpop.f32.mrb[0].mxu0
        %v2421 = vadd.f32 0.0, %v2420
        %v2422 = vpop.f32.mrb[0].mxu0
        %2423 = vdwg.mxu0
        %v2424 = vcombine.low %v1910, %v2056
        %v2425 = vcombine.high %v1910, %v2056
        %v2427 = vunpack.c.l.s4 1983009808
        %v2428 = vunpack.c.0.s8 %v2427
        %v2429 = vlaneseq
        %v2430 = vshrl.u32 %v2429, 7
        %v2431 = vsub.s32 %v2428, %v2430
        %v2432 = vrot.slane %v2424, %v2431
        %v2434 = vunpack.c.l.s4 1983009808
        %v2435 = vunpack.c.0.s8 %v2434
        %v2436 = vlaneseq
        %v2437 = vshrl.u32 %v2436, 7
        %v2438 = vsub.s32 %v2435, %v2437
        %v2439 = vrot.slane %v2425, %v2438
        %v2440 = vcombine.low %v1983, %v2129
        %v2441 = vcombine.high %v1983, %v2129
        %v2443 = vunpack.c.l.s4 1983009808
        %v2444 = vunpack.c.0.s8 %v2443
        %v2445 = vlaneseq
        %v2446 = vshrl.u32 %v2445, 7
        %v2447 = vsub.s32 %v2444, %v2446
        %v2448 = vrot.slane %v2440, %v2447
        %v2450 = vunpack.c.l.s4 1983009808
        %v2451 = vunpack.c.0.s8 %v2450
        %v2452 = vlaneseq
        %v2453 = vshrl.u32 %v2452, 7
        %v2454 = vsub.s32 %v2451, %v2453
        %v2455 = vrot.slane %v2441, %v2454
        %v2456 = vcombine.low %v2202, %v2348
        %v2457 = vcombine.high %v2202, %v2348
        %v2459 = vunpack.c.l.s4 1983009808
        %v2460 = vunpack.c.0.s8 %v2459
        %v2461 = vlaneseq
        %v2462 = vshrl.u32 %v2461, 7
        %v2463 = vsub.s32 %v2460, %v2462
        %v2464 = vrot.slane %v2456, %v2463
        %v2466 = vunpack.c.l.s4 1983009808
        %v2467 = vunpack.c.0.s8 %v2466
        %v2468 = vlaneseq
        %v2469 = vshrl.u32 %v2468, 7
        %v2470 = vsub.s32 %v2467, %v2469
        %v2471 = vrot.slane %v2457, %v2470
        %v2472 = vcombine.low %v2275, %v2421
        %v2473 = vcombine.high %v2275, %v2421
        %v2475 = vunpack.c.l.s4 1983009808
        %v2476 = vunpack.c.0.s8 %v2475
        %v2477 = vlaneseq
        %v2478 = vshrl.u32 %v2477, 7
        %v2479 = vsub.s32 %v2476, %v2478
        %v2480 = vrot.slane %v2472, %v2479
        %v2482 = vunpack.c.l.s4 1983009808
        %v2483 = vunpack.c.0.s8 %v2482
        %v2484 = vlaneseq
        %v2485 = vshrl.u32 %v2484, 7
        %v2486 = vsub.s32 %v2483, %v2485
        %v2487 = vrot.slane %v2473, %v2486
        %v2488 = vcombine.low %v2432, %v2448
        %v2489 = vcombine.high %v2432, %v2448
        %v2491 = vunpack.c.l.s4 1934713408
        %v2492 = vunpack.c.0.s8 %v2491
        %v2493 = vlaneseq
        %v2494 = vshrl.u32 %v2493, 7
        %v2495 = vsub.s32 %v2492, %v2494
        %v2496 = vrot.slane %v2488, %v2495
        %v2498 = vunpack.c.l.s4 1934713408
        %v2499 = vunpack.c.0.s8 %v2498
        %v2500 = vlaneseq
        %v2501 = vshrl.u32 %v2500, 7
        %v2502 = vsub.s32 %v2499, %v2501
        %v2503 = vrot.slane %v2489, %v2502
        %v2504 = vcombine.low %v2439, %v2455
        %v2505 = vcombine.high %v2439, %v2455
        %v2507 = vunpack.c.l.s4 1934713408
        %v2508 = vunpack.c.0.s8 %v2507
        %v2509 = vlaneseq
        %v2510 = vshrl.u32 %v2509, 7
        %v2511 = vsub.s32 %v2508, %v2510
        %v2512 = vrot.slane %v2504, %v2511
        %v2514 = vunpack.c.l.s4 1934713408
        %v2515 = vunpack.c.0.s8 %v2514
        %v2516 = vlaneseq
        %v2517 = vshrl.u32 %v2516, 7
        %v2518 = vsub.s32 %v2515, %v2517
        %v2519 = vrot.slane %v2505, %v2518
        %v2520 = vcombine.low %v2464, %v2480
        %v2521 = vcombine.high %v2464, %v2480
        %v2523 = vunpack.c.l.s4 1934713408
        %v2524 = vunpack.c.0.s8 %v2523
        %v2525 = vlaneseq
        %v2526 = vshrl.u32 %v2525, 7
        %v2527 = vsub.s32 %v2524, %v2526
        %v2528 = vrot.slane %v2520, %v2527
        %v2530 = vunpack.c.l.s4 1934713408
        %v2531 = vunpack.c.0.s8 %v2530
        %v2532 = vlaneseq
        %v2533 = vshrl.u32 %v2532, 7
        %v2534 = vsub.s32 %v2531, %v2533
        %v2535 = vrot.slane %v2521, %v2534
        %v2536 = vcombine.low %v2471, %v2487
        %v2537 = vcombine.high %v2471, %v2487
        %v2539 = vunpack.c.l.s4 1934713408
        %v2540 = vunpack.c.0.s8 %v2539
        %v2541 = vlaneseq
        %v2542 = vshrl.u32 %v2541, 7
        %v2543 = vsub.s32 %v2540, %v2542
        %v2544 = vrot.slane %v2536, %v2543
        %v2546 = vunpack.c.l.s4 1934713408
        %v2547 = vunpack.c.0.s8 %v2546
        %v2548 = vlaneseq
        %v2549 = vshrl.u32 %v2548, 7
        %v2550 = vsub.s32 %v2547, %v2549
        %v2551 = vrot.slane %v2537, %v2550
        %v2552 = vcombine.low %v2496, %v2528
        %v2553 = vcombine.high %v2496, %v2528
        %v2554 = vcombine.low %v2503, %v2535
        %v2555 = vcombine.high %v2503, %v2535
        %v2556 = vcombine.low %v2512, %v2544
        %v2557 = vcombine.high %v2512, %v2544
        %v2558 = vcombine.low %v2519, %v2551
        %v2559 = vcombine.high %v2519, %v2551
        %2561 = vrot.lane.b32.xlu0 %v2553, 32
        %v2562 = vpop.permute.xlu0 %2561
        %2565 = vrot.lane.b32.xlu0 %v2554, 64
        %v2566 = vpop.permute.xlu0 %2565
        %2569 = vrot.lane.b32.xlu0 %v2555, 96
        %v2570 = vpop.permute.xlu0 %2569
        %2573 = vrot.lane.b32.xlu0 %v2557, 32
        %v2574 = vpop.permute.xlu0 %2573
        %2577 = vrot.lane.b32.xlu0 %v2558, 64
        %v2578 = vpop.permute.xlu0 %2577
        %2581 = vrot.lane.b32.xlu0 %v2559, 96
        %v2582 = vpop.permute.xlu0 %2581
        %v2584 = vsel %vm420, %v2552, %v2562
        %vm2585 = vcmask 523264
        %v2586 = vsel %vm2585, %v2584, %v2566
        %vm2587 = vcmask 785408
        %v2588 = vsel %vm2587, %v2586, %v2570
        %v2589 = vsel %vm420, %v2556, %v2574
        %v2590 = vsel %vm2585, %v2589, %v2578
        %v2591 = vsel %vm2587, %v2590, %v2582
        %2592 = vst [vmem:[%s370] sm:$0xff] %v2588
        %2593 = vst [vmem:[%s370 + $0x8] sm:$0xff] %v2591
        %2594 = vxpose.xlu0.b32.start [1/16] %v1825, 128
        %2595 = vxpose.xlu0.b32.cont [2/16] 0.0, 128
        %2596 = vxpose.xlu0.b32.cont [3/16] 0.0, 128
        %2597 = vxpose.xlu0.b32.cont [4/16] 0.0, 128
        %2598 = vxpose.xlu0.b32.cont [5/16] 0.0, 128
        %2599 = vxpose.xlu0.b32.cont [6/16] 0.0, 128
        %2600 = vxpose.xlu0.b32.cont [7/16] 0.0, 128
        %2601 = vxpose.xlu0.b32.cont [8/16] 0.0, 128
        %2602 = vxpose.xlu0.b32.cont [9/16] 0.0, 128
        %2603 = vxpose.xlu0.b32.cont [10/16] 0.0, 128
        %2604 = vxpose.xlu0.b32.cont [11/16] 0.0, 128
        %2605 = vxpose.xlu0.b32.cont [12/16] 0.0, 128
        %2606 = vxpose.xlu0.b32.cont [13/16] 0.0, 128
        %2607 = vxpose.xlu0.b32.cont [14/16] 0.0, 128
        %2608 = vxpose.xlu0.b32.cont [15/16] 0.0, 128
        %2609 = vxpose.xlu0.b32.end [16/16] 0.0, 128
        %v2610 = vpop.trf.xlu0
        %v2611 = vpop.trf.xlu0
        %v2612 = vpop.trf.xlu0
        %v2613 = vpop.trf.xlu0
        %v2614 = vpop.trf.xlu0
        %v2615 = vpop.trf.xlu0
        %v2616 = vpop.trf.xlu0
        %v2617 = vpop.trf.xlu0
        %v2618 = vpop.trf.xlu0
        %v2619 = vpop.trf.xlu0
        %v2620 = vpop.trf.xlu0
        %v2621 = vpop.trf.xlu0
        %v2622 = vpop.trf.xlu0
        %v2623 = vpop.trf.xlu0
        %v2624 = vpop.trf.xlu0
        %v2625 = vpop.trf.xlu0
        %2626 = vxpose.xlu0.b32.start [1/16] %v1827, 128
        %2627 = vxpose.xlu0.b32.cont [2/16] 0.0, 128
        %2628 = vxpose.xlu0.b32.cont [3/16] 0.0, 128
        %2629 = vxpose.xlu0.b32.cont [4/16] 0.0, 128
        %2630 = vxpose.xlu0.b32.cont [5/16] 0.0, 128
        %2631 = vxpose.xlu0.b32.cont [6/16] 0.0, 128
        %2632 = vxpose.xlu0.b32.cont [7/16] 0.0, 128
        %2633 = vxpose.xlu0.b32.cont [8/16] 0.0, 128
        %2634 = vxpose.xlu0.b32.cont [9/16] 0.0, 128
        %2635 = vxpose.xlu0.b32.cont [10/16] 0.0, 128
        %2636 = vxpose.xlu0.b32.cont [11/16] 0.0, 128
        %2637 = vxpose.xlu0.b32.cont [12/16] 0.0, 128
        %2638 = vxpose.xlu0.b32.cont [13/16] 0.0, 128
        %2639 = vxpose.xlu0.b32.cont [14/16] 0.0, 128
        %2640 = vxpose.xlu0.b32.cont [15/16] 0.0, 128
        %2641 = vxpose.xlu0.b32.end [16/16] 0.0, 128
        %v2642 = vpop.trf.xlu0
        %v2643 = vpop.trf.xlu0
        %v2644 = vpop.trf.xlu0
        %v2645 = vpop.trf.xlu0
        %v2646 = vpop.trf.xlu0
        %v2647 = vpop.trf.xlu0
        %v2648 = vpop.trf.xlu0
        %v2649 = vpop.trf.xlu0
        %v2650 = vpop.trf.xlu0
        %v2651 = vpop.trf.xlu0
        %v2652 = vpop.trf.xlu0
        %v2653 = vpop.trf.xlu0
        %v2654 = vpop.trf.xlu0
        %v2655 = vpop.trf.xlu0
        %v2656 = vpop.trf.xlu0
        %v2657 = vpop.trf.xlu0
        %2658 = vxpose.xlu0.b32.start [1/16] %v1829, 128
        %2659 = vxpose.xlu0.b32.cont [2/16] 0.0, 128
        %2660 = vxpose.xlu0.b32.cont [3/16] 0.0, 128
        %2661 = vxpose.xlu0.b32.cont [4/16] 0.0, 128
        %2662 = vxpose.xlu0.b32.cont [5/16] 0.0, 128
        %2663 = vxpose.xlu0.b32.cont [6/16] 0.0, 128
        %2664 = vxpose.xlu0.b32.cont [7/16] 0.0, 128
        %2665 = vxpose.xlu0.b32.cont [8/16] 0.0, 128
        %2666 = vxpose.xlu0.b32.cont [9/16] 0.0, 128
        %2667 = vxpose.xlu0.b32.cont [10/16] 0.0, 128
        %2668 = vxpose.xlu0.b32.cont [11/16] 0.0, 128
        %2669 = vxpose.xlu0.b32.cont [12/16] 0.0, 128
        %2670 = vxpose.xlu0.b32.cont [13/16] 0.0, 128
        %2671 = vxpose.xlu0.b32.cont [14/16] 0.0, 128
        %2672 = vxpose.xlu0.b32.cont [15/16] 0.0, 128
        %2673 = vxpose.xlu0.b32.end [16/16] 0.0, 128
        %v2674 = vpop.trf.xlu0
        %v2675 = vpop.trf.xlu0
        %v2676 = vpop.trf.xlu0
        %v2677 = vpop.trf.xlu0
        %v2678 = vpop.trf.xlu0
        %v2679 = vpop.trf.xlu0
        %v2680 = vpop.trf.xlu0
        %v2681 = vpop.trf.xlu0
        %v2682 = vpop.trf.xlu0
        %v2683 = vpop.trf.xlu0
        %v2684 = vpop.trf.xlu0
        %v2685 = vpop.trf.xlu0
        %v2686 = vpop.trf.xlu0
        %v2687 = vpop.trf.xlu0
        %v2688 = vpop.trf.xlu0
        %v2689 = vpop.trf.xlu0
        %2690 = vxpose.xlu0.b32.start [1/16] %v1831, 128
        %2691 = vxpose.xlu0.b32.cont [2/16] 0.0, 128
        %2692 = vxpose.xlu0.b32.cont [3/16] 0.0, 128
        %2693 = vxpose.xlu0.b32.cont [4/16] 0.0, 128
        %2694 = vxpose.xlu0.b32.cont [5/16] 0.0, 128
        %2695 = vxpose.xlu0.b32.cont [6/16] 0.0, 128
        %2696 = vxpose.xlu0.b32.cont [7/16] 0.0, 128
        %2697 = vxpose.xlu0.b32.cont [8/16] 0.0, 128
        %2698 = vxpose.xlu0.b32.cont [9/16] 0.0, 128
        %2699 = vxpose.xlu0.b32.cont [10/16] 0.0, 128
        %2700 = vxpose.xlu0.b32.cont [11/16] 0.0, 128
        %2701 = vxpose.xlu0.b32.cont [12/16] 0.0, 128
        %2702 = vxpose.xlu0.b32.cont [13/16] 0.0, 128
        %2703 = vxpose.xlu0.b32.cont [14/16] 0.0, 128
        %2704 = vxpose.xlu0.b32.cont [15/16] 0.0, 128
        %2705 = vxpose.xlu0.b32.end [16/16] 0.0, 128
        %v2706 = vpop.trf.xlu0
        %v2707 = vpop.trf.xlu0
        %v2708 = vpop.trf.xlu0
        %v2709 = vpop.trf.xlu0
        %v2710 = vpop.trf.xlu0
        %v2711 = vpop.trf.xlu0
        %v2712 = vpop.trf.xlu0
        %v2713 = vpop.trf.xlu0
        %v2714 = vpop.trf.xlu0
        %v2715 = vpop.trf.xlu0
        %v2716 = vpop.trf.xlu0
        %v2717 = vpop.trf.xlu0
        %v2718 = vpop.trf.xlu0
        %v2719 = vpop.trf.xlu0
        %v2720 = vpop.trf.xlu0
        %v2721 = vpop.trf.xlu0
        %2722 = vxpose.xlu0.b32.start [1/16] %v1833, 128
        %2723 = vxpose.xlu0.b32.cont [2/16] 0.0, 128
        %2724 = vxpose.xlu0.b32.cont [3/16] 0.0, 128
        %2725 = vxpose.xlu0.b32.cont [4/16] 0.0, 128
        %2726 = vxpose.xlu0.b32.cont [5/16] 0.0, 128
        %2727 = vxpose.xlu0.b32.cont [6/16] 0.0, 128
        %2728 = vxpose.xlu0.b32.cont [7/16] 0.0, 128
        %2729 = vxpose.xlu0.b32.cont [8/16] 0.0, 128
        %2730 = vxpose.xlu0.b32.cont [9/16] 0.0, 128
        %2731 = vxpose.xlu0.b32.cont [10/16] 0.0, 128
        %2732 = vxpose.xlu0.b32.cont [11/16] 0.0, 128
        %2733 = vxpose.xlu0.b32.cont [12/16] 0.0, 128
        %2734 = vxpose.xlu0.b32.cont [13/16] 0.0, 128
        %2735 = vxpose.xlu0.b32.cont [14/16] 0.0, 128
        %2736 = vxpose.xlu0.b32.cont [15/16] 0.0, 128
        %2737 = vxpose.xlu0.b32.end [16/16] 0.0, 128
        %v2738 = vpop.trf.xlu0
        %v2739 = vpop.trf.xlu0
        %v2740 = vpop.trf.xlu0
        %v2741 = vpop.trf.xlu0
        %v2742 = vpop.trf.xlu0
        %v2743 = vpop.trf.xlu0
        %v2744 = vpop.trf.xlu0
        %v2745 = vpop.trf.xlu0
        %v2746 = vpop.trf.xlu0
        %v2747 = vpop.trf.xlu0
        %v2748 = vpop.trf.xlu0
        %v2749 = vpop.trf.xlu0
        %v2750 = vpop.trf.xlu0
        %v2751 = vpop.trf.xlu0
        %v2752 = vpop.trf.xlu0
        %v2753 = vpop.trf.xlu0
        %2754 = vxpose.xlu0.b32.start [1/16] %v1835, 128
        %2755 = vxpose.xlu0.b32.cont [2/16] 0.0, 128
        %2756 = vxpose.xlu0.b32.cont [3/16] 0.0, 128
        %2757 = vxpose.xlu0.b32.cont [4/16] 0.0, 128
        %2758 = vxpose.xlu0.b32.cont [5/16] 0.0, 128
        %2759 = vxpose.xlu0.b32.cont [6/16] 0.0, 128
        %2760 = vxpose.xlu0.b32.cont [7/16] 0.0, 128
        %2761 = vxpose.xlu0.b32.cont [8/16] 0.0, 128
        %2762 = vxpose.xlu0.b32.cont [9/16] 0.0, 128
        %2763 = vxpose.xlu0.b32.cont [10/16] 0.0, 128
        %2764 = vxpose.xlu0.b32.cont [11/16] 0.0, 128
        %2765 = vxpose.xlu0.b32.cont [12/16] 0.0, 128
        %2766 = vxpose.xlu0.b32.cont [13/16] 0.0, 128
        %2767 = vxpose.xlu0.b32.cont [14/16] 0.0, 128
        %2768 = vxpose.xlu0.b32.cont [15/16] 0.0, 128
        %2769 = vxpose.xlu0.b32.end [16/16] 0.0, 128
        %v2770 = vpop.trf.xlu0
        %v2771 = vpop.trf.xlu0
        %v2772 = vpop.trf.xlu0
        %v2773 = vpop.trf.xlu0
        %v2774 = vpop.trf.xlu0
        %v2775 = vpop.trf.xlu0
        %v2776 = vpop.trf.xlu0
        %v2777 = vpop.trf.xlu0
        %v2778 = vpop.trf.xlu0
        %v2779 = vpop.trf.xlu0
        %v2780 = vpop.trf.xlu0
        %v2781 = vpop.trf.xlu0
        %v2782 = vpop.trf.xlu0
        %v2783 = vpop.trf.xlu0
        %v2784 = vpop.trf.xlu0
        %v2785 = vpop.trf.xlu0
        %2786 = vxpose.xlu0.b32.start [1/16] %v1837, 128
        %2787 = vxpose.xlu0.b32.cont [2/16] 0.0, 128
        %2788 = vxpose.xlu0.b32.cont [3/16] 0.0, 128
        %2789 = vxpose.xlu0.b32.cont [4/16] 0.0, 128
        %2790 = vxpose.xlu0.b32.cont [5/16] 0.0, 128
        %2791 = vxpose.xlu0.b32.cont [6/16] 0.0, 128
        %2792 = vxpose.xlu0.b32.cont [7/16] 0.0, 128
        %2793 = vxpose.xlu0.b32.cont [8/16] 0.0, 128
        %2794 = vxpose.xlu0.b32.cont [9/16] 0.0, 128
        %2795 = vxpose.xlu0.b32.cont [10/16] 0.0, 128
        %2796 = vxpose.xlu0.b32.cont [11/16] 0.0, 128
        %2797 = vxpose.xlu0.b32.cont [12/16] 0.0, 128
        %2798 = vxpose.xlu0.b32.cont [13/16] 0.0, 128
        %2799 = vxpose.xlu0.b32.cont [14/16] 0.0, 128
        %2800 = vxpose.xlu0.b32.cont [15/16] 0.0, 128
        %2801 = vxpose.xlu0.b32.end [16/16] 0.0, 128
        %v2802 = vpop.trf.xlu0
        %v2803 = vpop.trf.xlu0
        %v2804 = vpop.trf.xlu0
        %v2805 = vpop.trf.xlu0
        %v2806 = vpop.trf.xlu0
        %v2807 = vpop.trf.xlu0
        %v2808 = vpop.trf.xlu0
        %v2809 = vpop.trf.xlu0
        %v2810 = vpop.trf.xlu0
        %v2811 = vpop.trf.xlu0
        %v2812 = vpop.trf.xlu0
        %v2813 = vpop.trf.xlu0
        %v2814 = vpop.trf.xlu0
        %v2815 = vpop.trf.xlu0
        %v2816 = vpop.trf.xlu0
        %v2817 = vpop.trf.xlu0
        %2818 = vxpose.xlu0.b32.start [1/16] %v1839, 128
        %2819 = vxpose.xlu0.b32.cont [2/16] 0.0, 128
        %2820 = vxpose.xlu0.b32.cont [3/16] 0.0, 128
        %2821 = vxpose.xlu0.b32.cont [4/16] 0.0, 128
        %2822 = vxpose.xlu0.b32.cont [5/16] 0.0, 128
        %2823 = vxpose.xlu0.b32.cont [6/16] 0.0, 128
        %2824 = vxpose.xlu0.b32.cont [7/16] 0.0, 128
        %2825 = vxpose.xlu0.b32.cont [8/16] 0.0, 128
        %2826 = vxpose.xlu0.b32.cont [9/16] 0.0, 128
        %2827 = vxpose.xlu0.b32.cont [10/16] 0.0, 128
        %2828 = vxpose.xlu0.b32.cont [11/16] 0.0, 128
        %2829 = vxpose.xlu0.b32.cont [12/16] 0.0, 128
        %2830 = vxpose.xlu0.b32.cont [13/16] 0.0, 128
        %2831 = vxpose.xlu0.b32.cont [14/16] 0.0, 128
        %2832 = vxpose.xlu0.b32.cont [15/16] 0.0, 128
        %2833 = vxpose.xlu0.b32.end [16/16] 0.0, 128
        %v2834 = vpop.trf.xlu0
        %v2835 = vpop.trf.xlu0
        %v2836 = vpop.trf.xlu0
        %v2837 = vpop.trf.xlu0
        %v2838 = vpop.trf.xlu0
        %v2839 = vpop.trf.xlu0
        %v2840 = vpop.trf.xlu0
        %v2841 = vpop.trf.xlu0
        %v2842 = vpop.trf.xlu0
        %v2843 = vpop.trf.xlu0
        %v2844 = vpop.trf.xlu0
        %v2845 = vpop.trf.xlu0
        %v2846 = vpop.trf.xlu0
        %v2847 = vpop.trf.xlu0
        %v2848 = vpop.trf.xlu0
        %v2849 = vpop.trf.xlu0
        %vm2850 = vcmask 64512
        %v2852 = vsel %vm2850, %v2610, 0
        %v2855 = vsel %vm2850, %v2611, 0
        %2857 = vmatprep.subr.mxu0 0.0
        %2858 = vmatpush1.msra.mxu0 %v390
        %2859 = vmatprep.subr.mxu0 0.0
        %2860 = vmatpush1.msra.mxu0 0.0
        %2861 = vmatprep.subr.mxu0 0.0
        %2862 = vmatpush1.msra.mxu0 0.0
        %2863 = vmatprep.subr.mxu0 0.0
        %2864 = vmatpush1.msra.mxu0 0.0
        %2865 = vmatprep.subr.mxu0 0.0
        %2866 = vmatpush1.msra.mxu0 0.0
        %2867 = vmatprep.subr.mxu0 0.0
        %2868 = vmatpush1.msra.mxu0 0.0
        %2869 = vmatprep.subr.mxu0 0.0
        %2870 = vmatpush1.msra.mxu0 0.0
        %2871 = vmatprep.subr.mxu0 0.0
        %2872 = vmatpush1.msra.mxu0 0.0
        %2873 = vmatprep.subr.mxu0 0.0
        %2874 = vmatpush1.msra.mxu0 0.0
        %2875 = vmatprep.subr.mxu0 0.0
        %2876 = vmatpush1.msra.mxu0 0.0
        %2877 = vmatprep.subr.mxu0 0.0
        %2878 = vmatpush1.msra.mxu0 0.0
        %2879 = vmatprep.subr.mxu0 0.0
        %2880 = vmatpush1.msra.mxu0 0.0
        %2881 = vmatprep.subr.mxu0 0.0
        %2882 = vmatpush1.msra.mxu0 0.0
        %2883 = vmatprep.subr.mxu0 0.0
        %2884 = vmatpush1.msra.mxu0 0.0
        %2885 = vmatprep.subr.mxu0 0.0
        %2886 = vmatpush1.msra.mxu0 0.0
        %2887 = vmatprep.subr.mxu0 0.0
        %2888 = vmatpush1.msra.mxu0 0.0
        %2889 = vmatprep.subr.mxu0 0.0
        %2890 = vmatpush1.msra.mxu0 0.0
        %2891 = vmatprep.subr.mxu0 0.0
        %2892 = vmatpush1.msra.mxu0 0.0
        %2893 = vmatprep.subr.mxu0 0.0
        %2894 = vmatpush1.msra.mxu0 0.0
        %2895 = vmatprep.subr.mxu0 0.0
        %2896 = vmatpush1.msra.mxu0 0.0
        %2897 = vmatprep.subr.mxu0 0.0
        %2898 = vmatpush1.msra.mxu0 0.0
        %2899 = vmatprep.subr.mxu0 0.0
        %2900 = vmatpush1.msra.mxu0 0.0
        %2901 = vmatprep.subr.mxu0 0.0
        %2902 = vmatpush1.msra.mxu0 0.0
        %2903 = vmatprep.subr.mxu0 0.0
        %2904 = vmatpush1.msra.mxu0 0.0
        %2905 = vmatprep.subr.mxu0 0.0
        %2906 = vmatpush1.msra.mxu0 0.0
        %2907 = vmatprep.subr.mxu0 0.0
        %2908 = vmatpush1.msra.mxu0 0.0
        %2909 = vmatprep.subr.mxu0 0.0
        %2910 = vmatpush1.msra.mxu0 0.0
        %2911 = vmatprep.subr.mxu0 0.0
        %2912 = vmatpush1.msra.mxu0 0.0
        %2913 = vmatprep.subr.mxu0 0.0
        %2914 = vmatpush1.msra.mxu0 0.0
        %2915 = vmatprep.subr.mxu0 0.0
        %2916 = vmatpush1.msra.mxu0 0.0
        %2917 = vmatprep.subr.mxu0 0.0
        %2918 = vmatpush1.msra.mxu0 0.0
        %2919 = vmatprep.subr.mxu0 0.0
        %2920 = vmatpush1.msra.mxu0 0.0
        %2921 = vmatprep.mubr.f32.mxu0 0.0
        %2922 = vmatmul.mubr.f32.gmra.mrb[0].mxu0 %v2852
        %v2923 = vpop.f32.mrb[0].mxu0
        %v2924 = vadd.f32 0.0, %v2923
        %v2925 = vpop.f32.mrb[0].mxu0
        %2926 = vmatprep.mubr.f32.mxu0 0.0
        %2927 = vmatmul.mubr.f32.gmra.mrb[0].mxu0 %v2855
        %v2928 = vpop.f32.mrb[0].mxu0
        %v2929 = vadd.f32 0.0, %v2928
        %v2930 = vpop.f32.mrb[0].mxu0
        %2931 = vdwg.mxu0
        %v2933 = vsel %vm2850, %v2642, 0
        %v2936 = vsel %vm2850, %v2643, 0
        %2938 = vmatprep.subr.mxu0 0.0
        %2939 = vmatpush1.msra.mxu0 %v391
        %2940 = vmatprep.subr.mxu0 0.0
        %2941 = vmatpush1.msra.mxu0 0.0
        %2942 = vmatprep.subr.mxu0 0.0
        %2943 = vmatpush1.msra.mxu0 0.0
        %2944 = vmatprep.subr.mxu0 0.0
        %2945 = vmatpush1.msra.mxu0 0.0
        %2946 = vmatprep.subr.mxu0 0.0
        %2947 = vmatpush1.msra.mxu0 0.0
        %2948 = vmatprep.subr.mxu0 0.0
        %2949 = vmatpush1.msra.mxu0 0.0
        %2950 = vmatprep.subr.mxu0 0.0
        %2951 = vmatpush1.msra.mxu0 0.0
        %2952 = vmatprep.subr.mxu0 0.0
        %2953 = vmatpush1.msra.mxu0 0.0
        %2954 = vmatprep.subr.mxu0 0.0
        %2955 = vmatpush1.msra.mxu0 0.0
        %2956 = vmatprep.subr.mxu0 0.0
        %2957 = vmatpush1.msra.mxu0 0.0
        %2958 = vmatprep.subr.mxu0 0.0
        %2959 = vmatpush1.msra.mxu0 0.0
        %2960 = vmatprep.subr.mxu0 0.0
        %2961 = vmatpush1.msra.mxu0 0.0
        %2962 = vmatprep.subr.mxu0 0.0
        %2963 = vmatpush1.msra.mxu0 0.0
        %2964 = vmatprep.subr.mxu0 0.0
        %2965 = vmatpush1.msra.mxu0 0.0
        %2966 = vmatprep.subr.mxu0 0.0
        %2967 = vmatpush1.msra.mxu0 0.0
        %2968 = vmatprep.subr.mxu0 0.0
        %2969 = vmatpush1.msra.mxu0 0.0
        %2970 = vmatprep.subr.mxu0 0.0
        %2971 = vmatpush1.msra.mxu0 0.0
        %2972 = vmatprep.subr.mxu0 0.0
        %2973 = vmatpush1.msra.mxu0 0.0
        %2974 = vmatprep.subr.mxu0 0.0
        %2975 = vmatpush1.msra.mxu0 0.0
        %2976 = vmatprep.subr.mxu0 0.0
        %2977 = vmatpush1.msra.mxu0 0.0
        %2978 = vmatprep.subr.mxu0 0.0
        %2979 = vmatpush1.msra.mxu0 0.0
        %2980 = vmatprep.subr.mxu0 0.0
        %2981 = vmatpush1.msra.mxu0 0.0
        %2982 = vmatprep.subr.mxu0 0.0
        %2983 = vmatpush1.msra.mxu0 0.0
        %2984 = vmatprep.subr.mxu0 0.0
        %2985 = vmatpush1.msra.mxu0 0.0
        %2986 = vmatprep.subr.mxu0 0.0
        %2987 = vmatpush1.msra.mxu0 0.0
        %2988 = vmatprep.subr.mxu0 0.0
        %2989 = vmatpush1.msra.mxu0 0.0
        %2990 = vmatprep.subr.mxu0 0.0
        %2991 = vmatpush1.msra.mxu0 0.0
        %2992 = vmatprep.subr.mxu0 0.0
        %2993 = vmatpush1.msra.mxu0 0.0
        %2994 = vmatprep.subr.mxu0 0.0
        %2995 = vmatpush1.msra.mxu0 0.0
        %2996 = vmatprep.subr.mxu0 0.0
        %2997 = vmatpush1.msra.mxu0 0.0
        %2998 = vmatprep.subr.mxu0 0.0
        %2999 = vmatpush1.msra.mxu0 0.0
        %3000 = vmatprep.subr.mxu0 0.0
        %3001 = vmatpush1.msra.mxu0 0.0
        %3002 = vmatprep.mubr.f32.mxu0 0.0
        %3003 = vmatmul.mubr.f32.gmra.mrb[0].mxu0 %v2933
        %v3004 = vpop.f32.mrb[0].mxu0
        %v3005 = vadd.f32 0.0, %v3004
        %v3006 = vpop.f32.mrb[0].mxu0
        %3007 = vmatprep.mubr.f32.mxu0 0.0
        %3008 = vmatmul.mubr.f32.gmra.mrb[0].mxu0 %v2936
        %v3009 = vpop.f32.mrb[0].mxu0
        %v3010 = vadd.f32 0.0, %v3009
        %v3011 = vpop.f32.mrb[0].mxu0
        %3012 = vdwg.mxu0
        %v3014 = vsel %vm2850, %v2674, 0
        %v3017 = vsel %vm2850, %v2675, 0
        %3019 = vmatprep.subr.mxu0 0.0
        %3020 = vmatpush1.msra.mxu0 %v392
        %3021 = vmatprep.subr.mxu0 0.0
        %3022 = vmatpush1.msra.mxu0 0.0
        %3023 = vmatprep.subr.mxu0 0.0
        %3024 = vmatpush1.msra.mxu0 0.0
        %3025 = vmatprep.subr.mxu0 0.0
        %3026 = vmatpush1.msra.mxu0 0.0
        %3027 = vmatprep.subr.mxu0 0.0
        %3028 = vmatpush1.msra.mxu0 0.0
        %3029 = vmatprep.subr.mxu0 0.0
        %3030 = vmatpush1.msra.mxu0 0.0
        %3031 = vmatprep.subr.mxu0 0.0
        %3032 = vmatpush1.msra.mxu0 0.0
        %3033 = vmatprep.subr.mxu0 0.0
        %3034 = vmatpush1.msra.mxu0 0.0
        %3035 = vmatprep.subr.mxu0 0.0
        %3036 = vmatpush1.msra.mxu0 0.0
        %3037 = vmatprep.subr.mxu0 0.0
        %3038 = vmatpush1.msra.mxu0 0.0
        %3039 = vmatprep.subr.mxu0 0.0
        %3040 = vmatpush1.msra.mxu0 0.0
        %3041 = vmatprep.subr.mxu0 0.0
        %3042 = vmatpush1.msra.mxu0 0.0
        %3043 = vmatprep.subr.mxu0 0.0
        %3044 = vmatpush1.msra.mxu0 0.0
        %3045 = vmatprep.subr.mxu0 0.0
        %3046 = vmatpush1.msra.mxu0 0.0
        %3047 = vmatprep.subr.mxu0 0.0
        %3048 = vmatpush1.msra.mxu0 0.0
        %3049 = vmatprep.subr.mxu0 0.0
        %3050 = vmatpush1.msra.mxu0 0.0
        %3051 = vmatprep.subr.mxu0 0.0
        %3052 = vmatpush1.msra.mxu0 0.0
        %3053 = vmatprep.subr.mxu0 0.0
        %3054 = vmatpush1.msra.mxu0 0.0
        %3055 = vmatprep.subr.mxu0 0.0
        %3056 = vmatpush1.msra.mxu0 0.0
        %3057 = vmatprep.subr.mxu0 0.0
        %3058 = vmatpush1.msra.mxu0 0.0
        %3059 = vmatprep.subr.mxu0 0.0
        %3060 = vmatpush1.msra.mxu0 0.0
        %3061 = vmatprep.subr.mxu0 0.0
        %3062 = vmatpush1.msra.mxu0 0.0
        %3063 = vmatprep.subr.mxu0 0.0
        %3064 = vmatpush1.msra.mxu0 0.0
        %3065 = vmatprep.subr.mxu0 0.0
        %3066 = vmatpush1.msra.mxu0 0.0
        %3067 = vmatprep.subr.mxu0 0.0
        %3068 = vmatpush1.msra.mxu0 0.0
        %3069 = vmatprep.subr.mxu0 0.0
        %3070 = vmatpush1.msra.mxu0 0.0
        %3071 = vmatprep.subr.mxu0 0.0
        %3072 = vmatpush1.msra.mxu0 0.0
        %3073 = vmatprep.subr.mxu0 0.0
        %3074 = vmatpush1.msra.mxu0 0.0
        %3075 = vmatprep.subr.mxu0 0.0
        %3076 = vmatpush1.msra.mxu0 0.0
        %3077 = vmatprep.subr.mxu0 0.0
        %3078 = vmatpush1.msra.mxu0 0.0
        %3079 = vmatprep.subr.mxu0 0.0
        %3080 = vmatpush1.msra.mxu0 0.0
        %3081 = vmatprep.subr.mxu0 0.0
        %3082 = vmatpush1.msra.mxu0 0.0
        %3083 = vmatprep.mubr.f32.mxu0 0.0
        %3084 = vmatmul.mubr.f32.gmra.mrb[0].mxu0 %v3014
        %v3085 = vpop.f32.mrb[0].mxu0
        %v3086 = vadd.f32 0.0, %v3085
        %v3087 = vpop.f32.mrb[0].mxu0
        %3088 = vmatprep.mubr.f32.mxu0 0.0
        %3089 = vmatmul.mubr.f32.gmra.mrb[0].mxu0 %v3017
        %v3090 = vpop.f32.mrb[0].mxu0
        %v3091 = vadd.f32 0.0, %v3090
        %v3092 = vpop.f32.mrb[0].mxu0
        %3093 = vdwg.mxu0
        %v3095 = vsel %vm2850, %v2706, 0
        %v3098 = vsel %vm2850, %v2707, 0
        %3100 = vmatprep.subr.mxu0 0.0
        %3101 = vmatpush1.msra.mxu0 %v393
        %3102 = vmatprep.subr.mxu0 0.0
        %3103 = vmatpush1.msra.mxu0 0.0
        %3104 = vmatprep.subr.mxu0 0.0
        %3105 = vmatpush1.msra.mxu0 0.0
        %3106 = vmatprep.subr.mxu0 0.0
        %3107 = vmatpush1.msra.mxu0 0.0
        %3108 = vmatprep.subr.mxu0 0.0
        %3109 = vmatpush1.msra.mxu0 0.0
        %3110 = vmatprep.subr.mxu0 0.0
        %3111 = vmatpush1.msra.mxu0 0.0
        %3112 = vmatprep.subr.mxu0 0.0
        %3113 = vmatpush1.msra.mxu0 0.0
        %3114 = vmatprep.subr.mxu0 0.0
        %3115 = vmatpush1.msra.mxu0 0.0
        %3116 = vmatprep.subr.mxu0 0.0
        %3117 = vmatpush1.msra.mxu0 0.0
        %3118 = vmatprep.subr.mxu0 0.0
        %3119 = vmatpush1.msra.mxu0 0.0
        %3120 = vmatprep.subr.mxu0 0.0
        %3121 = vmatpush1.msra.mxu0 0.0
        %3122 = vmatprep.subr.mxu0 0.0
        %3123 = vmatpush1.msra.mxu0 0.0
        %3124 = vmatprep.subr.mxu0 0.0
        %3125 = vmatpush1.msra.mxu0 0.0
        %3126 = vmatprep.subr.mxu0 0.0
        %3127 = vmatpush1.msra.mxu0 0.0
        %3128 = vmatprep.subr.mxu0 0.0
        %3129 = vmatpush1.msra.mxu0 0.0
        %3130 = vmatprep.subr.mxu0 0.0
        %3131 = vmatpush1.msra.mxu0 0.0
        %3132 = vmatprep.subr.mxu0 0.0
        %3133 = vmatpush1.msra.mxu0 0.0
        %3134 = vmatprep.subr.mxu0 0.0
        %3135 = vmatpush1.msra.mxu0 0.0
        %3136 = vmatprep.subr.mxu0 0.0
        %3137 = vmatpush1.msra.mxu0 0.0
        %3138 = vmatprep.subr.mxu0 0.0
        %3139 = vmatpush1.msra.mxu0 0.0
        %3140 = vmatprep.subr.mxu0 0.0
        %3141 = vmatpush1.msra.mxu0 0.0
        %3142 = vmatprep.subr.mxu0 0.0
        %3143 = vmatpush1.msra.mxu0 0.0
        %3144 = vmatprep.subr.mxu0 0.0
        %3145 = vmatpush1.msra.mxu0 0.0
        %3146 = vmatprep.subr.mxu0 0.0
        %3147 = vmatpush1.msra.mxu0 0.0
        %3148 = vmatprep.subr.mxu0 0.0
        %3149 = vmatpush1.msra.mxu0 0.0
        %3150 = vmatprep.subr.mxu0 0.0
        %3151 = vmatpush1.msra.mxu0 0.0
        %3152 = vmatprep.subr.mxu0 0.0
        %3153 = vmatpush1.msra.mxu0 0.0
        %3154 = vmatprep.subr.mxu0 0.0
        %3155 = vmatpush1.msra.mxu0 0.0
        %3156 = vmatprep.subr.mxu0 0.0
        %3157 = vmatpush1.msra.mxu0 0.0
        %3158 = vmatprep.subr.mxu0 0.0
        %3159 = vmatpush1.msra.mxu0 0.0
        %3160 = vmatprep.subr.mxu0 0.0
        %3161 = vmatpush1.msra.mxu0 0.0
        %3162 = vmatprep.subr.mxu0 0.0
        %3163 = vmatpush1.msra.mxu0 0.0
        %3164 = vmatprep.mubr.f32.mxu0 0.0
        %3165 = vmatmul.mubr.f32.gmra.mrb[0].mxu0 %v3095
        %v3166 = vpop.f32.mrb[0].mxu0
        %v3167 = vadd.f32 0.0, %v3166
        %v3168 = vpop.f32.mrb[0].mxu0
        %3169 = vmatprep.mubr.f32.mxu0 0.0
        %3170 = vmatmul.mubr.f32.gmra.mrb[0].mxu0 %v3098
        %v3171 = vpop.f32.mrb[0].mxu0
        %v3172 = vadd.f32 0.0, %v3171
        %v3173 = vpop.f32.mrb[0].mxu0
        %3174 = vdwg.mxu0
        %v3176 = vsel %vm2850, %v2738, 0
        %v3179 = vsel %vm2850, %v2739, 0
        %3181 = vmatprep.subr.mxu0 0.0
        %3182 = vmatpush1.msra.mxu0 %v394
        %3183 = vmatprep.subr.mxu0 0.0
        %3184 = vmatpush1.msra.mxu0 0.0
        %3185 = vmatprep.subr.mxu0 0.0
        %3186 = vmatpush1.msra.mxu0 0.0
        %3187 = vmatprep.subr.mxu0 0.0
        %3188 = vmatpush1.msra.mxu0 0.0
        %3189 = vmatprep.subr.mxu0 0.0
        %3190 = vmatpush1.msra.mxu0 0.0
        %3191 = vmatprep.subr.mxu0 0.0
        %3192 = vmatpush1.msra.mxu0 0.0
        %3193 = vmatprep.subr.mxu0 0.0
        %3194 = vmatpush1.msra.mxu0 0.0
        %3195 = vmatprep.subr.mxu0 0.0
        %3196 = vmatpush1.msra.mxu0 0.0
        %3197 = vmatprep.subr.mxu0 0.0
        %3198 = vmatpush1.msra.mxu0 0.0
        %3199 = vmatprep.subr.mxu0 0.0
        %3200 = vmatpush1.msra.mxu0 0.0
        %3201 = vmatprep.subr.mxu0 0.0
        %3202 = vmatpush1.msra.mxu0 0.0
        %3203 = vmatprep.subr.mxu0 0.0
        %3204 = vmatpush1.msra.mxu0 0.0
        %3205 = vmatprep.subr.mxu0 0.0
        %3206 = vmatpush1.msra.mxu0 0.0
        %3207 = vmatprep.subr.mxu0 0.0
        %3208 = vmatpush1.msra.mxu0 0.0
        %3209 = vmatprep.subr.mxu0 0.0
        %3210 = vmatpush1.msra.mxu0 0.0
        %3211 = vmatprep.subr.mxu0 0.0
        %3212 = vmatpush1.msra.mxu0 0.0
        %3213 = vmatprep.subr.mxu0 0.0
        %3214 = vmatpush1.msra.mxu0 0.0
        %3215 = vmatprep.subr.mxu0 0.0
        %3216 = vmatpush1.msra.mxu0 0.0
        %3217 = vmatprep.subr.mxu0 0.0
        %3218 = vmatpush1.msra.mxu0 0.0
        %3219 = vmatprep.subr.mxu0 0.0
        %3220 = vmatpush1.msra.mxu0 0.0
        %3221 = vmatprep.subr.mxu0 0.0
        %3222 = vmatpush1.msra.mxu0 0.0
        %3223 = vmatprep.subr.mxu0 0.0
        %3224 = vmatpush1.msra.mxu0 0.0
        %3225 = vmatprep.subr.mxu0 0.0
        %3226 = vmatpush1.msra.mxu0 0.0
        %3227 = vmatprep.subr.mxu0 0.0
        %3228 = vmatpush1.msra.mxu0 0.0
        %3229 = vmatprep.subr.mxu0 0.0
        %3230 = vmatpush1.msra.mxu0 0.0
        %3231 = vmatprep.subr.mxu0 0.0
        %3232 = vmatpush1.msra.mxu0 0.0
        %3233 = vmatprep.subr.mxu0 0.0
        %3234 = vmatpush1.msra.mxu0 0.0
        %3235 = vmatprep.subr.mxu0 0.0
        %3236 = vmatpush1.msra.mxu0 0.0
        %3237 = vmatprep.subr.mxu0 0.0
        %3238 = vmatpush1.msra.mxu0 0.0
        %3239 = vmatprep.subr.mxu0 0.0
        %3240 = vmatpush1.msra.mxu0 0.0
        %3241 = vmatprep.subr.mxu0 0.0
        %3242 = vmatpush1.msra.mxu0 0.0
        %3243 = vmatprep.subr.mxu0 0.0
        %3244 = vmatpush1.msra.mxu0 0.0
        %3245 = vmatprep.mubr.f32.mxu0 0.0
        %3246 = vmatmul.mubr.f32.gmra.mrb[0].mxu0 %v3176
        %v3247 = vpop.f32.mrb[0].mxu0
        %v3248 = vadd.f32 0.0, %v3247
        %v3249 = vpop.f32.mrb[0].mxu0
        %3250 = vmatprep.mubr.f32.mxu0 0.0
        %3251 = vmatmul.mubr.f32.gmra.mrb[0].mxu0 %v3179
        %v3252 = vpop.f32.mrb[0].mxu0
        %v3253 = vadd.f32 0.0, %v3252
        %v3254 = vpop.f32.mrb[0].mxu0
        %3255 = vdwg.mxu0
        %v3257 = vsel %vm2850, %v2770, 0
        %v3260 = vsel %vm2850, %v2771, 0
        %3262 = vmatprep.subr.mxu0 0.0
        %3263 = vmatpush1.msra.mxu0 %v395
        %3264 = vmatprep.subr.mxu0 0.0
        %3265 = vmatpush1.msra.mxu0 0.0
        %3266 = vmatprep.subr.mxu0 0.0
        %3267 = vmatpush1.msra.mxu0 0.0
        %3268 = vmatprep.subr.mxu0 0.0
        %3269 = vmatpush1.msra.mxu0 0.0
        %3270 = vmatprep.subr.mxu0 0.0
        %3271 = vmatpush1.msra.mxu0 0.0
        %3272 = vmatprep.subr.mxu0 0.0
        %3273 = vmatpush1.msra.mxu0 0.0
        %3274 = vmatprep.subr.mxu0 0.0
        %3275 = vmatpush1.msra.mxu0 0.0
        %3276 = vmatprep.subr.mxu0 0.0
        %3277 = vmatpush1.msra.mxu0 0.0
        %3278 = vmatprep.subr.mxu0 0.0
        %3279 = vmatpush1.msra.mxu0 0.0
        %3280 = vmatprep.subr.mxu0 0.0
        %3281 = vmatpush1.msra.mxu0 0.0
        %3282 = vmatprep.subr.mxu0 0.0
        %3283 = vmatpush1.msra.mxu0 0.0
        %3284 = vmatprep.subr.mxu0 0.0
        %3285 = vmatpush1.msra.mxu0 0.0
        %3286 = vmatprep.subr.mxu0 0.0
        %3287 = vmatpush1.msra.mxu0 0.0
        %3288 = vmatprep.subr.mxu0 0.0
        %3289 = vmatpush1.msra.mxu0 0.0
        %3290 = vmatprep.subr.mxu0 0.0
        %3291 = vmatpush1.msra.mxu0 0.0
        %3292 = vmatprep.subr.mxu0 0.0
        %3293 = vmatpush1.msra.mxu0 0.0
        %3294 = vmatprep.subr.mxu0 0.0
        %3295 = vmatpush1.msra.mxu0 0.0
        %3296 = vmatprep.subr.mxu0 0.0
        %3297 = vmatpush1.msra.mxu0 0.0
        %3298 = vmatprep.subr.mxu0 0.0
        %3299 = vmatpush1.msra.mxu0 0.0
        %3300 = vmatprep.subr.mxu0 0.0
        %3301 = vmatpush1.msra.mxu0 0.0
        %3302 = vmatprep.subr.mxu0 0.0
        %3303 = vmatpush1.msra.mxu0 0.0
        %3304 = vmatprep.subr.mxu0 0.0
        %3305 = vmatpush1.msra.mxu0 0.0
        %3306 = vmatprep.subr.mxu0 0.0
        %3307 = vmatpush1.msra.mxu0 0.0
        %3308 = vmatprep.subr.mxu0 0.0
        %3309 = vmatpush1.msra.mxu0 0.0
        %3310 = vmatprep.subr.mxu0 0.0
        %3311 = vmatpush1.msra.mxu0 0.0
        %3312 = vmatprep.subr.mxu0 0.0
        %3313 = vmatpush1.msra.mxu0 0.0
        %3314 = vmatprep.subr.mxu0 0.0
        %3315 = vmatpush1.msra.mxu0 0.0
        %3316 = vmatprep.subr.mxu0 0.0
        %3317 = vmatpush1.msra.mxu0 0.0
        %3318 = vmatprep.subr.mxu0 0.0
        %3319 = vmatpush1.msra.mxu0 0.0
        %3320 = vmatprep.subr.mxu0 0.0
        %3321 = vmatpush1.msra.mxu0 0.0
        %3322 = vmatprep.subr.mxu0 0.0
        %3323 = vmatpush1.msra.mxu0 0.0
        %3324 = vmatprep.subr.mxu0 0.0
        %3325 = vmatpush1.msra.mxu0 0.0
        %3326 = vmatprep.mubr.f32.mxu0 0.0
        %3327 = vmatmul.mubr.f32.gmra.mrb[0].mxu0 %v3257
        %v3328 = vpop.f32.mrb[0].mxu0
        %v3329 = vadd.f32 0.0, %v3328
        %v3330 = vpop.f32.mrb[0].mxu0
        %3331 = vmatprep.mubr.f32.mxu0 0.0
        %3332 = vmatmul.mubr.f32.gmra.mrb[0].mxu0 %v3260
        %v3333 = vpop.f32.mrb[0].mxu0
        %v3334 = vadd.f32 0.0, %v3333
        %v3335 = vpop.f32.mrb[0].mxu0
        %3336 = vdwg.mxu0
        %v3338 = vsel %vm2850, %v2802, 0
        %v3341 = vsel %vm2850, %v2803, 0
        %3343 = vmatprep.subr.mxu0 0.0
        %3344 = vmatpush1.msra.mxu0 %v396
        %3345 = vmatprep.subr.mxu0 0.0
        %3346 = vmatpush1.msra.mxu0 0.0
        %3347 = vmatprep.subr.mxu0 0.0
        %3348 = vmatpush1.msra.mxu0 0.0
        %3349 = vmatprep.subr.mxu0 0.0
        %3350 = vmatpush1.msra.mxu0 0.0
        %3351 = vmatprep.subr.mxu0 0.0
        %3352 = vmatpush1.msra.mxu0 0.0
        %3353 = vmatprep.subr.mxu0 0.0
        %3354 = vmatpush1.msra.mxu0 0.0
        %3355 = vmatprep.subr.mxu0 0.0
        %3356 = vmatpush1.msra.mxu0 0.0
        %3357 = vmatprep.subr.mxu0 0.0
        %3358 = vmatpush1.msra.mxu0 0.0
        %3359 = vmatprep.subr.mxu0 0.0
        %3360 = vmatpush1.msra.mxu0 0.0
        %3361 = vmatprep.subr.mxu0 0.0
        %3362 = vmatpush1.msra.mxu0 0.0
        %3363 = vmatprep.subr.mxu0 0.0
        %3364 = vmatpush1.msra.mxu0 0.0
        %3365 = vmatprep.subr.mxu0 0.0
        %3366 = vmatpush1.msra.mxu0 0.0
        %3367 = vmatprep.subr.mxu0 0.0
        %3368 = vmatpush1.msra.mxu0 0.0
        %3369 = vmatprep.subr.mxu0 0.0
        %3370 = vmatpush1.msra.mxu0 0.0
        %3371 = vmatprep.subr.mxu0 0.0
        %3372 = vmatpush1.msra.mxu0 0.0
        %3373 = vmatprep.subr.mxu0 0.0
        %3374 = vmatpush1.msra.mxu0 0.0
        %3375 = vmatprep.subr.mxu0 0.0
        %3376 = vmatpush1.msra.mxu0 0.0
        %3377 = vmatprep.subr.mxu0 0.0
        %3378 = vmatpush1.msra.mxu0 0.0
        %3379 = vmatprep.subr.mxu0 0.0
        %3380 = vmatpush1.msra.mxu0 0.0
        %3381 = vmatprep.subr.mxu0 0.0
        %3382 = vmatpush1.msra.mxu0 0.0
        %3383 = vmatprep.subr.mxu0 0.0
        %3384 = vmatpush1.msra.mxu0 0.0
        %3385 = vmatprep.subr.mxu0 0.0
        %3386 = vmatpush1.msra.mxu0 0.0
        %3387 = vmatprep.subr.mxu0 0.0
        %3388 = vmatpush1.msra.mxu0 0.0
        %3389 = vmatprep.subr.mxu0 0.0
        %3390 = vmatpush1.msra.mxu0 0.0
        %3391 = vmatprep.subr.mxu0 0.0
        %3392 = vmatpush1.msra.mxu0 0.0
        %3393 = vmatprep.subr.mxu0 0.0
        %3394 = vmatpush1.msra.mxu0 0.0
        %3395 = vmatprep.subr.mxu0 0.0
        %3396 = vmatpush1.msra.mxu0 0.0
        %3397 = vmatprep.subr.mxu0 0.0
        %3398 = vmatpush1.msra.mxu0 0.0
        %3399 = vmatprep.subr.mxu0 0.0
        %3400 = vmatpush1.msra.mxu0 0.0
        %3401 = vmatprep.subr.mxu0 0.0
        %3402 = vmatpush1.msra.mxu0 0.0
        %3403 = vmatprep.subr.mxu0 0.0
        %3404 = vmatpush1.msra.mxu0 0.0
        %3405 = vmatprep.subr.mxu0 0.0
        %3406 = vmatpush1.msra.mxu0 0.0
        %3407 = vmatprep.mubr.f32.mxu0 0.0
        %3408 = vmatmul.mubr.f32.gmra.mrb[0].mxu0 %v3338
        %v3409 = vpop.f32.mrb[0].mxu0
        %v3410 = vadd.f32 0.0, %v3409
        %v3411 = vpop.f32.mrb[0].mxu0
        %3412 = vmatprep.mubr.f32.mxu0 0.0
        %3413 = vmatmul.mubr.f32.gmra.mrb[0].mxu0 %v3341
        %v3414 = vpop.f32.mrb[0].mxu0
        %v3415 = vadd.f32 0.0, %v3414
        %v3416 = vpop.f32.mrb[0].mxu0
        %3417 = vdwg.mxu0
        %v3419 = vsel %vm2850, %v2834, 0
        %v3422 = vsel %vm2850, %v2835, 0
        %3424 = vmatprep.subr.mxu0 0.0
        %3425 = vmatpush1.msra.mxu0 %v397
        %3426 = vmatprep.subr.mxu0 0.0
        %3427 = vmatpush1.msra.mxu0 0.0
        %3428 = vmatprep.subr.mxu0 0.0
        %3429 = vmatpush1.msra.mxu0 0.0
        %3430 = vmatprep.subr.mxu0 0.0
        %3431 = vmatpush1.msra.mxu0 0.0
        %3432 = vmatprep.subr.mxu0 0.0
        %3433 = vmatpush1.msra.mxu0 0.0
        %3434 = vmatprep.subr.mxu0 0.0
        %3435 = vmatpush1.msra.mxu0 0.0
        %3436 = vmatprep.subr.mxu0 0.0
        %3437 = vmatpush1.msra.mxu0 0.0
        %3438 = vmatprep.subr.mxu0 0.0
        %3439 = vmatpush1.msra.mxu0 0.0
        %3440 = vmatprep.subr.mxu0 0.0
        %3441 = vmatpush1.msra.mxu0 0.0
        %3442 = vmatprep.subr.mxu0 0.0
        %3443 = vmatpush1.msra.mxu0 0.0
        %3444 = vmatprep.subr.mxu0 0.0
        %3445 = vmatpush1.msra.mxu0 0.0
        %3446 = vmatprep.subr.mxu0 0.0
        %3447 = vmatpush1.msra.mxu0 0.0
        %3448 = vmatprep.subr.mxu0 0.0
        %3449 = vmatpush1.msra.mxu0 0.0
        %3450 = vmatprep.subr.mxu0 0.0
        %3451 = vmatpush1.msra.mxu0 0.0
        %3452 = vmatprep.subr.mxu0 0.0
        %3453 = vmatpush1.msra.mxu0 0.0
        %3454 = vmatprep.subr.mxu0 0.0
        %3455 = vmatpush1.msra.mxu0 0.0
        %3456 = vmatprep.subr.mxu0 0.0
        %3457 = vmatpush1.msra.mxu0 0.0
        %3458 = vmatprep.subr.mxu0 0.0
        %3459 = vmatpush1.msra.mxu0 0.0
        %3460 = vmatprep.subr.mxu0 0.0
        %3461 = vmatpush1.msra.mxu0 0.0
        %3462 = vmatprep.subr.mxu0 0.0
        %3463 = vmatpush1.msra.mxu0 0.0
        %3464 = vmatprep.subr.mxu0 0.0
        %3465 = vmatpush1.msra.mxu0 0.0
        %3466 = vmatprep.subr.mxu0 0.0
        %3467 = vmatpush1.msra.mxu0 0.0
        %3468 = vmatprep.subr.mxu0 0.0
        %3469 = vmatpush1.msra.mxu0 0.0
        %3470 = vmatprep.subr.mxu0 0.0
        %3471 = vmatpush1.msra.mxu0 0.0
        %3472 = vmatprep.subr.mxu0 0.0
        %3473 = vmatpush1.msra.mxu0 0.0
        %3474 = vmatprep.subr.mxu0 0.0
        %3475 = vmatpush1.msra.mxu0 0.0
        %3476 = vmatprep.subr.mxu0 0.0
        %3477 = vmatpush1.msra.mxu0 0.0
        %3478 = vmatprep.subr.mxu0 0.0
        %3479 = vmatpush1.msra.mxu0 0.0
        %3480 = vmatprep.subr.mxu0 0.0
        %3481 = vmatpush1.msra.mxu0 0.0
        %3482 = vmatprep.subr.mxu0 0.0
        %3483 = vmatpush1.msra.mxu0 0.0
        %3484 = vmatprep.subr.mxu0 0.0
        %3485 = vmatpush1.msra.mxu0 0.0
        %3486 = vmatprep.subr.mxu0 0.0
        %3487 = vmatpush1.msra.mxu0 0.0
        %3488 = vmatprep.mubr.f32.mxu0 0.0
        %3489 = vmatmul.mubr.f32.gmra.mrb[0].mxu0 %v3419
        %v3490 = vpop.f32.mrb[0].mxu0
        %v3491 = vadd.f32 0.0, %v3490
        %v3492 = vpop.f32.mrb[0].mxu0
        %3493 = vmatprep.mubr.f32.mxu0 0.0
        %3494 = vmatmul.mubr.f32.gmra.mrb[0].mxu0 %v3422
        %v3495 = vpop.f32.mrb[0].mxu0
        %v3496 = vadd.f32 0.0, %v3495
        %v3497 = vpop.f32.mrb[0].mxu0
        %3498 = vdwg.mxu0
        %v3499 = vcombine.low %v2924, %v3086
        %v3500 = vcombine.high %v2924, %v3086
        %v3502 = vunpack.c.l.s4 1983009808
        %v3503 = vunpack.c.0.s8 %v3502
        %v3504 = vlaneseq
        %v3505 = vshrl.u32 %v3504, 7
        %v3506 = vsub.s32 %v3503, %v3505
        %v3507 = vrot.slane %v3499, %v3506
        %v3509 = vunpack.c.l.s4 1983009808
        %v3510 = vunpack.c.0.s8 %v3509
        %v3511 = vlaneseq
        %v3512 = vshrl.u32 %v3511, 7
        %v3513 = vsub.s32 %v3510, %v3512
        %v3514 = vrot.slane %v3500, %v3513
        %v3515 = vcombine.low %v3005, %v3167
        %v3516 = vcombine.high %v3005, %v3167
        %v3518 = vunpack.c.l.s4 1983009808
        %v3519 = vunpack.c.0.s8 %v3518
        %v3520 = vlaneseq
        %v3521 = vshrl.u32 %v3520, 7
        %v3522 = vsub.s32 %v3519, %v3521
        %v3523 = vrot.slane %v3515, %v3522
        %v3525 = vunpack.c.l.s4 1983009808
        %v3526 = vunpack.c.0.s8 %v3525
        %v3527 = vlaneseq
        %v3528 = vshrl.u32 %v3527, 7
        %v3529 = vsub.s32 %v3526, %v3528
        %v3530 = vrot.slane %v3516, %v3529
        %v3531 = vcombine.low %v3248, %v3410
        %v3532 = vcombine.high %v3248, %v3410
        %v3534 = vunpack.c.l.s4 1983009808
        %v3535 = vunpack.c.0.s8 %v3534
        %v3536 = vlaneseq
        %v3537 = vshrl.u32 %v3536, 7
        %v3538 = vsub.s32 %v3535, %v3537
        %v3539 = vrot.slane %v3531, %v3538
        %v3541 = vunpack.c.l.s4 1983009808
        %v3542 = vunpack.c.0.s8 %v3541
        %v3543 = vlaneseq
        %v3544 = vshrl.u32 %v3543, 7
        %v3545 = vsub.s32 %v3542, %v3544
        %v3546 = vrot.slane %v3532, %v3545
        %v3547 = vcombine.low %v3329, %v3491
        %v3548 = vcombine.high %v3329, %v3491
        %v3550 = vunpack.c.l.s4 1983009808
        %v3551 = vunpack.c.0.s8 %v3550
        %v3552 = vlaneseq
        %v3553 = vshrl.u32 %v3552, 7
        %v3554 = vsub.s32 %v3551, %v3553
        %v3555 = vrot.slane %v3547, %v3554
        %v3557 = vunpack.c.l.s4 1983009808
        %v3558 = vunpack.c.0.s8 %v3557
        %v3559 = vlaneseq
        %v3560 = vshrl.u32 %v3559, 7
        %v3561 = vsub.s32 %v3558, %v3560
        %v3562 = vrot.slane %v3548, %v3561
        %v3563 = vcombine.low %v3507, %v3523
        %v3564 = vcombine.high %v3507, %v3523
        %v3566 = vunpack.c.l.s4 1934713408
        %v3567 = vunpack.c.0.s8 %v3566
        %v3568 = vlaneseq
        %v3569 = vshrl.u32 %v3568, 7
        %v3570 = vsub.s32 %v3567, %v3569
        %v3571 = vrot.slane %v3563, %v3570
        %v3573 = vunpack.c.l.s4 1934713408
        %v3574 = vunpack.c.0.s8 %v3573
        %v3575 = vlaneseq
        %v3576 = vshrl.u32 %v3575, 7
        %v3577 = vsub.s32 %v3574, %v3576
        %v3578 = vrot.slane %v3564, %v3577
        %v3579 = vcombine.low %v3514, %v3530
        %v3580 = vcombine.high %v3514, %v3530
        %v3582 = vunpack.c.l.s4 1934713408
        %v3583 = vunpack.c.0.s8 %v3582
        %v3584 = vlaneseq
        %v3585 = vshrl.u32 %v3584, 7
        %v3586 = vsub.s32 %v3583, %v3585
        %v3587 = vrot.slane %v3579, %v3586
        %v3589 = vunpack.c.l.s4 1934713408
        %v3590 = vunpack.c.0.s8 %v3589
        %v3591 = vlaneseq
        %v3592 = vshrl.u32 %v3591, 7
        %v3593 = vsub.s32 %v3590, %v3592
        %v3594 = vrot.slane %v3580, %v3593
        %v3595 = vcombine.low %v3539, %v3555
        %v3596 = vcombine.high %v3539, %v3555
        %v3598 = vunpack.c.l.s4 1934713408
        %v3599 = vunpack.c.0.s8 %v3598
        %v3600 = vlaneseq
        %v3601 = vshrl.u32 %v3600, 7
        %v3602 = vsub.s32 %v3599, %v3601
        %v3603 = vrot.slane %v3595, %v3602
        %v3605 = vunpack.c.l.s4 1934713408
        %v3606 = vunpack.c.0.s8 %v3605
        %v3607 = vlaneseq
        %v3608 = vshrl.u32 %v3607, 7
        %v3609 = vsub.s32 %v3606, %v3608
        %v3610 = vrot.slane %v3596, %v3609
        %v3611 = vcombine.low %v3546, %v3562
        %v3612 = vcombine.high %v3546, %v3562
        %v3614 = vunpack.c.l.s4 1934713408
        %v3615 = vunpack.c.0.s8 %v3614
        %v3616 = vlaneseq
        %v3617 = vshrl.u32 %v3616, 7
        %v3618 = vsub.s32 %v3615, %v3617
        %v3619 = vrot.slane %v3611, %v3618
        %v3621 = vunpack.c.l.s4 1934713408
        %v3622 = vunpack.c.0.s8 %v3621
        %v3623 = vlaneseq
        %v3624 = vshrl.u32 %v3623, 7
        %v3625 = vsub.s32 %v3622, %v3624
        %v3626 = vrot.slane %v3612, %v3625
        %v3627 = vcombine.low %v3571, %v3603
        %v3628 = vcombine.high %v3571, %v3603
        %v3629 = vcombine.low %v3578, %v3610
        %v3630 = vcombine.high %v3578, %v3610
        %v3631 = vcombine.low %v3587, %v3619
        %v3632 = vcombine.high %v3587, %v3619
        %v3633 = vcombine.low %v3594, %v3626
        %v3634 = vcombine.high %v3594, %v3626
        %v3635 = vcombine.low %v2929, %v3091
        %v3636 = vcombine.high %v2929, %v3091
        %v3638 = vunpack.c.l.s4 1983009808
        %v3639 = vunpack.c.0.s8 %v3638
        %v3640 = vlaneseq
        %v3641 = vshrl.u32 %v3640, 7
        %v3642 = vsub.s32 %v3639, %v3641
        %v3643 = vrot.slane %v3635, %v3642
        %v3645 = vunpack.c.l.s4 1983009808
        %v3646 = vunpack.c.0.s8 %v3645
        %v3647 = vlaneseq
        %v3648 = vshrl.u32 %v3647, 7
        %v3649 = vsub.s32 %v3646, %v3648
        %v3650 = vrot.slane %v3636, %v3649
        %v3651 = vcombine.low %v3010, %v3172
        %v3652 = vcombine.high %v3010, %v3172
        %v3654 = vunpack.c.l.s4 1983009808
        %v3655 = vunpack.c.0.s8 %v3654
        %v3656 = vlaneseq
        %v3657 = vshrl.u32 %v3656, 7
        %v3658 = vsub.s32 %v3655, %v3657
        %v3659 = vrot.slane %v3651, %v3658
        %v3661 = vunpack.c.l.s4 1983009808
        %v3662 = vunpack.c.0.s8 %v3661
        %v3663 = vlaneseq
        %v3664 = vshrl.u32 %v3663, 7
        %v3665 = vsub.s32 %v3662, %v3664
        %v3666 = vrot.slane %v3652, %v3665
        %v3667 = vcombine.low %v3253, %v3415
        %v3668 = vcombine.high %v3253, %v3415
        %v3670 = vunpack.c.l.s4 1983009808
        %v3671 = vunpack.c.0.s8 %v3670
        %v3672 = vlaneseq
        %v3673 = vshrl.u32 %v3672, 7
        %v3674 = vsub.s32 %v3671, %v3673
        %v3675 = vrot.slane %v3667, %v3674
        %v3677 = vunpack.c.l.s4 1983009808
        %v3678 = vunpack.c.0.s8 %v3677
        %v3679 = vlaneseq
        %v3680 = vshrl.u32 %v3679, 7
        %v3681 = vsub.s32 %v3678, %v3680
        %v3682 = vrot.slane %v3668, %v3681
        %v3683 = vcombine.low %v3334, %v3496
        %v3684 = vcombine.high %v3334, %v3496
        %v3686 = vunpack.c.l.s4 1983009808
        %v3687 = vunpack.c.0.s8 %v3686
        %v3688 = vlaneseq
        %v3689 = vshrl.u32 %v3688, 7
        %v3690 = vsub.s32 %v3687, %v3689
        %v3691 = vrot.slane %v3683, %v3690
        %v3693 = vunpack.c.l.s4 1983009808
        %v3694 = vunpack.c.0.s8 %v3693
        %v3695 = vlaneseq
        %v3696 = vshrl.u32 %v3695, 7
        %v3697 = vsub.s32 %v3694, %v3696
        %v3698 = vrot.slane %v3684, %v3697
        %v3699 = vcombine.low %v3643, %v3659
        %v3700 = vcombine.high %v3643, %v3659
        %v3702 = vunpack.c.l.s4 1934713408
        %v3703 = vunpack.c.0.s8 %v3702
        %v3704 = vlaneseq
        %v3705 = vshrl.u32 %v3704, 7
        %v3706 = vsub.s32 %v3703, %v3705
        %v3707 = vrot.slane %v3699, %v3706
        %v3709 = vunpack.c.l.s4 1934713408
        %v3710 = vunpack.c.0.s8 %v3709
        %v3711 = vlaneseq
        %v3712 = vshrl.u32 %v3711, 7
        %v3713 = vsub.s32 %v3710, %v3712
        %v3714 = vrot.slane %v3700, %v3713
        %v3715 = vcombine.low %v3650, %v3666
        %v3716 = vcombine.high %v3650, %v3666
        %v3718 = vunpack.c.l.s4 1934713408
        %v3719 = vunpack.c.0.s8 %v3718
        %v3720 = vlaneseq
        %v3721 = vshrl.u32 %v3720, 7
        %v3722 = vsub.s32 %v3719, %v3721
        %v3723 = vrot.slane %v3715, %v3722
        %v3725 = vunpack.c.l.s4 1934713408
        %v3726 = vunpack.c.0.s8 %v3725
        %v3727 = vlaneseq
        %v3728 = vshrl.u32 %v3727, 7
        %v3729 = vsub.s32 %v3726, %v3728
        %v3730 = vrot.slane %v3716, %v3729
        %v3731 = vcombine.low %v3675, %v3691
        %v3732 = vcombine.high %v3675, %v3691
        %v3734 = vunpack.c.l.s4 1934713408
        %v3735 = vunpack.c.0.s8 %v3734
        %v3736 = vlaneseq
        %v3737 = vshrl.u32 %v3736, 7
        %v3738 = vsub.s32 %v3735, %v3737
        %v3739 = vrot.slane %v3731, %v3738
        %v3741 = vunpack.c.l.s4 1934713408
        %v3742 = vunpack.c.0.s8 %v3741
        %v3743 = vlaneseq
        %v3744 = vshrl.u32 %v3743, 7
        %v3745 = vsub.s32 %v3742, %v3744
        %v3746 = vrot.slane %v3732, %v3745
        %v3747 = vcombine.low %v3682, %v3698
        %v3748 = vcombine.high %v3682, %v3698
        %v3750 = vunpack.c.l.s4 1934713408
        %v3751 = vunpack.c.0.s8 %v3750
        %v3752 = vlaneseq
        %v3753 = vshrl.u32 %v3752, 7
        %v3754 = vsub.s32 %v3751, %v3753
        %v3755 = vrot.slane %v3747, %v3754
        %v3757 = vunpack.c.l.s4 1934713408
        %v3758 = vunpack.c.0.s8 %v3757
        %v3759 = vlaneseq
        %v3760 = vshrl.u32 %v3759, 7
        %v3761 = vsub.s32 %v3758, %v3760
        %v3762 = vrot.slane %v3748, %v3761
        %v3763 = vcombine.low %v3707, %v3739
        %v3764 = vcombine.high %v3707, %v3739
        %v3765 = vcombine.low %v3714, %v3746
        %v3766 = vcombine.high %v3714, %v3746
        %v3767 = vcombine.low %v3723, %v3755
        %v3768 = vcombine.high %v3723, %v3755
        %v3769 = vcombine.low %v3730, %v3762
        %v3770 = vcombine.high %v3730, %v3762
        %3772 = vrot.lane.b32.xlu0 %v3628, 32
        %v3773 = vpop.permute.xlu0 %3772
        %3776 = vrot.lane.b32.xlu0 %v3629, 64
        %v3777 = vpop.permute.xlu0 %3776
        %3780 = vrot.lane.b32.xlu0 %v3630, 96
        %v3781 = vpop.permute.xlu0 %3780
        %3784 = vrot.lane.b32.xlu0 %v3632, 32
        %v3785 = vpop.permute.xlu0 %3784
        %3788 = vrot.lane.b32.xlu0 %v3633, 64
        %v3789 = vpop.permute.xlu0 %3788
        %3792 = vrot.lane.b32.xlu0 %v3634, 96
        %v3793 = vpop.permute.xlu0 %3792
        %3796 = vrot.lane.b32.xlu0 %v3764, 32
        %v3797 = vpop.permute.xlu0 %3796
        %3800 = vrot.lane.b32.xlu0 %v3765, 64
        %v3801 = vpop.permute.xlu0 %3800
        %3804 = vrot.lane.b32.xlu0 %v3766, 96
        %v3805 = vpop.permute.xlu0 %3804
        %3808 = vrot.lane.b32.xlu0 %v3768, 32
        %v3809 = vpop.permute.xlu0 %3808
        %3812 = vrot.lane.b32.xlu0 %v3769, 64
        %v3813 = vpop.permute.xlu0 %3812
        %3816 = vrot.lane.b32.xlu0 %v3770, 96
        %v3817 = vpop.permute.xlu0 %3816
        %v3819 = vsel %vm420, %v3627, %v3773
        %v3820 = vsel %vm2585, %v3819, %v3777
        %v3821 = vsel %vm2587, %v3820, %v3781
        %v3822 = vsel %vm420, %v3631, %v3785
        %v3823 = vsel %vm2585, %v3822, %v3789
        %v3824 = vsel %vm2587, %v3823, %v3793
        %v3825 = vsel %vm420, %v3763, %v3797
        %v3826 = vsel %vm2585, %v3825, %v3801
        %v3827 = vsel %vm2587, %v3826, %v3805
        %v3828 = vsel %vm420, %v3767, %v3809
        %v3829 = vsel %vm2585, %v3828, %v3813
        %v3830 = vsel %vm2587, %v3829, %v3817
        %3831 = vst [vmem:[%s377] sm:$0xff] %v3821
        %3832 = vst [vmem:[%s377 + $0x8] sm:$0xff] %v3824
        %3833 = vst [vmem:[%s377 + $0x10] sm:$0xff] %v3827
        %3834 = vst [vmem:[%s377 + $0x18] sm:$0xff] %v3830
        %s3835 = sand.u32 %s176, 1
        %s3836 = scalar_lea.sflag [#allocation4], %s3835
        %s3837 = sand.u32 %s176, 1
        %s3838 = smul.addr %s3837, 16
        %s3839 = scalar_lea.vmem [#allocation10], %s3838
        %s3840 = sand.u32 %s202, 1
        %s3841 = scalar_lea.sflag [#allocation12], %s3840
        %s3842 = sand.u32 %s202, 1
        %s3843 = smul.addr %s3842, 32
        %s3844 = scalar_lea.vmem [#allocation11], %s3843
        // Predicated region
        $region61: #{tpu_custom_call.1} parent=43 // pred_check
          %p3845 = pneg %p186
        $region62: #{tpu_custom_call.1} parent=43 // pred_check_branch
          %3847 = sbr.rel (%p3845) target = $region64
        $region63: #{tpu_custom_call.1} parent=43 // pred_region
          %s3849 = ssub.s32 256, 256
          %3850 = vsyncadd %s3836, %s3849
          %s3851 = smul.addr %s32, 2
          %s3852 = smul.addr %s3851, 128
          %s3853 = scalar_lea.hbm %s6, %s3852
          %s3855 = sshll.u32 %s3839, 4
          %s3856 = int_to_ptr.vmem [resolvable:$true] %s3855
          %3858 = dma.vmem_to_hbm [thread:$0]  %s3856, 256, %s3853, %s3836
        $region64: #{tpu_custom_call.1} parent=43 // pred_fallthru
          _
        // Predicated region
        $region65: #{tpu_custom_call.1} parent=43 // pred_check
          %p3859 = pneg %p212
        $region66: #{tpu_custom_call.1} parent=43 // pred_check_branch
          %3861 = sbr.rel (%p3859) target = $region68
        $region67: #{tpu_custom_call.1} parent=43 // pred_region
          %s3863 = ssub.s32 512, 512
          %3864 = vsyncadd %s3841, %s3863
          %s3865 = smul.addr %s32, 4
          %s3866 = smul.addr %s3865, 128
          %s3867 = scalar_lea.hbm %s7, %s3866
          %s3869 = sshll.u32 %s3844, 4
          %s3870 = int_to_ptr.vmem [resolvable:$true] %s3869
          %3872 = dma.vmem_to_hbm [thread:$0]  %s3870, 512, %s3867, %s3841
        $region68: #{tpu_custom_call.1} parent=43 // pred_fallthru
          _
      $region44: #{tpu_custom_call.1} parent=5 // pred_fallthru
        _
      %p3873 = scmp.le.s32.totalorder 2, %s27
      // Predicated region
      $region69: #{tpu_custom_call.1} parent=5 // pred_check
        %p3874 = pneg %p3873
      $region70: #{tpu_custom_call.1} parent=5 // pred_check_branch
        %3876 = sbr.rel (%p3874) target = $region72
      $region71: #{tpu_custom_call.1} parent=5 // pred_region
        %s3877 = ssub.s32 %s27, 2
        // Predicated region
        $region73: #{tpu_custom_call.1} parent=71 // pred_check
          %p3878 = pneg %p192
        $region74: #{tpu_custom_call.1} parent=71 // pred_check_branch
          %3880 = sbr.rel (%p3878) target = $region76
        $region75: #{tpu_custom_call.1} parent=71 // pred_region
          %s3881 = sand.u32 %s177, 1
          %s3882 = scalar_lea.sflag [#allocation4], %s3881
          %s3883 = sand.u32 %s177, 1
          %s3884 = smul.addr %s3883, 16
          %s3885 = scalar_lea.vmem [#allocation10], %s3884
          %3886 = dma.done %s3882, 256
        $region76: #{tpu_custom_call.1} parent=71 // pred_fallthru
          _
        // Predicated region
        $region77: #{tpu_custom_call.1} parent=71 // pred_check
          %p3887 = pneg %p218
        $region78: #{tpu_custom_call.1} parent=71 // pred_check_branch
          %3889 = sbr.rel (%p3887) target = $region80
        $region79: #{tpu_custom_call.1} parent=71 // pred_region
          %s3890 = sand.u32 %s203, 1
          %s3891 = scalar_lea.sflag [#allocation12], %s3890
          %s3892 = sand.u32 %s203, 1
          %s3893 = smul.addr %s3892, 32
          %s3894 = scalar_lea.vmem [#allocation11], %s3893
          %3895 = dma.done %s3891, 512
        $region80: #{tpu_custom_call.1} parent=71 // pred_fallthru
          _
      $region72: #{tpu_custom_call.1} parent=5 // pred_fallthru
        _
    $region6: #{tpu_custom_call.1} parent=1 // loop_footer
      %s31 = sadd.s32 1, %s27
    $region7: #{tpu_custom_call.1} parent=1 // loop_footer_branch
      %26 = sbr.rel target = $region3
    $region8: #{tpu_custom_call.1} parent=1 // loop_exit
      _
    %3896 = vsyncpa [#allocation3], 1
    %s3897 = scalar_lea.sflag [#allocation3], 1
    %3898 = vsyncpa %s3897, 1
    %3899 = vsyncpa [#allocation6], 1
    %s3900 = scalar_lea.sflag [#allocation6], 1
    %3901 = vsyncpa %s3900, 1
    %3902 = vsyncpa [#allocation9], 1
    %3903 = vsyncpa [#allocation4], 1
    %s3904 = scalar_lea.sflag [#allocation4], 1
    %3905 = vsyncpa %s3904, 1
    %3906 = vsyncpa [#allocation12], 1
    %s3907 = scalar_lea.sflag [#allocation12], 1
    %3908 = vsyncpa %s3907, 1

// kernel: tpu_custom_call.1
$region0: #{tpu_custom_call.1}
  #allocation0 [shape = 'u32[]', space=smem, size = 0x4, offset = 0x4, fixed_abs, tag = 'smem constant byte address 0x4 - core index']
  #allocation1 [shape = 'u32[144,128]{1,0:T(1,128)}', space=vmem, size = 0x12000, scoped, tag = 'internal scratch']
  %s0 = inlined_call_operand.hbm [shape: f32[16,8,32], index: 0, kind: input, shape index: {}]
  %s1 = inlined_call_operand.hbm [shape: f32[16,16,32], index: 1, kind: input, shape index: {}]
  %s2 = inlined_call_operand.hbm [shape: f32[32,32], index: 2, kind: input, shape index: {}]
  %s3 = inlined_call_operand.vmem [shape: f32[1,32], index: 3, kind: input, shape index: {}]
  %s4 = inlined_call_operand.hbm [shape: f32[32,32], index: 4, kind: input, shape index: {}]
  %s5 = inlined_call_operand.vmem [shape: f32[1,32], index: 5, kind: input, shape index: {}]
  %s6 = inlined_call_operand.hbm [shape: f32[16,8,32], index: 6, kind: output, shape index: {0}]
  %s7 = inlined_call_operand.hbm [shape: f32[16,16,32], index: 7, kind: output, shape index: {1}]
  %8 = xla_tuple %s6, %s7
  %s9 = sld [smem:[#allocation0]]
  $region81: #{tpu_custom_call.1} parent=0
    _
  %s11 = ssub.s32 1, %s9
  %s12 = scalar_select 0, %s11, %s9
  $region1: #{tpu_custom_call.1} parent=0
    #allocation2 [shape = 'u8[65536]{0}', space=vmem, size = 0x10000, scoped, tag = 'input window, operand 0']
    #allocation3 [shape = 's32[2]{0}', space=sflag, size = 0x8, scoped, tag = 'scoped memory for tpu_custom_call.1']
    #allocation4 [shape = 's32[2]{0}', space=sflag, size = 0x8, scoped, tag = 'scoped memory for tpu_custom_call.1']
    #allocation5 [shape = 'u8[131072]{0}', space=vmem, size = 0x20000, scoped, tag = 'input window, operand 1']
    #allocation6 [shape = 's32[2]{0}', space=sflag, size = 0x8, scoped, tag = 'scoped memory for tpu_custom_call.1']
    #allocation7 [shape = 'u8[16384]{0}', space=vmem, size = 0x4000, scoped, tag = 'input window, operand 2, single buffered']
    #allocation8 [shape = 'u8[16384]{0}', space=vmem, size = 0x4000, scoped, tag = 'input window, operand 4, single buffered']
    #allocation9 [shape = 's32[1]{0}', space=sflag, size = 0x4, scoped, tag = 'scoped memory for tpu_custom_call.1']
    #allocation10 [shape = 'u8[65536]{0}', space=vmem, size = 0x10000, scoped, tag = 'output window, operand 0']
    #allocation11 [shape = 'u8[131072]{0}', space=vmem, size = 0x20000, scoped, tag = 'output window, operand 1']
    #allocation12 [shape = 's32[2]{0}', space=sflag, size = 0x8, scoped, tag = 'scoped memory for tpu_custom_call.1']
    %13 = vsyncpa [#allocation3], 0
    %s14 = scalar_lea.sflag [#allocation3], 1
    %15 = vsyncpa %s14, 0
    %16 = vsyncpa [#allocation6], 0
    %s17 = scalar_lea.sflag [#allocation6], 1
    %18 = vsyncpa %s17, 0
    %19 = vsyncpa [#allocation9], 0
    %20 = vsyncpa [#allocation4], 0
    %s21 = scalar_lea.sflag [#allocation4], 1
    %22 = vsyncpa %s21, 0
    %23 = vsyncpa [#allocation12], 0
    %s24 = scalar_lea.sflag [#allocation12], 1
    %25 = vsyncpa %s24, 0
    loop: start=0, step=1, limit=4
    $region2: #{tpu_custom_call.1} parent=1 // loop_pre_header
      _
    $region3: #{tpu_custom_call.1} parent=1 // loop_header
      %s27 = sphi 0, %s31
      %p28 = scmp.ge.s32.totalorder %s27, 4
      %s37 = sphi 0, %s39
      %s40 = sphi 0, %s37
      %s41 = sphi 0, %s40
      %s57 = sphi 0, %s41
      %s63 = sphi 0, %s65
      %s66 = sphi 0, %s63
      %s67 = sphi 0, %s66
      %s83 = sphi 0, %s67
      %s87 = sphi 0, %s87
      %s89 = sphi 0, %s87
      %s90 = sphi 0, %s89
      %s104 = sphi 0, %s90
      %s108 = sphi 0, %s108
      %s110 = sphi 0, %s108
      %s111 = sphi 0, %s110
      %s125 = sphi 0, %s111
      %s129 = sphi 0, %s129
      %s131 = sphi 0, %s129
      %s132 = sphi 0, %s131
      %s146 = sphi 0, %s132
      %s150 = sphi 0, %s150
      %s152 = sphi 0, %s150
      %s153 = sphi 0, %s152
      %s167 = sphi 0, %s153
      %s173 = sphi 0, %s175
      %s176 = sphi 0, %s173
      %s177 = sphi 0, %s176
      %s193 = sphi 0, %s177
      %s199 = sphi 0, %s201
      %s202 = sphi 0, %s199
      %s203 = sphi 0, %s202
      %s219 = sphi 0, %s203
    $region4: #{tpu_custom_call.1} parent=1 // loop_header_branch
      %30 = sbr.rel (%p28) target = $region8
    $region5: #{tpu_custom_call.1} parent=1 // loop_body
      %s32 = ssub.s32 %s27, 1
      %s33 = ssub.s32 %s27, 2
      %s34 = sadd.s32 %s27, 1
      %s35 = ssub.s32 %s27, %s34
      %p36 = scmp.eq.s32.totalorder %s35, 0
      %s38 = sadd.s32 %s37, 1
      %s39 = scalar_select %p36, %s37, %s38
      %p42 = pneg %p36
      %p43 = scmp.eq.s32.totalorder %s27, 1
      %p44 = por %p42, %p43
      %p45 = scmp.ne.s32.totalorder %s37, %s40
      %p46 = scmp.eq.s32.totalorder %s27, 0
      %p47 = por %p45, %p46
      %p48 = scmp.ne.s32.totalorder %s37, %s40
      %p49 = scmp.eq.s32.totalorder %s32, 1
      %p50 = por %p48, %p49
      %p51 = scmp.ne.s32.totalorder %s40, %s41
      %p52 = scmp.eq.s32.totalorder %s32, 0
      %p53 = por %p51, %p52
      %p54 = scmp.ne.s32.totalorder %s40, %s41
      %p55 = scmp.eq.s32.totalorder %s33, 1
      %p56 = por %p54, %p55
      %p58 = scmp.ne.s32.totalorder %s41, %s57
      %p59 = scmp.eq.s32.totalorder %s33, 0
      %p60 = por %p58, %p59
      %s61 = ssub.s32 %s27, %s34
      %p62 = scmp.eq.s32.totalorder %s61, 0
      %s64 = sadd.s32 %s63, 1
      %s65 = scalar_select %p62, %s63, %s64
      %p68 = pneg %p62
      %p69 = scmp.eq.s32.totalorder %s27, 1
      %p70 = por %p68, %p69
      %p71 = scmp.ne.s32.totalorder %s63, %s66
      %p72 = scmp.eq.s32.totalorder %s27, 0
      %p73 = por %p71, %p72
      %p74 = scmp.ne.s32.totalorder %s63, %s66
      %p75 = scmp.eq.s32.totalorder %s32, 1
      %p76 = por %p74, %p75
      %p77 = scmp.ne.s32.totalorder %s66, %s67
      %p78 = scmp.eq.s32.totalorder %s32, 0
      %p79 = por %p77, %p78
      %p80 = scmp.ne.s32.totalorder %s66, %s67
      %p81 = scmp.eq.s32.totalorder %s33, 1
      %p82 = por %p80, %p81
      %p84 = scmp.ne.s32.totalorder %s67, %s83
      %p85 = scmp.eq.s32.totalorder %s33, 0
      %p86 = por %p84, %p85
      %s88 = sadd.s32 %s87, 1
      %p91 = scmp.eq.s32.totalorder %s27, 1
      %p92 = scmp.ne.s32.totalorder %s87, %s89
      %p93 = scmp.eq.s32.totalorder %s27, 0
      %p94 = por %p92, %p93
      %p95 = scmp.ne.s32.totalorder %s87, %s89
      %p96 = scmp.eq.s32.totalorder %s32, 1
      %p97 = por %p95, %p96
      %p98 = scmp.ne.s32.totalorder %s89, %s90
      %p99 = scmp.eq.s32.totalorder %s32, 0
      %p100 = por %p98, %p99
      %p101 = scmp.ne.s32.totalorder %s89, %s90
      %p102 = scmp.eq.s32.totalorder %s33, 1
      %p103 = por %p101, %p102
      %p105 = scmp.ne.s32.totalorder %s90, %s104
      %p106 = scmp.eq.s32.totalorder %s33, 0
      %p107 = por %p105, %p106
      %s109 = sadd.s32 %s108, 1
      %p112 = scmp.eq.s32.totalorder %s27, 1
      %p113 = scmp.ne.s32.totalorder %s108, %s110
      %p114 = scmp.eq.s32.totalorder %s27, 0
      %p115 = por %p113, %p114
      %p116 = scmp.ne.s32.totalorder %s108, %s110
      %p117 = scmp.eq.s32.totalorder %s32, 1
      %p118 = por %p116, %p117
      %p119 = scmp.ne.s32.totalorder %s110, %s111
      %p120 = scmp.eq.s32.totalorder %s32, 0
      %p121 = por %p119, %p120
      %p122 = scmp.ne.s32.totalorder %s110, %s111
      %p123 = scmp.eq.s32.totalorder %s33, 1
      %p124 = por %p122, %p123
      %p126 = scmp.ne.s32.totalorder %s111, %s125
      %p127 = scmp.eq.s32.totalorder %s33, 0
      %p128 = por %p126, %p127
      %s130 = sadd.s32 %s129, 1
      %p133 = scmp.eq.s32.totalorder %s27, 1
      %p134 = scmp.ne.s32.totalorder %s129, %s131
      %p135 = scmp.eq.s32.totalorder %s27, 0
      %p136 = por %p134, %p135
      %p137 = scmp.ne.s32.totalorder %s129, %s131
      %p138 = scmp.eq.s32.totalorder %s32, 1
      %p139 = por %p137, %p138
      %p140 = scmp.ne.s32.totalorder %s131, %s132
      %p141 = scmp.eq.s32.totalorder %s32, 0
      %p142 = por %p140, %p141
      %p143 = scmp.ne.s32.totalorder %s131, %s132
      %p144 = scmp.eq.s32.totalorder %s33, 1
      %p145 = por %p143, %p144
      %p147 = scmp.ne.s32.totalorder %s132, %s146
      %p148 = scmp.eq.s32.totalorder %s33, 0
      %p149 = por %p147, %p148
      %s151 = sadd.s32 %s150, 1
      %p154 = scmp.eq.s32.totalorder %s27, 1
      %p155 = scmp.ne.s32.totalorder %s150, %s152
      %p156 = scmp.eq.s32.totalorder %s27, 0
      %p157 = por %p155, %p156
      %p158 = scmp.ne.s32.totalorder %s150, %s152
      %p159 = scmp.eq.s32.totalorder %s32, 1
      %p160 = por %p158, %p159
      %p161 = scmp.ne.s32.totalorder %s152, %s153
      %p162 = scmp.eq.s32.totalorder %s32, 0
      %p163 = por %p161, %p162
      %p164 = scmp.ne.s32.totalorder %s152, %s153
      %p165 = scmp.eq.s32.totalorder %s33, 1
      %p166 = por %p164, %p165
      %p168 = scmp.ne.s32.totalorder %s153, %s167
      %p169 = scmp.eq.s32.totalorder %s33, 0
      %p170 = por %p168, %p169
      %s171 = ssub.s32 %s27, %s34
      %p172 = scmp.eq.s32.totalorder %s171, 0
      %s174 = sadd.s32 %s173, 1
      %s175 = scalar_select %p172, %s173, %s174
      %p178 = pneg %p172
      %p179 = scmp.eq.s32.totalorder %s27, 1
      %p180 = por %p178, %p179
      %p181 = scmp.ne.s32.totalorder %s173, %s176
      %p182 = scmp.eq.s32.totalorder %s27, 0
      %p183 = por %p181, %p182
      %p184 = scmp.ne.s32.totalorder %s173, %s176
      %p185 = scmp.eq.s32.totalorder %s32, 1
      %p186 = por %p184, %p185
      %p187 = scmp.ne.s32.totalorder %s176, %s177
      %p188 = scmp.eq.s32.totalorder %s32, 0
      %p189 = por %p187, %p188
      %p190 = scmp.ne.s32.totalorder %s176, %s177
      %p191 = scmp.eq.s32.totalorder %s33, 1
      %p192 = por %p190, %p191
      %p194 = scmp.ne.s32.totalorder %s177, %s193
      %p195 = scmp.eq.s32.totalorder %s33, 0
      %p196 = por %p194, %p195
      %s197 = ssub.s32 %s27, %s34
      %p198 = scmp.eq.s32.totalorder %s197, 0
      %s200 = sadd.s32 %s199, 1
      %s201 = scalar_select %p198, %s199, %s200
      %p204 = pneg %p198
      %p205 = scmp.eq.s32.totalorder %s27, 1
      %p206 = por %p204, %p205
      %p207 = scmp.ne.s32.totalorder %s199, %s202
      %p208 = scmp.eq.s32.totalorder %s27, 0
      %p209 = por %p207, %p208
      %p210 = scmp.ne.s32.totalorder %s199, %s202
      %p211 = scmp.eq.s32.totalorder %s32, 1
      %p212 = por %p210, %p211
      %p213 = scmp.ne.s32.totalorder %s202, %s203
      %p214 = scmp.eq.s32.totalorder %s32, 0
      %p215 = por %p213, %p214
      %p216 = scmp.ne.s32.totalorder %s202, %s203
      %p217 = scmp.eq.s32.totalorder %s33, 1
      %p218 = por %p216, %p217
      %p220 = scmp.ne.s32.totalorder %s203, %s219
      %p221 = scmp.eq.s32.totalorder %s33, 0
      %p222 = por %p220, %p221
      %p223 = scmp.le.s32.totalorder 1, %s27
      %p224 = scmp.lt.s32.totalorder %s27, 3
      %p225 = pnand %p223, %p224
      %p226 = pneg %p225
      // Predicated region
      $region9: #{tpu_custom_call.1} parent=5 // pred_check
        _
      $region10: #{tpu_custom_call.1} parent=5 // pred_check_branch
        %228 = sbr.rel (%p225) target = $region12
      $region11: #{tpu_custom_call.1} parent=5 // pred_region
        %s229 = ssub.s32 %s27, 1
        // Predicated region
        $region13: #{tpu_custom_call.1} parent=11 // pred_check
          %p230 = pneg %p100
        $region14: #{tpu_custom_call.1} parent=11 // pred_check_branch
          %232 = sbr.rel (%p230) target = $region16
        $region15: #{tpu_custom_call.1} parent=11 // pred_region
          %s234 = ssub.s32 512, 512
          %235 = vsyncadd [#allocation6], %s234
          %s236 = sshll.u32 [#allocation7], 4
          %s237 = int_to_ptr.vmem [resolvable:$true] %s236
          %242 = dma.hbm_to_vmem [thread:$0]  %s2, 512, %s237, [#allocation6], 128, 128, 8
        $region16: #{tpu_custom_call.1} parent=11 // pred_fallthru
          _
        // Predicated region
        $region17: #{tpu_custom_call.1} parent=11 // pred_check
          %p243 = pneg %p121
        $region18: #{tpu_custom_call.1} parent=11 // pred_check_branch
          %245 = sbr.rel (%p243) target = $region20
        $region19: #{tpu_custom_call.1} parent=11 // pred_region
          _
        $region20: #{tpu_custom_call.1} parent=11 // pred_fallthru
          _
        // Predicated region
        $region21: #{tpu_custom_call.1} parent=11 // pred_check
          %p246 = pneg %p142
        $region22: #{tpu_custom_call.1} parent=11 // pred_check_branch
          %248 = sbr.rel (%p246) target = $region24
        $region23: #{tpu_custom_call.1} parent=11 // pred_region
          %s250 = ssub.s32 512, 512
          %251 = vsyncadd [#allocation9], %s250
          %s252 = sshll.u32 [#allocation8], 4
          %s253 = int_to_ptr.vmem [resolvable:$true] %s252
          %258 = dma.hbm_to_vmem [thread:$0]  %s4, 512, %s253, [#allocation9], 128, 128, 8
        $region24: #{tpu_custom_call.1} parent=11 // pred_fallthru
          _
        // Predicated region
        $region25: #{tpu_custom_call.1} parent=11 // pred_check
          %p259 = pneg %p163
        $region26: #{tpu_custom_call.1} parent=11 // pred_check_branch
          %261 = sbr.rel (%p259) target = $region28
        $region27: #{tpu_custom_call.1} parent=11 // pred_region
          _
        $region28: #{tpu_custom_call.1} parent=11 // pred_fallthru
          _
      $region12: #{tpu_custom_call.1} parent=5 // pred_fallthru
        _
      %p262 = scmp.lt.s32.totalorder %s27, 2
      // Predicated region
      $region29: #{tpu_custom_call.1} parent=5 // pred_check
        %p263 = pneg %p262
      $region30: #{tpu_custom_call.1} parent=5 // pred_check_branch
        %265 = sbr.rel (%p263) target = $region32
      $region31: #{tpu_custom_call.1} parent=5 // pred_region
        // Predicated region
        $region33: #{tpu_custom_call.1} parent=31 // pred_check
          %p266 = pneg %p47
        $region34: #{tpu_custom_call.1} parent=31 // pred_check_branch
          %268 = sbr.rel (%p266) target = $region36
        $region35: #{tpu_custom_call.1} parent=31 // pred_region
          %s269 = sand.u32 %s37, 1
          %s270 = scalar_lea.sflag [#allocation3], %s269
          %s271 = sand.u32 %s37, 1
          %s272 = smul.addr %s271, 64
          %s273 = scalar_lea.vmem [#allocation2], %s272
          %s274 = smul.u32 8, %s27
          %s276 = ssub.s32 1024, 1024
          %277 = vsyncadd %s270, %s276
          %s278 = smul.addr %s274, 128
          %s279 = scalar_lea.hbm %s0, %s278
          %s280 = sshll.u32 %s273, 4
          %s281 = int_to_ptr.vmem [resolvable:$true] %s280
          %286 = dma.hbm_to_vmem [thread:$0]  %s279, 1024, %s281, %s270, 128, 128, 8
        $region36: #{tpu_custom_call.1} parent=31 // pred_fallthru
          _
        // Predicated region
        $region37: #{tpu_custom_call.1} parent=31 // pred_check
          %p287 = pneg %p73
        $region38: #{tpu_custom_call.1} parent=31 // pred_check_branch
          %289 = sbr.rel (%p287) target = $region40
        $region39: #{tpu_custom_call.1} parent=31 // pred_region
          %s290 = sand.u32 %s27, 1
          %s291 = scalar_lea.sflag [#allocation6], %s290
          %s292 = sand.u32 %s63, 1
          %s293 = smul.addr %s292, 128
          %s294 = scalar_lea.vmem [#allocation5], %s293
          %s295 = smul.u32 8, %s27
          %s297 = ssub.s32 2048, 2048
          %298 = vsyncadd %s291, %s297
          %s299 = smul.addr %s295, 2
          %s300 = smul.addr %s299, 128
          %s301 = scalar_lea.hbm %s1, %s300
          %s302 = sshll.u32 %s294, 4
          %s303 = int_to_ptr.vmem [resolvable:$true] %s302
          %308 = dma.hbm_to_vmem [thread:$0]  %s301, 2048, %s303, %s291, 128, 128, 8
        $region40: #{tpu_custom_call.1} parent=31 // pred_fallthru
          _
      $region32: #{tpu_custom_call.1} parent=5 // pred_fallthru
        _
      %p309 = scmp.le.s32.totalorder 1, %s27
      %p310 = scmp.lt.s32.totalorder %s27, 3
      %p311 = pnand %p309, %p310
      %p312 = pneg %p311
      // Predicated region
      $region41: #{tpu_custom_call.1} parent=5 // pred_check
        _
      $region42: #{tpu_custom_call.1} parent=5 // pred_check_branch
        %314 = sbr.rel (%p311) target = $region44
      $region43: #{tpu_custom_call.1} parent=5 // pred_region
        %s315 = ssub.s32 %s27, 1
        %s316 = sand.u32 %s40, 1
        %s317 = scalar_lea.sflag [#allocation3], %s316
        %s318 = sand.u32 %s40, 1
        %s319 = smul.addr %s318, 64
        %s320 = scalar_lea.vmem [#allocation2], %s319
        // Predicated region
        $region45: #{tpu_custom_call.1} parent=43 // pred_check
          %p321 = pneg %p53
        $region46: #{tpu_custom_call.1} parent=43 // pred_check_branch
          %323 = sbr.rel (%p321) target = $region48
        $region47: #{tpu_custom_call.1} parent=43 // pred_region
          %324 = dma.done %s317, 1024
        $region48: #{tpu_custom_call.1} parent=43 // pred_fallthru
          _
        %s325 = sand.u32 %s32, 1
        %s326 = scalar_lea.sflag [#allocation6], %s325
        %s327 = sand.u32 %s66, 1
        %s328 = smul.addr %s327, 128
        %s329 = scalar_lea.vmem [#allocation5], %s328
        // Predicated region
        $region49: #{tpu_custom_call.1} parent=43 // pred_check
          %p330 = pneg %p79
        $region50: #{tpu_custom_call.1} parent=43 // pred_check_branch
          %332 = sbr.rel (%p330) target = $region52
        $region51: #{tpu_custom_call.1} parent=43 // pred_region
          %333 = dma.done %s326, 2048
        $region52: #{tpu_custom_call.1} parent=43 // pred_fallthru
          _
        // Predicated region
        $region53: #{tpu_custom_call.1} parent=43 // pred_check
          %p334 = pneg %p100
        $region54: #{tpu_custom_call.1} parent=43 // pred_check_branch
          %336 = sbr.rel (%p334) target = $region56
        $region55: #{tpu_custom_call.1} parent=43 // pred_region
          %337 = dma.done [#allocation6], 512
        $region56: #{tpu_custom_call.1} parent=43 // pred_fallthru
          _
        // Predicated region
        $region57: #{tpu_custom_call.1} parent=43 // pred_check
          %p338 = pneg %p142
        $region58: #{tpu_custom_call.1} parent=43 // pred_check_branch
          %340 = sbr.rel (%p338) target = $region60
        $region59: #{tpu_custom_call.1} parent=43 // pred_region
          %341 = dma.done [#allocation9], 512
        $region60: #{tpu_custom_call.1} parent=43 // pred_fallthru
          _
        %s342 = sand.u32 %s40, 1
        %s343 = scalar_lea.sflag [#allocation3], %s342
        %s344 = sand.u32 %s40, 1
        %s345 = smul.addr %s344, 64
        %s346 = scalar_lea.vmem [#allocation2], %s345
        %p347 = pneg %p53
        %p348 = pneg %p50
        %s349 = sand.u32 %s32, 1
        %s350 = scalar_lea.sflag [#allocation6], %s349
        %s351 = sand.u32 %s66, 1
        %s352 = smul.addr %s351, 128
        %s353 = scalar_lea.vmem [#allocation5], %s352
        %p354 = pneg %p79
        %p355 = pneg %p76
        %p356 = pneg %p100
        %p357 = pneg %p97
        %p358 = pneg %p121
        %p359 = pneg %p118
        %p360 = pneg %p142
        %p361 = pneg %p139
        %p362 = pneg %p163
        %p363 = pneg %p160
        %p364 = pneg %p189
        %p365 = pneg %p186
        %s366 = sand.u32 %s176, 1
        %s367 = scalar_lea.sflag [#allocation4], %s366
        %s368 = sand.u32 %s176, 1
        %s369 = smul.addr %s368, 64
        %s370 = scalar_lea.vmem [#allocation10], %s369
        %p371 = pneg %p215
        %p372 = pneg %p212
        %s373 = sand.u32 %s202, 1
        %s374 = scalar_lea.sflag [#allocation12], %s373
        %s375 = sand.u32 %s202, 1
        %s376 = smul.addr %s375, 128
        %s377 = scalar_lea.vmem [#allocation11], %s376
        %s378 = smul.u32 8, %s32
        %s379 = smul.u32 8, %s32
        %s380 = smul.u32 8, %s32
        %s381 = smul.u32 8, %s32
        %v382 = vld [vmem:[#allocation7] sm:$0xff]
        %v383 = vld [vmem:[#allocation7 + $0x8] sm:$0xff]
        %v384 = vld [vmem:[#allocation7 + $0x10] sm:$0xff]
        %v385 = vld [vmem:[#allocation7 + $0x18] sm:$0xff]
        %v386 = vld [vmem:[%s3] sm:$0x1]
        %v387 = vld [vmem:[#allocation8] sm:$0xff]
        %v388 = vld [vmem:[#allocation8 + $0x8] sm:$0xff]
        %v389 = vld [vmem:[#allocation8 + $0x10] sm:$0xff]
        %v390 = vld [vmem:[#allocation8 + $0x18] sm:$0xff]
        %v391 = vld [vmem:[%s5] sm:$0x1]
        %v392 = vld [vmem:[%s320] sm:$0xff]
        %v393 = vld [vmem:[%s320 + $0x8] sm:$0xff]
        %v394 = vld [vmem:[%s320 + $0x10] sm:$0xff]
        %v395 = vld [vmem:[%s320 + $0x18] sm:$0xff]
        %v396 = vld [vmem:[%s320 + $0x20] sm:$0xff]
        %v397 = vld [vmem:[%s320 + $0x28] sm:$0xff]
        %v398 = vld [vmem:[%s320 + $0x30] sm:$0xff]
        %v399 = vld [vmem:[%s320 + $0x38] sm:$0xff]
        %v400 = vld [vmem:[%s329] sm:$0xff]
        %v401 = vld [vmem:[%s329 + $0x8] sm:$0xff]
        %v402 = vld [vmem:[%s329 + $0x10] sm:$0xff]
        %v403 = vld [vmem:[%s329 + $0x18] sm:$0xff]
        %v404 = vld [vmem:[%s329 + $0x20] sm:$0xff]
        %v405 = vld [vmem:[%s329 + $0x28] sm:$0xff]
        %v406 = vld [vmem:[%s329 + $0x30] sm:$0xff]
        %v407 = vld [vmem:[%s329 + $0x38] sm:$0xff]
        %v408 = vld [vmem:[%s329 + $0x40] sm:$0xff]
        %v409 = vld [vmem:[%s329 + $0x48] sm:$0xff]
        %v410 = vld [vmem:[%s329 + $0x50] sm:$0xff]
        %v411 = vld [vmem:[%s329 + $0x58] sm:$0xff]
        %v412 = vld [vmem:[%s329 + $0x60] sm:$0xff]
        %v413 = vld [vmem:[%s329 + $0x68] sm:$0xff]
        %v414 = vld [vmem:[%s329 + $0x70] sm:$0xff]
        %v415 = vld [vmem:[%s329 + $0x78] sm:$0xff]
        %v417 = vlaneseq
        %v418 = vshrl.u32 %v417, 7
        %v419 = vsub.s32 0, %v418
        %v420 = vrot.slane %v386, %v419
        %vm422 = vcmask 261120
        %v424 = vsel %vm422, %v392, 0
        %v427 = vsel %vm422, %v393, 0
        %v430 = vsel %vm422, %v394, 0
        %v433 = vsel %vm422, %v395, 0
        %v436 = vsel %vm422, %v396, 0
        %v439 = vsel %vm422, %v397, 0
        %v442 = vsel %vm422, %v398, 0
        %v445 = vsel %vm422, %v399, 0
        %447 = vmatprep.subr.mxu0 0.0
        %448 = vmatpush1.msra.mxu0 %v382
        %449 = vmatprep.subr.mxu0 0.0
        %450 = vmatpush1.msra.mxu0 %v383
        %451 = vmatprep.subr.mxu0 0.0
        %452 = vmatpush1.msra.mxu0 %v384
        %453 = vmatprep.subr.mxu0 0.0
        %454 = vmatpush1.msra.mxu0 %v385
        %455 = vmatprep.subr.mxu0 0.0
        %456 = vmatpush1.msra.mxu0 0.0
        %457 = vmatprep.subr.mxu0 0.0
        %458 = vmatpush1.msra.mxu0 0.0
        %459 = vmatprep.subr.mxu0 0.0
        %460 = vmatpush1.msra.mxu0 0.0
        %461 = vmatprep.subr.mxu0 0.0
        %462 = vmatpush1.msra.mxu0 0.0
        %463 = vmatprep.subr.mxu0 0.0
        %464 = vmatpush1.msra.mxu0 0.0
        %465 = vmatprep.subr.mxu0 0.0
        %466 = vmatpush1.msra.mxu0 0.0
        %467 = vmatprep.subr.mxu0 0.0
        %468 = vmatpush1.msra.mxu0 0.0
        %469 = vmatprep.subr.mxu0 0.0
        %470 = vmatpush1.msra.mxu0 0.0
        %471 = vmatprep.subr.mxu0 0.0
        %472 = vmatpush1.msra.mxu0 0.0
        %473 = vmatprep.subr.mxu0 0.0
        %474 = vmatpush1.msra.mxu0 0.0
        %475 = vmatprep.subr.mxu0 0.0
        %476 = vmatpush1.msra.mxu0 0.0
        %477 = vmatprep.subr.mxu0 0.0
        %478 = vmatpush1.msra.mxu0 0.0
        %479 = vmatprep.subr.mxu0 0.0
        %480 = vmatpush1.msra.mxu0 0.0
        %481 = vmatprep.subr.mxu0 0.0
        %482 = vmatpush1.msra.mxu0 0.0
        %483 = vmatprep.subr.mxu0 0.0
        %484 = vmatpush1.msra.mxu0 0.0
        %485 = vmatprep.subr.mxu0 0.0
        %486 = vmatpush1.msra.mxu0 0.0
        %487 = vmatprep.subr.mxu0 0.0
        %488 = vmatpush1.msra.mxu0 0.0
        %489 = vmatprep.subr.mxu0 0.0
        %490 = vmatpush1.msra.mxu0 0.0
        %491 = vmatprep.subr.mxu0 0.0
        %492 = vmatpush1.msra.mxu0 0.0
        %493 = vmatprep.subr.mxu0 0.0
        %494 = vmatpush1.msra.mxu0 0.0
        %495 = vmatprep.subr.mxu0 0.0
        %496 = vmatpush1.msra.mxu0 0.0
        %497 = vmatprep.subr.mxu0 0.0
        %498 = vmatpush1.msra.mxu0 0.0
        %499 = vmatprep.subr.mxu0 0.0
        %500 = vmatpush1.msra.mxu0 0.0
        %501 = vmatprep.subr.mxu0 0.0
        %502 = vmatpush1.msra.mxu0 0.0
        %503 = vmatprep.subr.mxu0 0.0
        %504 = vmatpush1.msra.mxu0 0.0
        %505 = vmatprep.subr.mxu0 0.0
        %506 = vmatpush1.msra.mxu0 0.0
        %507 = vmatprep.subr.mxu0 0.0
        %508 = vmatpush1.msra.mxu0 0.0
        %509 = vmatprep.subr.mxu0 0.0
        %510 = vmatpush1.msra.mxu0 0.0
        %511 = vmatprep.mubr.f32.mxu0 0.0
        %512 = vmatmul.mubr.f32.gmra.mrb[0].mxu0 %v424
        %v513 = vpop.f32.mrb[0].mxu0
        %v514 = vadd.f32 %v420, %v513
        %v515 = vpop.f32.mrb[0].mxu0
        %516 = vmatprep.mubr.f32.mxu0 0.0
        %517 = vmatmul.mubr.f32.gmra.mrb[0].mxu0 %v427
        %v518 = vpop.f32.mrb[0].mxu0
        %v519 = vadd.f32 %v420, %v518
        %v520 = vpop.f32.mrb[0].mxu0
        %521 = vmatprep.mubr.f32.mxu0 0.0
        %522 = vmatmul.mubr.f32.gmra.mrb[0].mxu0 %v430
        %v523 = vpop.f32.mrb[0].mxu0
        %v524 = vadd.f32 %v420, %v523
        %v525 = vpop.f32.mrb[0].mxu0
        %526 = vmatprep.mubr.f32.mxu0 0.0
        %527 = vmatmul.mubr.f32.gmra.mrb[0].mxu0 %v433
        %v528 = vpop.f32.mrb[0].mxu0
        %v529 = vadd.f32 %v420, %v528
        %v530 = vpop.f32.mrb[0].mxu0
        %531 = vmatprep.mubr.f32.mxu0 0.0
        %532 = vmatmul.mubr.f32.gmra.mrb[0].mxu0 %v436
        %v533 = vpop.f32.mrb[0].mxu0
        %v534 = vadd.f32 %v420, %v533
        %v535 = vpop.f32.mrb[0].mxu0
        %536 = vmatprep.mubr.f32.mxu0 0.0
        %537 = vmatmul.mubr.f32.gmra.mrb[0].mxu0 %v439
        %v538 = vpop.f32.mrb[0].mxu0
        %v539 = vadd.f32 %v420, %v538
        %v540 = vpop.f32.mrb[0].mxu0
        %541 = vmatprep.mubr.f32.mxu0 0.0
        %542 = vmatmul.mubr.f32.gmra.mrb[0].mxu0 %v442
        %v543 = vpop.f32.mrb[0].mxu0
        %v544 = vadd.f32 %v420, %v543
        %v545 = vpop.f32.mrb[0].mxu0
        %546 = vmatprep.mubr.f32.mxu0 0.0
        %547 = vmatmul.mubr.f32.gmra.mrb[0].mxu0 %v445
        %v548 = vpop.f32.mrb[0].mxu0
        %v549 = vadd.f32 %v420, %v548
        %v550 = vpop.f32.mrb[0].mxu0
        %551 = vdwg.mxu0
        %v552 = vmax.f32 %v514, 0.0
        %v553 = vmax.f32 %v519, 0.0
        %v554 = vmax.f32 %v524, 0.0
        %v555 = vmax.f32 %v529, 0.0
        %v556 = vmax.f32 %v534, 0.0
        %v557 = vmax.f32 %v539, 0.0
        %v558 = vmax.f32 %v544, 0.0
        %v559 = vmax.f32 %v549, 0.0
        %v561 = vlaneseq
        %v562 = vshrl.u32 %v561, 7
        %v563 = vsub.s32 0, %v562
        %v564 = vrot.slane %v391, %v563
        %v567 = vsel %vm422, %v552, 0
        %v570 = vsel %vm422, %v553, 0
        %v573 = vsel %vm422, %v554, 0
        %v576 = vsel %vm422, %v555, 0
        %v579 = vsel %vm422, %v556, 0
        %v582 = vsel %vm422, %v557, 0
        %v585 = vsel %vm422, %v558, 0
        %v588 = vsel %vm422, %v559, 0
        %590 = vmatprep.subr.mxu0 0.0
        %591 = vmatpush1.msra.mxu0 %v387
        %592 = vmatprep.subr.mxu0 0.0
        %593 = vmatpush1.msra.mxu0 %v388
        %594 = vmatprep.subr.mxu0 0.0
        %595 = vmatpush1.msra.mxu0 %v389
        %596 = vmatprep.subr.mxu0 0.0
        %597 = vmatpush1.msra.mxu0 %v390
        %598 = vmatprep.subr.mxu0 0.0
        %599 = vmatpush1.msra.mxu0 0.0
        %600 = vmatprep.subr.mxu0 0.0
        %601 = vmatpush1.msra.mxu0 0.0
        %602 = vmatprep.subr.mxu0 0.0
        %603 = vmatpush1.msra.mxu0 0.0
        %604 = vmatprep.subr.mxu0 0.0
        %605 = vmatpush1.msra.mxu0 0.0
        %606 = vmatprep.subr.mxu0 0.0
        %607 = vmatpush1.msra.mxu0 0.0
        %608 = vmatprep.subr.mxu0 0.0
        %609 = vmatpush1.msra.mxu0 0.0
        %610 = vmatprep.subr.mxu0 0.0
        %611 = vmatpush1.msra.mxu0 0.0
        %612 = vmatprep.subr.mxu0 0.0
        %613 = vmatpush1.msra.mxu0 0.0
        %614 = vmatprep.subr.mxu0 0.0
        %615 = vmatpush1.msra.mxu0 0.0
        %616 = vmatprep.subr.mxu0 0.0
        %617 = vmatpush1.msra.mxu0 0.0
        %618 = vmatprep.subr.mxu0 0.0
        %619 = vmatpush1.msra.mxu0 0.0
        %620 = vmatprep.subr.mxu0 0.0
        %621 = vmatpush1.msra.mxu0 0.0
        %622 = vmatprep.subr.mxu0 0.0
        %623 = vmatpush1.msra.mxu0 0.0
        %624 = vmatprep.subr.mxu0 0.0
        %625 = vmatpush1.msra.mxu0 0.0
        %626 = vmatprep.subr.mxu0 0.0
        %627 = vmatpush1.msra.mxu0 0.0
        %628 = vmatprep.subr.mxu0 0.0
        %629 = vmatpush1.msra.mxu0 0.0
        %630 = vmatprep.subr.mxu0 0.0
        %631 = vmatpush1.msra.mxu0 0.0
        %632 = vmatprep.subr.mxu0 0.0
        %633 = vmatpush1.msra.mxu0 0.0
        %634 = vmatprep.subr.mxu0 0.0
        %635 = vmatpush1.msra.mxu0 0.0
        %636 = vmatprep.subr.mxu0 0.0
        %637 = vmatpush1.msra.mxu0 0.0
        %638 = vmatprep.subr.mxu0 0.0
        %639 = vmatpush1.msra.mxu0 0.0
        %640 = vmatprep.subr.mxu0 0.0
        %641 = vmatpush1.msra.mxu0 0.0
        %642 = vmatprep.subr.mxu0 0.0
        %643 = vmatpush1.msra.mxu0 0.0
        %644 = vmatprep.subr.mxu0 0.0
        %645 = vmatpush1.msra.mxu0 0.0
        %646 = vmatprep.subr.mxu0 0.0
        %647 = vmatpush1.msra.mxu0 0.0
        %648 = vmatprep.subr.mxu0 0.0
        %649 = vmatpush1.msra.mxu0 0.0
        %650 = vmatprep.subr.mxu0 0.0
        %651 = vmatpush1.msra.mxu0 0.0
        %652 = vmatprep.subr.mxu0 0.0
        %653 = vmatpush1.msra.mxu0 0.0
        %654 = vmatprep.mubr.f32.mxu0 0.0
        %655 = vmatmul.mubr.f32.gmra.mrb[0].mxu0 %v567
        %v656 = vpop.f32.mrb[0].mxu0
        %v657 = vadd.f32 %v564, %v656
        %v658 = vpop.f32.mrb[0].mxu0
        %659 = vmatprep.mubr.f32.mxu0 0.0
        %660 = vmatmul.mubr.f32.gmra.mrb[0].mxu0 %v570
        %v661 = vpop.f32.mrb[0].mxu0
        %v662 = vadd.f32 %v564, %v661
        %v663 = vpop.f32.mrb[0].mxu0
        %664 = vmatprep.mubr.f32.mxu0 0.0
        %665 = vmatmul.mubr.f32.gmra.mrb[0].mxu0 %v573
        %v666 = vpop.f32.mrb[0].mxu0
        %v667 = vadd.f32 %v564, %v666
        %v668 = vpop.f32.mrb[0].mxu0
        %669 = vmatprep.mubr.f32.mxu0 0.0
        %670 = vmatmul.mubr.f32.gmra.mrb[0].mxu0 %v576
        %v671 = vpop.f32.mrb[0].mxu0
        %v672 = vadd.f32 %v564, %v671
        %v673 = vpop.f32.mrb[0].mxu0
        %674 = vmatprep.mubr.f32.mxu0 0.0
        %675 = vmatmul.mubr.f32.gmra.mrb[0].mxu0 %v579
        %v676 = vpop.f32.mrb[0].mxu0
        %v677 = vadd.f32 %v564, %v676
        %v678 = vpop.f32.mrb[0].mxu0
        %679 = vmatprep.mubr.f32.mxu0 0.0
        %680 = vmatmul.mubr.f32.gmra.mrb[0].mxu0 %v582
        %v681 = vpop.f32.mrb[0].mxu0
        %v682 = vadd.f32 %v564, %v681
        %v683 = vpop.f32.mrb[0].mxu0
        %684 = vmatprep.mubr.f32.mxu0 0.0
        %685 = vmatmul.mubr.f32.gmra.mrb[0].mxu0 %v585
        %v686 = vpop.f32.mrb[0].mxu0
        %v687 = vadd.f32 %v564, %v686
        %v688 = vpop.f32.mrb[0].mxu0
        %689 = vmatprep.mubr.f32.mxu0 0.0
        %690 = vmatmul.mubr.f32.gmra.mrb[0].mxu0 %v588
        %v691 = vpop.f32.mrb[0].mxu0
        %v692 = vadd.f32 %v564, %v691
        %v693 = vpop.f32.mrb[0].mxu0
        %694 = vdwg.mxu0
        %v695 = vmax.f32 %v657, 0.0
        %v696 = vmax.f32 %v662, 0.0
        %v697 = vmax.f32 %v667, 0.0
        %v698 = vmax.f32 %v672, 0.0
        %v699 = vmax.f32 %v677, 0.0
        %v700 = vmax.f32 %v682, 0.0
        %v701 = vmax.f32 %v687, 0.0
        %v702 = vmax.f32 %v692, 0.0
        %v704 = vsel %vm422, %v400, 0
        %v707 = vsel %vm422, %v401, 0
        %v710 = vsel %vm422, %v402, 0
        %v713 = vsel %vm422, %v403, 0
        %v716 = vsel %vm422, %v404, 0
        %v719 = vsel %vm422, %v405, 0
        %v722 = vsel %vm422, %v406, 0
        %v725 = vsel %vm422, %v407, 0
        %v728 = vsel %vm422, %v408, 0
        %v731 = vsel %vm422, %v409, 0
        %v734 = vsel %vm422, %v410, 0
        %v737 = vsel %vm422, %v411, 0
        %v740 = vsel %vm422, %v412, 0
        %v743 = vsel %vm422, %v413, 0
        %v746 = vsel %vm422, %v414, 0
        %v749 = vsel %vm422, %v415, 0
        %751 = vmatprep.subr.mxu0 0.0
        %752 = vmatpush1.msra.mxu0 %v382
        %753 = vmatprep.subr.mxu0 0.0
        %754 = vmatpush1.msra.mxu0 %v383
        %755 = vmatprep.subr.mxu0 0.0
        %756 = vmatpush1.msra.mxu0 %v384
        %757 = vmatprep.subr.mxu0 0.0
        %758 = vmatpush1.msra.mxu0 %v385
        %759 = vmatprep.subr.mxu0 0.0
        %760 = vmatpush1.msra.mxu0 0.0
        %761 = vmatprep.subr.mxu0 0.0
        %762 = vmatpush1.msra.mxu0 0.0
        %763 = vmatprep.subr.mxu0 0.0
        %764 = vmatpush1.msra.mxu0 0.0
        %765 = vmatprep.subr.mxu0 0.0
        %766 = vmatpush1.msra.mxu0 0.0
        %767 = vmatprep.subr.mxu0 0.0
        %768 = vmatpush1.msra.mxu0 0.0
        %769 = vmatprep.subr.mxu0 0.0
        %770 = vmatpush1.msra.mxu0 0.0
        %771 = vmatprep.subr.mxu0 0.0
        %772 = vmatpush1.msra.mxu0 0.0
        %773 = vmatprep.subr.mxu0 0.0
        %774 = vmatpush1.msra.mxu0 0.0
        %775 = vmatprep.subr.mxu0 0.0
        %776 = vmatpush1.msra.mxu0 0.0
        %777 = vmatprep.subr.mxu0 0.0
        %778 = vmatpush1.msra.mxu0 0.0
        %779 = vmatprep.subr.mxu0 0.0
        %780 = vmatpush1.msra.mxu0 0.0
        %781 = vmatprep.subr.mxu0 0.0
        %782 = vmatpush1.msra.mxu0 0.0
        %783 = vmatprep.subr.mxu0 0.0
        %784 = vmatpush1.msra.mxu0 0.0
        %785 = vmatprep.subr.mxu0 0.0
        %786 = vmatpush1.msra.mxu0 0.0
        %787 = vmatprep.subr.mxu0 0.0
        %788 = vmatpush1.msra.mxu0 0.0
        %789 = vmatprep.subr.mxu0 0.0
        %790 = vmatpush1.msra.mxu0 0.0
        %791 = vmatprep.subr.mxu0 0.0
        %792 = vmatpush1.msra.mxu0 0.0
        %793 = vmatprep.subr.mxu0 0.0
        %794 = vmatpush1.msra.mxu0 0.0
        %795 = vmatprep.subr.mxu0 0.0
        %796 = vmatpush1.msra.mxu0 0.0
        %797 = vmatprep.subr.mxu0 0.0
        %798 = vmatpush1.msra.mxu0 0.0
        %799 = vmatprep.subr.mxu0 0.0
        %800 = vmatpush1.msra.mxu0 0.0
        %801 = vmatprep.subr.mxu0 0.0
        %802 = vmatpush1.msra.mxu0 0.0
        %803 = vmatprep.subr.mxu0 0.0
        %804 = vmatpush1.msra.mxu0 0.0
        %805 = vmatprep.subr.mxu0 0.0
        %806 = vmatpush1.msra.mxu0 0.0
        %807 = vmatprep.subr.mxu0 0.0
        %808 = vmatpush1.msra.mxu0 0.0
        %809 = vmatprep.subr.mxu0 0.0
        %810 = vmatpush1.msra.mxu0 0.0
        %811 = vmatprep.subr.mxu0 0.0
        %812 = vmatpush1.msra.mxu0 0.0
        %813 = vmatprep.subr.mxu0 0.0
        %814 = vmatpush1.msra.mxu0 0.0
        %815 = vmatprep.mubr.f32.mxu0 0.0
        %816 = vmatmul.mubr.f32.gmra.mrb[0].mxu0 %v704
        %v817 = vpop.f32.mrb[0].mxu0
        %v818 = vadd.f32 %v420, %v817
        %v819 = vpop.f32.mrb[0].mxu0
        %820 = vmatprep.mubr.f32.mxu0 0.0
        %821 = vmatmul.mubr.f32.gmra.mrb[0].mxu0 %v707
        %v822 = vpop.f32.mrb[0].mxu0
        %v823 = vadd.f32 %v420, %v822
        %v824 = vpop.f32.mrb[0].mxu0
        %825 = vmatprep.mubr.f32.mxu0 0.0
        %826 = vmatmul.mubr.f32.gmra.mrb[0].mxu0 %v710
        %v827 = vpop.f32.mrb[0].mxu0
        %v828 = vadd.f32 %v420, %v827
        %v829 = vpop.f32.mrb[0].mxu0
        %830 = vmatprep.mubr.f32.mxu0 0.0
        %831 = vmatmul.mubr.f32.gmra.mrb[0].mxu0 %v713
        %v832 = vpop.f32.mrb[0].mxu0
        %v833 = vadd.f32 %v420, %v832
        %v834 = vpop.f32.mrb[0].mxu0
        %835 = vmatprep.mubr.f32.mxu0 0.0
        %836 = vmatmul.mubr.f32.gmra.mrb[0].mxu0 %v716
        %v837 = vpop.f32.mrb[0].mxu0
        %v838 = vadd.f32 %v420, %v837
        %v839 = vpop.f32.mrb[0].mxu0
        %840 = vmatprep.mubr.f32.mxu0 0.0
        %841 = vmatmul.mubr.f32.gmra.mrb[0].mxu0 %v719
        %v842 = vpop.f32.mrb[0].mxu0
        %v843 = vadd.f32 %v420, %v842
        %v844 = vpop.f32.mrb[0].mxu0
        %845 = vmatprep.mubr.f32.mxu0 0.0
        %846 = vmatmul.mubr.f32.gmra.mrb[0].mxu0 %v722
        %v847 = vpop.f32.mrb[0].mxu0
        %v848 = vadd.f32 %v420, %v847
        %v849 = vpop.f32.mrb[0].mxu0
        %850 = vmatprep.mubr.f32.mxu0 0.0
        %851 = vmatmul.mubr.f32.gmra.mrb[0].mxu0 %v725
        %v852 = vpop.f32.mrb[0].mxu0
        %v853 = vadd.f32 %v420, %v852
        %v854 = vpop.f32.mrb[0].mxu0
        %855 = vmatprep.mubr.f32.mxu0 0.0
        %856 = vmatmul.mubr.f32.gmra.mrb[0].mxu0 %v728
        %v857 = vpop.f32.mrb[0].mxu0
        %v858 = vadd.f32 %v420, %v857
        %v859 = vpop.f32.mrb[0].mxu0
        %860 = vmatprep.mubr.f32.mxu0 0.0
        %861 = vmatmul.mubr.f32.gmra.mrb[0].mxu0 %v731
        %v862 = vpop.f32.mrb[0].mxu0
        %v863 = vadd.f32 %v420, %v862
        %v864 = vpop.f32.mrb[0].mxu0
        %865 = vmatprep.mubr.f32.mxu0 0.0
        %866 = vmatmul.mubr.f32.gmra.mrb[0].mxu0 %v734
        %v867 = vpop.f32.mrb[0].mxu0
        %v868 = vadd.f32 %v420, %v867
        %v869 = vpop.f32.mrb[0].mxu0
        %870 = vmatprep.mubr.f32.mxu0 0.0
        %871 = vmatmul.mubr.f32.gmra.mrb[0].mxu0 %v737
        %v872 = vpop.f32.mrb[0].mxu0
        %v873 = vadd.f32 %v420, %v872
        %v874 = vpop.f32.mrb[0].mxu0
        %875 = vmatprep.mubr.f32.mxu0 0.0
        %876 = vmatmul.mubr.f32.gmra.mrb[0].mxu0 %v740
        %v877 = vpop.f32.mrb[0].mxu0
        %v878 = vadd.f32 %v420, %v877
        %v879 = vpop.f32.mrb[0].mxu0
        %880 = vmatprep.mubr.f32.mxu0 0.0
        %881 = vmatmul.mubr.f32.gmra.mrb[0].mxu0 %v743
        %v882 = vpop.f32.mrb[0].mxu0
        %v883 = vadd.f32 %v420, %v882
        %v884 = vpop.f32.mrb[0].mxu0
        %885 = vmatprep.mubr.f32.mxu0 0.0
        %886 = vmatmul.mubr.f32.gmra.mrb[0].mxu0 %v746
        %v887 = vpop.f32.mrb[0].mxu0
        %v888 = vadd.f32 %v420, %v887
        %v889 = vpop.f32.mrb[0].mxu0
        %890 = vmatprep.mubr.f32.mxu0 0.0
        %891 = vmatmul.mubr.f32.gmra.mrb[0].mxu0 %v749
        %v892 = vpop.f32.mrb[0].mxu0
        %v893 = vadd.f32 %v420, %v892
        %v894 = vpop.f32.mrb[0].mxu0
        %895 = vdwg.mxu0
        %v896 = vmax.f32 %v818, 0.0
        %v897 = vmax.f32 %v823, 0.0
        %v898 = vmax.f32 %v828, 0.0
        %v899 = vmax.f32 %v833, 0.0
        %v900 = vmax.f32 %v838, 0.0
        %v901 = vmax.f32 %v843, 0.0
        %v902 = vmax.f32 %v848, 0.0
        %v903 = vmax.f32 %v853, 0.0
        %v904 = vmax.f32 %v858, 0.0
        %v905 = vmax.f32 %v863, 0.0
        %v906 = vmax.f32 %v868, 0.0
        %v907 = vmax.f32 %v873, 0.0
        %v908 = vmax.f32 %v878, 0.0
        %v909 = vmax.f32 %v883, 0.0
        %v910 = vmax.f32 %v888, 0.0
        %v911 = vmax.f32 %v893, 0.0
        %v913 = vsel %vm422, %v896, 0
        %v916 = vsel %vm422, %v897, 0
        %v919 = vsel %vm422, %v898, 0
        %v922 = vsel %vm422, %v899, 0
        %v925 = vsel %vm422, %v900, 0
        %v928 = vsel %vm422, %v901, 0
        %v931 = vsel %vm422, %v902, 0
        %v934 = vsel %vm422, %v903, 0
        %v937 = vsel %vm422, %v904, 0
        %v940 = vsel %vm422, %v905, 0
        %v943 = vsel %vm422, %v906, 0
        %v946 = vsel %vm422, %v907, 0
        %v949 = vsel %vm422, %v908, 0
        %v952 = vsel %vm422, %v909, 0
        %v955 = vsel %vm422, %v910, 0
        %v958 = vsel %vm422, %v911, 0
        %960 = vmatprep.subr.mxu0 0.0
        %961 = vmatpush1.msra.mxu0 %v387
        %962 = vmatprep.subr.mxu0 0.0
        %963 = vmatpush1.msra.mxu0 %v388
        %964 = vmatprep.subr.mxu0 0.0
        %965 = vmatpush1.msra.mxu0 %v389
        %966 = vmatprep.subr.mxu0 0.0
        %967 = vmatpush1.msra.mxu0 %v390
        %968 = vmatprep.subr.mxu0 0.0
        %969 = vmatpush1.msra.mxu0 0.0
        %970 = vmatprep.subr.mxu0 0.0
        %971 = vmatpush1.msra.mxu0 0.0
        %972 = vmatprep.subr.mxu0 0.0
        %973 = vmatpush1.msra.mxu0 0.0
        %974 = vmatprep.subr.mxu0 0.0
        %975 = vmatpush1.msra.mxu0 0.0
        %976 = vmatprep.subr.mxu0 0.0
        %977 = vmatpush1.msra.mxu0 0.0
        %978 = vmatprep.subr.mxu0 0.0
        %979 = vmatpush1.msra.mxu0 0.0
        %980 = vmatprep.subr.mxu0 0.0
        %981 = vmatpush1.msra.mxu0 0.0
        %982 = vmatprep.subr.mxu0 0.0
        %983 = vmatpush1.msra.mxu0 0.0
        %984 = vmatprep.subr.mxu0 0.0
        %985 = vmatpush1.msra.mxu0 0.0
        %986 = vmatprep.subr.mxu0 0.0
        %987 = vmatpush1.msra.mxu0 0.0
        %988 = vmatprep.subr.mxu0 0.0
        %989 = vmatpush1.msra.mxu0 0.0
        %990 = vmatprep.subr.mxu0 0.0
        %991 = vmatpush1.msra.mxu0 0.0
        %992 = vmatprep.subr.mxu0 0.0
        %993 = vmatpush1.msra.mxu0 0.0
        %994 = vmatprep.subr.mxu0 0.0
        %995 = vmatpush1.msra.mxu0 0.0
        %996 = vmatprep.subr.mxu0 0.0
        %997 = vmatpush1.msra.mxu0 0.0
        %998 = vmatprep.subr.mxu0 0.0
        %999 = vmatpush1.msra.mxu0 0.0
        %1000 = vmatprep.subr.mxu0 0.0
        %1001 = vmatpush1.msra.mxu0 0.0
        %1002 = vmatprep.subr.mxu0 0.0
        %1003 = vmatpush1.msra.mxu0 0.0
        %1004 = vmatprep.subr.mxu0 0.0
        %1005 = vmatpush1.msra.mxu0 0.0
        %1006 = vmatprep.subr.mxu0 0.0
        %1007 = vmatpush1.msra.mxu0 0.0
        %1008 = vmatprep.subr.mxu0 0.0
        %1009 = vmatpush1.msra.mxu0 0.0
        %1010 = vmatprep.subr.mxu0 0.0
        %1011 = vmatpush1.msra.mxu0 0.0
        %1012 = vmatprep.subr.mxu0 0.0
        %1013 = vmatpush1.msra.mxu0 0.0
        %1014 = vmatprep.subr.mxu0 0.0
        %1015 = vmatpush1.msra.mxu0 0.0
        %1016 = vmatprep.subr.mxu0 0.0
        %1017 = vmatpush1.msra.mxu0 0.0
        %1018 = vmatprep.subr.mxu0 0.0
        %1019 = vmatpush1.msra.mxu0 0.0
        %1020 = vmatprep.subr.mxu0 0.0
        %1021 = vmatpush1.msra.mxu0 0.0
        %1022 = vmatprep.subr.mxu0 0.0
        %1023 = vmatpush1.msra.mxu0 0.0
        %1024 = vmatprep.mubr.f32.mxu0 0.0
        %1025 = vmatmul.mubr.f32.gmra.mrb[0].mxu0 %v913
        %v1026 = vpop.f32.mrb[0].mxu0
        %v1027 = vadd.f32 %v564, %v1026
        %v1028 = vpop.f32.mrb[0].mxu0
        %1029 = vmatprep.mubr.f32.mxu0 0.0
        %1030 = vmatmul.mubr.f32.gmra.mrb[0].mxu0 %v916
        %v1031 = vpop.f32.mrb[0].mxu0
        %v1032 = vadd.f32 %v564, %v1031
        %v1033 = vpop.f32.mrb[0].mxu0
        %1034 = vmatprep.mubr.f32.mxu0 0.0
        %1035 = vmatmul.mubr.f32.gmra.mrb[0].mxu0 %v919
        %v1036 = vpop.f32.mrb[0].mxu0
        %v1037 = vadd.f32 %v564, %v1036
        %v1038 = vpop.f32.mrb[0].mxu0
        %1039 = vmatprep.mubr.f32.mxu0 0.0
        %1040 = vmatmul.mubr.f32.gmra.mrb[0].mxu0 %v922
        %v1041 = vpop.f32.mrb[0].mxu0
        %v1042 = vadd.f32 %v564, %v1041
        %v1043 = vpop.f32.mrb[0].mxu0
        %1044 = vmatprep.mubr.f32.mxu0 0.0
        %1045 = vmatmul.mubr.f32.gmra.mrb[0].mxu0 %v925
        %v1046 = vpop.f32.mrb[0].mxu0
        %v1047 = vadd.f32 %v564, %v1046
        %v1048 = vpop.f32.mrb[0].mxu0
        %1049 = vmatprep.mubr.f32.mxu0 0.0
        %1050 = vmatmul.mubr.f32.gmra.mrb[0].mxu0 %v928
        %v1051 = vpop.f32.mrb[0].mxu0
        %v1052 = vadd.f32 %v564, %v1051
        %v1053 = vpop.f32.mrb[0].mxu0
        %1054 = vmatprep.mubr.f32.mxu0 0.0
        %1055 = vmatmul.mubr.f32.gmra.mrb[0].mxu0 %v931
        %v1056 = vpop.f32.mrb[0].mxu0
        %v1057 = vadd.f32 %v564, %v1056
        %v1058 = vpop.f32.mrb[0].mxu0
        %1059 = vmatprep.mubr.f32.mxu0 0.0
        %1060 = vmatmul.mubr.f32.gmra.mrb[0].mxu0 %v934
        %v1061 = vpop.f32.mrb[0].mxu0
        %v1062 = vadd.f32 %v564, %v1061
        %v1063 = vpop.f32.mrb[0].mxu0
        %1064 = vmatprep.mubr.f32.mxu0 0.0
        %1065 = vmatmul.mubr.f32.gmra.mrb[0].mxu0 %v937
        %v1066 = vpop.f32.mrb[0].mxu0
        %v1067 = vadd.f32 %v564, %v1066
        %v1068 = vpop.f32.mrb[0].mxu0
        %1069 = vmatprep.mubr.f32.mxu0 0.0
        %1070 = vmatmul.mubr.f32.gmra.mrb[0].mxu0 %v940
        %v1071 = vpop.f32.mrb[0].mxu0
        %v1072 = vadd.f32 %v564, %v1071
        %v1073 = vpop.f32.mrb[0].mxu0
        %1074 = vmatprep.mubr.f32.mxu0 0.0
        %1075 = vmatmul.mubr.f32.gmra.mrb[0].mxu0 %v943
        %v1076 = vpop.f32.mrb[0].mxu0
        %v1077 = vadd.f32 %v564, %v1076
        %v1078 = vpop.f32.mrb[0].mxu0
        %1079 = vmatprep.mubr.f32.mxu0 0.0
        %1080 = vmatmul.mubr.f32.gmra.mrb[0].mxu0 %v946
        %v1081 = vpop.f32.mrb[0].mxu0
        %v1082 = vadd.f32 %v564, %v1081
        %v1083 = vpop.f32.mrb[0].mxu0
        %1084 = vmatprep.mubr.f32.mxu0 0.0
        %1085 = vmatmul.mubr.f32.gmra.mrb[0].mxu0 %v949
        %v1086 = vpop.f32.mrb[0].mxu0
        %v1087 = vadd.f32 %v564, %v1086
        %v1088 = vpop.f32.mrb[0].mxu0
        %1089 = vmatprep.mubr.f32.mxu0 0.0
        %1090 = vmatmul.mubr.f32.gmra.mrb[0].mxu0 %v952
        %v1091 = vpop.f32.mrb[0].mxu0
        %v1092 = vadd.f32 %v564, %v1091
        %v1093 = vpop.f32.mrb[0].mxu0
        %1094 = vmatprep.mubr.f32.mxu0 0.0
        %1095 = vmatmul.mubr.f32.gmra.mrb[0].mxu0 %v955
        %v1096 = vpop.f32.mrb[0].mxu0
        %v1097 = vadd.f32 %v564, %v1096
        %v1098 = vpop.f32.mrb[0].mxu0
        %1099 = vmatprep.mubr.f32.mxu0 0.0
        %1100 = vmatmul.mubr.f32.gmra.mrb[0].mxu0 %v958
        %v1101 = vpop.f32.mrb[0].mxu0
        %v1102 = vadd.f32 %v564, %v1101
        %v1103 = vpop.f32.mrb[0].mxu0
        %1104 = vdwg.mxu0
        %v1105 = vmax.f32 %v1027, 0.0
        %v1106 = vmax.f32 %v1032, 0.0
        %v1107 = vmax.f32 %v1037, 0.0
        %v1108 = vmax.f32 %v1042, 0.0
        %v1109 = vmax.f32 %v1047, 0.0
        %v1110 = vmax.f32 %v1052, 0.0
        %v1111 = vmax.f32 %v1057, 0.0
        %v1112 = vmax.f32 %v1062, 0.0
        %v1113 = vmax.f32 %v1067, 0.0
        %v1114 = vmax.f32 %v1072, 0.0
        %v1115 = vmax.f32 %v1077, 0.0
        %v1116 = vmax.f32 %v1082, 0.0
        %v1117 = vmax.f32 %v1087, 0.0
        %v1118 = vmax.f32 %v1092, 0.0
        %v1119 = vmax.f32 %v1097, 0.0
        %v1120 = vmax.f32 %v1102, 0.0
        %v1122 = vsel %vm422, %v695, 0
        %v1125 = vsel %vm422, %v1105, 0
        %v1128 = vsel %vm422, %v1106, 0
        %1130 = vmatprep.subr.mxu0 0.0
        %1131 = vmatpush1.xpose.msra.mxu0 %v1125
        %1132 = vmatprep.subr.mxu0 0.0
        %1133 = vmatpush1.xpose.msra.mxu0 %v1128
        %1134 = vmatprep.subr.mxu0 0.0
        %1135 = vmatpush1.xpose.msra.mxu0 0.0
        %1136 = vmatprep.subr.mxu0 0.0
        %1137 = vmatpush1.xpose.msra.mxu0 0.0
        %1138 = vmatprep.subr.mxu0 0.0
        %1139 = vmatpush1.xpose.msra.mxu0 0.0
        %1140 = vmatprep.subr.mxu0 0.0
        %1141 = vmatpush1.xpose.msra.mxu0 0.0
        %1142 = vmatprep.subr.mxu0 0.0
        %1143 = vmatpush1.xpose.msra.mxu0 0.0
        %1144 = vmatprep.subr.mxu0 0.0
        %1145 = vmatpush1.xpose.msra.mxu0 0.0
        %1146 = vmatprep.subr.mxu0 0.0
        %1147 = vmatpush1.xpose.msra.mxu0 0.0
        %1148 = vmatprep.subr.mxu0 0.0
        %1149 = vmatpush1.xpose.msra.mxu0 0.0
        %1150 = vmatprep.subr.mxu0 0.0
        %1151 = vmatpush1.xpose.msra.mxu0 0.0
        %1152 = vmatprep.subr.mxu0 0.0
        %1153 = vmatpush1.xpose.msra.mxu0 0.0
        %1154 = vmatprep.subr.mxu0 0.0
        %1155 = vmatpush1.xpose.msra.mxu0 0.0
        %1156 = vmatprep.subr.mxu0 0.0
        %1157 = vmatpush1.xpose.msra.mxu0 0.0
        %1158 = vmatprep.subr.mxu0 0.0
        %1159 = vmatpush1.xpose.msra.mxu0 0.0
        %1160 = vmatprep.subr.mxu0 0.0
        %1161 = vmatpush1.xpose.msra.mxu0 0.0
        %1162 = vmatprep.subr.mxu0 0.0
        %1163 = vmatpush1.xpose.msra.mxu0 0.0
        %1164 = vmatprep.subr.mxu0 0.0
        %1165 = vmatpush1.xpose.msra.mxu0 0.0
        %1166 = vmatprep.subr.mxu0 0.0
        %1167 = vmatpush1.xpose.msra.mxu0 0.0
        %1168 = vmatprep.subr.mxu0 0.0
        %1169 = vmatpush1.xpose.msra.mxu0 0.0
        %1170 = vmatprep.subr.mxu0 0.0
        %1171 = vmatpush1.xpose.msra.mxu0 0.0
        %1172 = vmatprep.subr.mxu0 0.0
        %1173 = vmatpush1.xpose.msra.mxu0 0.0
        %1174 = vmatprep.subr.mxu0 0.0
        %1175 = vmatpush1.xpose.msra.mxu0 0.0
        %1176 = vmatprep.subr.mxu0 0.0
        %1177 = vmatpush1.xpose.msra.mxu0 0.0
        %1178 = vmatprep.subr.mxu0 0.0
        %1179 = vmatpush1.xpose.msra.mxu0 0.0
        %1180 = vmatprep.subr.mxu0 0.0
        %1181 = vmatpush1.xpose.msra.mxu0 0.0
        %1182 = vmatprep.subr.mxu0 0.0
        %1183 = vmatpush1.xpose.msra.mxu0 0.0
        %1184 = vmatprep.subr.mxu0 0.0
        %1185 = vmatpush1.xpose.msra.mxu0 0.0
        %1186 = vmatprep.subr.mxu0 0.0
        %1187 = vmatpush1.xpose.msra.mxu0 0.0
        %1188 = vmatprep.subr.mxu0 0.0
        %1189 = vmatpush1.xpose.msra.mxu0 0.0
        %1190 = vmatprep.subr.mxu0 0.0
        %1191 = vmatpush1.xpose.msra.mxu0 0.0
        %1192 = vmatprep.subr.mxu0 0.0
        %1193 = vmatpush1.xpose.msra.mxu0 0.0
        %1194 = vmatprep.mubr.f32.mxu0 0.0
        %1195 = vmatmul.mubr.f32.gmra.mrb[0].mxu0 %v1122
        %v1196 = vpop.f32.mrb[0].mxu0
        %v1197 = vadd.f32 0.0, %v1196
        %v1198 = vpop.f32.mrb[0].mxu0
        %1199 = vdwg.mxu0
        %v1201 = vsel %vm422, %v696, 0
        %v1204 = vsel %vm422, %v1107, 0
        %v1207 = vsel %vm422, %v1108, 0
        %1209 = vmatprep.subr.mxu0 0.0
        %1210 = vmatpush1.xpose.msra.mxu0 %v1204
        %1211 = vmatprep.subr.mxu0 0.0
        %1212 = vmatpush1.xpose.msra.mxu0 %v1207
        %1213 = vmatprep.subr.mxu0 0.0
        %1214 = vmatpush1.xpose.msra.mxu0 0.0
        %1215 = vmatprep.subr.mxu0 0.0
        %1216 = vmatpush1.xpose.msra.mxu0 0.0
        %1217 = vmatprep.subr.mxu0 0.0
        %1218 = vmatpush1.xpose.msra.mxu0 0.0
        %1219 = vmatprep.subr.mxu0 0.0
        %1220 = vmatpush1.xpose.msra.mxu0 0.0
        %1221 = vmatprep.subr.mxu0 0.0
        %1222 = vmatpush1.xpose.msra.mxu0 0.0
        %1223 = vmatprep.subr.mxu0 0.0
        %1224 = vmatpush1.xpose.msra.mxu0 0.0
        %1225 = vmatprep.subr.mxu0 0.0
        %1226 = vmatpush1.xpose.msra.mxu0 0.0
        %1227 = vmatprep.subr.mxu0 0.0
        %1228 = vmatpush1.xpose.msra.mxu0 0.0
        %1229 = vmatprep.subr.mxu0 0.0
        %1230 = vmatpush1.xpose.msra.mxu0 0.0
        %1231 = vmatprep.subr.mxu0 0.0
        %1232 = vmatpush1.xpose.msra.mxu0 0.0
        %1233 = vmatprep.subr.mxu0 0.0
        %1234 = vmatpush1.xpose.msra.mxu0 0.0
        %1235 = vmatprep.subr.mxu0 0.0
        %1236 = vmatpush1.xpose.msra.mxu0 0.0
        %1237 = vmatprep.subr.mxu0 0.0
        %1238 = vmatpush1.xpose.msra.mxu0 0.0
        %1239 = vmatprep.subr.mxu0 0.0
        %1240 = vmatpush1.xpose.msra.mxu0 0.0
        %1241 = vmatprep.subr.mxu0 0.0
        %1242 = vmatpush1.xpose.msra.mxu0 0.0
        %1243 = vmatprep.subr.mxu0 0.0
        %1244 = vmatpush1.xpose.msra.mxu0 0.0
        %1245 = vmatprep.subr.mxu0 0.0
        %1246 = vmatpush1.xpose.msra.mxu0 0.0
        %1247 = vmatprep.subr.mxu0 0.0
        %1248 = vmatpush1.xpose.msra.mxu0 0.0
        %1249 = vmatprep.subr.mxu0 0.0
        %1250 = vmatpush1.xpose.msra.mxu0 0.0
        %1251 = vmatprep.subr.mxu0 0.0
        %1252 = vmatpush1.xpose.msra.mxu0 0.0
        %1253 = vmatprep.subr.mxu0 0.0
        %1254 = vmatpush1.xpose.msra.mxu0 0.0
        %1255 = vmatprep.subr.mxu0 0.0
        %1256 = vmatpush1.xpose.msra.mxu0 0.0
        %1257 = vmatprep.subr.mxu0 0.0
        %1258 = vmatpush1.xpose.msra.mxu0 0.0
        %1259 = vmatprep.subr.mxu0 0.0
        %1260 = vmatpush1.xpose.msra.mxu0 0.0
        %1261 = vmatprep.subr.mxu0 0.0
        %1262 = vmatpush1.xpose.msra.mxu0 0.0
        %1263 = vmatprep.subr.mxu0 0.0
        %1264 = vmatpush1.xpose.msra.mxu0 0.0
        %1265 = vmatprep.subr.mxu0 0.0
        %1266 = vmatpush1.xpose.msra.mxu0 0.0
        %1267 = vmatprep.subr.mxu0 0.0
        %1268 = vmatpush1.xpose.msra.mxu0 0.0
        %1269 = vmatprep.subr.mxu0 0.0
        %1270 = vmatpush1.xpose.msra.mxu0 0.0
        %1271 = vmatprep.subr.mxu0 0.0
        %1272 = vmatpush1.xpose.msra.mxu0 0.0
        %1273 = vmatprep.mubr.f32.mxu0 0.0
        %1274 = vmatmul.mubr.f32.gmra.mrb[0].mxu0 %v1201
        %v1275 = vpop.f32.mrb[0].mxu0
        %v1276 = vadd.f32 0.0, %v1275
        %v1277 = vpop.f32.mrb[0].mxu0
        %1278 = vdwg.mxu0
        %v1280 = vsel %vm422, %v697, 0
        %v1283 = vsel %vm422, %v1109, 0
        %v1286 = vsel %vm422, %v1110, 0
        %1288 = vmatprep.subr.mxu0 0.0
        %1289 = vmatpush1.xpose.msra.mxu0 %v1283
        %1290 = vmatprep.subr.mxu0 0.0
        %1291 = vmatpush1.xpose.msra.mxu0 %v1286
        %1292 = vmatprep.subr.mxu0 0.0
        %1293 = vmatpush1.xpose.msra.mxu0 0.0
        %1294 = vmatprep.subr.mxu0 0.0
        %1295 = vmatpush1.xpose.msra.mxu0 0.0
        %1296 = vmatprep.subr.mxu0 0.0
        %1297 = vmatpush1.xpose.msra.mxu0 0.0
        %1298 = vmatprep.subr.mxu0 0.0
        %1299 = vmatpush1.xpose.msra.mxu0 0.0
        %1300 = vmatprep.subr.mxu0 0.0
        %1301 = vmatpush1.xpose.msra.mxu0 0.0
        %1302 = vmatprep.subr.mxu0 0.0
        %1303 = vmatpush1.xpose.msra.mxu0 0.0
        %1304 = vmatprep.subr.mxu0 0.0
        %1305 = vmatpush1.xpose.msra.mxu0 0.0
        %1306 = vmatprep.subr.mxu0 0.0
        %1307 = vmatpush1.xpose.msra.mxu0 0.0
        %1308 = vmatprep.subr.mxu0 0.0
        %1309 = vmatpush1.xpose.msra.mxu0 0.0
        %1310 = vmatprep.subr.mxu0 0.0
        %1311 = vmatpush1.xpose.msra.mxu0 0.0
        %1312 = vmatprep.subr.mxu0 0.0
        %1313 = vmatpush1.xpose.msra.mxu0 0.0
        %1314 = vmatprep.subr.mxu0 0.0
        %1315 = vmatpush1.xpose.msra.mxu0 0.0
        %1316 = vmatprep.subr.mxu0 0.0
        %1317 = vmatpush1.xpose.msra.mxu0 0.0
        %1318 = vmatprep.subr.mxu0 0.0
        %1319 = vmatpush1.xpose.msra.mxu0 0.0
        %1320 = vmatprep.subr.mxu0 0.0
        %1321 = vmatpush1.xpose.msra.mxu0 0.0
        %1322 = vmatprep.subr.mxu0 0.0
        %1323 = vmatpush1.xpose.msra.mxu0 0.0
        %1324 = vmatprep.subr.mxu0 0.0
        %1325 = vmatpush1.xpose.msra.mxu0 0.0
        %1326 = vmatprep.subr.mxu0 0.0
        %1327 = vmatpush1.xpose.msra.mxu0 0.0
        %1328 = vmatprep.subr.mxu0 0.0
        %1329 = vmatpush1.xpose.msra.mxu0 0.0
        %1330 = vmatprep.subr.mxu0 0.0
        %1331 = vmatpush1.xpose.msra.mxu0 0.0
        %1332 = vmatprep.subr.mxu0 0.0
        %1333 = vmatpush1.xpose.msra.mxu0 0.0
        %1334 = vmatprep.subr.mxu0 0.0
        %1335 = vmatpush1.xpose.msra.mxu0 0.0
        %1336 = vmatprep.subr.mxu0 0.0
        %1337 = vmatpush1.xpose.msra.mxu0 0.0
        %1338 = vmatprep.subr.mxu0 0.0
        %1339 = vmatpush1.xpose.msra.mxu0 0.0
        %1340 = vmatprep.subr.mxu0 0.0
        %1341 = vmatpush1.xpose.msra.mxu0 0.0
        %1342 = vmatprep.subr.mxu0 0.0
        %1343 = vmatpush1.xpose.msra.mxu0 0.0
        %1344 = vmatprep.subr.mxu0 0.0
        %1345 = vmatpush1.xpose.msra.mxu0 0.0
        %1346 = vmatprep.subr.mxu0 0.0
        %1347 = vmatpush1.xpose.msra.mxu0 0.0
        %1348 = vmatprep.subr.mxu0 0.0
        %1349 = vmatpush1.xpose.msra.mxu0 0.0
        %1350 = vmatprep.subr.mxu0 0.0
        %1351 = vmatpush1.xpose.msra.mxu0 0.0
        %1352 = vmatprep.mubr.f32.mxu0 0.0
        %1353 = vmatmul.mubr.f32.gmra.mrb[0].mxu0 %v1280
        %v1354 = vpop.f32.mrb[0].mxu0
        %v1355 = vadd.f32 0.0, %v1354
        %v1356 = vpop.f32.mrb[0].mxu0
        %1357 = vdwg.mxu0
        %v1359 = vsel %vm422, %v698, 0
        %v1362 = vsel %vm422, %v1111, 0
        %v1365 = vsel %vm422, %v1112, 0
        %1367 = vmatprep.subr.mxu0 0.0
        %1368 = vmatpush1.xpose.msra.mxu0 %v1362
        %1369 = vmatprep.subr.mxu0 0.0
        %1370 = vmatpush1.xpose.msra.mxu0 %v1365
        %1371 = vmatprep.subr.mxu0 0.0
        %1372 = vmatpush1.xpose.msra.mxu0 0.0
        %1373 = vmatprep.subr.mxu0 0.0
        %1374 = vmatpush1.xpose.msra.mxu0 0.0
        %1375 = vmatprep.subr.mxu0 0.0
        %1376 = vmatpush1.xpose.msra.mxu0 0.0
        %1377 = vmatprep.subr.mxu0 0.0
        %1378 = vmatpush1.xpose.msra.mxu0 0.0
        %1379 = vmatprep.subr.mxu0 0.0
        %1380 = vmatpush1.xpose.msra.mxu0 0.0
        %1381 = vmatprep.subr.mxu0 0.0
        %1382 = vmatpush1.xpose.msra.mxu0 0.0
        %1383 = vmatprep.subr.mxu0 0.0
        %1384 = vmatpush1.xpose.msra.mxu0 0.0
        %1385 = vmatprep.subr.mxu0 0.0
        %1386 = vmatpush1.xpose.msra.mxu0 0.0
        %1387 = vmatprep.subr.mxu0 0.0
        %1388 = vmatpush1.xpose.msra.mxu0 0.0
        %1389 = vmatprep.subr.mxu0 0.0
        %1390 = vmatpush1.xpose.msra.mxu0 0.0
        %1391 = vmatprep.subr.mxu0 0.0
        %1392 = vmatpush1.xpose.msra.mxu0 0.0
        %1393 = vmatprep.subr.mxu0 0.0
        %1394 = vmatpush1.xpose.msra.mxu0 0.0
        %1395 = vmatprep.subr.mxu0 0.0
        %1396 = vmatpush1.xpose.msra.mxu0 0.0
        %1397 = vmatprep.subr.mxu0 0.0
        %1398 = vmatpush1.xpose.msra.mxu0 0.0
        %1399 = vmatprep.subr.mxu0 0.0
        %1400 = vmatpush1.xpose.msra.mxu0 0.0
        %1401 = vmatprep.subr.mxu0 0.0
        %1402 = vmatpush1.xpose.msra.mxu0 0.0
        %1403 = vmatprep.subr.mxu0 0.0
        %1404 = vmatpush1.xpose.msra.mxu0 0.0
        %1405 = vmatprep.subr.mxu0 0.0
        %1406 = vmatpush1.xpose.msra.mxu0 0.0
        %1407 = vmatprep.subr.mxu0 0.0
        %1408 = vmatpush1.xpose.msra.mxu0 0.0
        %1409 = vmatprep.subr.mxu0 0.0
        %1410 = vmatpush1.xpose.msra.mxu0 0.0
        %1411 = vmatprep.subr.mxu0 0.0
        %1412 = vmatpush1.xpose.msra.mxu0 0.0
        %1413 = vmatprep.subr.mxu0 0.0
        %1414 = vmatpush1.xpose.msra.mxu0 0.0
        %1415 = vmatprep.subr.mxu0 0.0
        %1416 = vmatpush1.xpose.msra.mxu0 0.0
        %1417 = vmatprep.subr.mxu0 0.0
        %1418 = vmatpush1.xpose.msra.mxu0 0.0
        %1419 = vmatprep.subr.mxu0 0.0
        %1420 = vmatpush1.xpose.msra.mxu0 0.0
        %1421 = vmatprep.subr.mxu0 0.0
        %1422 = vmatpush1.xpose.msra.mxu0 0.0
        %1423 = vmatprep.subr.mxu0 0.0
        %1424 = vmatpush1.xpose.msra.mxu0 0.0
        %1425 = vmatprep.subr.mxu0 0.0
        %1426 = vmatpush1.xpose.msra.mxu0 0.0
        %1427 = vmatprep.subr.mxu0 0.0
        %1428 = vmatpush1.xpose.msra.mxu0 0.0
        %1429 = vmatprep.subr.mxu0 0.0
        %1430 = vmatpush1.xpose.msra.mxu0 0.0
        %1431 = vmatprep.mubr.f32.mxu0 0.0
        %1432 = vmatmul.mubr.f32.gmra.mrb[0].mxu0 %v1359
        %v1433 = vpop.f32.mrb[0].mxu0
        %v1434 = vadd.f32 0.0, %v1433
        %v1435 = vpop.f32.mrb[0].mxu0
        %1436 = vdwg.mxu0
        %v1438 = vsel %vm422, %v699, 0
        %v1441 = vsel %vm422, %v1113, 0
        %v1444 = vsel %vm422, %v1114, 0
        %1446 = vmatprep.subr.mxu0 0.0
        %1447 = vmatpush1.xpose.msra.mxu0 %v1441
        %1448 = vmatprep.subr.mxu0 0.0
        %1449 = vmatpush1.xpose.msra.mxu0 %v1444
        %1450 = vmatprep.subr.mxu0 0.0
        %1451 = vmatpush1.xpose.msra.mxu0 0.0
        %1452 = vmatprep.subr.mxu0 0.0
        %1453 = vmatpush1.xpose.msra.mxu0 0.0
        %1454 = vmatprep.subr.mxu0 0.0
        %1455 = vmatpush1.xpose.msra.mxu0 0.0
        %1456 = vmatprep.subr.mxu0 0.0
        %1457 = vmatpush1.xpose.msra.mxu0 0.0
        %1458 = vmatprep.subr.mxu0 0.0
        %1459 = vmatpush1.xpose.msra.mxu0 0.0
        %1460 = vmatprep.subr.mxu0 0.0
        %1461 = vmatpush1.xpose.msra.mxu0 0.0
        %1462 = vmatprep.subr.mxu0 0.0
        %1463 = vmatpush1.xpose.msra.mxu0 0.0
        %1464 = vmatprep.subr.mxu0 0.0
        %1465 = vmatpush1.xpose.msra.mxu0 0.0
        %1466 = vmatprep.subr.mxu0 0.0
        %1467 = vmatpush1.xpose.msra.mxu0 0.0
        %1468 = vmatprep.subr.mxu0 0.0
        %1469 = vmatpush1.xpose.msra.mxu0 0.0
        %1470 = vmatprep.subr.mxu0 0.0
        %1471 = vmatpush1.xpose.msra.mxu0 0.0
        %1472 = vmatprep.subr.mxu0 0.0
        %1473 = vmatpush1.xpose.msra.mxu0 0.0
        %1474 = vmatprep.subr.mxu0 0.0
        %1475 = vmatpush1.xpose.msra.mxu0 0.0
        %1476 = vmatprep.subr.mxu0 0.0
        %1477 = vmatpush1.xpose.msra.mxu0 0.0
        %1478 = vmatprep.subr.mxu0 0.0
        %1479 = vmatpush1.xpose.msra.mxu0 0.0
        %1480 = vmatprep.subr.mxu0 0.0
        %1481 = vmatpush1.xpose.msra.mxu0 0.0
        %1482 = vmatprep.subr.mxu0 0.0
        %1483 = vmatpush1.xpose.msra.mxu0 0.0
        %1484 = vmatprep.subr.mxu0 0.0
        %1485 = vmatpush1.xpose.msra.mxu0 0.0
        %1486 = vmatprep.subr.mxu0 0.0
        %1487 = vmatpush1.xpose.msra.mxu0 0.0
        %1488 = vmatprep.subr.mxu0 0.0
        %1489 = vmatpush1.xpose.msra.mxu0 0.0
        %1490 = vmatprep.subr.mxu0 0.0
        %1491 = vmatpush1.xpose.msra.mxu0 0.0
        %1492 = vmatprep.subr.mxu0 0.0
        %1493 = vmatpush1.xpose.msra.mxu0 0.0
        %1494 = vmatprep.subr.mxu0 0.0
        %1495 = vmatpush1.xpose.msra.mxu0 0.0
        %1496 = vmatprep.subr.mxu0 0.0
        %1497 = vmatpush1.xpose.msra.mxu0 0.0
        %1498 = vmatprep.subr.mxu0 0.0
        %1499 = vmatpush1.xpose.msra.mxu0 0.0
        %1500 = vmatprep.subr.mxu0 0.0
        %1501 = vmatpush1.xpose.msra.mxu0 0.0
        %1502 = vmatprep.subr.mxu0 0.0
        %1503 = vmatpush1.xpose.msra.mxu0 0.0
        %1504 = vmatprep.subr.mxu0 0.0
        %1505 = vmatpush1.xpose.msra.mxu0 0.0
        %1506 = vmatprep.subr.mxu0 0.0
        %1507 = vmatpush1.xpose.msra.mxu0 0.0
        %1508 = vmatprep.subr.mxu0 0.0
        %1509 = vmatpush1.xpose.msra.mxu0 0.0
        %1510 = vmatprep.mubr.f32.mxu0 0.0
        %1511 = vmatmul.mubr.f32.gmra.mrb[0].mxu0 %v1438
        %v1512 = vpop.f32.mrb[0].mxu0
        %v1513 = vadd.f32 0.0, %v1512
        %v1514 = vpop.f32.mrb[0].mxu0
        %1515 = vdwg.mxu0
        %v1517 = vsel %vm422, %v700, 0
        %v1520 = vsel %vm422, %v1115, 0
        %v1523 = vsel %vm422, %v1116, 0
        %1525 = vmatprep.subr.mxu0 0.0
        %1526 = vmatpush1.xpose.msra.mxu0 %v1520
        %1527 = vmatprep.subr.mxu0 0.0
        %1528 = vmatpush1.xpose.msra.mxu0 %v1523
        %1529 = vmatprep.subr.mxu0 0.0
        %1530 = vmatpush1.xpose.msra.mxu0 0.0
        %1531 = vmatprep.subr.mxu0 0.0
        %1532 = vmatpush1.xpose.msra.mxu0 0.0
        %1533 = vmatprep.subr.mxu0 0.0
        %1534 = vmatpush1.xpose.msra.mxu0 0.0
        %1535 = vmatprep.subr.mxu0 0.0
        %1536 = vmatpush1.xpose.msra.mxu0 0.0
        %1537 = vmatprep.subr.mxu0 0.0
        %1538 = vmatpush1.xpose.msra.mxu0 0.0
        %1539 = vmatprep.subr.mxu0 0.0
        %1540 = vmatpush1.xpose.msra.mxu0 0.0
        %1541 = vmatprep.subr.mxu0 0.0
        %1542 = vmatpush1.xpose.msra.mxu0 0.0
        %1543 = vmatprep.subr.mxu0 0.0
        %1544 = vmatpush1.xpose.msra.mxu0 0.0
        %1545 = vmatprep.subr.mxu0 0.0
        %1546 = vmatpush1.xpose.msra.mxu0 0.0
        %1547 = vmatprep.subr.mxu0 0.0
        %1548 = vmatpush1.xpose.msra.mxu0 0.0
        %1549 = vmatprep.subr.mxu0 0.0
        %1550 = vmatpush1.xpose.msra.mxu0 0.0
        %1551 = vmatprep.subr.mxu0 0.0
        %1552 = vmatpush1.xpose.msra.mxu0 0.0
        %1553 = vmatprep.subr.mxu0 0.0
        %1554 = vmatpush1.xpose.msra.mxu0 0.0
        %1555 = vmatprep.subr.mxu0 0.0
        %1556 = vmatpush1.xpose.msra.mxu0 0.0
        %1557 = vmatprep.subr.mxu0 0.0
        %1558 = vmatpush1.xpose.msra.mxu0 0.0
        %1559 = vmatprep.subr.mxu0 0.0
        %1560 = vmatpush1.xpose.msra.mxu0 0.0
        %1561 = vmatprep.subr.mxu0 0.0
        %1562 = vmatpush1.xpose.msra.mxu0 0.0
        %1563 = vmatprep.subr.mxu0 0.0
        %1564 = vmatpush1.xpose.msra.mxu0 0.0
        %1565 = vmatprep.subr.mxu0 0.0
        %1566 = vmatpush1.xpose.msra.mxu0 0.0
        %1567 = vmatprep.subr.mxu0 0.0
        %1568 = vmatpush1.xpose.msra.mxu0 0.0
        %1569 = vmatprep.subr.mxu0 0.0
        %1570 = vmatpush1.xpose.msra.mxu0 0.0
        %1571 = vmatprep.subr.mxu0 0.0
        %1572 = vmatpush1.xpose.msra.mxu0 0.0
        %1573 = vmatprep.subr.mxu0 0.0
        %1574 = vmatpush1.xpose.msra.mxu0 0.0
        %1575 = vmatprep.subr.mxu0 0.0
        %1576 = vmatpush1.xpose.msra.mxu0 0.0
        %1577 = vmatprep.subr.mxu0 0.0
        %1578 = vmatpush1.xpose.msra.mxu0 0.0
        %1579 = vmatprep.subr.mxu0 0.0
        %1580 = vmatpush1.xpose.msra.mxu0 0.0
        %1581 = vmatprep.subr.mxu0 0.0
        %1582 = vmatpush1.xpose.msra.mxu0 0.0
        %1583 = vmatprep.subr.mxu0 0.0
        %1584 = vmatpush1.xpose.msra.mxu0 0.0
        %1585 = vmatprep.subr.mxu0 0.0
        %1586 = vmatpush1.xpose.msra.mxu0 0.0
        %1587 = vmatprep.subr.mxu0 0.0
        %1588 = vmatpush1.xpose.msra.mxu0 0.0
        %1589 = vmatprep.mubr.f32.mxu0 0.0
        %1590 = vmatmul.mubr.f32.gmra.mrb[0].mxu0 %v1517
        %v1591 = vpop.f32.mrb[0].mxu0
        %v1592 = vadd.f32 0.0, %v1591
        %v1593 = vpop.f32.mrb[0].mxu0
        %1594 = vdwg.mxu0
        %v1596 = vsel %vm422, %v701, 0
        %v1599 = vsel %vm422, %v1117, 0
        %v1602 = vsel %vm422, %v1118, 0
        %1604 = vmatprep.subr.mxu0 0.0
        %1605 = vmatpush1.xpose.msra.mxu0 %v1599
        %1606 = vmatprep.subr.mxu0 0.0
        %1607 = vmatpush1.xpose.msra.mxu0 %v1602
        %1608 = vmatprep.subr.mxu0 0.0
        %1609 = vmatpush1.xpose.msra.mxu0 0.0
        %1610 = vmatprep.subr.mxu0 0.0
        %1611 = vmatpush1.xpose.msra.mxu0 0.0
        %1612 = vmatprep.subr.mxu0 0.0
        %1613 = vmatpush1.xpose.msra.mxu0 0.0
        %1614 = vmatprep.subr.mxu0 0.0
        %1615 = vmatpush1.xpose.msra.mxu0 0.0
        %1616 = vmatprep.subr.mxu0 0.0
        %1617 = vmatpush1.xpose.msra.mxu0 0.0
        %1618 = vmatprep.subr.mxu0 0.0
        %1619 = vmatpush1.xpose.msra.mxu0 0.0
        %1620 = vmatprep.subr.mxu0 0.0
        %1621 = vmatpush1.xpose.msra.mxu0 0.0
        %1622 = vmatprep.subr.mxu0 0.0
        %1623 = vmatpush1.xpose.msra.mxu0 0.0
        %1624 = vmatprep.subr.mxu0 0.0
        %1625 = vmatpush1.xpose.msra.mxu0 0.0
        %1626 = vmatprep.subr.mxu0 0.0
        %1627 = vmatpush1.xpose.msra.mxu0 0.0
        %1628 = vmatprep.subr.mxu0 0.0
        %1629 = vmatpush1.xpose.msra.mxu0 0.0
        %1630 = vmatprep.subr.mxu0 0.0
        %1631 = vmatpush1.xpose.msra.mxu0 0.0
        %1632 = vmatprep.subr.mxu0 0.0
        %1633 = vmatpush1.xpose.msra.mxu0 0.0
        %1634 = vmatprep.subr.mxu0 0.0
        %1635 = vmatpush1.xpose.msra.mxu0 0.0
        %1636 = vmatprep.subr.mxu0 0.0
        %1637 = vmatpush1.xpose.msra.mxu0 0.0
        %1638 = vmatprep.subr.mxu0 0.0
        %1639 = vmatpush1.xpose.msra.mxu0 0.0
        %1640 = vmatprep.subr.mxu0 0.0
        %1641 = vmatpush1.xpose.msra.mxu0 0.0
        %1642 = vmatprep.subr.mxu0 0.0
        %1643 = vmatpush1.xpose.msra.mxu0 0.0
        %1644 = vmatprep.subr.mxu0 0.0
        %1645 = vmatpush1.xpose.msra.mxu0 0.0
        %1646 = vmatprep.subr.mxu0 0.0
        %1647 = vmatpush1.xpose.msra.mxu0 0.0
        %1648 = vmatprep.subr.mxu0 0.0
        %1649 = vmatpush1.xpose.msra.mxu0 0.0
        %1650 = vmatprep.subr.mxu0 0.0
        %1651 = vmatpush1.xpose.msra.mxu0 0.0
        %1652 = vmatprep.subr.mxu0 0.0
        %1653 = vmatpush1.xpose.msra.mxu0 0.0
        %1654 = vmatprep.subr.mxu0 0.0
        %1655 = vmatpush1.xpose.msra.mxu0 0.0
        %1656 = vmatprep.subr.mxu0 0.0
        %1657 = vmatpush1.xpose.msra.mxu0 0.0
        %1658 = vmatprep.subr.mxu0 0.0
        %1659 = vmatpush1.xpose.msra.mxu0 0.0
        %1660 = vmatprep.subr.mxu0 0.0
        %1661 = vmatpush1.xpose.msra.mxu0 0.0
        %1662 = vmatprep.subr.mxu0 0.0
        %1663 = vmatpush1.xpose.msra.mxu0 0.0
        %1664 = vmatprep.subr.mxu0 0.0
        %1665 = vmatpush1.xpose.msra.mxu0 0.0
        %1666 = vmatprep.subr.mxu0 0.0
        %1667 = vmatpush1.xpose.msra.mxu0 0.0
        %1668 = vmatprep.mubr.f32.mxu0 0.0
        %1669 = vmatmul.mubr.f32.gmra.mrb[0].mxu0 %v1596
        %v1670 = vpop.f32.mrb[0].mxu0
        %v1671 = vadd.f32 0.0, %v1670
        %v1672 = vpop.f32.mrb[0].mxu0
        %1673 = vdwg.mxu0
        %v1675 = vsel %vm422, %v702, 0
        %v1678 = vsel %vm422, %v1119, 0
        %v1681 = vsel %vm422, %v1120, 0
        %1683 = vmatprep.subr.mxu0 0.0
        %1684 = vmatpush1.xpose.msra.mxu0 %v1678
        %1685 = vmatprep.subr.mxu0 0.0
        %1686 = vmatpush1.xpose.msra.mxu0 %v1681
        %1687 = vmatprep.subr.mxu0 0.0
        %1688 = vmatpush1.xpose.msra.mxu0 0.0
        %1689 = vmatprep.subr.mxu0 0.0
        %1690 = vmatpush1.xpose.msra.mxu0 0.0
        %1691 = vmatprep.subr.mxu0 0.0
        %1692 = vmatpush1.xpose.msra.mxu0 0.0
        %1693 = vmatprep.subr.mxu0 0.0
        %1694 = vmatpush1.xpose.msra.mxu0 0.0
        %1695 = vmatprep.subr.mxu0 0.0
        %1696 = vmatpush1.xpose.msra.mxu0 0.0
        %1697 = vmatprep.subr.mxu0 0.0
        %1698 = vmatpush1.xpose.msra.mxu0 0.0
        %1699 = vmatprep.subr.mxu0 0.0
        %1700 = vmatpush1.xpose.msra.mxu0 0.0
        %1701 = vmatprep.subr.mxu0 0.0
        %1702 = vmatpush1.xpose.msra.mxu0 0.0
        %1703 = vmatprep.subr.mxu0 0.0
        %1704 = vmatpush1.xpose.msra.mxu0 0.0
        %1705 = vmatprep.subr.mxu0 0.0
        %1706 = vmatpush1.xpose.msra.mxu0 0.0
        %1707 = vmatprep.subr.mxu0 0.0
        %1708 = vmatpush1.xpose.msra.mxu0 0.0
        %1709 = vmatprep.subr.mxu0 0.0
        %1710 = vmatpush1.xpose.msra.mxu0 0.0
        %1711 = vmatprep.subr.mxu0 0.0
        %1712 = vmatpush1.xpose.msra.mxu0 0.0
        %1713 = vmatprep.subr.mxu0 0.0
        %1714 = vmatpush1.xpose.msra.mxu0 0.0
        %1715 = vmatprep.subr.mxu0 0.0
        %1716 = vmatpush1.xpose.msra.mxu0 0.0
        %1717 = vmatprep.subr.mxu0 0.0
        %1718 = vmatpush1.xpose.msra.mxu0 0.0
        %1719 = vmatprep.subr.mxu0 0.0
        %1720 = vmatpush1.xpose.msra.mxu0 0.0
        %1721 = vmatprep.subr.mxu0 0.0
        %1722 = vmatpush1.xpose.msra.mxu0 0.0
        %1723 = vmatprep.subr.mxu0 0.0
        %1724 = vmatpush1.xpose.msra.mxu0 0.0
        %1725 = vmatprep.subr.mxu0 0.0
        %1726 = vmatpush1.xpose.msra.mxu0 0.0
        %1727 = vmatprep.subr.mxu0 0.0
        %1728 = vmatpush1.xpose.msra.mxu0 0.0
        %1729 = vmatprep.subr.mxu0 0.0
        %1730 = vmatpush1.xpose.msra.mxu0 0.0
        %1731 = vmatprep.subr.mxu0 0.0
        %1732 = vmatpush1.xpose.msra.mxu0 0.0
        %1733 = vmatprep.subr.mxu0 0.0
        %1734 = vmatpush1.xpose.msra.mxu0 0.0
        %1735 = vmatprep.subr.mxu0 0.0
        %1736 = vmatpush1.xpose.msra.mxu0 0.0
        %1737 = vmatprep.subr.mxu0 0.0
        %1738 = vmatpush1.xpose.msra.mxu0 0.0
        %1739 = vmatprep.subr.mxu0 0.0
        %1740 = vmatpush1.xpose.msra.mxu0 0.0
        %1741 = vmatprep.subr.mxu0 0.0
        %1742 = vmatpush1.xpose.msra.mxu0 0.0
        %1743 = vmatprep.subr.mxu0 0.0
        %1744 = vmatpush1.xpose.msra.mxu0 0.0
        %1745 = vmatprep.subr.mxu0 0.0
        %1746 = vmatpush1.xpose.msra.mxu0 0.0
        %1747 = vmatprep.mubr.f32.mxu0 0.0
        %1748 = vmatmul.mubr.f32.gmra.mrb[0].mxu0 %v1675
        %v1749 = vpop.f32.mrb[0].mxu0
        %v1750 = vadd.f32 0.0, %v1749
        %v1751 = vpop.f32.mrb[0].mxu0
        %1752 = vdwg.mxu0
        %vm1753 = vcmask 130048
        %v1754 = vsel %vm1753, %v1197, -inf
        %1755 = vmax.xlane.f32.xlu0 %v1754
        %v1756 = vpop.xlane.xlu0 %1755
        %v1757 = vsel %vm1753, %v1276, -inf
        %1758 = vmax.xlane.f32.xlu0 %v1757
        %v1759 = vpop.xlane.xlu0 %1758
        %v1760 = vsel %vm1753, %v1355, -inf
        %1761 = vmax.xlane.f32.xlu0 %v1760
        %v1762 = vpop.xlane.xlu0 %1761
        %v1763 = vsel %vm1753, %v1434, -inf
        %1764 = vmax.xlane.f32.xlu0 %v1763
        %v1765 = vpop.xlane.xlu0 %1764
        %v1766 = vsel %vm1753, %v1513, -inf
        %1767 = vmax.xlane.f32.xlu0 %v1766
        %v1768 = vpop.xlane.xlu0 %1767
        %v1769 = vsel %vm1753, %v1592, -inf
        %1770 = vmax.xlane.f32.xlu0 %v1769
        %v1771 = vpop.xlane.xlu0 %1770
        %v1772 = vsel %vm1753, %v1671, -inf
        %1773 = vmax.xlane.f32.xlu0 %v1772
        %v1774 = vpop.xlane.xlu0 %1773
        %v1775 = vsel %vm1753, %v1750, -inf
        %1776 = vmax.xlane.f32.xlu0 %v1775
        %v1777 = vpop.xlane.xlu0 %1776
        %v1778 = vsub.f32 %v1197, %v1756
        %v1779 = vsub.f32 %v1276, %v1759
        %v1780 = vsub.f32 %v1355, %v1762
        %v1781 = vsub.f32 %v1434, %v1765
        %v1782 = vsub.f32 %v1513, %v1768
        %v1783 = vsub.f32 %v1592, %v1771
        %v1784 = vsub.f32 %v1671, %v1774
        %v1785 = vsub.f32 %v1750, %v1777
        %v1786 = vmul.f32 %v1778, 1.442695
        %v1787 = vpow.pop %v1786
        %v1788 = vmul.f32 %v1779, 1.442695
        %v1789 = vpow.pop %v1788
        %v1790 = vmul.f32 %v1780, 1.442695
        %v1791 = vpow.pop %v1790
        %v1792 = vmul.f32 %v1781, 1.442695
        %v1793 = vpow.pop %v1792
        %v1794 = vmul.f32 %v1782, 1.442695
        %v1795 = vpow.pop %v1794
        %v1796 = vmul.f32 %v1783, 1.442695
        %v1797 = vpow.pop %v1796
        %v1798 = vmul.f32 %v1784, 1.442695
        %v1799 = vpow.pop %v1798
        %v1800 = vmul.f32 %v1785, 1.442695
        %v1801 = vpow.pop %v1800
        %v1802 = vsel %vm1753, %v1787, 0.0
        %1803 = vadd.xlane.f32.xlu0 %v1802
        %v1804 = vpop.xlane.xlu0 %1803
        %v1805 = vsel %vm1753, %v1789, 0.0
        %1806 = vadd.xlane.f32.xlu0 %v1805
        %v1807 = vpop.xlane.xlu0 %1806
        %v1808 = vsel %vm1753, %v1791, 0.0
        %1809 = vadd.xlane.f32.xlu0 %v1808
        %v1810 = vpop.xlane.xlu0 %1809
        %v1811 = vsel %vm1753, %v1793, 0.0
        %1812 = vadd.xlane.f32.xlu0 %v1811
        %v1813 = vpop.xlane.xlu0 %1812
        %v1814 = vsel %vm1753, %v1795, 0.0
        %1815 = vadd.xlane.f32.xlu0 %v1814
        %v1816 = vpop.xlane.xlu0 %1815
        %v1817 = vsel %vm1753, %v1797, 0.0
        %1818 = vadd.xlane.f32.xlu0 %v1817
        %v1819 = vpop.xlane.xlu0 %1818
        %v1820 = vsel %vm1753, %v1799, 0.0
        %1821 = vadd.xlane.f32.xlu0 %v1820
        %v1822 = vpop.xlane.xlu0 %1821
        %v1823 = vsel %vm1753, %v1801, 0.0
        %1824 = vadd.xlane.f32.xlu0 %v1823
        %v1825 = vpop.xlane.xlu0 %1824
        %v1826 = vrcp.pop %v1804
        %v1827 = vmul.f32 %v1787, %v1826
        %v1828 = vrcp.pop %v1807
        %v1829 = vmul.f32 %v1789, %v1828
        %v1830 = vrcp.pop %v1810
        %v1831 = vmul.f32 %v1791, %v1830
        %v1832 = vrcp.pop %v1813
        %v1833 = vmul.f32 %v1793, %v1832
        %v1834 = vrcp.pop %v1816
        %v1835 = vmul.f32 %v1795, %v1834
        %v1836 = vrcp.pop %v1819
        %v1837 = vmul.f32 %v1797, %v1836
        %v1838 = vrcp.pop %v1822
        %v1839 = vmul.f32 %v1799, %v1838
        %v1840 = vrcp.pop %v1825
        %v1841 = vmul.f32 %v1801, %v1840
        %v1843 = vsel %vm1753, %v1827, 0
        %1845 = vmatprep.subr.mxu0 0.0
        %1846 = vmatpush1.msra.mxu0 %v400
        %1847 = vmatprep.subr.mxu0 0.0
        %1848 = vmatpush1.msra.mxu0 %v401
        %1849 = vmatprep.subr.mxu0 0.0
        %1850 = vmatpush1.msra.mxu0 0.0
        %1851 = vmatprep.subr.mxu0 0.0
        %1852 = vmatpush1.msra.mxu0 0.0
        %1853 = vmatprep.subr.mxu0 0.0
        %1854 = vmatpush1.msra.mxu0 0.0
        %1855 = vmatprep.subr.mxu0 0.0
        %1856 = vmatpush1.msra.mxu0 0.0
        %1857 = vmatprep.subr.mxu0 0.0
        %1858 = vmatpush1.msra.mxu0 0.0
        %1859 = vmatprep.subr.mxu0 0.0
        %1860 = vmatpush1.msra.mxu0 0.0
        %1861 = vmatprep.subr.mxu0 0.0
        %1862 = vmatpush1.msra.mxu0 0.0
        %1863 = vmatprep.subr.mxu0 0.0
        %1864 = vmatpush1.msra.mxu0 0.0
        %1865 = vmatprep.subr.mxu0 0.0
        %1866 = vmatpush1.msra.mxu0 0.0
        %1867 = vmatprep.subr.mxu0 0.0
        %1868 = vmatpush1.msra.mxu0 0.0
        %1869 = vmatprep.subr.mxu0 0.0
        %1870 = vmatpush1.msra.mxu0 0.0
        %1871 = vmatprep.subr.mxu0 0.0
        %1872 = vmatpush1.msra.mxu0 0.0
        %1873 = vmatprep.subr.mxu0 0.0
        %1874 = vmatpush1.msra.mxu0 0.0
        %1875 = vmatprep.subr.mxu0 0.0
        %1876 = vmatpush1.msra.mxu0 0.0
        %1877 = vmatprep.subr.mxu0 0.0
        %1878 = vmatpush1.msra.mxu0 0.0
        %1879 = vmatprep.subr.mxu0 0.0
        %1880 = vmatpush1.msra.mxu0 0.0
        %1881 = vmatprep.subr.mxu0 0.0
        %1882 = vmatpush1.msra.mxu0 0.0
        %1883 = vmatprep.subr.mxu0 0.0
        %1884 = vmatpush1.msra.mxu0 0.0
        %1885 = vmatprep.subr.mxu0 0.0
        %1886 = vmatpush1.msra.mxu0 0.0
        %1887 = vmatprep.subr.mxu0 0.0
        %1888 = vmatpush1.msra.mxu0 0.0
        %1889 = vmatprep.subr.mxu0 0.0
        %1890 = vmatpush1.msra.mxu0 0.0
        %1891 = vmatprep.subr.mxu0 0.0
        %1892 = vmatpush1.msra.mxu0 0.0
        %1893 = vmatprep.subr.mxu0 0.0
        %1894 = vmatpush1.msra.mxu0 0.0
        %1895 = vmatprep.subr.mxu0 0.0
        %1896 = vmatpush1.msra.mxu0 0.0
        %1897 = vmatprep.subr.mxu0 0.0
        %1898 = vmatpush1.msra.mxu0 0.0
        %1899 = vmatprep.subr.mxu0 0.0
        %1900 = vmatpush1.msra.mxu0 0.0
        %1901 = vmatprep.subr.mxu0 0.0
        %1902 = vmatpush1.msra.mxu0 0.0
        %1903 = vmatprep.subr.mxu0 0.0
        %1904 = vmatpush1.msra.mxu0 0.0
        %1905 = vmatprep.subr.mxu0 0.0
        %1906 = vmatpush1.msra.mxu0 0.0
        %1907 = vmatprep.subr.mxu0 0.0
        %1908 = vmatpush1.msra.mxu0 0.0
        %1909 = vmatprep.mubr.f32.mxu0 0.0
        %1910 = vmatmul.mubr.f32.gmra.mrb[0].mxu0 %v1843
        %v1911 = vpop.f32.mrb[0].mxu0
        %v1912 = vadd.f32 0.0, %v1911
        %v1913 = vpop.f32.mrb[0].mxu0
        %1914 = vdwg.mxu0
        %v1916 = vsel %vm1753, %v1829, 0
        %1918 = vmatprep.subr.mxu0 0.0
        %1919 = vmatpush1.msra.mxu0 %v402
        %1920 = vmatprep.subr.mxu0 0.0
        %1921 = vmatpush1.msra.mxu0 %v403
        %1922 = vmatprep.subr.mxu0 0.0
        %1923 = vmatpush1.msra.mxu0 0.0
        %1924 = vmatprep.subr.mxu0 0.0
        %1925 = vmatpush1.msra.mxu0 0.0
        %1926 = vmatprep.subr.mxu0 0.0
        %1927 = vmatpush1.msra.mxu0 0.0
        %1928 = vmatprep.subr.mxu0 0.0
        %1929 = vmatpush1.msra.mxu0 0.0
        %1930 = vmatprep.subr.mxu0 0.0
        %1931 = vmatpush1.msra.mxu0 0.0
        %1932 = vmatprep.subr.mxu0 0.0
        %1933 = vmatpush1.msra.mxu0 0.0
        %1934 = vmatprep.subr.mxu0 0.0
        %1935 = vmatpush1.msra.mxu0 0.0
        %1936 = vmatprep.subr.mxu0 0.0
        %1937 = vmatpush1.msra.mxu0 0.0
        %1938 = vmatprep.subr.mxu0 0.0
        %1939 = vmatpush1.msra.mxu0 0.0
        %1940 = vmatprep.subr.mxu0 0.0
        %1941 = vmatpush1.msra.mxu0 0.0
        %1942 = vmatprep.subr.mxu0 0.0
        %1943 = vmatpush1.msra.mxu0 0.0
        %1944 = vmatprep.subr.mxu0 0.0
        %1945 = vmatpush1.msra.mxu0 0.0
        %1946 = vmatprep.subr.mxu0 0.0
        %1947 = vmatpush1.msra.mxu0 0.0
        %1948 = vmatprep.subr.mxu0 0.0
        %1949 = vmatpush1.msra.mxu0 0.0
        %1950 = vmatprep.subr.mxu0 0.0
        %1951 = vmatpush1.msra.mxu0 0.0
        %1952 = vmatprep.subr.mxu0 0.0
        %1953 = vmatpush1.msra.mxu0 0.0
        %1954 = vmatprep.subr.mxu0 0.0
        %1955 = vmatpush1.msra.mxu0 0.0
        %1956 = vmatprep.subr.mxu0 0.0
        %1957 = vmatpush1.msra.mxu0 0.0
        %1958 = vmatprep.subr.mxu0 0.0
        %1959 = vmatpush1.msra.mxu0 0.0
        %1960 = vmatprep.subr.mxu0 0.0
        %1961 = vmatpush1.msra.mxu0 0.0
        %1962 = vmatprep.subr.mxu0 0.0
        %1963 = vmatpush1.msra.mxu0 0.0
        %1964 = vmatprep.subr.mxu0 0.0
        %1965 = vmatpush1.msra.mxu0 0.0
        %1966 = vmatprep.subr.mxu0 0.0
        %1967 = vmatpush1.msra.mxu0 0.0
        %1968 = vmatprep.subr.mxu0 0.0
        %1969 = vmatpush1.msra.mxu0 0.0
        %1970 = vmatprep.subr.mxu0 0.0
        %1971 = vmatpush1.msra.mxu0 0.0
        %1972 = vmatprep.subr.mxu0 0.0
        %1973 = vmatpush1.msra.mxu0 0.0
        %1974 = vmatprep.subr.mxu0 0.0
        %1975 = vmatpush1.msra.mxu0 0.0
        %1976 = vmatprep.subr.mxu0 0.0
        %1977 = vmatpush1.msra.mxu0 0.0
        %1978 = vmatprep.subr.mxu0 0.0
        %1979 = vmatpush1.msra.mxu0 0.0
        %1980 = vmatprep.subr.mxu0 0.0
        %1981 = vmatpush1.msra.mxu0 0.0
        %1982 = vmatprep.mubr.f32.mxu0 0.0
        %1983 = vmatmul.mubr.f32.gmra.mrb[0].mxu0 %v1916
        %v1984 = vpop.f32.mrb[0].mxu0
        %v1985 = vadd.f32 0.0, %v1984
        %v1986 = vpop.f32.mrb[0].mxu0
        %1987 = vdwg.mxu0
        %v1989 = vsel %vm1753, %v1831, 0
        %1991 = vmatprep.subr.mxu0 0.0
        %1992 = vmatpush1.msra.mxu0 %v404
        %1993 = vmatprep.subr.mxu0 0.0
        %1994 = vmatpush1.msra.mxu0 %v405
        %1995 = vmatprep.subr.mxu0 0.0
        %1996 = vmatpush1.msra.mxu0 0.0
        %1997 = vmatprep.subr.mxu0 0.0
        %1998 = vmatpush1.msra.mxu0 0.0
        %1999 = vmatprep.subr.mxu0 0.0
        %2000 = vmatpush1.msra.mxu0 0.0
        %2001 = vmatprep.subr.mxu0 0.0
        %2002 = vmatpush1.msra.mxu0 0.0
        %2003 = vmatprep.subr.mxu0 0.0
        %2004 = vmatpush1.msra.mxu0 0.0
        %2005 = vmatprep.subr.mxu0 0.0
        %2006 = vmatpush1.msra.mxu0 0.0
        %2007 = vmatprep.subr.mxu0 0.0
        %2008 = vmatpush1.msra.mxu0 0.0
        %2009 = vmatprep.subr.mxu0 0.0
        %2010 = vmatpush1.msra.mxu0 0.0
        %2011 = vmatprep.subr.mxu0 0.0
        %2012 = vmatpush1.msra.mxu0 0.0
        %2013 = vmatprep.subr.mxu0 0.0
        %2014 = vmatpush1.msra.mxu0 0.0
        %2015 = vmatprep.subr.mxu0 0.0
        %2016 = vmatpush1.msra.mxu0 0.0
        %2017 = vmatprep.subr.mxu0 0.0
        %2018 = vmatpush1.msra.mxu0 0.0
        %2019 = vmatprep.subr.mxu0 0.0
        %2020 = vmatpush1.msra.mxu0 0.0
        %2021 = vmatprep.subr.mxu0 0.0
        %2022 = vmatpush1.msra.mxu0 0.0
        %2023 = vmatprep.subr.mxu0 0.0
        %2024 = vmatpush1.msra.mxu0 0.0
        %2025 = vmatprep.subr.mxu0 0.0
        %2026 = vmatpush1.msra.mxu0 0.0
        %2027 = vmatprep.subr.mxu0 0.0
        %2028 = vmatpush1.msra.mxu0 0.0
        %2029 = vmatprep.subr.mxu0 0.0
        %2030 = vmatpush1.msra.mxu0 0.0
        %2031 = vmatprep.subr.mxu0 0.0
        %2032 = vmatpush1.msra.mxu0 0.0
        %2033 = vmatprep.subr.mxu0 0.0
        %2034 = vmatpush1.msra.mxu0 0.0
        %2035 = vmatprep.subr.mxu0 0.0
        %2036 = vmatpush1.msra.mxu0 0.0
        %2037 = vmatprep.subr.mxu0 0.0
        %2038 = vmatpush1.msra.mxu0 0.0
        %2039 = vmatprep.subr.mxu0 0.0
        %2040 = vmatpush1.msra.mxu0 0.0
        %2041 = vmatprep.subr.mxu0 0.0
        %2042 = vmatpush1.msra.mxu0 0.0
        %2043 = vmatprep.subr.mxu0 0.0
        %2044 = vmatpush1.msra.mxu0 0.0
        %2045 = vmatprep.subr.mxu0 0.0
        %2046 = vmatpush1.msra.mxu0 0.0
        %2047 = vmatprep.subr.mxu0 0.0
        %2048 = vmatpush1.msra.mxu0 0.0
        %2049 = vmatprep.subr.mxu0 0.0
        %2050 = vmatpush1.msra.mxu0 0.0
        %2051 = vmatprep.subr.mxu0 0.0
        %2052 = vmatpush1.msra.mxu0 0.0
        %2053 = vmatprep.subr.mxu0 0.0
        %2054 = vmatpush1.msra.mxu0 0.0
        %2055 = vmatprep.mubr.f32.mxu0 0.0
        %2056 = vmatmul.mubr.f32.gmra.mrb[0].mxu0 %v1989
        %v2057 = vpop.f32.mrb[0].mxu0
        %v2058 = vadd.f32 0.0, %v2057
        %v2059 = vpop.f32.mrb[0].mxu0
        %2060 = vdwg.mxu0
        %v2062 = vsel %vm1753, %v1833, 0
        %2064 = vmatprep.subr.mxu0 0.0
        %2065 = vmatpush1.msra.mxu0 %v406
        %2066 = vmatprep.subr.mxu0 0.0
        %2067 = vmatpush1.msra.mxu0 %v407
        %2068 = vmatprep.subr.mxu0 0.0
        %2069 = vmatpush1.msra.mxu0 0.0
        %2070 = vmatprep.subr.mxu0 0.0
        %2071 = vmatpush1.msra.mxu0 0.0
        %2072 = vmatprep.subr.mxu0 0.0
        %2073 = vmatpush1.msra.mxu0 0.0
        %2074 = vmatprep.subr.mxu0 0.0
        %2075 = vmatpush1.msra.mxu0 0.0
        %2076 = vmatprep.subr.mxu0 0.0
        %2077 = vmatpush1.msra.mxu0 0.0
        %2078 = vmatprep.subr.mxu0 0.0
        %2079 = vmatpush1.msra.mxu0 0.0
        %2080 = vmatprep.subr.mxu0 0.0
        %2081 = vmatpush1.msra.mxu0 0.0
        %2082 = vmatprep.subr.mxu0 0.0
        %2083 = vmatpush1.msra.mxu0 0.0
        %2084 = vmatprep.subr.mxu0 0.0
        %2085 = vmatpush1.msra.mxu0 0.0
        %2086 = vmatprep.subr.mxu0 0.0
        %2087 = vmatpush1.msra.mxu0 0.0
        %2088 = vmatprep.subr.mxu0 0.0
        %2089 = vmatpush1.msra.mxu0 0.0
        %2090 = vmatprep.subr.mxu0 0.0
        %2091 = vmatpush1.msra.mxu0 0.0
        %2092 = vmatprep.subr.mxu0 0.0
        %2093 = vmatpush1.msra.mxu0 0.0
        %2094 = vmatprep.subr.mxu0 0.0
        %2095 = vmatpush1.msra.mxu0 0.0
        %2096 = vmatprep.subr.mxu0 0.0
        %2097 = vmatpush1.msra.mxu0 0.0
        %2098 = vmatprep.subr.mxu0 0.0
        %2099 = vmatpush1.msra.mxu0 0.0
        %2100 = vmatprep.subr.mxu0 0.0
        %2101 = vmatpush1.msra.mxu0 0.0
        %2102 = vmatprep.subr.mxu0 0.0
        %2103 = vmatpush1.msra.mxu0 0.0
        %2104 = vmatprep.subr.mxu0 0.0
        %2105 = vmatpush1.msra.mxu0 0.0
        %2106 = vmatprep.subr.mxu0 0.0
        %2107 = vmatpush1.msra.mxu0 0.0
        %2108 = vmatprep.subr.mxu0 0.0
        %2109 = vmatpush1.msra.mxu0 0.0
        %2110 = vmatprep.subr.mxu0 0.0
        %2111 = vmatpush1.msra.mxu0 0.0
        %2112 = vmatprep.subr.mxu0 0.0
        %2113 = vmatpush1.msra.mxu0 0.0
        %2114 = vmatprep.subr.mxu0 0.0
        %2115 = vmatpush1.msra.mxu0 0.0
        %2116 = vmatprep.subr.mxu0 0.0
        %2117 = vmatpush1.msra.mxu0 0.0
        %2118 = vmatprep.subr.mxu0 0.0
        %2119 = vmatpush1.msra.mxu0 0.0
        %2120 = vmatprep.subr.mxu0 0.0
        %2121 = vmatpush1.msra.mxu0 0.0
        %2122 = vmatprep.subr.mxu0 0.0
        %2123 = vmatpush1.msra.mxu0 0.0
        %2124 = vmatprep.subr.mxu0 0.0
        %2125 = vmatpush1.msra.mxu0 0.0
        %2126 = vmatprep.subr.mxu0 0.0
        %2127 = vmatpush1.msra.mxu0 0.0
        %2128 = vmatprep.mubr.f32.mxu0 0.0
        %2129 = vmatmul.mubr.f32.gmra.mrb[0].mxu0 %v2062
        %v2130 = vpop.f32.mrb[0].mxu0
        %v2131 = vadd.f32 0.0, %v2130
        %v2132 = vpop.f32.mrb[0].mxu0
        %2133 = vdwg.mxu0
        %v2135 = vsel %vm1753, %v1835, 0
        %2137 = vmatprep.subr.mxu0 0.0
        %2138 = vmatpush1.msra.mxu0 %v408
        %2139 = vmatprep.subr.mxu0 0.0
        %2140 = vmatpush1.msra.mxu0 %v409
        %2141 = vmatprep.subr.mxu0 0.0
        %2142 = vmatpush1.msra.mxu0 0.0
        %2143 = vmatprep.subr.mxu0 0.0
        %2144 = vmatpush1.msra.mxu0 0.0
        %2145 = vmatprep.subr.mxu0 0.0
        %2146 = vmatpush1.msra.mxu0 0.0
        %2147 = vmatprep.subr.mxu0 0.0
        %2148 = vmatpush1.msra.mxu0 0.0
        %2149 = vmatprep.subr.mxu0 0.0
        %2150 = vmatpush1.msra.mxu0 0.0
        %2151 = vmatprep.subr.mxu0 0.0
        %2152 = vmatpush1.msra.mxu0 0.0
        %2153 = vmatprep.subr.mxu0 0.0
        %2154 = vmatpush1.msra.mxu0 0.0
        %2155 = vmatprep.subr.mxu0 0.0
        %2156 = vmatpush1.msra.mxu0 0.0
        %2157 = vmatprep.subr.mxu0 0.0
        %2158 = vmatpush1.msra.mxu0 0.0
        %2159 = vmatprep.subr.mxu0 0.0
        %2160 = vmatpush1.msra.mxu0 0.0
        %2161 = vmatprep.subr.mxu0 0.0
        %2162 = vmatpush1.msra.mxu0 0.0
        %2163 = vmatprep.subr.mxu0 0.0
        %2164 = vmatpush1.msra.mxu0 0.0
        %2165 = vmatprep.subr.mxu0 0.0
        %2166 = vmatpush1.msra.mxu0 0.0
        %2167 = vmatprep.subr.mxu0 0.0
        %2168 = vmatpush1.msra.mxu0 0.0
        %2169 = vmatprep.subr.mxu0 0.0
        %2170 = vmatpush1.msra.mxu0 0.0
        %2171 = vmatprep.subr.mxu0 0.0
        %2172 = vmatpush1.msra.mxu0 0.0
        %2173 = vmatprep.subr.mxu0 0.0
        %2174 = vmatpush1.msra.mxu0 0.0
        %2175 = vmatprep.subr.mxu0 0.0
        %2176 = vmatpush1.msra.mxu0 0.0
        %2177 = vmatprep.subr.mxu0 0.0
        %2178 = vmatpush1.msra.mxu0 0.0
        %2179 = vmatprep.subr.mxu0 0.0
        %2180 = vmatpush1.msra.mxu0 0.0
        %2181 = vmatprep.subr.mxu0 0.0
        %2182 = vmatpush1.msra.mxu0 0.0
        %2183 = vmatprep.subr.mxu0 0.0
        %2184 = vmatpush1.msra.mxu0 0.0
        %2185 = vmatprep.subr.mxu0 0.0
        %2186 = vmatpush1.msra.mxu0 0.0
        %2187 = vmatprep.subr.mxu0 0.0
        %2188 = vmatpush1.msra.mxu0 0.0
        %2189 = vmatprep.subr.mxu0 0.0
        %2190 = vmatpush1.msra.mxu0 0.0
        %2191 = vmatprep.subr.mxu0 0.0
        %2192 = vmatpush1.msra.mxu0 0.0
        %2193 = vmatprep.subr.mxu0 0.0
        %2194 = vmatpush1.msra.mxu0 0.0
        %2195 = vmatprep.subr.mxu0 0.0
        %2196 = vmatpush1.msra.mxu0 0.0
        %2197 = vmatprep.subr.mxu0 0.0
        %2198 = vmatpush1.msra.mxu0 0.0
        %2199 = vmatprep.subr.mxu0 0.0
        %2200 = vmatpush1.msra.mxu0 0.0
        %2201 = vmatprep.mubr.f32.mxu0 0.0
        %2202 = vmatmul.mubr.f32.gmra.mrb[0].mxu0 %v2135
        %v2203 = vpop.f32.mrb[0].mxu0
        %v2204 = vadd.f32 0.0, %v2203
        %v2205 = vpop.f32.mrb[0].mxu0
        %2206 = vdwg.mxu0
        %v2208 = vsel %vm1753, %v1837, 0
        %2210 = vmatprep.subr.mxu0 0.0
        %2211 = vmatpush1.msra.mxu0 %v410
        %2212 = vmatprep.subr.mxu0 0.0
        %2213 = vmatpush1.msra.mxu0 %v411
        %2214 = vmatprep.subr.mxu0 0.0
        %2215 = vmatpush1.msra.mxu0 0.0
        %2216 = vmatprep.subr.mxu0 0.0
        %2217 = vmatpush1.msra.mxu0 0.0
        %2218 = vmatprep.subr.mxu0 0.0
        %2219 = vmatpush1.msra.mxu0 0.0
        %2220 = vmatprep.subr.mxu0 0.0
        %2221 = vmatpush1.msra.mxu0 0.0
        %2222 = vmatprep.subr.mxu0 0.0
        %2223 = vmatpush1.msra.mxu0 0.0
        %2224 = vmatprep.subr.mxu0 0.0
        %2225 = vmatpush1.msra.mxu0 0.0
        %2226 = vmatprep.subr.mxu0 0.0
        %2227 = vmatpush1.msra.mxu0 0.0
        %2228 = vmatprep.subr.mxu0 0.0
        %2229 = vmatpush1.msra.mxu0 0.0
        %2230 = vmatprep.subr.mxu0 0.0
        %2231 = vmatpush1.msra.mxu0 0.0
        %2232 = vmatprep.subr.mxu0 0.0
        %2233 = vmatpush1.msra.mxu0 0.0
        %2234 = vmatprep.subr.mxu0 0.0
        %2235 = vmatpush1.msra.mxu0 0.0
        %2236 = vmatprep.subr.mxu0 0.0
        %2237 = vmatpush1.msra.mxu0 0.0
        %2238 = vmatprep.subr.mxu0 0.0
        %2239 = vmatpush1.msra.mxu0 0.0
        %2240 = vmatprep.subr.mxu0 0.0
        %2241 = vmatpush1.msra.mxu0 0.0
        %2242 = vmatprep.subr.mxu0 0.0
        %2243 = vmatpush1.msra.mxu0 0.0
        %2244 = vmatprep.subr.mxu0 0.0
        %2245 = vmatpush1.msra.mxu0 0.0
        %2246 = vmatprep.subr.mxu0 0.0
        %2247 = vmatpush1.msra.mxu0 0.0
        %2248 = vmatprep.subr.mxu0 0.0
        %2249 = vmatpush1.msra.mxu0 0.0
        %2250 = vmatprep.subr.mxu0 0.0
        %2251 = vmatpush1.msra.mxu0 0.0
        %2252 = vmatprep.subr.mxu0 0.0
        %2253 = vmatpush1.msra.mxu0 0.0
        %2254 = vmatprep.subr.mxu0 0.0
        %2255 = vmatpush1.msra.mxu0 0.0
        %2256 = vmatprep.subr.mxu0 0.0
        %2257 = vmatpush1.msra.mxu0 0.0
        %2258 = vmatprep.subr.mxu0 0.0
        %2259 = vmatpush1.msra.mxu0 0.0
        %2260 = vmatprep.subr.mxu0 0.0
        %2261 = vmatpush1.msra.mxu0 0.0
        %2262 = vmatprep.subr.mxu0 0.0
        %2263 = vmatpush1.msra.mxu0 0.0
        %2264 = vmatprep.subr.mxu0 0.0
        %2265 = vmatpush1.msra.mxu0 0.0
        %2266 = vmatprep.subr.mxu0 0.0
        %2267 = vmatpush1.msra.mxu0 0.0
        %2268 = vmatprep.subr.mxu0 0.0
        %2269 = vmatpush1.msra.mxu0 0.0
        %2270 = vmatprep.subr.mxu0 0.0
        %2271 = vmatpush1.msra.mxu0 0.0
        %2272 = vmatprep.subr.mxu0 0.0
        %2273 = vmatpush1.msra.mxu0 0.0
        %2274 = vmatprep.mubr.f32.mxu0 0.0
        %2275 = vmatmul.mubr.f32.gmra.mrb[0].mxu0 %v2208
        %v2276 = vpop.f32.mrb[0].mxu0
        %v2277 = vadd.f32 0.0, %v2276
        %v2278 = vpop.f32.mrb[0].mxu0
        %2279 = vdwg.mxu0
        %v2281 = vsel %vm1753, %v1839, 0
        %2283 = vmatprep.subr.mxu0 0.0
        %2284 = vmatpush1.msra.mxu0 %v412
        %2285 = vmatprep.subr.mxu0 0.0
        %2286 = vmatpush1.msra.mxu0 %v413
        %2287 = vmatprep.subr.mxu0 0.0
        %2288 = vmatpush1.msra.mxu0 0.0
        %2289 = vmatprep.subr.mxu0 0.0
        %2290 = vmatpush1.msra.mxu0 0.0
        %2291 = vmatprep.subr.mxu0 0.0
        %2292 = vmatpush1.msra.mxu0 0.0
        %2293 = vmatprep.subr.mxu0 0.0
        %2294 = vmatpush1.msra.mxu0 0.0
        %2295 = vmatprep.subr.mxu0 0.0
        %2296 = vmatpush1.msra.mxu0 0.0
        %2297 = vmatprep.subr.mxu0 0.0
        %2298 = vmatpush1.msra.mxu0 0.0
        %2299 = vmatprep.subr.mxu0 0.0
        %2300 = vmatpush1.msra.mxu0 0.0
        %2301 = vmatprep.subr.mxu0 0.0
        %2302 = vmatpush1.msra.mxu0 0.0
        %2303 = vmatprep.subr.mxu0 0.0
        %2304 = vmatpush1.msra.mxu0 0.0
        %2305 = vmatprep.subr.mxu0 0.0
        %2306 = vmatpush1.msra.mxu0 0.0
        %2307 = vmatprep.subr.mxu0 0.0
        %2308 = vmatpush1.msra.mxu0 0.0
        %2309 = vmatprep.subr.mxu0 0.0
        %2310 = vmatpush1.msra.mxu0 0.0
        %2311 = vmatprep.subr.mxu0 0.0
        %2312 = vmatpush1.msra.mxu0 0.0
        %2313 = vmatprep.subr.mxu0 0.0
        %2314 = vmatpush1.msra.mxu0 0.0
        %2315 = vmatprep.subr.mxu0 0.0
        %2316 = vmatpush1.msra.mxu0 0.0
        %2317 = vmatprep.subr.mxu0 0.0
        %2318 = vmatpush1.msra.mxu0 0.0
        %2319 = vmatprep.subr.mxu0 0.0
        %2320 = vmatpush1.msra.mxu0 0.0
        %2321 = vmatprep.subr.mxu0 0.0
        %2322 = vmatpush1.msra.mxu0 0.0
        %2323 = vmatprep.subr.mxu0 0.0
        %2324 = vmatpush1.msra.mxu0 0.0
        %2325 = vmatprep.subr.mxu0 0.0
        %2326 = vmatpush1.msra.mxu0 0.0
        %2327 = vmatprep.subr.mxu0 0.0
        %2328 = vmatpush1.msra.mxu0 0.0
        %2329 = vmatprep.subr.mxu0 0.0
        %2330 = vmatpush1.msra.mxu0 0.0
        %2331 = vmatprep.subr.mxu0 0.0
        %2332 = vmatpush1.msra.mxu0 0.0
        %2333 = vmatprep.subr.mxu0 0.0
        %2334 = vmatpush1.msra.mxu0 0.0
        %2335 = vmatprep.subr.mxu0 0.0
        %2336 = vmatpush1.msra.mxu0 0.0
        %2337 = vmatprep.subr.mxu0 0.0
        %2338 = vmatpush1.msra.mxu0 0.0
        %2339 = vmatprep.subr.mxu0 0.0
        %2340 = vmatpush1.msra.mxu0 0.0
        %2341 = vmatprep.subr.mxu0 0.0
        %2342 = vmatpush1.msra.mxu0 0.0
        %2343 = vmatprep.subr.mxu0 0.0
        %2344 = vmatpush1.msra.mxu0 0.0
        %2345 = vmatprep.subr.mxu0 0.0
        %2346 = vmatpush1.msra.mxu0 0.0
        %2347 = vmatprep.mubr.f32.mxu0 0.0
        %2348 = vmatmul.mubr.f32.gmra.mrb[0].mxu0 %v2281
        %v2349 = vpop.f32.mrb[0].mxu0
        %v2350 = vadd.f32 0.0, %v2349
        %v2351 = vpop.f32.mrb[0].mxu0
        %2352 = vdwg.mxu0
        %v2354 = vsel %vm1753, %v1841, 0
        %2356 = vmatprep.subr.mxu0 0.0
        %2357 = vmatpush1.msra.mxu0 %v414
        %2358 = vmatprep.subr.mxu0 0.0
        %2359 = vmatpush1.msra.mxu0 %v415
        %2360 = vmatprep.subr.mxu0 0.0
        %2361 = vmatpush1.msra.mxu0 0.0
        %2362 = vmatprep.subr.mxu0 0.0
        %2363 = vmatpush1.msra.mxu0 0.0
        %2364 = vmatprep.subr.mxu0 0.0
        %2365 = vmatpush1.msra.mxu0 0.0
        %2366 = vmatprep.subr.mxu0 0.0
        %2367 = vmatpush1.msra.mxu0 0.0
        %2368 = vmatprep.subr.mxu0 0.0
        %2369 = vmatpush1.msra.mxu0 0.0
        %2370 = vmatprep.subr.mxu0 0.0
        %2371 = vmatpush1.msra.mxu0 0.0
        %2372 = vmatprep.subr.mxu0 0.0
        %2373 = vmatpush1.msra.mxu0 0.0
        %2374 = vmatprep.subr.mxu0 0.0
        %2375 = vmatpush1.msra.mxu0 0.0
        %2376 = vmatprep.subr.mxu0 0.0
        %2377 = vmatpush1.msra.mxu0 0.0
        %2378 = vmatprep.subr.mxu0 0.0
        %2379 = vmatpush1.msra.mxu0 0.0
        %2380 = vmatprep.subr.mxu0 0.0
        %2381 = vmatpush1.msra.mxu0 0.0
        %2382 = vmatprep.subr.mxu0 0.0
        %2383 = vmatpush1.msra.mxu0 0.0
        %2384 = vmatprep.subr.mxu0 0.0
        %2385 = vmatpush1.msra.mxu0 0.0
        %2386 = vmatprep.subr.mxu0 0.0
        %2387 = vmatpush1.msra.mxu0 0.0
        %2388 = vmatprep.subr.mxu0 0.0
        %2389 = vmatpush1.msra.mxu0 0.0
        %2390 = vmatprep.subr.mxu0 0.0
        %2391 = vmatpush1.msra.mxu0 0.0
        %2392 = vmatprep.subr.mxu0 0.0
        %2393 = vmatpush1.msra.mxu0 0.0
        %2394 = vmatprep.subr.mxu0 0.0
        %2395 = vmatpush1.msra.mxu0 0.0
        %2396 = vmatprep.subr.mxu0 0.0
        %2397 = vmatpush1.msra.mxu0 0.0
        %2398 = vmatprep.subr.mxu0 0.0
        %2399 = vmatpush1.msra.mxu0 0.0
        %2400 = vmatprep.subr.mxu0 0.0
        %2401 = vmatpush1.msra.mxu0 0.0
        %2402 = vmatprep.subr.mxu0 0.0
        %2403 = vmatpush1.msra.mxu0 0.0
        %2404 = vmatprep.subr.mxu0 0.0
        %2405 = vmatpush1.msra.mxu0 0.0
        %2406 = vmatprep.subr.mxu0 0.0
        %2407 = vmatpush1.msra.mxu0 0.0
        %2408 = vmatprep.subr.mxu0 0.0
        %2409 = vmatpush1.msra.mxu0 0.0
        %2410 = vmatprep.subr.mxu0 0.0
        %2411 = vmatpush1.msra.mxu0 0.0
        %2412 = vmatprep.subr.mxu0 0.0
        %2413 = vmatpush1.msra.mxu0 0.0
        %2414 = vmatprep.subr.mxu0 0.0
        %2415 = vmatpush1.msra.mxu0 0.0
        %2416 = vmatprep.subr.mxu0 0.0
        %2417 = vmatpush1.msra.mxu0 0.0
        %2418 = vmatprep.subr.mxu0 0.0
        %2419 = vmatpush1.msra.mxu0 0.0
        %2420 = vmatprep.mubr.f32.mxu0 0.0
        %2421 = vmatmul.mubr.f32.gmra.mrb[0].mxu0 %v2354
        %v2422 = vpop.f32.mrb[0].mxu0
        %v2423 = vadd.f32 0.0, %v2422
        %v2424 = vpop.f32.mrb[0].mxu0
        %2425 = vdwg.mxu0
        %2426 = vst.msk [vmem:[%s370] sm:$0xff] %vm422, %v1912
        %2427 = vst.msk [vmem:[%s370 + $0x8] sm:$0xff] %vm422, %v1985
        %2428 = vst.msk [vmem:[%s370 + $0x10] sm:$0xff] %vm422, %v2058
        %2429 = vst.msk [vmem:[%s370 + $0x18] sm:$0xff] %vm422, %v2131
        %2430 = vst.msk [vmem:[%s370 + $0x20] sm:$0xff] %vm422, %v2204
        %2431 = vst.msk [vmem:[%s370 + $0x28] sm:$0xff] %vm422, %v2277
        %2432 = vst.msk [vmem:[%s370 + $0x30] sm:$0xff] %vm422, %v2350
        %2433 = vst.msk [vmem:[%s370 + $0x38] sm:$0xff] %vm422, %v2423
        %2434 = vxpose.xlu0.b32.start [1/16] %v1827, 128
        %2435 = vxpose.xlu0.b32.cont [2/16] 0.0, 128
        %2436 = vxpose.xlu0.b32.cont [3/16] 0.0, 128
        %2437 = vxpose.xlu0.b32.cont [4/16] 0.0, 128
        %2438 = vxpose.xlu0.b32.cont [5/16] 0.0, 128
        %2439 = vxpose.xlu0.b32.cont [6/16] 0.0, 128
        %2440 = vxpose.xlu0.b32.cont [7/16] 0.0, 128
        %2441 = vxpose.xlu0.b32.cont [8/16] 0.0, 128
        %2442 = vxpose.xlu0.b32.cont [9/16] 0.0, 128
        %2443 = vxpose.xlu0.b32.cont [10/16] 0.0, 128
        %2444 = vxpose.xlu0.b32.cont [11/16] 0.0, 128
        %2445 = vxpose.xlu0.b32.cont [12/16] 0.0, 128
        %2446 = vxpose.xlu0.b32.cont [13/16] 0.0, 128
        %2447 = vxpose.xlu0.b32.cont [14/16] 0.0, 128
        %2448 = vxpose.xlu0.b32.cont [15/16] 0.0, 128
        %2449 = vxpose.xlu0.b32.end [16/16] 0.0, 128
        %v2450 = vpop.trf.xlu0
        %v2451 = vpop.trf.xlu0
        %v2452 = vpop.trf.xlu0
        %v2453 = vpop.trf.xlu0
        %v2454 = vpop.trf.xlu0
        %v2455 = vpop.trf.xlu0
        %v2456 = vpop.trf.xlu0
        %v2457 = vpop.trf.xlu0
        %v2458 = vpop.trf.xlu0
        %v2459 = vpop.trf.xlu0
        %v2460 = vpop.trf.xlu0
        %v2461 = vpop.trf.xlu0
        %v2462 = vpop.trf.xlu0
        %v2463 = vpop.trf.xlu0
        %v2464 = vpop.trf.xlu0
        %v2465 = vpop.trf.xlu0
        %2466 = vxpose.xlu0.b32.start [1/16] %v1829, 128
        %2467 = vxpose.xlu0.b32.cont [2/16] 0.0, 128
        %2468 = vxpose.xlu0.b32.cont [3/16] 0.0, 128
        %2469 = vxpose.xlu0.b32.cont [4/16] 0.0, 128
        %2470 = vxpose.xlu0.b32.cont [5/16] 0.0, 128
        %2471 = vxpose.xlu0.b32.cont [6/16] 0.0, 128
        %2472 = vxpose.xlu0.b32.cont [7/16] 0.0, 128
        %2473 = vxpose.xlu0.b32.cont [8/16] 0.0, 128
        %2474 = vxpose.xlu0.b32.cont [9/16] 0.0, 128
        %2475 = vxpose.xlu0.b32.cont [10/16] 0.0, 128
        %2476 = vxpose.xlu0.b32.cont [11/16] 0.0, 128
        %2477 = vxpose.xlu0.b32.cont [12/16] 0.0, 128
        %2478 = vxpose.xlu0.b32.cont [13/16] 0.0, 128
        %2479 = vxpose.xlu0.b32.cont [14/16] 0.0, 128
        %2480 = vxpose.xlu0.b32.cont [15/16] 0.0, 128
        %2481 = vxpose.xlu0.b32.end [16/16] 0.0, 128
        %v2482 = vpop.trf.xlu0
        %v2483 = vpop.trf.xlu0
        %v2484 = vpop.trf.xlu0
        %v2485 = vpop.trf.xlu0
        %v2486 = vpop.trf.xlu0
        %v2487 = vpop.trf.xlu0
        %v2488 = vpop.trf.xlu0
        %v2489 = vpop.trf.xlu0
        %v2490 = vpop.trf.xlu0
        %v2491 = vpop.trf.xlu0
        %v2492 = vpop.trf.xlu0
        %v2493 = vpop.trf.xlu0
        %v2494 = vpop.trf.xlu0
        %v2495 = vpop.trf.xlu0
        %v2496 = vpop.trf.xlu0
        %v2497 = vpop.trf.xlu0
        %2498 = vxpose.xlu0.b32.start [1/16] %v1831, 128
        %2499 = vxpose.xlu0.b32.cont [2/16] 0.0, 128
        %2500 = vxpose.xlu0.b32.cont [3/16] 0.0, 128
        %2501 = vxpose.xlu0.b32.cont [4/16] 0.0, 128
        %2502 = vxpose.xlu0.b32.cont [5/16] 0.0, 128
        %2503 = vxpose.xlu0.b32.cont [6/16] 0.0, 128
        %2504 = vxpose.xlu0.b32.cont [7/16] 0.0, 128
        %2505 = vxpose.xlu0.b32.cont [8/16] 0.0, 128
        %2506 = vxpose.xlu0.b32.cont [9/16] 0.0, 128
        %2507 = vxpose.xlu0.b32.cont [10/16] 0.0, 128
        %2508 = vxpose.xlu0.b32.cont [11/16] 0.0, 128
        %2509 = vxpose.xlu0.b32.cont [12/16] 0.0, 128
        %2510 = vxpose.xlu0.b32.cont [13/16] 0.0, 128
        %2511 = vxpose.xlu0.b32.cont [14/16] 0.0, 128
        %2512 = vxpose.xlu0.b32.cont [15/16] 0.0, 128
        %2513 = vxpose.xlu0.b32.end [16/16] 0.0, 128
        %v2514 = vpop.trf.xlu0
        %v2515 = vpop.trf.xlu0
        %v2516 = vpop.trf.xlu0
        %v2517 = vpop.trf.xlu0
        %v2518 = vpop.trf.xlu0
        %v2519 = vpop.trf.xlu0
        %v2520 = vpop.trf.xlu0
        %v2521 = vpop.trf.xlu0
        %v2522 = vpop.trf.xlu0
        %v2523 = vpop.trf.xlu0
        %v2524 = vpop.trf.xlu0
        %v2525 = vpop.trf.xlu0
        %v2526 = vpop.trf.xlu0
        %v2527 = vpop.trf.xlu0
        %v2528 = vpop.trf.xlu0
        %v2529 = vpop.trf.xlu0
        %2530 = vxpose.xlu0.b32.start [1/16] %v1833, 128
        %2531 = vxpose.xlu0.b32.cont [2/16] 0.0, 128
        %2532 = vxpose.xlu0.b32.cont [3/16] 0.0, 128
        %2533 = vxpose.xlu0.b32.cont [4/16] 0.0, 128
        %2534 = vxpose.xlu0.b32.cont [5/16] 0.0, 128
        %2535 = vxpose.xlu0.b32.cont [6/16] 0.0, 128
        %2536 = vxpose.xlu0.b32.cont [7/16] 0.0, 128
        %2537 = vxpose.xlu0.b32.cont [8/16] 0.0, 128
        %2538 = vxpose.xlu0.b32.cont [9/16] 0.0, 128
        %2539 = vxpose.xlu0.b32.cont [10/16] 0.0, 128
        %2540 = vxpose.xlu0.b32.cont [11/16] 0.0, 128
        %2541 = vxpose.xlu0.b32.cont [12/16] 0.0, 128
        %2542 = vxpose.xlu0.b32.cont [13/16] 0.0, 128
        %2543 = vxpose.xlu0.b32.cont [14/16] 0.0, 128
        %2544 = vxpose.xlu0.b32.cont [15/16] 0.0, 128
        %2545 = vxpose.xlu0.b32.end [16/16] 0.0, 128
        %v2546 = vpop.trf.xlu0
        %v2547 = vpop.trf.xlu0
        %v2548 = vpop.trf.xlu0
        %v2549 = vpop.trf.xlu0
        %v2550 = vpop.trf.xlu0
        %v2551 = vpop.trf.xlu0
        %v2552 = vpop.trf.xlu0
        %v2553 = vpop.trf.xlu0
        %v2554 = vpop.trf.xlu0
        %v2555 = vpop.trf.xlu0
        %v2556 = vpop.trf.xlu0
        %v2557 = vpop.trf.xlu0
        %v2558 = vpop.trf.xlu0
        %v2559 = vpop.trf.xlu0
        %v2560 = vpop.trf.xlu0
        %v2561 = vpop.trf.xlu0
        %2562 = vxpose.xlu0.b32.start [1/16] %v1835, 128
        %2563 = vxpose.xlu0.b32.cont [2/16] 0.0, 128
        %2564 = vxpose.xlu0.b32.cont [3/16] 0.0, 128
        %2565 = vxpose.xlu0.b32.cont [4/16] 0.0, 128
        %2566 = vxpose.xlu0.b32.cont [5/16] 0.0, 128
        %2567 = vxpose.xlu0.b32.cont [6/16] 0.0, 128
        %2568 = vxpose.xlu0.b32.cont [7/16] 0.0, 128
        %2569 = vxpose.xlu0.b32.cont [8/16] 0.0, 128
        %2570 = vxpose.xlu0.b32.cont [9/16] 0.0, 128
        %2571 = vxpose.xlu0.b32.cont [10/16] 0.0, 128
        %2572 = vxpose.xlu0.b32.cont [11/16] 0.0, 128
        %2573 = vxpose.xlu0.b32.cont [12/16] 0.0, 128
        %2574 = vxpose.xlu0.b32.cont [13/16] 0.0, 128
        %2575 = vxpose.xlu0.b32.cont [14/16] 0.0, 128
        %2576 = vxpose.xlu0.b32.cont [15/16] 0.0, 128
        %2577 = vxpose.xlu0.b32.end [16/16] 0.0, 128
        %v2578 = vpop.trf.xlu0
        %v2579 = vpop.trf.xlu0
        %v2580 = vpop.trf.xlu0
        %v2581 = vpop.trf.xlu0
        %v2582 = vpop.trf.xlu0
        %v2583 = vpop.trf.xlu0
        %v2584 = vpop.trf.xlu0
        %v2585 = vpop.trf.xlu0
        %v2586 = vpop.trf.xlu0
        %v2587 = vpop.trf.xlu0
        %v2588 = vpop.trf.xlu0
        %v2589 = vpop.trf.xlu0
        %v2590 = vpop.trf.xlu0
        %v2591 = vpop.trf.xlu0
        %v2592 = vpop.trf.xlu0
        %v2593 = vpop.trf.xlu0
        %2594 = vxpose.xlu0.b32.start [1/16] %v1837, 128
        %2595 = vxpose.xlu0.b32.cont [2/16] 0.0, 128
        %2596 = vxpose.xlu0.b32.cont [3/16] 0.0, 128
        %2597 = vxpose.xlu0.b32.cont [4/16] 0.0, 128
        %2598 = vxpose.xlu0.b32.cont [5/16] 0.0, 128
        %2599 = vxpose.xlu0.b32.cont [6/16] 0.0, 128
        %2600 = vxpose.xlu0.b32.cont [7/16] 0.0, 128
        %2601 = vxpose.xlu0.b32.cont [8/16] 0.0, 128
        %2602 = vxpose.xlu0.b32.cont [9/16] 0.0, 128
        %2603 = vxpose.xlu0.b32.cont [10/16] 0.0, 128
        %2604 = vxpose.xlu0.b32.cont [11/16] 0.0, 128
        %2605 = vxpose.xlu0.b32.cont [12/16] 0.0, 128
        %2606 = vxpose.xlu0.b32.cont [13/16] 0.0, 128
        %2607 = vxpose.xlu0.b32.cont [14/16] 0.0, 128
        %2608 = vxpose.xlu0.b32.cont [15/16] 0.0, 128
        %2609 = vxpose.xlu0.b32.end [16/16] 0.0, 128
        %v2610 = vpop.trf.xlu0
        %v2611 = vpop.trf.xlu0
        %v2612 = vpop.trf.xlu0
        %v2613 = vpop.trf.xlu0
        %v2614 = vpop.trf.xlu0
        %v2615 = vpop.trf.xlu0
        %v2616 = vpop.trf.xlu0
        %v2617 = vpop.trf.xlu0
        %v2618 = vpop.trf.xlu0
        %v2619 = vpop.trf.xlu0
        %v2620 = vpop.trf.xlu0
        %v2621 = vpop.trf.xlu0
        %v2622 = vpop.trf.xlu0
        %v2623 = vpop.trf.xlu0
        %v2624 = vpop.trf.xlu0
        %v2625 = vpop.trf.xlu0
        %2626 = vxpose.xlu0.b32.start [1/16] %v1839, 128
        %2627 = vxpose.xlu0.b32.cont [2/16] 0.0, 128
        %2628 = vxpose.xlu0.b32.cont [3/16] 0.0, 128
        %2629 = vxpose.xlu0.b32.cont [4/16] 0.0, 128
        %2630 = vxpose.xlu0.b32.cont [5/16] 0.0, 128
        %2631 = vxpose.xlu0.b32.cont [6/16] 0.0, 128
        %2632 = vxpose.xlu0.b32.cont [7/16] 0.0, 128
        %2633 = vxpose.xlu0.b32.cont [8/16] 0.0, 128
        %2634 = vxpose.xlu0.b32.cont [9/16] 0.0, 128
        %2635 = vxpose.xlu0.b32.cont [10/16] 0.0, 128
        %2636 = vxpose.xlu0.b32.cont [11/16] 0.0, 128
        %2637 = vxpose.xlu0.b32.cont [12/16] 0.0, 128
        %2638 = vxpose.xlu0.b32.cont [13/16] 0.0, 128
        %2639 = vxpose.xlu0.b32.cont [14/16] 0.0, 128
        %2640 = vxpose.xlu0.b32.cont [15/16] 0.0, 128
        %2641 = vxpose.xlu0.b32.end [16/16] 0.0, 128
        %v2642 = vpop.trf.xlu0
        %v2643 = vpop.trf.xlu0
        %v2644 = vpop.trf.xlu0
        %v2645 = vpop.trf.xlu0
        %v2646 = vpop.trf.xlu0
        %v2647 = vpop.trf.xlu0
        %v2648 = vpop.trf.xlu0
        %v2649 = vpop.trf.xlu0
        %v2650 = vpop.trf.xlu0
        %v2651 = vpop.trf.xlu0
        %v2652 = vpop.trf.xlu0
        %v2653 = vpop.trf.xlu0
        %v2654 = vpop.trf.xlu0
        %v2655 = vpop.trf.xlu0
        %v2656 = vpop.trf.xlu0
        %v2657 = vpop.trf.xlu0
        %2658 = vxpose.xlu0.b32.start [1/16] %v1841, 128
        %2659 = vxpose.xlu0.b32.cont [2/16] 0.0, 128
        %2660 = vxpose.xlu0.b32.cont [3/16] 0.0, 128
        %2661 = vxpose.xlu0.b32.cont [4/16] 0.0, 128
        %2662 = vxpose.xlu0.b32.cont [5/16] 0.0, 128
        %2663 = vxpose.xlu0.b32.cont [6/16] 0.0, 128
        %2664 = vxpose.xlu0.b32.cont [7/16] 0.0, 128
        %2665 = vxpose.xlu0.b32.cont [8/16] 0.0, 128
        %2666 = vxpose.xlu0.b32.cont [9/16] 0.0, 128
        %2667 = vxpose.xlu0.b32.cont [10/16] 0.0, 128
        %2668 = vxpose.xlu0.b32.cont [11/16] 0.0, 128
        %2669 = vxpose.xlu0.b32.cont [12/16] 0.0, 128
        %2670 = vxpose.xlu0.b32.cont [13/16] 0.0, 128
        %2671 = vxpose.xlu0.b32.cont [14/16] 0.0, 128
        %2672 = vxpose.xlu0.b32.cont [15/16] 0.0, 128
        %2673 = vxpose.xlu0.b32.end [16/16] 0.0, 128
        %v2674 = vpop.trf.xlu0
        %v2675 = vpop.trf.xlu0
        %v2676 = vpop.trf.xlu0
        %v2677 = vpop.trf.xlu0
        %v2678 = vpop.trf.xlu0
        %v2679 = vpop.trf.xlu0
        %v2680 = vpop.trf.xlu0
        %v2681 = vpop.trf.xlu0
        %v2682 = vpop.trf.xlu0
        %v2683 = vpop.trf.xlu0
        %v2684 = vpop.trf.xlu0
        %v2685 = vpop.trf.xlu0
        %v2686 = vpop.trf.xlu0
        %v2687 = vpop.trf.xlu0
        %v2688 = vpop.trf.xlu0
        %v2689 = vpop.trf.xlu0
        %vm2690 = vcmask 64512
        %v2692 = vsel %vm2690, %v2450, 0
        %v2695 = vsel %vm2690, %v2451, 0
        %2697 = vmatprep.subr.mxu0 0.0
        %2698 = vmatpush1.msra.mxu0 %v392
        %2699 = vmatprep.subr.mxu0 0.0
        %2700 = vmatpush1.msra.mxu0 0.0
        %2701 = vmatprep.subr.mxu0 0.0
        %2702 = vmatpush1.msra.mxu0 0.0
        %2703 = vmatprep.subr.mxu0 0.0
        %2704 = vmatpush1.msra.mxu0 0.0
        %2705 = vmatprep.subr.mxu0 0.0
        %2706 = vmatpush1.msra.mxu0 0.0
        %2707 = vmatprep.subr.mxu0 0.0
        %2708 = vmatpush1.msra.mxu0 0.0
        %2709 = vmatprep.subr.mxu0 0.0
        %2710 = vmatpush1.msra.mxu0 0.0
        %2711 = vmatprep.subr.mxu0 0.0
        %2712 = vmatpush1.msra.mxu0 0.0
        %2713 = vmatprep.subr.mxu0 0.0
        %2714 = vmatpush1.msra.mxu0 0.0
        %2715 = vmatprep.subr.mxu0 0.0
        %2716 = vmatpush1.msra.mxu0 0.0
        %2717 = vmatprep.subr.mxu0 0.0
        %2718 = vmatpush1.msra.mxu0 0.0
        %2719 = vmatprep.subr.mxu0 0.0
        %2720 = vmatpush1.msra.mxu0 0.0
        %2721 = vmatprep.subr.mxu0 0.0
        %2722 = vmatpush1.msra.mxu0 0.0
        %2723 = vmatprep.subr.mxu0 0.0
        %2724 = vmatpush1.msra.mxu0 0.0
        %2725 = vmatprep.subr.mxu0 0.0
        %2726 = vmatpush1.msra.mxu0 0.0
        %2727 = vmatprep.subr.mxu0 0.0
        %2728 = vmatpush1.msra.mxu0 0.0
        %2729 = vmatprep.subr.mxu0 0.0
        %2730 = vmatpush1.msra.mxu0 0.0
        %2731 = vmatprep.subr.mxu0 0.0
        %2732 = vmatpush1.msra.mxu0 0.0
        %2733 = vmatprep.subr.mxu0 0.0
        %2734 = vmatpush1.msra.mxu0 0.0
        %2735 = vmatprep.subr.mxu0 0.0
        %2736 = vmatpush1.msra.mxu0 0.0
        %2737 = vmatprep.subr.mxu0 0.0
        %2738 = vmatpush1.msra.mxu0 0.0
        %2739 = vmatprep.subr.mxu0 0.0
        %2740 = vmatpush1.msra.mxu0 0.0
        %2741 = vmatprep.subr.mxu0 0.0
        %2742 = vmatpush1.msra.mxu0 0.0
        %2743 = vmatprep.subr.mxu0 0.0
        %2744 = vmatpush1.msra.mxu0 0.0
        %2745 = vmatprep.subr.mxu0 0.0
        %2746 = vmatpush1.msra.mxu0 0.0
        %2747 = vmatprep.subr.mxu0 0.0
        %2748 = vmatpush1.msra.mxu0 0.0
        %2749 = vmatprep.subr.mxu0 0.0
        %2750 = vmatpush1.msra.mxu0 0.0
        %2751 = vmatprep.subr.mxu0 0.0
        %2752 = vmatpush1.msra.mxu0 0.0
        %2753 = vmatprep.subr.mxu0 0.0
        %2754 = vmatpush1.msra.mxu0 0.0
        %2755 = vmatprep.subr.mxu0 0.0
        %2756 = vmatpush1.msra.mxu0 0.0
        %2757 = vmatprep.subr.mxu0 0.0
        %2758 = vmatpush1.msra.mxu0 0.0
        %2759 = vmatprep.subr.mxu0 0.0
        %2760 = vmatpush1.msra.mxu0 0.0
        %2761 = vmatprep.mubr.f32.mxu0 0.0
        %2762 = vmatmul.mubr.f32.gmra.mrb[0].mxu0 %v2692
        %v2763 = vpop.f32.mrb[0].mxu0
        %v2764 = vadd.f32 0.0, %v2763
        %v2765 = vpop.f32.mrb[0].mxu0
        %2766 = vmatprep.mubr.f32.mxu0 0.0
        %2767 = vmatmul.mubr.f32.gmra.mrb[0].mxu0 %v2695
        %v2768 = vpop.f32.mrb[0].mxu0
        %v2769 = vadd.f32 0.0, %v2768
        %v2770 = vpop.f32.mrb[0].mxu0
        %2771 = vdwg.mxu0
        %v2773 = vsel %vm2690, %v2482, 0
        %v2776 = vsel %vm2690, %v2483, 0
        %2778 = vmatprep.subr.mxu0 0.0
        %2779 = vmatpush1.msra.mxu0 %v393
        %2780 = vmatprep.subr.mxu0 0.0
        %2781 = vmatpush1.msra.mxu0 0.0
        %2782 = vmatprep.subr.mxu0 0.0
        %2783 = vmatpush1.msra.mxu0 0.0
        %2784 = vmatprep.subr.mxu0 0.0
        %2785 = vmatpush1.msra.mxu0 0.0
        %2786 = vmatprep.subr.mxu0 0.0
        %2787 = vmatpush1.msra.mxu0 0.0
        %2788 = vmatprep.subr.mxu0 0.0
        %2789 = vmatpush1.msra.mxu0 0.0
        %2790 = vmatprep.subr.mxu0 0.0
        %2791 = vmatpush1.msra.mxu0 0.0
        %2792 = vmatprep.subr.mxu0 0.0
        %2793 = vmatpush1.msra.mxu0 0.0
        %2794 = vmatprep.subr.mxu0 0.0
        %2795 = vmatpush1.msra.mxu0 0.0
        %2796 = vmatprep.subr.mxu0 0.0
        %2797 = vmatpush1.msra.mxu0 0.0
        %2798 = vmatprep.subr.mxu0 0.0
        %2799 = vmatpush1.msra.mxu0 0.0
        %2800 = vmatprep.subr.mxu0 0.0
        %2801 = vmatpush1.msra.mxu0 0.0
        %2802 = vmatprep.subr.mxu0 0.0
        %2803 = vmatpush1.msra.mxu0 0.0
        %2804 = vmatprep.subr.mxu0 0.0
        %2805 = vmatpush1.msra.mxu0 0.0
        %2806 = vmatprep.subr.mxu0 0.0
        %2807 = vmatpush1.msra.mxu0 0.0
        %2808 = vmatprep.subr.mxu0 0.0
        %2809 = vmatpush1.msra.mxu0 0.0
        %2810 = vmatprep.subr.mxu0 0.0
        %2811 = vmatpush1.msra.mxu0 0.0
        %2812 = vmatprep.subr.mxu0 0.0
        %2813 = vmatpush1.msra.mxu0 0.0
        %2814 = vmatprep.subr.mxu0 0.0
        %2815 = vmatpush1.msra.mxu0 0.0
        %2816 = vmatprep.subr.mxu0 0.0
        %2817 = vmatpush1.msra.mxu0 0.0
        %2818 = vmatprep.subr.mxu0 0.0
        %2819 = vmatpush1.msra.mxu0 0.0
        %2820 = vmatprep.subr.mxu0 0.0
        %2821 = vmatpush1.msra.mxu0 0.0
        %2822 = vmatprep.subr.mxu0 0.0
        %2823 = vmatpush1.msra.mxu0 0.0
        %2824 = vmatprep.subr.mxu0 0.0
        %2825 = vmatpush1.msra.mxu0 0.0
        %2826 = vmatprep.subr.mxu0 0.0
        %2827 = vmatpush1.msra.mxu0 0.0
        %2828 = vmatprep.subr.mxu0 0.0
        %2829 = vmatpush1.msra.mxu0 0.0
        %2830 = vmatprep.subr.mxu0 0.0
        %2831 = vmatpush1.msra.mxu0 0.0
        %2832 = vmatprep.subr.mxu0 0.0
        %2833 = vmatpush1.msra.mxu0 0.0
        %2834 = vmatprep.subr.mxu0 0.0
        %2835 = vmatpush1.msra.mxu0 0.0
        %2836 = vmatprep.subr.mxu0 0.0
        %2837 = vmatpush1.msra.mxu0 0.0
        %2838 = vmatprep.subr.mxu0 0.0
        %2839 = vmatpush1.msra.mxu0 0.0
        %2840 = vmatprep.subr.mxu0 0.0
        %2841 = vmatpush1.msra.mxu0 0.0
        %2842 = vmatprep.mubr.f32.mxu0 0.0
        %2843 = vmatmul.mubr.f32.gmra.mrb[0].mxu0 %v2773
        %v2844 = vpop.f32.mrb[0].mxu0
        %v2845 = vadd.f32 0.0, %v2844
        %v2846 = vpop.f32.mrb[0].mxu0
        %2847 = vmatprep.mubr.f32.mxu0 0.0
        %2848 = vmatmul.mubr.f32.gmra.mrb[0].mxu0 %v2776
        %v2849 = vpop.f32.mrb[0].mxu0
        %v2850 = vadd.f32 0.0, %v2849
        %v2851 = vpop.f32.mrb[0].mxu0
        %2852 = vdwg.mxu0
        %v2854 = vsel %vm2690, %v2514, 0
        %v2857 = vsel %vm2690, %v2515, 0
        %2859 = vmatprep.subr.mxu0 0.0
        %2860 = vmatpush1.msra.mxu0 %v394
        %2861 = vmatprep.subr.mxu0 0.0
        %2862 = vmatpush1.msra.mxu0 0.0
        %2863 = vmatprep.subr.mxu0 0.0
        %2864 = vmatpush1.msra.mxu0 0.0
        %2865 = vmatprep.subr.mxu0 0.0
        %2866 = vmatpush1.msra.mxu0 0.0
        %2867 = vmatprep.subr.mxu0 0.0
        %2868 = vmatpush1.msra.mxu0 0.0
        %2869 = vmatprep.subr.mxu0 0.0
        %2870 = vmatpush1.msra.mxu0 0.0
        %2871 = vmatprep.subr.mxu0 0.0
        %2872 = vmatpush1.msra.mxu0 0.0
        %2873 = vmatprep.subr.mxu0 0.0
        %2874 = vmatpush1.msra.mxu0 0.0
        %2875 = vmatprep.subr.mxu0 0.0
        %2876 = vmatpush1.msra.mxu0 0.0
        %2877 = vmatprep.subr.mxu0 0.0
        %2878 = vmatpush1.msra.mxu0 0.0
        %2879 = vmatprep.subr.mxu0 0.0
        %2880 = vmatpush1.msra.mxu0 0.0
        %2881 = vmatprep.subr.mxu0 0.0
        %2882 = vmatpush1.msra.mxu0 0.0
        %2883 = vmatprep.subr.mxu0 0.0
        %2884 = vmatpush1.msra.mxu0 0.0
        %2885 = vmatprep.subr.mxu0 0.0
        %2886 = vmatpush1.msra.mxu0 0.0
        %2887 = vmatprep.subr.mxu0 0.0
        %2888 = vmatpush1.msra.mxu0 0.0
        %2889 = vmatprep.subr.mxu0 0.0
        %2890 = vmatpush1.msra.mxu0 0.0
        %2891 = vmatprep.subr.mxu0 0.0
        %2892 = vmatpush1.msra.mxu0 0.0
        %2893 = vmatprep.subr.mxu0 0.0
        %2894 = vmatpush1.msra.mxu0 0.0
        %2895 = vmatprep.subr.mxu0 0.0
        %2896 = vmatpush1.msra.mxu0 0.0
        %2897 = vmatprep.subr.mxu0 0.0
        %2898 = vmatpush1.msra.mxu0 0.0
        %2899 = vmatprep.subr.mxu0 0.0
        %2900 = vmatpush1.msra.mxu0 0.0
        %2901 = vmatprep.subr.mxu0 0.0
        %2902 = vmatpush1.msra.mxu0 0.0
        %2903 = vmatprep.subr.mxu0 0.0
        %2904 = vmatpush1.msra.mxu0 0.0
        %2905 = vmatprep.subr.mxu0 0.0
        %2906 = vmatpush1.msra.mxu0 0.0
        %2907 = vmatprep.subr.mxu0 0.0
        %2908 = vmatpush1.msra.mxu0 0.0
        %2909 = vmatprep.subr.mxu0 0.0
        %2910 = vmatpush1.msra.mxu0 0.0
        %2911 = vmatprep.subr.mxu0 0.0
        %2912 = vmatpush1.msra.mxu0 0.0
        %2913 = vmatprep.subr.mxu0 0.0
        %2914 = vmatpush1.msra.mxu0 0.0
        %2915 = vmatprep.subr.mxu0 0.0
        %2916 = vmatpush1.msra.mxu0 0.0
        %2917 = vmatprep.subr.mxu0 0.0
        %2918 = vmatpush1.msra.mxu0 0.0
        %2919 = vmatprep.subr.mxu0 0.0
        %2920 = vmatpush1.msra.mxu0 0.0
        %2921 = vmatprep.subr.mxu0 0.0
        %2922 = vmatpush1.msra.mxu0 0.0
        %2923 = vmatprep.mubr.f32.mxu0 0.0
        %2924 = vmatmul.mubr.f32.gmra.mrb[0].mxu0 %v2854
        %v2925 = vpop.f32.mrb[0].mxu0
        %v2926 = vadd.f32 0.0, %v2925
        %v2927 = vpop.f32.mrb[0].mxu0
        %2928 = vmatprep.mubr.f32.mxu0 0.0
        %2929 = vmatmul.mubr.f32.gmra.mrb[0].mxu0 %v2857
        %v2930 = vpop.f32.mrb[0].mxu0
        %v2931 = vadd.f32 0.0, %v2930
        %v2932 = vpop.f32.mrb[0].mxu0
        %2933 = vdwg.mxu0
        %v2935 = vsel %vm2690, %v2546, 0
        %v2938 = vsel %vm2690, %v2547, 0
        %2940 = vmatprep.subr.mxu0 0.0
        %2941 = vmatpush1.msra.mxu0 %v395
        %2942 = vmatprep.subr.mxu0 0.0
        %2943 = vmatpush1.msra.mxu0 0.0
        %2944 = vmatprep.subr.mxu0 0.0
        %2945 = vmatpush1.msra.mxu0 0.0
        %2946 = vmatprep.subr.mxu0 0.0
        %2947 = vmatpush1.msra.mxu0 0.0
        %2948 = vmatprep.subr.mxu0 0.0
        %2949 = vmatpush1.msra.mxu0 0.0
        %2950 = vmatprep.subr.mxu0 0.0
        %2951 = vmatpush1.msra.mxu0 0.0
        %2952 = vmatprep.subr.mxu0 0.0
        %2953 = vmatpush1.msra.mxu0 0.0
        %2954 = vmatprep.subr.mxu0 0.0
        %2955 = vmatpush1.msra.mxu0 0.0
        %2956 = vmatprep.subr.mxu0 0.0
        %2957 = vmatpush1.msra.mxu0 0.0
        %2958 = vmatprep.subr.mxu0 0.0
        %2959 = vmatpush1.msra.mxu0 0.0
        %2960 = vmatprep.subr.mxu0 0.0
        %2961 = vmatpush1.msra.mxu0 0.0
        %2962 = vmatprep.subr.mxu0 0.0
        %2963 = vmatpush1.msra.mxu0 0.0
        %2964 = vmatprep.subr.mxu0 0.0
        %2965 = vmatpush1.msra.mxu0 0.0
        %2966 = vmatprep.subr.mxu0 0.0
        %2967 = vmatpush1.msra.mxu0 0.0
        %2968 = vmatprep.subr.mxu0 0.0
        %2969 = vmatpush1.msra.mxu0 0.0
        %2970 = vmatprep.subr.mxu0 0.0
        %2971 = vmatpush1.msra.mxu0 0.0
        %2972 = vmatprep.subr.mxu0 0.0
        %2973 = vmatpush1.msra.mxu0 0.0
        %2974 = vmatprep.subr.mxu0 0.0
        %2975 = vmatpush1.msra.mxu0 0.0
        %2976 = vmatprep.subr.mxu0 0.0
        %2977 = vmatpush1.msra.mxu0 0.0
        %2978 = vmatprep.subr.mxu0 0.0
        %2979 = vmatpush1.msra.mxu0 0.0
        %2980 = vmatprep.subr.mxu0 0.0
        %2981 = vmatpush1.msra.mxu0 0.0
        %2982 = vmatprep.subr.mxu0 0.0
        %2983 = vmatpush1.msra.mxu0 0.0
        %2984 = vmatprep.subr.mxu0 0.0
        %2985 = vmatpush1.msra.mxu0 0.0
        %2986 = vmatprep.subr.mxu0 0.0
        %2987 = vmatpush1.msra.mxu0 0.0
        %2988 = vmatprep.subr.mxu0 0.0
        %2989 = vmatpush1.msra.mxu0 0.0
        %2990 = vmatprep.subr.mxu0 0.0
        %2991 = vmatpush1.msra.mxu0 0.0
        %2992 = vmatprep.subr.mxu0 0.0
        %2993 = vmatpush1.msra.mxu0 0.0
        %2994 = vmatprep.subr.mxu0 0.0
        %2995 = vmatpush1.msra.mxu0 0.0
        %2996 = vmatprep.subr.mxu0 0.0
        %2997 = vmatpush1.msra.mxu0 0.0
        %2998 = vmatprep.subr.mxu0 0.0
        %2999 = vmatpush1.msra.mxu0 0.0
        %3000 = vmatprep.subr.mxu0 0.0
        %3001 = vmatpush1.msra.mxu0 0.0
        %3002 = vmatprep.subr.mxu0 0.0
        %3003 = vmatpush1.msra.mxu0 0.0
        %3004 = vmatprep.mubr.f32.mxu0 0.0
        %3005 = vmatmul.mubr.f32.gmra.mrb[0].mxu0 %v2935
        %v3006 = vpop.f32.mrb[0].mxu0
        %v3007 = vadd.f32 0.0, %v3006
        %v3008 = vpop.f32.mrb[0].mxu0
        %3009 = vmatprep.mubr.f32.mxu0 0.0
        %3010 = vmatmul.mubr.f32.gmra.mrb[0].mxu0 %v2938
        %v3011 = vpop.f32.mrb[0].mxu0
        %v3012 = vadd.f32 0.0, %v3011
        %v3013 = vpop.f32.mrb[0].mxu0
        %3014 = vdwg.mxu0
        %v3016 = vsel %vm2690, %v2578, 0
        %v3019 = vsel %vm2690, %v2579, 0
        %3021 = vmatprep.subr.mxu0 0.0
        %3022 = vmatpush1.msra.mxu0 %v396
        %3023 = vmatprep.subr.mxu0 0.0
        %3024 = vmatpush1.msra.mxu0 0.0
        %3025 = vmatprep.subr.mxu0 0.0
        %3026 = vmatpush1.msra.mxu0 0.0
        %3027 = vmatprep.subr.mxu0 0.0
        %3028 = vmatpush1.msra.mxu0 0.0
        %3029 = vmatprep.subr.mxu0 0.0
        %3030 = vmatpush1.msra.mxu0 0.0
        %3031 = vmatprep.subr.mxu0 0.0
        %3032 = vmatpush1.msra.mxu0 0.0
        %3033 = vmatprep.subr.mxu0 0.0
        %3034 = vmatpush1.msra.mxu0 0.0
        %3035 = vmatprep.subr.mxu0 0.0
        %3036 = vmatpush1.msra.mxu0 0.0
        %3037 = vmatprep.subr.mxu0 0.0
        %3038 = vmatpush1.msra.mxu0 0.0
        %3039 = vmatprep.subr.mxu0 0.0
        %3040 = vmatpush1.msra.mxu0 0.0
        %3041 = vmatprep.subr.mxu0 0.0
        %3042 = vmatpush1.msra.mxu0 0.0
        %3043 = vmatprep.subr.mxu0 0.0
        %3044 = vmatpush1.msra.mxu0 0.0
        %3045 = vmatprep.subr.mxu0 0.0
        %3046 = vmatpush1.msra.mxu0 0.0
        %3047 = vmatprep.subr.mxu0 0.0
        %3048 = vmatpush1.msra.mxu0 0.0
        %3049 = vmatprep.subr.mxu0 0.0
        %3050 = vmatpush1.msra.mxu0 0.0
        %3051 = vmatprep.subr.mxu0 0.0
        %3052 = vmatpush1.msra.mxu0 0.0
        %3053 = vmatprep.subr.mxu0 0.0
        %3054 = vmatpush1.msra.mxu0 0.0
        %3055 = vmatprep.subr.mxu0 0.0
        %3056 = vmatpush1.msra.mxu0 0.0
        %3057 = vmatprep.subr.mxu0 0.0
        %3058 = vmatpush1.msra.mxu0 0.0
        %3059 = vmatprep.subr.mxu0 0.0
        %3060 = vmatpush1.msra.mxu0 0.0
        %3061 = vmatprep.subr.mxu0 0.0
        %3062 = vmatpush1.msra.mxu0 0.0
        %3063 = vmatprep.subr.mxu0 0.0
        %3064 = vmatpush1.msra.mxu0 0.0
        %3065 = vmatprep.subr.mxu0 0.0
        %3066 = vmatpush1.msra.mxu0 0.0
        %3067 = vmatprep.subr.mxu0 0.0
        %3068 = vmatpush1.msra.mxu0 0.0
        %3069 = vmatprep.subr.mxu0 0.0
        %3070 = vmatpush1.msra.mxu0 0.0
        %3071 = vmatprep.subr.mxu0 0.0
        %3072 = vmatpush1.msra.mxu0 0.0
        %3073 = vmatprep.subr.mxu0 0.0
        %3074 = vmatpush1.msra.mxu0 0.0
        %3075 = vmatprep.subr.mxu0 0.0
        %3076 = vmatpush1.msra.mxu0 0.0
        %3077 = vmatprep.subr.mxu0 0.0
        %3078 = vmatpush1.msra.mxu0 0.0
        %3079 = vmatprep.subr.mxu0 0.0
        %3080 = vmatpush1.msra.mxu0 0.0
        %3081 = vmatprep.subr.mxu0 0.0
        %3082 = vmatpush1.msra.mxu0 0.0
        %3083 = vmatprep.subr.mxu0 0.0
        %3084 = vmatpush1.msra.mxu0 0.0
        %3085 = vmatprep.mubr.f32.mxu0 0.0
        %3086 = vmatmul.mubr.f32.gmra.mrb[0].mxu0 %v3016
        %v3087 = vpop.f32.mrb[0].mxu0
        %v3088 = vadd.f32 0.0, %v3087
        %v3089 = vpop.f32.mrb[0].mxu0
        %3090 = vmatprep.mubr.f32.mxu0 0.0
        %3091 = vmatmul.mubr.f32.gmra.mrb[0].mxu0 %v3019
        %v3092 = vpop.f32.mrb[0].mxu0
        %v3093 = vadd.f32 0.0, %v3092
        %v3094 = vpop.f32.mrb[0].mxu0
        %3095 = vdwg.mxu0
        %v3097 = vsel %vm2690, %v2610, 0
        %v3100 = vsel %vm2690, %v2611, 0
        %3102 = vmatprep.subr.mxu0 0.0
        %3103 = vmatpush1.msra.mxu0 %v397
        %3104 = vmatprep.subr.mxu0 0.0
        %3105 = vmatpush1.msra.mxu0 0.0
        %3106 = vmatprep.subr.mxu0 0.0
        %3107 = vmatpush1.msra.mxu0 0.0
        %3108 = vmatprep.subr.mxu0 0.0
        %3109 = vmatpush1.msra.mxu0 0.0
        %3110 = vmatprep.subr.mxu0 0.0
        %3111 = vmatpush1.msra.mxu0 0.0
        %3112 = vmatprep.subr.mxu0 0.0
        %3113 = vmatpush1.msra.mxu0 0.0
        %3114 = vmatprep.subr.mxu0 0.0
        %3115 = vmatpush1.msra.mxu0 0.0
        %3116 = vmatprep.subr.mxu0 0.0
        %3117 = vmatpush1.msra.mxu0 0.0
        %3118 = vmatprep.subr.mxu0 0.0
        %3119 = vmatpush1.msra.mxu0 0.0
        %3120 = vmatprep.subr.mxu0 0.0
        %3121 = vmatpush1.msra.mxu0 0.0
        %3122 = vmatprep.subr.mxu0 0.0
        %3123 = vmatpush1.msra.mxu0 0.0
        %3124 = vmatprep.subr.mxu0 0.0
        %3125 = vmatpush1.msra.mxu0 0.0
        %3126 = vmatprep.subr.mxu0 0.0
        %3127 = vmatpush1.msra.mxu0 0.0
        %3128 = vmatprep.subr.mxu0 0.0
        %3129 = vmatpush1.msra.mxu0 0.0
        %3130 = vmatprep.subr.mxu0 0.0
        %3131 = vmatpush1.msra.mxu0 0.0
        %3132 = vmatprep.subr.mxu0 0.0
        %3133 = vmatpush1.msra.mxu0 0.0
        %3134 = vmatprep.subr.mxu0 0.0
        %3135 = vmatpush1.msra.mxu0 0.0
        %3136 = vmatprep.subr.mxu0 0.0
        %3137 = vmatpush1.msra.mxu0 0.0
        %3138 = vmatprep.subr.mxu0 0.0
        %3139 = vmatpush1.msra.mxu0 0.0
        %3140 = vmatprep.subr.mxu0 0.0
        %3141 = vmatpush1.msra.mxu0 0.0
        %3142 = vmatprep.subr.mxu0 0.0
        %3143 = vmatpush1.msra.mxu0 0.0
        %3144 = vmatprep.subr.mxu0 0.0
        %3145 = vmatpush1.msra.mxu0 0.0
        %3146 = vmatprep.subr.mxu0 0.0
        %3147 = vmatpush1.msra.mxu0 0.0
        %3148 = vmatprep.subr.mxu0 0.0
        %3149 = vmatpush1.msra.mxu0 0.0
        %3150 = vmatprep.subr.mxu0 0.0
        %3151 = vmatpush1.msra.mxu0 0.0
        %3152 = vmatprep.subr.mxu0 0.0
        %3153 = vmatpush1.msra.mxu0 0.0
        %3154 = vmatprep.subr.mxu0 0.0
        %3155 = vmatpush1.msra.mxu0 0.0
        %3156 = vmatprep.subr.mxu0 0.0
        %3157 = vmatpush1.msra.mxu0 0.0
        %3158 = vmatprep.subr.mxu0 0.0
        %3159 = vmatpush1.msra.mxu0 0.0
        %3160 = vmatprep.subr.mxu0 0.0
        %3161 = vmatpush1.msra.mxu0 0.0
        %3162 = vmatprep.subr.mxu0 0.0
        %3163 = vmatpush1.msra.mxu0 0.0
        %3164 = vmatprep.subr.mxu0 0.0
        %3165 = vmatpush1.msra.mxu0 0.0
        %3166 = vmatprep.mubr.f32.mxu0 0.0
        %3167 = vmatmul.mubr.f32.gmra.mrb[0].mxu0 %v3097
        %v3168 = vpop.f32.mrb[0].mxu0
        %v3169 = vadd.f32 0.0, %v3168
        %v3170 = vpop.f32.mrb[0].mxu0
        %3171 = vmatprep.mubr.f32.mxu0 0.0
        %3172 = vmatmul.mubr.f32.gmra.mrb[0].mxu0 %v3100
        %v3173 = vpop.f32.mrb[0].mxu0
        %v3174 = vadd.f32 0.0, %v3173
        %v3175 = vpop.f32.mrb[0].mxu0
        %3176 = vdwg.mxu0
        %v3178 = vsel %vm2690, %v2642, 0
        %v3181 = vsel %vm2690, %v2643, 0
        %3183 = vmatprep.subr.mxu0 0.0
        %3184 = vmatpush1.msra.mxu0 %v398
        %3185 = vmatprep.subr.mxu0 0.0
        %3186 = vmatpush1.msra.mxu0 0.0
        %3187 = vmatprep.subr.mxu0 0.0
        %3188 = vmatpush1.msra.mxu0 0.0
        %3189 = vmatprep.subr.mxu0 0.0
        %3190 = vmatpush1.msra.mxu0 0.0
        %3191 = vmatprep.subr.mxu0 0.0
        %3192 = vmatpush1.msra.mxu0 0.0
        %3193 = vmatprep.subr.mxu0 0.0
        %3194 = vmatpush1.msra.mxu0 0.0
        %3195 = vmatprep.subr.mxu0 0.0
        %3196 = vmatpush1.msra.mxu0 0.0
        %3197 = vmatprep.subr.mxu0 0.0
        %3198 = vmatpush1.msra.mxu0 0.0
        %3199 = vmatprep.subr.mxu0 0.0
        %3200 = vmatpush1.msra.mxu0 0.0
        %3201 = vmatprep.subr.mxu0 0.0
        %3202 = vmatpush1.msra.mxu0 0.0
        %3203 = vmatprep.subr.mxu0 0.0
        %3204 = vmatpush1.msra.mxu0 0.0
        %3205 = vmatprep.subr.mxu0 0.0
        %3206 = vmatpush1.msra.mxu0 0.0
        %3207 = vmatprep.subr.mxu0 0.0
        %3208 = vmatpush1.msra.mxu0 0.0
        %3209 = vmatprep.subr.mxu0 0.0
        %3210 = vmatpush1.msra.mxu0 0.0
        %3211 = vmatprep.subr.mxu0 0.0
        %3212 = vmatpush1.msra.mxu0 0.0
        %3213 = vmatprep.subr.mxu0 0.0
        %3214 = vmatpush1.msra.mxu0 0.0
        %3215 = vmatprep.subr.mxu0 0.0
        %3216 = vmatpush1.msra.mxu0 0.0
        %3217 = vmatprep.subr.mxu0 0.0
        %3218 = vmatpush1.msra.mxu0 0.0
        %3219 = vmatprep.subr.mxu0 0.0
        %3220 = vmatpush1.msra.mxu0 0.0
        %3221 = vmatprep.subr.mxu0 0.0
        %3222 = vmatpush1.msra.mxu0 0.0
        %3223 = vmatprep.subr.mxu0 0.0
        %3224 = vmatpush1.msra.mxu0 0.0
        %3225 = vmatprep.subr.mxu0 0.0
        %3226 = vmatpush1.msra.mxu0 0.0
        %3227 = vmatprep.subr.mxu0 0.0
        %3228 = vmatpush1.msra.mxu0 0.0
        %3229 = vmatprep.subr.mxu0 0.0
        %3230 = vmatpush1.msra.mxu0 0.0
        %3231 = vmatprep.subr.mxu0 0.0
        %3232 = vmatpush1.msra.mxu0 0.0
        %3233 = vmatprep.subr.mxu0 0.0
        %3234 = vmatpush1.msra.mxu0 0.0
        %3235 = vmatprep.subr.mxu0 0.0
        %3236 = vmatpush1.msra.mxu0 0.0
        %3237 = vmatprep.subr.mxu0 0.0
        %3238 = vmatpush1.msra.mxu0 0.0
        %3239 = vmatprep.subr.mxu0 0.0
        %3240 = vmatpush1.msra.mxu0 0.0
        %3241 = vmatprep.subr.mxu0 0.0
        %3242 = vmatpush1.msra.mxu0 0.0
        %3243 = vmatprep.subr.mxu0 0.0
        %3244 = vmatpush1.msra.mxu0 0.0
        %3245 = vmatprep.subr.mxu0 0.0
        %3246 = vmatpush1.msra.mxu0 0.0
        %3247 = vmatprep.mubr.f32.mxu0 0.0
        %3248 = vmatmul.mubr.f32.gmra.mrb[0].mxu0 %v3178
        %v3249 = vpop.f32.mrb[0].mxu0
        %v3250 = vadd.f32 0.0, %v3249
        %v3251 = vpop.f32.mrb[0].mxu0
        %3252 = vmatprep.mubr.f32.mxu0 0.0
        %3253 = vmatmul.mubr.f32.gmra.mrb[0].mxu0 %v3181
        %v3254 = vpop.f32.mrb[0].mxu0
        %v3255 = vadd.f32 0.0, %v3254
        %v3256 = vpop.f32.mrb[0].mxu0
        %3257 = vdwg.mxu0
        %v3259 = vsel %vm2690, %v2674, 0
        %v3262 = vsel %vm2690, %v2675, 0
        %3264 = vmatprep.subr.mxu0 0.0
        %3265 = vmatpush1.msra.mxu0 %v399
        %3266 = vmatprep.subr.mxu0 0.0
        %3267 = vmatpush1.msra.mxu0 0.0
        %3268 = vmatprep.subr.mxu0 0.0
        %3269 = vmatpush1.msra.mxu0 0.0
        %3270 = vmatprep.subr.mxu0 0.0
        %3271 = vmatpush1.msra.mxu0 0.0
        %3272 = vmatprep.subr.mxu0 0.0
        %3273 = vmatpush1.msra.mxu0 0.0
        %3274 = vmatprep.subr.mxu0 0.0
        %3275 = vmatpush1.msra.mxu0 0.0
        %3276 = vmatprep.subr.mxu0 0.0
        %3277 = vmatpush1.msra.mxu0 0.0
        %3278 = vmatprep.subr.mxu0 0.0
        %3279 = vmatpush1.msra.mxu0 0.0
        %3280 = vmatprep.subr.mxu0 0.0
        %3281 = vmatpush1.msra.mxu0 0.0
        %3282 = vmatprep.subr.mxu0 0.0
        %3283 = vmatpush1.msra.mxu0 0.0
        %3284 = vmatprep.subr.mxu0 0.0
        %3285 = vmatpush1.msra.mxu0 0.0
        %3286 = vmatprep.subr.mxu0 0.0
        %3287 = vmatpush1.msra.mxu0 0.0
        %3288 = vmatprep.subr.mxu0 0.0
        %3289 = vmatpush1.msra.mxu0 0.0
        %3290 = vmatprep.subr.mxu0 0.0
        %3291 = vmatpush1.msra.mxu0 0.0
        %3292 = vmatprep.subr.mxu0 0.0
        %3293 = vmatpush1.msra.mxu0 0.0
        %3294 = vmatprep.subr.mxu0 0.0
        %3295 = vmatpush1.msra.mxu0 0.0
        %3296 = vmatprep.subr.mxu0 0.0
        %3297 = vmatpush1.msra.mxu0 0.0
        %3298 = vmatprep.subr.mxu0 0.0
        %3299 = vmatpush1.msra.mxu0 0.0
        %3300 = vmatprep.subr.mxu0 0.0
        %3301 = vmatpush1.msra.mxu0 0.0
        %3302 = vmatprep.subr.mxu0 0.0
        %3303 = vmatpush1.msra.mxu0 0.0
        %3304 = vmatprep.subr.mxu0 0.0
        %3305 = vmatpush1.msra.mxu0 0.0
        %3306 = vmatprep.subr.mxu0 0.0
        %3307 = vmatpush1.msra.mxu0 0.0
        %3308 = vmatprep.subr.mxu0 0.0
        %3309 = vmatpush1.msra.mxu0 0.0
        %3310 = vmatprep.subr.mxu0 0.0
        %3311 = vmatpush1.msra.mxu0 0.0
        %3312 = vmatprep.subr.mxu0 0.0
        %3313 = vmatpush1.msra.mxu0 0.0
        %3314 = vmatprep.subr.mxu0 0.0
        %3315 = vmatpush1.msra.mxu0 0.0
        %3316 = vmatprep.subr.mxu0 0.0
        %3317 = vmatpush1.msra.mxu0 0.0
        %3318 = vmatprep.subr.mxu0 0.0
        %3319 = vmatpush1.msra.mxu0 0.0
        %3320 = vmatprep.subr.mxu0 0.0
        %3321 = vmatpush1.msra.mxu0 0.0
        %3322 = vmatprep.subr.mxu0 0.0
        %3323 = vmatpush1.msra.mxu0 0.0
        %3324 = vmatprep.subr.mxu0 0.0
        %3325 = vmatpush1.msra.mxu0 0.0
        %3326 = vmatprep.subr.mxu0 0.0
        %3327 = vmatpush1.msra.mxu0 0.0
        %3328 = vmatprep.mubr.f32.mxu0 0.0
        %3329 = vmatmul.mubr.f32.gmra.mrb[0].mxu0 %v3259
        %v3330 = vpop.f32.mrb[0].mxu0
        %v3331 = vadd.f32 0.0, %v3330
        %v3332 = vpop.f32.mrb[0].mxu0
        %3333 = vmatprep.mubr.f32.mxu0 0.0
        %3334 = vmatmul.mubr.f32.gmra.mrb[0].mxu0 %v3262
        %v3335 = vpop.f32.mrb[0].mxu0
        %v3336 = vadd.f32 0.0, %v3335
        %v3337 = vpop.f32.mrb[0].mxu0
        %3338 = vdwg.mxu0
        %3339 = vst.msk [vmem:[%s377] sm:$0xff] %vm422, %v2764
        %3340 = vst.msk [vmem:[%s377 + $0x8] sm:$0xff] %vm422, %v2769
        %3341 = vst.msk [vmem:[%s377 + $0x10] sm:$0xff] %vm422, %v2845
        %3342 = vst.msk [vmem:[%s377 + $0x18] sm:$0xff] %vm422, %v2850
        %3343 = vst.msk [vmem:[%s377 + $0x20] sm:$0xff] %vm422, %v2926
        %3344 = vst.msk [vmem:[%s377 + $0x28] sm:$0xff] %vm422, %v2931
        %3345 = vst.msk [vmem:[%s377 + $0x30] sm:$0xff] %vm422, %v3007
        %3346 = vst.msk [vmem:[%s377 + $0x38] sm:$0xff] %vm422, %v3012
        %3347 = vst.msk [vmem:[%s377 + $0x40] sm:$0xff] %vm422, %v3088
        %3348 = vst.msk [vmem:[%s377 + $0x48] sm:$0xff] %vm422, %v3093
        %3349 = vst.msk [vmem:[%s377 + $0x50] sm:$0xff] %vm422, %v3169
        %3350 = vst.msk [vmem:[%s377 + $0x58] sm:$0xff] %vm422, %v3174
        %3351 = vst.msk [vmem:[%s377 + $0x60] sm:$0xff] %vm422, %v3250
        %3352 = vst.msk [vmem:[%s377 + $0x68] sm:$0xff] %vm422, %v3255
        %3353 = vst.msk [vmem:[%s377 + $0x70] sm:$0xff] %vm422, %v3331
        %3354 = vst.msk [vmem:[%s377 + $0x78] sm:$0xff] %vm422, %v3336
        %s3355 = sand.u32 %s176, 1
        %s3356 = scalar_lea.sflag [#allocation4], %s3355
        %s3357 = sand.u32 %s176, 1
        %s3358 = smul.addr %s3357, 64
        %s3359 = scalar_lea.vmem [#allocation10], %s3358
        %s3360 = sand.u32 %s202, 1
        %s3361 = scalar_lea.sflag [#allocation12], %s3360
        %s3362 = sand.u32 %s202, 1
        %s3363 = smul.addr %s3362, 128
        %s3364 = scalar_lea.vmem [#allocation11], %s3363
        // Predicated region
        $region61: #{tpu_custom_call.1} parent=43 // pred_check
          %p3365 = pneg %p186
        $region62: #{tpu_custom_call.1} parent=43 // pred_check_branch
          %3367 = sbr.rel (%p3365) target = $region64
        $region63: #{tpu_custom_call.1} parent=43 // pred_region
          %s3368 = smul.u32 8, %s32
          %s3370 = ssub.s32 1024, 1024
          %3371 = vsyncadd %s3356, %s3370
          %s3372 = smul.addr %s3368, 128
          %s3373 = scalar_lea.hbm %s6, %s3372
          %s3374 = sshll.u32 %s3359, 4
          %s3375 = int_to_ptr.vmem [resolvable:$true] %s3374
          %3380 = dma.vmem_to_hbm [thread:$0]  %s3375, 1024, %s3373, %s3356, 128, 128, 8
        $region64: #{tpu_custom_call.1} parent=43 // pred_fallthru
          _
        // Predicated region
        $region65: #{tpu_custom_call.1} parent=43 // pred_check
          %p3381 = pneg %p212
        $region66: #{tpu_custom_call.1} parent=43 // pred_check_branch
          %3383 = sbr.rel (%p3381) target = $region68
        $region67: #{tpu_custom_call.1} parent=43 // pred_region
          %s3384 = smul.u32 8, %s32
          %s3386 = ssub.s32 2048, 2048
          %3387 = vsyncadd %s3361, %s3386
          %s3388 = smul.addr %s3384, 2
          %s3389 = smul.addr %s3388, 128
          %s3390 = scalar_lea.hbm %s7, %s3389
          %s3391 = sshll.u32 %s3364, 4
          %s3392 = int_to_ptr.vmem [resolvable:$true] %s3391
          %3397 = dma.vmem_to_hbm [thread:$0]  %s3392, 2048, %s3390, %s3361, 128, 128, 8
        $region68: #{tpu_custom_call.1} parent=43 // pred_fallthru
          _
      $region44: #{tpu_custom_call.1} parent=5 // pred_fallthru
        _
      %p3398 = scmp.le.s32.totalorder 2, %s27
      // Predicated region
      $region69: #{tpu_custom_call.1} parent=5 // pred_check
        %p3399 = pneg %p3398
      $region70: #{tpu_custom_call.1} parent=5 // pred_check_branch
        %3401 = sbr.rel (%p3399) target = $region72
      $region71: #{tpu_custom_call.1} parent=5 // pred_region
        %s3402 = ssub.s32 %s27, 2
        // Predicated region
        $region73: #{tpu_custom_call.1} parent=71 // pred_check
          %p3403 = pneg %p192
        $region74: #{tpu_custom_call.1} parent=71 // pred_check_branch
          %3405 = sbr.rel (%p3403) target = $region76
        $region75: #{tpu_custom_call.1} parent=71 // pred_region
          %s3406 = sand.u32 %s177, 1
          %s3407 = scalar_lea.sflag [#allocation4], %s3406
          %s3408 = sand.u32 %s177, 1
          %s3409 = smul.addr %s3408, 64
          %s3410 = scalar_lea.vmem [#allocation10], %s3409
          %3411 = dma.done %s3407, 1024
        $region76: #{tpu_custom_call.1} parent=71 // pred_fallthru
          _
        // Predicated region
        $region77: #{tpu_custom_call.1} parent=71 // pred_check
          %p3412 = pneg %p218
        $region78: #{tpu_custom_call.1} parent=71 // pred_check_branch
          %3414 = sbr.rel (%p3412) target = $region80
        $region79: #{tpu_custom_call.1} parent=71 // pred_region
          %s3415 = sand.u32 %s203, 1
          %s3416 = scalar_lea.sflag [#allocation12], %s3415
          %s3417 = sand.u32 %s203, 1
          %s3418 = smul.addr %s3417, 128
          %s3419 = scalar_lea.vmem [#allocation11], %s3418
          %3420 = dma.done %s3416, 2048
        $region80: #{tpu_custom_call.1} parent=71 // pred_fallthru
          _
      $region72: #{tpu_custom_call.1} parent=5 // pred_fallthru
        _
    $region6: #{tpu_custom_call.1} parent=1 // loop_footer
      %s31 = sadd.s32 1, %s27
    $region7: #{tpu_custom_call.1} parent=1 // loop_footer_branch
      %26 = sbr.rel target = $region3
    $region8: #{tpu_custom_call.1} parent=1 // loop_exit
      _
    %3421 = vsyncpa [#allocation3], 1
    %s3422 = scalar_lea.sflag [#allocation3], 1
    %3423 = vsyncpa %s3422, 1
    %3424 = vsyncpa [#allocation6], 1
    %s3425 = scalar_lea.sflag [#allocation6], 1
    %3426 = vsyncpa %s3425, 1
    %3427 = vsyncpa [#allocation9], 1
    %3428 = vsyncpa [#allocation4], 1
    %s3429 = scalar_lea.sflag [#allocation4], 1
    %3430 = vsyncpa %s3429, 1
    %3431 = vsyncpa [#allocation12], 1
    %s3432 = scalar_lea.sflag [#allocation12], 1
    %3433 = vsyncpa %s3432, 1

</llo_original>
